<compile_context>
chip_gen: v5e
topology: v5e:2x2
jax: 0.10.0
libtpu: 0.0.40
codegen_flags: <defaults>
</compile_context>

<pallas_src>
import jax
import jax.numpy as jnp
from jax.experimental import pallas as pl
from jax.experimental.pallas import tpu as pltpu

EPS = 1e-5


def se_conv_bn_kernel(xse_ref, w1_ref, b1_ref, x_ref, w2_ref,
                      gamma_ref, beta_ref, o_ref):
    # conv2d142 (1x1, with bias): w1 [Cmid, Cin] @ xse [Cin, 1] -> [Cmid, 1], f32 acc
    s = jnp.dot(w1_ref[...], xse_ref[...].astype(jnp.bfloat16),
                preferred_element_type=jnp.float32)
    # sigmoid28 (EUP, f32)
    s = jax.nn.sigmoid(s + b1_ref[...])                          # [Cmid, 1]
    # SE scale: column vector broadcast over the HW lanes; x arrives f32 from HBM,
    # product cast to bf16 for the MXU (accumulation stays f32).
    xs = (s * x_ref[...]).astype(jnp.bfloat16)                   # [Cmid, HW]
    # conv2d143 (1x1, no bias): w2 [Cout, Cmid] @ xs [Cmid, HW] -> [Cout, HW], f32 acc
    y = jnp.dot(w2_ref[...], xs, preferred_element_type=jnp.float32)
    # batchnorm2d85 (training mode, N=1): per-channel batch stats over the HW lanes.
    hw = y.shape[1]
    inv_hw = 1.0 / hw
    mean = jnp.sum(y, axis=1, keepdims=True) * inv_hw            # [Cout, 1]
    mean_sq = jnp.sum(y * y, axis=1, keepdims=True) * inv_hw
    var = jnp.maximum(mean_sq - mean * mean, 0.0)                # clamp: no negative var
    # Folded BN affine: 2 elementwise passes over [Cout, HW] instead of 4.
    scale = gamma_ref[...] * jax.lax.rsqrt(var + EPS)            # [Cout, 1]
    shift = beta_ref[...] - mean * scale
    o_ref[...] = y * scale + shift
    # TODO(synk): BatchNorm2d running_mean/running_var momentum updates (training-mode
    # side effects) are not reproduced; only the normalized output is computed.


def prepare_params(params):
    """One-time weight preparation OUTSIDE the hot path (per perf review)."""
    Cmid, Cin = params["w1"].shape[:2]
    Cout = params["w2"].shape[0]
    return {
        "w1": params["w1"].reshape(Cmid, Cin).astype(jnp.bfloat16),     # [Cmid, Cin]
        "b1": params["b1"].reshape(Cmid, 1).astype(jnp.float32),        # [Cmid, 1]
        "w2": params["w2"].reshape(Cout, Cmid).astype(jnp.bfloat16),    # [Cout, Cmid]
        "gamma": params["gamma"].reshape(Cout, 1).astype(jnp.float32),  # [Cout, 1]
        "beta": params["beta"].reshape(Cout, 1).astype(jnp.float32),    # [Cout, 1]
    }


def model_forward(x442, x439, prepped):
    """x442: [1, Cin, 1, 1] squeeze input; x439: [1, Cmid, H, W] main activation."""
    N, Cin, _, _ = x442.shape
    _, Cmid, H, W = x439.shape
    Cout = prepped["w2"].shape[0]
    assert N == 1, "kernel implemented for batch size 1 (as in the reference module)"
    HW = H * W

    # Channel-major views: both reshapes are free in NCHW memory layout (no transpose).
    xse = x442.reshape(Cin, 1)                   # [Cin, 1] f32
    x = x439.reshape(Cmid, HW)                   # [Cmid, HW] f32 (cast in-kernel)

    vmem = pl.BlockSpec(memory_space=pltpu.MemorySpace.VMEM)
    flops = (2 * Cmid * Cin            # first 1x1 conv
             + 2 * Cout * Cmid * HW    # second 1x1 conv
             + 3 * Cmid * HW           # SE scale + cast
             + 8 * Cout * HW)          # batchnorm
    bytes_accessed = (Cin * 4 + Cmid * Cin * 2 + Cmid * 4        # xse, w1, b1
                      + Cmid * HW * 4 + Cout * Cmid * 2          # x, w2
                      + 2 * Cout * 4                             # gamma, beta
                      + Cout * HW * 4)                           # output

    out = pl.pallas_call(
        se_conv_bn_kernel,
        out_shape=jax.ShapeDtypeStruct((Cout, HW), jnp.float32),
        in_specs=[vmem] * 7,
        out_specs=vmem,
        cost_estimate=pl.CostEstimate(
            flops=flops,
            transcendentals=Cmid + Cout,   # sigmoid + rsqrt
            bytes_accessed=bytes_accessed),
    )(xse, prepped["w1"], prepped["b1"], x, prepped["w2"],
      prepped["gamma"], prepped["beta"])

    # [Cout, HW] -> [1, Cout, H, W] is a free reshape (no transpose).
    return out.reshape(1, Cout, H, W)


def reference_forward(x442, x439, params):
    """Pure-f32 reference matching the PyTorch module's forward (training-mode BN)."""
    Cmid = x439.shape[1]
    Cout = params["w2"].shape[0]
    s = jnp.einsum("oc,nchw->nohw", params["w1"].reshape(Cmid, -1), x442)
    s = jax.nn.sigmoid(s + params["b1"].reshape(1, Cmid, 1, 1))
    xs = s * x439
    y = jnp.einsum("oc,nchw->nohw", params["w2"].reshape(Cout, Cmid), xs)
    mean = jnp.mean(y, axis=(0, 2, 3), keepdims=True)
    var = jnp.mean((y - mean) ** 2, axis=(0, 2, 3), keepdims=True)
    y = (y - mean) / jnp.sqrt(var + EPS)
    return y * params["gamma"].reshape(1, Cout, 1, 1) + params["beta"].reshape(1, Cout, 1, 1)


if __name__ == "__main__":
    # Shapes implied by the module:
    # Conv2d(68,1632,1) -> Sigmoid -> mul -> Conv2d(1632,272,1,bias=False) -> BN(272)
    Cin, Cmid, Cout, H, W = 68, 1632, 272, 7, 7

    key = jax.random.PRNGKey(0)
    k1, k2, k3, k4, k5 = jax.random.split(key, 5)

    params = {
        "w1": jax.random.normal(k1, (Cmid, Cin, 1, 1), jnp.float32) * 0.05,   # Conv2d(68,1632,1)
        "b1": jax.random.normal(k2, (Cmid,), jnp.float32) * 0.05,
        "w2": jax.random.normal(k3, (Cout, Cmid, 1, 1), jnp.float32) * 0.02,  # Conv2d(1632,272,1,bias=False)
        "gamma": jnp.ones((Cout,), jnp.float32),                              # BatchNorm2d(272) affine
        "beta": jnp.zeros((Cout,), jnp.float32),
    }

    x442 = jax.random.normal(k4, (1, Cin, 1, 1), jnp.float32)   # squeeze-excite input
    x439 = jax.random.normal(k5, (1, Cmid, H, W), jnp.float32)  # main activation

    # One-time weight prep (hoisted out of the hot path per perf review).
    prepped = jax.block_until_ready(prepare_params(params))

    fwd = jax.jit(model_forward)
    out = jax.block_until_ready(fwd(x442, x439, prepped))

    ref = reference_forward(x442, x439, params)
    assert out.shape == (1, Cout, H, W)
    # bf16 MXU operands vs pure-f32 reference -> tolerance sized for bf16 rounding
    # (f32 accumulation keeps the error at a few 1e-3 rms on the standardized output).
    assert jnp.allclose(out, ref, atol=2e-2, rtol=2e-2)

    print("KERNEL_OK")
</pallas_src>

<mosaic_0001>
module attributes {stable_mosaic.version = 11 : i64} {
  func.func @se_conv_bn_kernel(%arg0: memref<68x1xf32, #tpu.memory_space<vmem>>, %arg1: memref<1632x68xbf16, #tpu.memory_space<vmem>>, %arg2: memref<1632x1xf32, #tpu.memory_space<vmem>>, %arg3: memref<1632x49xf32, #tpu.memory_space<vmem>>, %arg4: memref<272x1632xbf16, #tpu.memory_space<vmem>>, %arg5: memref<272x1xf32, #tpu.memory_space<vmem>>, %arg6: memref<272x1xf32, #tpu.memory_space<vmem>>, %arg7: memref<272x49xf32, #tpu.memory_space<vmem>>) attributes {dimension_semantics = [], scalar_prefetch = 0 : i64, scratch_operands = 0 : i64, tpu.core_type = #tpu.core_type<tc>} {
    %c0 = arith.constant 0 : index
    %c0_0 = arith.constant 0 : index
    %0 = vector.load %arg1[%c0, %c0_0] : memref<1632x68xbf16, #tpu.memory_space<vmem>>, vector<1632x68xbf16>
    %c0_1 = arith.constant 0 : index
    %c0_2 = arith.constant 0 : index
    %1 = vector.load %arg0[%c0_1, %c0_2] : memref<68x1xf32, #tpu.memory_space<vmem>>, vector<68x1xf32>
    %2 = arith.truncf %1 : vector<68x1xf32> to vector<68x1xbf16>
    %cst = arith.constant dense<0.000000e+00> : vector<1632x1xf32>
    %3 = tpu.matmul %0, %2, %cst {dimension_numbers = #tpu.dot_dimension_numbers<[1], [0], [0], [1], [0, 0, 1, 1], [], []>} : vector<1632x68xbf16>, vector<68x1xbf16>, vector<1632x1xf32> -> vector<1632x1xf32>
    %c0_3 = arith.constant 0 : index
    %c0_4 = arith.constant 0 : index
    %4 = vector.load %arg2[%c0_3, %c0_4] : memref<1632x1xf32, #tpu.memory_space<vmem>>, vector<1632x1xf32>
    %5 = arith.addf %3, %4 : vector<1632x1xf32>
    %6 = arith.negf %5 : vector<1632x1xf32>
    %7 = math.exp %6 : vector<1632x1xf32>
    %cst_5 = arith.constant 1.000000e+00 : f32
    %8 = vector.broadcast %cst_5 : f32 to vector<1632x1xf32>
    %9 = arith.addf %8, %7 : vector<1632x1xf32>
    %10 = arith.divf %8, %9 : vector<1632x1xf32>
    %c0_6 = arith.constant 0 : index
    %c0_7 = arith.constant 0 : index
    %11 = vector.load %arg3[%c0_6, %c0_7] : memref<1632x49xf32, #tpu.memory_space<vmem>>, vector<1632x49xf32>
    %12 = vector.broadcast %10 : vector<1632x1xf32> to vector<1632x49xf32>
    %13 = arith.mulf %12, %11 : vector<1632x49xf32>
    %14 = arith.truncf %13 : vector<1632x49xf32> to vector<1632x49xbf16>
    %c0_8 = arith.constant 0 : index
    %c0_9 = arith.constant 0 : index
    %15 = vector.load %arg4[%c0_8, %c0_9] : memref<272x1632xbf16, #tpu.memory_space<vmem>>, vector<272x1632xbf16>
    %cst_10 = arith.constant dense<0.000000e+00> : vector<272x49xf32>
    %16 = tpu.matmul %15, %14, %cst_10 {dimension_numbers = #tpu.dot_dimension_numbers<[1], [0], [0], [1], [0, 0, 1, 1], [], []>} : vector<272x1632xbf16>, vector<1632x49xbf16>, vector<272x49xf32> -> vector<272x49xf32>
    %cst_11 = arith.constant dense<0.000000e+00> : vector<272xf32>
    %17 = vector.multi_reduction <add>, %16, %cst_11 [1] : vector<272x49xf32> to vector<272xf32>
    %18 = vector.shape_cast %17 : vector<272xf32> to vector<272x1xf32>
    %cst_12 = arith.constant 0.0204081628 : f32
    %19 = vector.broadcast %cst_12 : f32 to vector<272x1xf32>
    %20 = arith.mulf %18, %19 : vector<272x1xf32>
    %21 = arith.mulf %16, %16 : vector<272x49xf32>
    %cst_13 = arith.constant dense<0.000000e+00> : vector<272xf32>
    %22 = vector.multi_reduction <add>, %21, %cst_13 [1] : vector<272x49xf32> to vector<272xf32>
    %23 = vector.shape_cast %22 : vector<272xf32> to vector<272x1xf32>
    %cst_14 = arith.constant 0.0204081628 : f32
    %24 = vector.broadcast %cst_14 : f32 to vector<272x1xf32>
    %25 = arith.mulf %23, %24 : vector<272x1xf32>
    %26 = arith.mulf %20, %20 : vector<272x1xf32>
    %27 = arith.subf %25, %26 : vector<272x1xf32>
    %cst_15 = arith.constant 0.000000e+00 : f32
    %28 = vector.broadcast %cst_15 : f32 to vector<272x1xf32>
    %29 = arith.maximumf %27, %28 : vector<272x1xf32>
    %c0_16 = arith.constant 0 : index
    %c0_17 = arith.constant 0 : index
    %30 = vector.load %arg5[%c0_16, %c0_17] : memref<272x1xf32, #tpu.memory_space<vmem>>, vector<272x1xf32>
    %cst_18 = arith.constant 9.99999974E-6 : f32
    %31 = vector.broadcast %cst_18 : f32 to vector<272x1xf32>
    %32 = arith.addf %29, %31 : vector<272x1xf32>
    %33 = math.rsqrt %32 : vector<272x1xf32>
    %34 = arith.mulf %30, %33 : vector<272x1xf32>
    %c0_19 = arith.constant 0 : index
    %c0_20 = arith.constant 0 : index
    %35 = vector.load %arg6[%c0_19, %c0_20] : memref<272x1xf32, #tpu.memory_space<vmem>>, vector<272x1xf32>
    %36 = arith.mulf %20, %34 : vector<272x1xf32>
    %37 = arith.subf %35, %36 : vector<272x1xf32>
    %38 = vector.broadcast %34 : vector<272x1xf32> to vector<272x49xf32>
    %39 = arith.mulf %16, %38 : vector<272x49xf32>
    %40 = vector.broadcast %37 : vector<272x1xf32> to vector<272x49xf32>
    %41 = arith.addf %39, %40 : vector<272x49xf32>
    %c0_21 = arith.constant 0 : index
    %c0_22 = arith.constant 0 : index
    %42 = vector.load %arg7[%c0_21, %c0_22] : memref<272x49xf32, #tpu.memory_space<vmem>>, vector<272x49xf32>
    tpu.vector_store %arg7[%c0_21, %c0_22], %41 {strides = array<i32>} : memref<272x49xf32, #tpu.memory_space<vmem>>, vector<272x49xf32>,
    return
  }
}

</mosaic_0001>

<llo_original>
// kernel: model_forward.1
$region0: #{model_forward.1}
  #allocation0 [shape = 'u32[]', space=smem, size = 0x4, offset = 0x4, fixed_abs, tag = 'smem constant byte address 0x4 - core index']
  #allocation1 [shape = 'u32[72,128]{1,0:T(1,128)}', space=vmem, size = 0x9000, scoped, tag = 'internal scratch']
  %s0 = inlined_call_operand.vmem [shape: f32[68,1], index: 0, kind: input, shape index: {}]
  %s1 = inlined_call_operand.vmem [shape: bf16[1632,68], index: 1, kind: input, shape index: {}]
  %s2 = inlined_call_operand.vmem [shape: f32[1632,1], index: 2, kind: input, shape index: {}]
  %s3 = inlined_call_operand.vmem [shape: f32[1632,49], index: 3, kind: input, shape index: {}]
  %s4 = inlined_call_operand.vmem [shape: bf16[272,1632], index: 4, kind: input, shape index: {}]
  %s5 = inlined_call_operand.vmem [shape: f32[272,1], index: 5, kind: input, shape index: {}]
  %s6 = inlined_call_operand.vmem [shape: f32[272,1], index: 6, kind: input, shape index: {}]
  %s7 = inlined_call_operand.vmem [shape: f32[272,49], index: 7, kind: output, shape index: {}]
  %s8 = sld [smem:[#allocation0]]
  $region38: #{model_forward.1} parent=0
    _
  %s10 = ssub.s32 1, %s8
  %s11 = scalar_select 0, %s10, %s8
  // Predicated region
  $region2: #{model_forward.1} parent=0 // pred_check
    _
  $region3: #{model_forward.1} parent=0 // pred_check_branch
    %13 = sbr.rel (0) target = $region5
  $region4: #{model_forward.1} parent=0 // pred_region
    _
  $region5: #{model_forward.1} parent=0 // pred_fallthru
    _
  // Predicated region
  $region6: #{model_forward.1} parent=0 // pred_check
    _
  $region7: #{model_forward.1} parent=0 // pred_check_branch
    %15 = sbr.rel (0) target = $region9
  $region8: #{model_forward.1} parent=0 // pred_region
    _
  $region9: #{model_forward.1} parent=0 // pred_fallthru
    _
  // Predicated region
  $region10: #{model_forward.1} parent=0 // pred_check
    _
  $region11: #{model_forward.1} parent=0 // pred_check_branch
    %17 = sbr.rel (0) target = $region13
  $region12: #{model_forward.1} parent=0 // pred_region
    _
  $region13: #{model_forward.1} parent=0 // pred_fallthru
    _
  // Predicated region
  $region14: #{model_forward.1} parent=0 // pred_check
    _
  $region15: #{model_forward.1} parent=0 // pred_check_branch
    %19 = sbr.rel (0) target = $region17
  $region16: #{model_forward.1} parent=0 // pred_region
    _
  $region17: #{model_forward.1} parent=0 // pred_fallthru
    _
  // Predicated region
  $region18: #{model_forward.1} parent=0 // pred_check
    _
  $region19: #{model_forward.1} parent=0 // pred_check_branch
    %21 = sbr.rel (0) target = $region21
  $region20: #{model_forward.1} parent=0 // pred_region
    _
  $region21: #{model_forward.1} parent=0 // pred_fallthru
    _
  // Predicated region
  $region22: #{model_forward.1} parent=0 // pred_check
    _
  $region23: #{model_forward.1} parent=0 // pred_check_branch
    %23 = sbr.rel (0) target = $region25
  $region24: #{model_forward.1} parent=0 // pred_region
    _
  $region25: #{model_forward.1} parent=0 // pred_fallthru
    _
  // Predicated region
  $region26: #{model_forward.1} parent=0 // pred_check
    _
  $region27: #{model_forward.1} parent=0 // pred_check_branch
    %25 = sbr.rel (0) target = $region29
  $region28: #{model_forward.1} parent=0 // pred_region
    _
  $region29: #{model_forward.1} parent=0 // pred_fallthru
    _
  %v27 = vld [vmem:[%s1] sm:$0xf]
  %v28 = vld [vmem:[%s1 + $0x4] sm:$0xf]
  %v29 = vld [vmem:[%s1 + $0x8] sm:$0xf]
  %v30 = vld [vmem:[%s1 + $0xc] sm:$0xf]
  %v31 = vld [vmem:[%s1 + $0x10] sm:$0xf]
  %v32 = vld [vmem:[%s1 + $0x14] sm:$0xf]
  %v33 = vld [vmem:[%s1 + $0x18] sm:$0xf]
  %v34 = vld [vmem:[%s1 + $0x1c] sm:$0xf]
  %v35 = vld [vmem:[%s1 + $0x20] sm:$0xf]
  %v36 = vld [vmem:[%s1 + $0x24] sm:$0xf]
  %v37 = vld [vmem:[%s1 + $0x28] sm:$0xf]
  %v38 = vld [vmem:[%s1 + $0x2c] sm:$0xf]
  %v39 = vld [vmem:[%s1 + $0x30] sm:$0xf]
  %v40 = vld [vmem:[%s1 + $0x34] sm:$0xf]
  %v41 = vld [vmem:[%s1 + $0x38] sm:$0xf]
  %v42 = vld [vmem:[%s1 + $0x3c] sm:$0xf]
  %v43 = vld [vmem:[%s1 + $0x40] sm:$0xf]
  %v44 = vld [vmem:[%s1 + $0x44] sm:$0xf]
  %v45 = vld [vmem:[%s1 + $0x48] sm:$0xf]
  %v46 = vld [vmem:[%s1 + $0x4c] sm:$0xf]
  %v47 = vld [vmem:[%s1 + $0x50] sm:$0xf]
  %v48 = vld [vmem:[%s1 + $0x54] sm:$0xf]
  %v49 = vld [vmem:[%s1 + $0x58] sm:$0xf]
  %v50 = vld [vmem:[%s1 + $0x5c] sm:$0xf]
  %v51 = vld [vmem:[%s1 + $0x60] sm:$0xf]
  %v52 = vld [vmem:[%s1 + $0x64] sm:$0xf]
  %v53 = vld [vmem:[%s1 + $0x68] sm:$0xf]
  %v54 = vld [vmem:[%s1 + $0x6c] sm:$0xf]
  %v55 = vld [vmem:[%s1 + $0x70] sm:$0xf]
  %v56 = vld [vmem:[%s1 + $0x74] sm:$0xf]
  %v57 = vld [vmem:[%s1 + $0x78] sm:$0xf]
  %v58 = vld [vmem:[%s1 + $0x7c] sm:$0xf]
  %v59 = vld [vmem:[%s1 + $0x80] sm:$0xf]
  %v60 = vld [vmem:[%s1 + $0x84] sm:$0xf]
  %v61 = vld [vmem:[%s1 + $0x88] sm:$0xf]
  %v62 = vld [vmem:[%s1 + $0x8c] sm:$0xf]
  %v63 = vld [vmem:[%s1 + $0x90] sm:$0xf]
  %v64 = vld [vmem:[%s1 + $0x94] sm:$0xf]
  %v65 = vld [vmem:[%s1 + $0x98] sm:$0xf]
  %v66 = vld [vmem:[%s1 + $0x9c] sm:$0xf]
  %v67 = vld [vmem:[%s1 + $0xa0] sm:$0xf]
  %v68 = vld [vmem:[%s1 + $0xa4] sm:$0xf]
  %v69 = vld [vmem:[%s1 + $0xa8] sm:$0xf]
  %v70 = vld [vmem:[%s1 + $0xac] sm:$0xf]
  %v71 = vld [vmem:[%s1 + $0xb0] sm:$0xf]
  %v72 = vld [vmem:[%s1 + $0xb4] sm:$0xf]
  %v73 = vld [vmem:[%s1 + $0xb8] sm:$0xf]
  %v74 = vld [vmem:[%s1 + $0xbc] sm:$0xf]
  %v75 = vld [vmem:[%s1 + $0xc0] sm:$0xf]
  %v76 = vld [vmem:[%s1 + $0xc4] sm:$0xf]
  %v77 = vld [vmem:[%s1 + $0xc8] sm:$0xf]
  %v78 = vld [vmem:[%s1 + $0xcc] sm:$0xf]
  %v79 = vld [vmem:[%s1 + $0xd0] sm:$0xf]
  %v80 = vld [vmem:[%s1 + $0xd4] sm:$0xf]
  %v81 = vld [vmem:[%s1 + $0xd8] sm:$0xf]
  %v82 = vld [vmem:[%s1 + $0xdc] sm:$0xf]
  %v83 = vld [vmem:[%s1 + $0xe0] sm:$0xf]
  %v84 = vld [vmem:[%s1 + $0xe4] sm:$0xf]
  %v85 = vld [vmem:[%s1 + $0xe8] sm:$0xf]
  %v86 = vld [vmem:[%s1 + $0xec] sm:$0xf]
  %v87 = vld [vmem:[%s1 + $0xf0] sm:$0xf]
  %v88 = vld [vmem:[%s1 + $0xf4] sm:$0xf]
  %v89 = vld [vmem:[%s1 + $0xf8] sm:$0xf]
  %v90 = vld [vmem:[%s1 + $0xfc] sm:$0xf]
  %v91 = vld [vmem:[%s1 + $0x100] sm:$0xf]
  %v92 = vld [vmem:[%s1 + $0x104] sm:$0xf]
  %v93 = vld [vmem:[%s1 + $0x108] sm:$0xf]
  %v94 = vld [vmem:[%s1 + $0x10c] sm:$0xf]
  %v95 = vld [vmem:[%s1 + $0x110] sm:$0xf]
  %v96 = vld [vmem:[%s1 + $0x114] sm:$0xf]
  %v97 = vld [vmem:[%s1 + $0x118] sm:$0xf]
  %v98 = vld [vmem:[%s1 + $0x11c] sm:$0xf]
  %v99 = vld [vmem:[%s1 + $0x120] sm:$0xf]
  %v100 = vld [vmem:[%s1 + $0x124] sm:$0xf]
  %v101 = vld [vmem:[%s1 + $0x128] sm:$0xf]
  %v102 = vld [vmem:[%s1 + $0x12c] sm:$0xf]
  %v103 = vld [vmem:[%s1 + $0x130] sm:$0xf]
  %v104 = vld [vmem:[%s1 + $0x134] sm:$0xf]
  %v105 = vld [vmem:[%s1 + $0x138] sm:$0xf]
  %v106 = vld [vmem:[%s1 + $0x13c] sm:$0xf]
  %v107 = vld [vmem:[%s1 + $0x140] sm:$0xf]
  %v108 = vld [vmem:[%s1 + $0x144] sm:$0xf]
  %v109 = vld [vmem:[%s1 + $0x148] sm:$0xf]
  %v110 = vld [vmem:[%s1 + $0x14c] sm:$0xf]
  %v111 = vld [vmem:[%s1 + $0x150] sm:$0xf]
  %v112 = vld [vmem:[%s1 + $0x154] sm:$0xf]
  %v113 = vld [vmem:[%s1 + $0x158] sm:$0xf]
  %v114 = vld [vmem:[%s1 + $0x15c] sm:$0xf]
  %v115 = vld [vmem:[%s1 + $0x160] sm:$0xf]
  %v116 = vld [vmem:[%s1 + $0x164] sm:$0xf]
  %v117 = vld [vmem:[%s1 + $0x168] sm:$0xf]
  %v118 = vld [vmem:[%s1 + $0x16c] sm:$0xf]
  %v119 = vld [vmem:[%s1 + $0x170] sm:$0xf]
  %v120 = vld [vmem:[%s1 + $0x174] sm:$0xf]
  %v121 = vld [vmem:[%s1 + $0x178] sm:$0xf]
  %v122 = vld [vmem:[%s1 + $0x17c] sm:$0xf]
  %v123 = vld [vmem:[%s1 + $0x180] sm:$0xf]
  %v124 = vld [vmem:[%s1 + $0x184] sm:$0xf]
  %v125 = vld [vmem:[%s1 + $0x188] sm:$0xf]
  %v126 = vld [vmem:[%s1 + $0x18c] sm:$0xf]
  %v127 = vld [vmem:[%s1 + $0x190] sm:$0xf]
  %v128 = vld [vmem:[%s1 + $0x194] sm:$0xf]
  %v129 = vld [vmem:[%s1 + $0x198] sm:$0xf]
  %v130 = vld [vmem:[%s1 + $0x19c] sm:$0xf]
  %v131 = vld [vmem:[%s1 + $0x1a0] sm:$0xf]
  %v132 = vld [vmem:[%s1 + $0x1a4] sm:$0xf]
  %v133 = vld [vmem:[%s1 + $0x1a8] sm:$0xf]
  %v134 = vld [vmem:[%s1 + $0x1ac] sm:$0xf]
  %v135 = vld [vmem:[%s1 + $0x1b0] sm:$0xf]
  %v136 = vld [vmem:[%s1 + $0x1b4] sm:$0xf]
  %v137 = vld [vmem:[%s1 + $0x1b8] sm:$0xf]
  %v138 = vld [vmem:[%s1 + $0x1bc] sm:$0xf]
  %v139 = vld [vmem:[%s1 + $0x1c0] sm:$0xf]
  %v140 = vld [vmem:[%s1 + $0x1c4] sm:$0xf]
  %v141 = vld [vmem:[%s1 + $0x1c8] sm:$0xf]
  %v142 = vld [vmem:[%s1 + $0x1cc] sm:$0xf]
  %v143 = vld [vmem:[%s1 + $0x1d0] sm:$0xf]
  %v144 = vld [vmem:[%s1 + $0x1d4] sm:$0xf]
  %v145 = vld [vmem:[%s1 + $0x1d8] sm:$0xf]
  %v146 = vld [vmem:[%s1 + $0x1dc] sm:$0xf]
  %v147 = vld [vmem:[%s1 + $0x1e0] sm:$0xf]
  %v148 = vld [vmem:[%s1 + $0x1e4] sm:$0xf]
  %v149 = vld [vmem:[%s1 + $0x1e8] sm:$0xf]
  %v150 = vld [vmem:[%s1 + $0x1ec] sm:$0xf]
  %v151 = vld [vmem:[%s1 + $0x1f0] sm:$0xf]
  %v152 = vld [vmem:[%s1 + $0x1f4] sm:$0xf]
  %v153 = vld [vmem:[%s1 + $0x1f8] sm:$0xf]
  %v154 = vld [vmem:[%s1 + $0x1fc] sm:$0xf]
  %v155 = vld [vmem:[%s1 + $0x200] sm:$0xf]
  %v156 = vld [vmem:[%s1 + $0x204] sm:$0xf]
  %v157 = vld [vmem:[%s1 + $0x208] sm:$0xf]
  %v158 = vld [vmem:[%s1 + $0x20c] sm:$0xf]
  %v159 = vld [vmem:[%s1 + $0x210] sm:$0xf]
  %v160 = vld [vmem:[%s1 + $0x214] sm:$0xf]
  %v161 = vld [vmem:[%s1 + $0x218] sm:$0xf]
  %v162 = vld [vmem:[%s1 + $0x21c] sm:$0xf]
  %v163 = vld [vmem:[%s1 + $0x220] sm:$0xf]
  %v164 = vld [vmem:[%s1 + $0x224] sm:$0xf]
  %v165 = vld [vmem:[%s1 + $0x228] sm:$0xf]
  %v166 = vld [vmem:[%s1 + $0x22c] sm:$0xf]
  %v167 = vld [vmem:[%s1 + $0x230] sm:$0xf]
  %v168 = vld [vmem:[%s1 + $0x234] sm:$0xf]
  %v169 = vld [vmem:[%s1 + $0x238] sm:$0xf]
  %v170 = vld [vmem:[%s1 + $0x23c] sm:$0xf]
  %v171 = vld [vmem:[%s1 + $0x240] sm:$0xf]
  %v172 = vld [vmem:[%s1 + $0x244] sm:$0xf]
  %v173 = vld [vmem:[%s1 + $0x248] sm:$0xf]
  %v174 = vld [vmem:[%s1 + $0x24c] sm:$0xf]
  %v175 = vld [vmem:[%s1 + $0x250] sm:$0xf]
  %v176 = vld [vmem:[%s1 + $0x254] sm:$0xf]
  %v177 = vld [vmem:[%s1 + $0x258] sm:$0xf]
  %v178 = vld [vmem:[%s1 + $0x25c] sm:$0xf]
  %v179 = vld [vmem:[%s1 + $0x260] sm:$0xf]
  %v180 = vld [vmem:[%s1 + $0x264] sm:$0xf]
  %v181 = vld [vmem:[%s1 + $0x268] sm:$0xf]
  %v182 = vld [vmem:[%s1 + $0x26c] sm:$0xf]
  %v183 = vld [vmem:[%s1 + $0x270] sm:$0xf]
  %v184 = vld [vmem:[%s1 + $0x274] sm:$0xf]
  %v185 = vld [vmem:[%s1 + $0x278] sm:$0xf]
  %v186 = vld [vmem:[%s1 + $0x27c] sm:$0xf]
  %v187 = vld [vmem:[%s1 + $0x280] sm:$0xf]
  %v188 = vld [vmem:[%s1 + $0x284] sm:$0xf]
  %v189 = vld [vmem:[%s1 + $0x288] sm:$0xf]
  %v190 = vld [vmem:[%s1 + $0x28c] sm:$0xf]
  %v191 = vld [vmem:[%s1 + $0x290] sm:$0xf]
  %v192 = vld [vmem:[%s1 + $0x294] sm:$0xf]
  %v193 = vld [vmem:[%s1 + $0x298] sm:$0xf]
  %v194 = vld [vmem:[%s1 + $0x29c] sm:$0xf]
  %v195 = vld [vmem:[%s1 + $0x2a0] sm:$0xf]
  %v196 = vld [vmem:[%s1 + $0x2a4] sm:$0xf]
  %v197 = vld [vmem:[%s1 + $0x2a8] sm:$0xf]
  %v198 = vld [vmem:[%s1 + $0x2ac] sm:$0xf]
  %v199 = vld [vmem:[%s1 + $0x2b0] sm:$0xf]
  %v200 = vld [vmem:[%s1 + $0x2b4] sm:$0xf]
  %v201 = vld [vmem:[%s1 + $0x2b8] sm:$0xf]
  %v202 = vld [vmem:[%s1 + $0x2bc] sm:$0xf]
  %v203 = vld [vmem:[%s1 + $0x2c0] sm:$0xf]
  %v204 = vld [vmem:[%s1 + $0x2c4] sm:$0xf]
  %v205 = vld [vmem:[%s1 + $0x2c8] sm:$0xf]
  %v206 = vld [vmem:[%s1 + $0x2cc] sm:$0xf]
  %v207 = vld [vmem:[%s1 + $0x2d0] sm:$0xf]
  %v208 = vld [vmem:[%s1 + $0x2d4] sm:$0xf]
  %v209 = vld [vmem:[%s1 + $0x2d8] sm:$0xf]
  %v210 = vld [vmem:[%s1 + $0x2dc] sm:$0xf]
  %v211 = vld [vmem:[%s1 + $0x2e0] sm:$0xf]
  %v212 = vld [vmem:[%s1 + $0x2e4] sm:$0xf]
  %v213 = vld [vmem:[%s1 + $0x2e8] sm:$0xf]
  %v214 = vld [vmem:[%s1 + $0x2ec] sm:$0xf]
  %v215 = vld [vmem:[%s1 + $0x2f0] sm:$0xf]
  %v216 = vld [vmem:[%s1 + $0x2f4] sm:$0xf]
  %v217 = vld [vmem:[%s1 + $0x2f8] sm:$0xf]
  %v218 = vld [vmem:[%s1 + $0x2fc] sm:$0xf]
  %v219 = vld [vmem:[%s1 + $0x300] sm:$0xf]
  %v220 = vld [vmem:[%s1 + $0x304] sm:$0xf]
  %v221 = vld [vmem:[%s1 + $0x308] sm:$0xf]
  %v222 = vld [vmem:[%s1 + $0x30c] sm:$0xf]
  %v223 = vld [vmem:[%s1 + $0x310] sm:$0xf]
  %v224 = vld [vmem:[%s1 + $0x314] sm:$0xf]
  %v225 = vld [vmem:[%s1 + $0x318] sm:$0xf]
  %v226 = vld [vmem:[%s1 + $0x31c] sm:$0xf]
  %v227 = vld [vmem:[%s1 + $0x320] sm:$0xf]
  %v228 = vld [vmem:[%s1 + $0x324] sm:$0xf]
  %v229 = vld [vmem:[%s1 + $0x328] sm:$0xf]
  %v230 = vld [vmem:[%s1 + $0x32c] sm:$0xf]
  %v231 = vld [vmem:[%s0] sm:$0xff]
  %v232 = vld [vmem:[%s0 + $0x8] sm:$0xff]
  %v233 = vld [vmem:[%s0 + $0x10] sm:$0xff]
  %v234 = vld [vmem:[%s0 + $0x18] sm:$0xff]
  %v235 = vld [vmem:[%s0 + $0x20] sm:$0xff]
  %v236 = vld [vmem:[%s0 + $0x28] sm:$0xff]
  %v237 = vld [vmem:[%s0 + $0x30] sm:$0xff]
  %v238 = vld [vmem:[%s0 + $0x38] sm:$0xff]
  %v239 = vld [vmem:[%s0 + $0x40] sm:$0xf]
  %v240 = vpack.c.bf16 %v232, %v231
  %v241 = vpack.c.bf16 %v234, %v233
  %v242 = vpack.c.bf16 %v236, %v235
  %v243 = vpack.c.bf16 %v238, %v237
  %v244 = vpack.c.bf16 %v239, %v239
  %v245 = vld [vmem:[%s2] sm:$0xff]
  %v246 = vld [vmem:[%s2 + $0x8] sm:$0xff]
  %v247 = vld [vmem:[%s2 + $0x10] sm:$0xff]
  %v248 = vld [vmem:[%s2 + $0x18] sm:$0xff]
  %v249 = vld [vmem:[%s2 + $0x20] sm:$0xff]
  %v250 = vld [vmem:[%s2 + $0x28] sm:$0xff]
  %v251 = vld [vmem:[%s2 + $0x30] sm:$0xff]
  %v252 = vld [vmem:[%s2 + $0x38] sm:$0xff]
  %v253 = vld [vmem:[%s2 + $0x40] sm:$0xff]
  %v254 = vld [vmem:[%s2 + $0x48] sm:$0xff]
  %v255 = vld [vmem:[%s2 + $0x50] sm:$0xff]
  %v256 = vld [vmem:[%s2 + $0x58] sm:$0xff]
  %v257 = vld [vmem:[%s2 + $0x60] sm:$0xff]
  %v258 = vld [vmem:[%s2 + $0x68] sm:$0xff]
  %v259 = vld [vmem:[%s2 + $0x70] sm:$0xff]
  %v260 = vld [vmem:[%s2 + $0x78] sm:$0xff]
  %v261 = vld [vmem:[%s2 + $0x80] sm:$0xff]
  %v262 = vld [vmem:[%s2 + $0x88] sm:$0xff]
  %v263 = vld [vmem:[%s2 + $0x90] sm:$0xff]
  %v264 = vld [vmem:[%s2 + $0x98] sm:$0xff]
  %v265 = vld [vmem:[%s2 + $0xa0] sm:$0xff]
  %v266 = vld [vmem:[%s2 + $0xa8] sm:$0xff]
  %v267 = vld [vmem:[%s2 + $0xb0] sm:$0xff]
  %v268 = vld [vmem:[%s2 + $0xb8] sm:$0xff]
  %v269 = vld [vmem:[%s2 + $0xc0] sm:$0xff]
  %v270 = vld [vmem:[%s2 + $0xc8] sm:$0xff]
  %v271 = vld [vmem:[%s2 + $0xd0] sm:$0xff]
  %v272 = vld [vmem:[%s2 + $0xd8] sm:$0xff]
  %v273 = vld [vmem:[%s2 + $0xe0] sm:$0xff]
  %v274 = vld [vmem:[%s2 + $0xe8] sm:$0xff]
  %v275 = vld [vmem:[%s2 + $0xf0] sm:$0xff]
  %v276 = vld [vmem:[%s2 + $0xf8] sm:$0xff]
  %v277 = vld [vmem:[%s2 + $0x100] sm:$0xff]
  %v278 = vld [vmem:[%s2 + $0x108] sm:$0xff]
  %v279 = vld [vmem:[%s2 + $0x110] sm:$0xff]
  %v280 = vld [vmem:[%s2 + $0x118] sm:$0xff]
  %v281 = vld [vmem:[%s2 + $0x120] sm:$0xff]
  %v282 = vld [vmem:[%s2 + $0x128] sm:$0xff]
  %v283 = vld [vmem:[%s2 + $0x130] sm:$0xff]
  %v284 = vld [vmem:[%s2 + $0x138] sm:$0xff]
  %v285 = vld [vmem:[%s2 + $0x140] sm:$0xff]
  %v286 = vld [vmem:[%s2 + $0x148] sm:$0xff]
  %v287 = vld [vmem:[%s2 + $0x150] sm:$0xff]
  %v288 = vld [vmem:[%s2 + $0x158] sm:$0xff]
  %v289 = vld [vmem:[%s2 + $0x160] sm:$0xff]
  %v290 = vld [vmem:[%s2 + $0x168] sm:$0xff]
  %v291 = vld [vmem:[%s2 + $0x170] sm:$0xff]
  %v292 = vld [vmem:[%s2 + $0x178] sm:$0xff]
  %v293 = vld [vmem:[%s2 + $0x180] sm:$0xff]
  %v294 = vld [vmem:[%s2 + $0x188] sm:$0xff]
  %v295 = vld [vmem:[%s2 + $0x190] sm:$0xff]
  %v296 = vld [vmem:[%s2 + $0x198] sm:$0xff]
  %v297 = vld [vmem:[%s2 + $0x1a0] sm:$0xff]
  %v298 = vld [vmem:[%s2 + $0x1a8] sm:$0xff]
  %v299 = vld [vmem:[%s2 + $0x1b0] sm:$0xff]
  %v300 = vld [vmem:[%s2 + $0x1b8] sm:$0xff]
  %v301 = vld [vmem:[%s2 + $0x1c0] sm:$0xff]
  %v302 = vld [vmem:[%s2 + $0x1c8] sm:$0xff]
  %v303 = vld [vmem:[%s2 + $0x1d0] sm:$0xff]
  %v304 = vld [vmem:[%s2 + $0x1d8] sm:$0xff]
  %v305 = vld [vmem:[%s2 + $0x1e0] sm:$0xff]
  %v306 = vld [vmem:[%s2 + $0x1e8] sm:$0xff]
  %v307 = vld [vmem:[%s2 + $0x1f0] sm:$0xff]
  %v308 = vld [vmem:[%s2 + $0x1f8] sm:$0xff]
  %v309 = vld [vmem:[%s2 + $0x200] sm:$0xff]
  %v310 = vld [vmem:[%s2 + $0x208] sm:$0xff]
  %v311 = vld [vmem:[%s2 + $0x210] sm:$0xff]
  %v312 = vld [vmem:[%s2 + $0x218] sm:$0xff]
  %v313 = vld [vmem:[%s2 + $0x220] sm:$0xff]
  %v314 = vld [vmem:[%s2 + $0x228] sm:$0xff]
  %v315 = vld [vmem:[%s2 + $0x230] sm:$0xff]
  %v316 = vld [vmem:[%s2 + $0x238] sm:$0xff]
  %v317 = vld [vmem:[%s2 + $0x240] sm:$0xff]
  %v318 = vld [vmem:[%s2 + $0x248] sm:$0xff]
  %v319 = vld [vmem:[%s2 + $0x250] sm:$0xff]
  %v320 = vld [vmem:[%s2 + $0x258] sm:$0xff]
  %v321 = vld [vmem:[%s2 + $0x260] sm:$0xff]
  %v322 = vld [vmem:[%s2 + $0x268] sm:$0xff]
  %v323 = vld [vmem:[%s2 + $0x270] sm:$0xff]
  %v324 = vld [vmem:[%s2 + $0x278] sm:$0xff]
  %v325 = vld [vmem:[%s2 + $0x280] sm:$0xff]
  %v326 = vld [vmem:[%s2 + $0x288] sm:$0xff]
  %v327 = vld [vmem:[%s2 + $0x290] sm:$0xff]
  %v328 = vld [vmem:[%s2 + $0x298] sm:$0xff]
  %v329 = vld [vmem:[%s2 + $0x2a0] sm:$0xff]
  %v330 = vld [vmem:[%s2 + $0x2a8] sm:$0xff]
  %v331 = vld [vmem:[%s2 + $0x2b0] sm:$0xff]
  %v332 = vld [vmem:[%s2 + $0x2b8] sm:$0xff]
  %v333 = vld [vmem:[%s2 + $0x2c0] sm:$0xff]
  %v334 = vld [vmem:[%s2 + $0x2c8] sm:$0xff]
  %v335 = vld [vmem:[%s2 + $0x2d0] sm:$0xff]
  %v336 = vld [vmem:[%s2 + $0x2d8] sm:$0xff]
  %v337 = vld [vmem:[%s2 + $0x2e0] sm:$0xff]
  %v338 = vld [vmem:[%s2 + $0x2e8] sm:$0xff]
  %v339 = vld [vmem:[%s2 + $0x2f0] sm:$0xff]
  %v340 = vld [vmem:[%s2 + $0x2f8] sm:$0xff]
  %v341 = vld [vmem:[%s2 + $0x300] sm:$0xff]
  %v342 = vld [vmem:[%s2 + $0x308] sm:$0xff]
  %v343 = vld [vmem:[%s2 + $0x310] sm:$0xff]
  %v344 = vld [vmem:[%s2 + $0x318] sm:$0xff]
  %v345 = vld [vmem:[%s2 + $0x320] sm:$0xff]
  %v346 = vld [vmem:[%s2 + $0x328] sm:$0xff]
  %v347 = vld [vmem:[%s2 + $0x330] sm:$0xff]
  %v348 = vld [vmem:[%s2 + $0x338] sm:$0xff]
  %v349 = vld [vmem:[%s2 + $0x340] sm:$0xff]
  %v350 = vld [vmem:[%s2 + $0x348] sm:$0xff]
  %v351 = vld [vmem:[%s2 + $0x350] sm:$0xff]
  %v352 = vld [vmem:[%s2 + $0x358] sm:$0xff]
  %v353 = vld [vmem:[%s2 + $0x360] sm:$0xff]
  %v354 = vld [vmem:[%s2 + $0x368] sm:$0xff]
  %v355 = vld [vmem:[%s2 + $0x370] sm:$0xff]
  %v356 = vld [vmem:[%s2 + $0x378] sm:$0xff]
  %v357 = vld [vmem:[%s2 + $0x380] sm:$0xff]
  %v358 = vld [vmem:[%s2 + $0x388] sm:$0xff]
  %v359 = vld [vmem:[%s2 + $0x390] sm:$0xff]
  %v360 = vld [vmem:[%s2 + $0x398] sm:$0xff]
  %v361 = vld [vmem:[%s2 + $0x3a0] sm:$0xff]
  %v362 = vld [vmem:[%s2 + $0x3a8] sm:$0xff]
  %v363 = vld [vmem:[%s2 + $0x3b0] sm:$0xff]
  %v364 = vld [vmem:[%s2 + $0x3b8] sm:$0xff]
  %v365 = vld [vmem:[%s2 + $0x3c0] sm:$0xff]
  %v366 = vld [vmem:[%s2 + $0x3c8] sm:$0xff]
  %v367 = vld [vmem:[%s2 + $0x3d0] sm:$0xff]
  %v368 = vld [vmem:[%s2 + $0x3d8] sm:$0xff]
  %v369 = vld [vmem:[%s2 + $0x3e0] sm:$0xff]
  %v370 = vld [vmem:[%s2 + $0x3e8] sm:$0xff]
  %v371 = vld [vmem:[%s2 + $0x3f0] sm:$0xff]
  %v372 = vld [vmem:[%s2 + $0x3f8] sm:$0xff]
  %v373 = vld [vmem:[%s2 + $0x400] sm:$0xff]
  %v374 = vld [vmem:[%s2 + $0x408] sm:$0xff]
  %v375 = vld [vmem:[%s2 + $0x410] sm:$0xff]
  %v376 = vld [vmem:[%s2 + $0x418] sm:$0xff]
  %v377 = vld [vmem:[%s2 + $0x420] sm:$0xff]
  %v378 = vld [vmem:[%s2 + $0x428] sm:$0xff]
  %v379 = vld [vmem:[%s2 + $0x430] sm:$0xff]
  %v380 = vld [vmem:[%s2 + $0x438] sm:$0xff]
  %v381 = vld [vmem:[%s2 + $0x440] sm:$0xff]
  %v382 = vld [vmem:[%s2 + $0x448] sm:$0xff]
  %v383 = vld [vmem:[%s2 + $0x450] sm:$0xff]
  %v384 = vld [vmem:[%s2 + $0x458] sm:$0xff]
  %v385 = vld [vmem:[%s2 + $0x460] sm:$0xff]
  %v386 = vld [vmem:[%s2 + $0x468] sm:$0xff]
  %v387 = vld [vmem:[%s2 + $0x470] sm:$0xff]
  %v388 = vld [vmem:[%s2 + $0x478] sm:$0xff]
  %v389 = vld [vmem:[%s2 + $0x480] sm:$0xff]
  %v390 = vld [vmem:[%s2 + $0x488] sm:$0xff]
  %v391 = vld [vmem:[%s2 + $0x490] sm:$0xff]
  %v392 = vld [vmem:[%s2 + $0x498] sm:$0xff]
  %v393 = vld [vmem:[%s2 + $0x4a0] sm:$0xff]
  %v394 = vld [vmem:[%s2 + $0x4a8] sm:$0xff]
  %v395 = vld [vmem:[%s2 + $0x4b0] sm:$0xff]
  %v396 = vld [vmem:[%s2 + $0x4b8] sm:$0xff]
  %v397 = vld [vmem:[%s2 + $0x4c0] sm:$0xff]
  %v398 = vld [vmem:[%s2 + $0x4c8] sm:$0xff]
  %v399 = vld [vmem:[%s2 + $0x4d0] sm:$0xff]
  %v400 = vld [vmem:[%s2 + $0x4d8] sm:$0xff]
  %v401 = vld [vmem:[%s2 + $0x4e0] sm:$0xff]
  %v402 = vld [vmem:[%s2 + $0x4e8] sm:$0xff]
  %v403 = vld [vmem:[%s2 + $0x4f0] sm:$0xff]
  %v404 = vld [vmem:[%s2 + $0x4f8] sm:$0xff]
  %v405 = vld [vmem:[%s2 + $0x500] sm:$0xff]
  %v406 = vld [vmem:[%s2 + $0x508] sm:$0xff]
  %v407 = vld [vmem:[%s2 + $0x510] sm:$0xff]
  %v408 = vld [vmem:[%s2 + $0x518] sm:$0xff]
  %v409 = vld [vmem:[%s2 + $0x520] sm:$0xff]
  %v410 = vld [vmem:[%s2 + $0x528] sm:$0xff]
  %v411 = vld [vmem:[%s2 + $0x530] sm:$0xff]
  %v412 = vld [vmem:[%s2 + $0x538] sm:$0xff]
  %v413 = vld [vmem:[%s2 + $0x540] sm:$0xff]
  %v414 = vld [vmem:[%s2 + $0x548] sm:$0xff]
  %v415 = vld [vmem:[%s2 + $0x550] sm:$0xff]
  %v416 = vld [vmem:[%s2 + $0x558] sm:$0xff]
  %v417 = vld [vmem:[%s2 + $0x560] sm:$0xff]
  %v418 = vld [vmem:[%s2 + $0x568] sm:$0xff]
  %v419 = vld [vmem:[%s2 + $0x570] sm:$0xff]
  %v420 = vld [vmem:[%s2 + $0x578] sm:$0xff]
  %v421 = vld [vmem:[%s2 + $0x580] sm:$0xff]
  %v422 = vld [vmem:[%s2 + $0x588] sm:$0xff]
  %v423 = vld [vmem:[%s2 + $0x590] sm:$0xff]
  %v424 = vld [vmem:[%s2 + $0x598] sm:$0xff]
  %v425 = vld [vmem:[%s2 + $0x5a0] sm:$0xff]
  %v426 = vld [vmem:[%s2 + $0x5a8] sm:$0xff]
  %v427 = vld [vmem:[%s2 + $0x5b0] sm:$0xff]
  %v428 = vld [vmem:[%s2 + $0x5b8] sm:$0xff]
  %v429 = vld [vmem:[%s2 + $0x5c0] sm:$0xff]
  %v430 = vld [vmem:[%s2 + $0x5c8] sm:$0xff]
  %v431 = vld [vmem:[%s2 + $0x5d0] sm:$0xff]
  %v432 = vld [vmem:[%s2 + $0x5d8] sm:$0xff]
  %v433 = vld [vmem:[%s2 + $0x5e0] sm:$0xff]
  %v434 = vld [vmem:[%s2 + $0x5e8] sm:$0xff]
  %v435 = vld [vmem:[%s2 + $0x5f0] sm:$0xff]
  %v436 = vld [vmem:[%s2 + $0x5f8] sm:$0xff]
  %v437 = vld [vmem:[%s2 + $0x600] sm:$0xff]
  %v438 = vld [vmem:[%s2 + $0x608] sm:$0xff]
  %v439 = vld [vmem:[%s2 + $0x610] sm:$0xff]
  %v440 = vld [vmem:[%s2 + $0x618] sm:$0xff]
  %v441 = vld [vmem:[%s2 + $0x620] sm:$0xff]
  %v442 = vld [vmem:[%s2 + $0x628] sm:$0xff]
  %v443 = vld [vmem:[%s2 + $0x630] sm:$0xff]
  %v444 = vld [vmem:[%s2 + $0x638] sm:$0xff]
  %v445 = vld [vmem:[%s2 + $0x640] sm:$0xff]
  %v446 = vld [vmem:[%s2 + $0x648] sm:$0xff]
  %v447 = vld [vmem:[%s2 + $0x650] sm:$0xff]
  %v448 = vld [vmem:[%s2 + $0x658] sm:$0xff]
  %v653 = vunpack.c.l.b16 %v27
  %v654 = vunpack.c.l.b16 %v28
  %v655 = vunpack.c.l.b16 %v29
  %v656 = vunpack.c.l.b16 %v30
  %v657 = vunpack.c.l.b16 %v31
  %v658 = vunpack.c.l.b16 %v32
  %v659 = vunpack.c.l.b16 %v33
  %v660 = vunpack.c.l.b16 %v34
  %v661 = vunpack.c.l.b16 %v35
  %v662 = vunpack.c.l.b16 %v36
  %v663 = vunpack.c.l.b16 %v37
  %v664 = vunpack.c.l.b16 %v38
  %v665 = vunpack.c.l.b16 %v39
  %v666 = vunpack.c.l.b16 %v40
  %v667 = vunpack.c.l.b16 %v41
  %v668 = vunpack.c.l.b16 %v42
  %v669 = vunpack.c.l.b16 %v43
  %v670 = vunpack.c.l.b16 %v44
  %v671 = vunpack.c.l.b16 %v45
  %v672 = vunpack.c.l.b16 %v46
  %v673 = vunpack.c.l.b16 %v47
  %v674 = vunpack.c.l.b16 %v48
  %v675 = vunpack.c.l.b16 %v49
  %v676 = vunpack.c.l.b16 %v50
  %v677 = vunpack.c.l.b16 %v51
  %v678 = vunpack.c.l.b16 %v52
  %v679 = vunpack.c.l.b16 %v53
  %v680 = vunpack.c.l.b16 %v54
  %v681 = vunpack.c.l.b16 %v55
  %v682 = vunpack.c.l.b16 %v56
  %v683 = vunpack.c.l.b16 %v57
  %v684 = vunpack.c.l.b16 %v58
  %v685 = vunpack.c.l.b16 %v59
  %v686 = vunpack.c.l.b16 %v60
  %v687 = vunpack.c.l.b16 %v61
  %v688 = vunpack.c.l.b16 %v62
  %v689 = vunpack.c.l.b16 %v63
  %v690 = vunpack.c.l.b16 %v64
  %v691 = vunpack.c.l.b16 %v65
  %v692 = vunpack.c.l.b16 %v66
  %v693 = vunpack.c.l.b16 %v67
  %v694 = vunpack.c.l.b16 %v68
  %v695 = vunpack.c.l.b16 %v69
  %v696 = vunpack.c.l.b16 %v70
  %v697 = vunpack.c.l.b16 %v71
  %v698 = vunpack.c.l.b16 %v72
  %v699 = vunpack.c.l.b16 %v73
  %v700 = vunpack.c.l.b16 %v74
  %v701 = vunpack.c.l.b16 %v75
  %v702 = vunpack.c.l.b16 %v76
  %v703 = vunpack.c.l.b16 %v77
  %v704 = vunpack.c.l.b16 %v78
  %v705 = vunpack.c.l.b16 %v79
  %v706 = vunpack.c.l.b16 %v80
  %v707 = vunpack.c.l.b16 %v81
  %v708 = vunpack.c.l.b16 %v82
  %v709 = vunpack.c.l.b16 %v83
  %v710 = vunpack.c.l.b16 %v84
  %v711 = vunpack.c.l.b16 %v85
  %v712 = vunpack.c.l.b16 %v86
  %v713 = vunpack.c.l.b16 %v87
  %v714 = vunpack.c.l.b16 %v88
  %v715 = vunpack.c.l.b16 %v89
  %v716 = vunpack.c.l.b16 %v90
  %v717 = vunpack.c.l.b16 %v91
  %v718 = vunpack.c.l.b16 %v92
  %v719 = vunpack.c.l.b16 %v93
  %v720 = vunpack.c.l.b16 %v94
  %v721 = vunpack.c.l.b16 %v95
  %v722 = vunpack.c.l.b16 %v96
  %v723 = vunpack.c.l.b16 %v97
  %v724 = vunpack.c.l.b16 %v98
  %v725 = vunpack.c.l.b16 %v99
  %v726 = vunpack.c.l.b16 %v100
  %v727 = vunpack.c.l.b16 %v101
  %v728 = vunpack.c.l.b16 %v102
  %v729 = vunpack.c.l.b16 %v103
  %v730 = vunpack.c.l.b16 %v104
  %v731 = vunpack.c.l.b16 %v105
  %v732 = vunpack.c.l.b16 %v106
  %v733 = vunpack.c.l.b16 %v107
  %v734 = vunpack.c.l.b16 %v108
  %v735 = vunpack.c.l.b16 %v109
  %v736 = vunpack.c.l.b16 %v110
  %v737 = vunpack.c.l.b16 %v111
  %v738 = vunpack.c.l.b16 %v112
  %v739 = vunpack.c.l.b16 %v113
  %v740 = vunpack.c.l.b16 %v114
  %v741 = vunpack.c.l.b16 %v115
  %v742 = vunpack.c.l.b16 %v116
  %v743 = vunpack.c.l.b16 %v117
  %v744 = vunpack.c.l.b16 %v118
  %v745 = vunpack.c.l.b16 %v119
  %v746 = vunpack.c.l.b16 %v120
  %v747 = vunpack.c.l.b16 %v121
  %v748 = vunpack.c.l.b16 %v122
  %v749 = vunpack.c.l.b16 %v123
  %v750 = vunpack.c.l.b16 %v124
  %v751 = vunpack.c.l.b16 %v125
  %v752 = vunpack.c.l.b16 %v126
  %v753 = vunpack.c.l.b16 %v127
  %v754 = vunpack.c.l.b16 %v128
  %v755 = vunpack.c.l.b16 %v129
  %v756 = vunpack.c.l.b16 %v130
  %v757 = vunpack.c.l.b16 %v131
  %v758 = vunpack.c.l.b16 %v132
  %v759 = vunpack.c.l.b16 %v133
  %v760 = vunpack.c.l.b16 %v134
  %v761 = vunpack.c.l.b16 %v135
  %v762 = vunpack.c.l.b16 %v136
  %v763 = vunpack.c.l.b16 %v137
  %v764 = vunpack.c.l.b16 %v138
  %v765 = vunpack.c.l.b16 %v139
  %v766 = vunpack.c.l.b16 %v140
  %v767 = vunpack.c.l.b16 %v141
  %v768 = vunpack.c.l.b16 %v142
  %v769 = vunpack.c.l.b16 %v143
  %v770 = vunpack.c.l.b16 %v144
  %v771 = vunpack.c.l.b16 %v145
  %v772 = vunpack.c.l.b16 %v146
  %v773 = vunpack.c.l.b16 %v147
  %v774 = vunpack.c.l.b16 %v148
  %v775 = vunpack.c.l.b16 %v149
  %v776 = vunpack.c.l.b16 %v150
  %v777 = vunpack.c.l.b16 %v151
  %v778 = vunpack.c.l.b16 %v152
  %v779 = vunpack.c.l.b16 %v153
  %v780 = vunpack.c.l.b16 %v154
  %v781 = vunpack.c.l.b16 %v155
  %v782 = vunpack.c.l.b16 %v156
  %v783 = vunpack.c.l.b16 %v157
  %v784 = vunpack.c.l.b16 %v158
  %v785 = vunpack.c.l.b16 %v159
  %v786 = vunpack.c.l.b16 %v160
  %v787 = vunpack.c.l.b16 %v161
  %v788 = vunpack.c.l.b16 %v162
  %v789 = vunpack.c.l.b16 %v163
  %v790 = vunpack.c.l.b16 %v164
  %v791 = vunpack.c.l.b16 %v165
  %v792 = vunpack.c.l.b16 %v166
  %v793 = vunpack.c.l.b16 %v167
  %v794 = vunpack.c.l.b16 %v168
  %v795 = vunpack.c.l.b16 %v169
  %v796 = vunpack.c.l.b16 %v170
  %v797 = vunpack.c.l.b16 %v171
  %v798 = vunpack.c.l.b16 %v172
  %v799 = vunpack.c.l.b16 %v173
  %v800 = vunpack.c.l.b16 %v174
  %v801 = vunpack.c.l.b16 %v175
  %v802 = vunpack.c.l.b16 %v176
  %v803 = vunpack.c.l.b16 %v177
  %v804 = vunpack.c.l.b16 %v178
  %v805 = vunpack.c.l.b16 %v179
  %v806 = vunpack.c.l.b16 %v180
  %v807 = vunpack.c.l.b16 %v181
  %v808 = vunpack.c.l.b16 %v182
  %v809 = vunpack.c.l.b16 %v183
  %v810 = vunpack.c.l.b16 %v184
  %v811 = vunpack.c.l.b16 %v185
  %v812 = vunpack.c.l.b16 %v186
  %v813 = vunpack.c.l.b16 %v187
  %v814 = vunpack.c.l.b16 %v188
  %v815 = vunpack.c.l.b16 %v189
  %v816 = vunpack.c.l.b16 %v190
  %v817 = vunpack.c.l.b16 %v191
  %v818 = vunpack.c.l.b16 %v192
  %v819 = vunpack.c.l.b16 %v193
  %v820 = vunpack.c.l.b16 %v194
  %v821 = vunpack.c.l.b16 %v195
  %v822 = vunpack.c.l.b16 %v196
  %v823 = vunpack.c.l.b16 %v197
  %v824 = vunpack.c.l.b16 %v198
  %v825 = vunpack.c.l.b16 %v199
  %v826 = vunpack.c.l.b16 %v200
  %v827 = vunpack.c.l.b16 %v201
  %v828 = vunpack.c.l.b16 %v202
  %v829 = vunpack.c.l.b16 %v203
  %v830 = vunpack.c.l.b16 %v204
  %v831 = vunpack.c.l.b16 %v205
  %v832 = vunpack.c.l.b16 %v206
  %v833 = vunpack.c.l.b16 %v207
  %v834 = vunpack.c.l.b16 %v208
  %v835 = vunpack.c.l.b16 %v209
  %v836 = vunpack.c.l.b16 %v210
  %v837 = vunpack.c.l.b16 %v211
  %v838 = vunpack.c.l.b16 %v212
  %v839 = vunpack.c.l.b16 %v213
  %v840 = vunpack.c.l.b16 %v214
  %v841 = vunpack.c.l.b16 %v215
  %v842 = vunpack.c.l.b16 %v216
  %v843 = vunpack.c.l.b16 %v217
  %v844 = vunpack.c.l.b16 %v218
  %v845 = vunpack.c.l.b16 %v219
  %v846 = vunpack.c.l.b16 %v220
  %v847 = vunpack.c.l.b16 %v221
  %v848 = vunpack.c.l.b16 %v222
  %v849 = vunpack.c.l.b16 %v223
  %v850 = vunpack.c.l.b16 %v224
  %v851 = vunpack.c.l.b16 %v225
  %v852 = vunpack.c.l.b16 %v226
  %v853 = vunpack.c.l.b16 %v227
  %v854 = vunpack.c.l.b16 %v228
  %v855 = vunpack.c.l.b16 %v229
  %v856 = vunpack.c.l.b16 %v230
  %v857 = vpack.c.b16 %v654, %v653
  %v858 = vpack.c.b16 %v656, %v655
  %v859 = vpack.c.b16 %v658, %v657
  %v860 = vpack.c.b16 %v660, %v659
  %v861 = vpack.c.b16 %v662, %v661
  %v862 = vpack.c.b16 %v664, %v663
  %v863 = vpack.c.b16 %v666, %v665
  %v864 = vpack.c.b16 %v668, %v667
  %v865 = vpack.c.b16 %v670, %v669
  %v866 = vpack.c.b16 %v672, %v671
  %v867 = vpack.c.b16 %v674, %v673
  %v868 = vpack.c.b16 %v676, %v675
  %v869 = vpack.c.b16 %v678, %v677
  %v870 = vpack.c.b16 %v680, %v679
  %v871 = vpack.c.b16 %v682, %v681
  %v872 = vpack.c.b16 %v684, %v683
  %v873 = vpack.c.b16 %v686, %v685
  %v874 = vpack.c.b16 %v688, %v687
  %v875 = vpack.c.b16 %v690, %v689
  %v876 = vpack.c.b16 %v692, %v691
  %v877 = vpack.c.b16 %v694, %v693
  %v878 = vpack.c.b16 %v696, %v695
  %v879 = vpack.c.b16 %v698, %v697
  %v880 = vpack.c.b16 %v700, %v699
  %v881 = vpack.c.b16 %v702, %v701
  %v882 = vpack.c.b16 %v704, %v703
  %v883 = vpack.c.b16 %v706, %v705
  %v884 = vpack.c.b16 %v708, %v707
  %v885 = vpack.c.b16 %v710, %v709
  %v886 = vpack.c.b16 %v712, %v711
  %v887 = vpack.c.b16 %v714, %v713
  %v888 = vpack.c.b16 %v716, %v715
  %v889 = vpack.c.b16 %v718, %v717
  %v890 = vpack.c.b16 %v720, %v719
  %v891 = vpack.c.b16 %v722, %v721
  %v892 = vpack.c.b16 %v724, %v723
  %v893 = vpack.c.b16 %v726, %v725
  %v894 = vpack.c.b16 %v728, %v727
  %v895 = vpack.c.b16 %v730, %v729
  %v896 = vpack.c.b16 %v732, %v731
  %v897 = vpack.c.b16 %v734, %v733
  %v898 = vpack.c.b16 %v736, %v735
  %v899 = vpack.c.b16 %v738, %v737
  %v900 = vpack.c.b16 %v740, %v739
  %v901 = vpack.c.b16 %v742, %v741
  %v902 = vpack.c.b16 %v744, %v743
  %v903 = vpack.c.b16 %v746, %v745
  %v904 = vpack.c.b16 %v748, %v747
  %v905 = vpack.c.b16 %v750, %v749
  %v906 = vpack.c.b16 %v752, %v751
  %v907 = vpack.c.b16 %v754, %v753
  %v908 = vpack.c.b16 %v756, %v755
  %v909 = vpack.c.b16 %v758, %v757
  %v910 = vpack.c.b16 %v760, %v759
  %v911 = vpack.c.b16 %v762, %v761
  %v912 = vpack.c.b16 %v764, %v763
  %v913 = vpack.c.b16 %v766, %v765
  %v914 = vpack.c.b16 %v768, %v767
  %v915 = vpack.c.b16 %v770, %v769
  %v916 = vpack.c.b16 %v772, %v771
  %v917 = vpack.c.b16 %v774, %v773
  %v918 = vpack.c.b16 %v776, %v775
  %v919 = vpack.c.b16 %v778, %v777
  %v920 = vpack.c.b16 %v780, %v779
  %v921 = vpack.c.b16 %v782, %v781
  %v922 = vpack.c.b16 %v784, %v783
  %v923 = vpack.c.b16 %v786, %v785
  %v924 = vpack.c.b16 %v788, %v787
  %v925 = vpack.c.b16 %v790, %v789
  %v926 = vpack.c.b16 %v792, %v791
  %v927 = vpack.c.b16 %v794, %v793
  %v928 = vpack.c.b16 %v796, %v795
  %v929 = vpack.c.b16 %v798, %v797
  %v930 = vpack.c.b16 %v800, %v799
  %v931 = vpack.c.b16 %v802, %v801
  %v932 = vpack.c.b16 %v804, %v803
  %v933 = vpack.c.b16 %v806, %v805
  %v934 = vpack.c.b16 %v808, %v807
  %v935 = vpack.c.b16 %v810, %v809
  %v936 = vpack.c.b16 %v812, %v811
  %v937 = vpack.c.b16 %v814, %v813
  %v938 = vpack.c.b16 %v816, %v815
  %v939 = vpack.c.b16 %v818, %v817
  %v940 = vpack.c.b16 %v820, %v819
  %v941 = vpack.c.b16 %v822, %v821
  %v942 = vpack.c.b16 %v824, %v823
  %v943 = vpack.c.b16 %v826, %v825
  %v944 = vpack.c.b16 %v828, %v827
  %v945 = vpack.c.b16 %v830, %v829
  %v946 = vpack.c.b16 %v832, %v831
  %v947 = vpack.c.b16 %v834, %v833
  %v948 = vpack.c.b16 %v836, %v835
  %v949 = vpack.c.b16 %v838, %v837
  %v950 = vpack.c.b16 %v840, %v839
  %v951 = vpack.c.b16 %v842, %v841
  %v952 = vpack.c.b16 %v844, %v843
  %v953 = vpack.c.b16 %v846, %v845
  %v954 = vpack.c.b16 %v848, %v847
  %v955 = vpack.c.b16 %v850, %v849
  %v956 = vpack.c.b16 %v852, %v851
  %v957 = vpack.c.b16 %v854, %v853
  %v958 = vpack.c.b16 %v856, %v855
  %vm959 = vcmask 556032
  %v961 = vsel %vm959, %v857, 0
  %v964 = vsel %vm959, %v858, 0
  %v967 = vsel %vm959, %v859, 0
  %v970 = vsel %vm959, %v860, 0
  %v973 = vsel %vm959, %v861, 0
  %v976 = vsel %vm959, %v862, 0
  %v979 = vsel %vm959, %v863, 0
  %v982 = vsel %vm959, %v864, 0
  %v985 = vsel %vm959, %v865, 0
  %v988 = vsel %vm959, %v866, 0
  %v991 = vsel %vm959, %v867, 0
  %v994 = vsel %vm959, %v868, 0
  %v997 = vsel %vm959, %v869, 0
  %v1000 = vsel %vm959, %v870, 0
  %v1003 = vsel %vm959, %v871, 0
  %v1006 = vsel %vm959, %v872, 0
  %v1009 = vsel %vm959, %v873, 0
  %v1012 = vsel %vm959, %v874, 0
  %v1015 = vsel %vm959, %v875, 0
  %v1018 = vsel %vm959, %v876, 0
  %v1021 = vsel %vm959, %v877, 0
  %v1024 = vsel %vm959, %v878, 0
  %v1027 = vsel %vm959, %v879, 0
  %v1030 = vsel %vm959, %v880, 0
  %v1033 = vsel %vm959, %v881, 0
  %v1036 = vsel %vm959, %v882, 0
  %v1039 = vsel %vm959, %v883, 0
  %v1042 = vsel %vm959, %v884, 0
  %v1045 = vsel %vm959, %v885, 0
  %v1048 = vsel %vm959, %v886, 0
  %v1051 = vsel %vm959, %v887, 0
  %v1054 = vsel %vm959, %v888, 0
  %v1057 = vsel %vm959, %v889, 0
  %v1060 = vsel %vm959, %v890, 0
  %v1063 = vsel %vm959, %v891, 0
  %v1066 = vsel %vm959, %v892, 0
  %v1069 = vsel %vm959, %v893, 0
  %v1072 = vsel %vm959, %v894, 0
  %v1075 = vsel %vm959, %v895, 0
  %v1078 = vsel %vm959, %v896, 0
  %v1081 = vsel %vm959, %v897, 0
  %v1084 = vsel %vm959, %v898, 0
  %v1087 = vsel %vm959, %v899, 0
  %v1090 = vsel %vm959, %v900, 0
  %v1093 = vsel %vm959, %v901, 0
  %v1096 = vsel %vm959, %v902, 0
  %v1099 = vsel %vm959, %v903, 0
  %v1102 = vsel %vm959, %v904, 0
  %v1105 = vsel %vm959, %v905, 0
  %v1108 = vsel %vm959, %v906, 0
  %v1111 = vsel %vm959, %v907, 0
  %v1114 = vsel %vm959, %v908, 0
  %v1117 = vsel %vm959, %v909, 0
  %v1120 = vsel %vm959, %v910, 0
  %v1123 = vsel %vm959, %v911, 0
  %v1126 = vsel %vm959, %v912, 0
  %v1129 = vsel %vm959, %v913, 0
  %v1132 = vsel %vm959, %v914, 0
  %v1135 = vsel %vm959, %v915, 0
  %v1138 = vsel %vm959, %v916, 0
  %v1141 = vsel %vm959, %v917, 0
  %v1144 = vsel %vm959, %v918, 0
  %v1147 = vsel %vm959, %v919, 0
  %v1150 = vsel %vm959, %v920, 0
  %v1153 = vsel %vm959, %v921, 0
  %v1156 = vsel %vm959, %v922, 0
  %v1159 = vsel %vm959, %v923, 0
  %v1162 = vsel %vm959, %v924, 0
  %v1165 = vsel %vm959, %v925, 0
  %v1168 = vsel %vm959, %v926, 0
  %v1171 = vsel %vm959, %v927, 0
  %v1174 = vsel %vm959, %v928, 0
  %v1177 = vsel %vm959, %v929, 0
  %v1180 = vsel %vm959, %v930, 0
  %v1183 = vsel %vm959, %v931, 0
  %v1186 = vsel %vm959, %v932, 0
  %v1189 = vsel %vm959, %v933, 0
  %v1192 = vsel %vm959, %v934, 0
  %v1195 = vsel %vm959, %v935, 0
  %v1198 = vsel %vm959, %v936, 0
  %v1201 = vsel %vm959, %v937, 0
  %v1204 = vsel %vm959, %v938, 0
  %v1207 = vsel %vm959, %v939, 0
  %v1210 = vsel %vm959, %v940, 0
  %v1213 = vsel %vm959, %v941, 0
  %v1216 = vsel %vm959, %v942, 0
  %v1219 = vsel %vm959, %v943, 0
  %v1222 = vsel %vm959, %v944, 0
  %v1225 = vsel %vm959, %v945, 0
  %v1228 = vsel %vm959, %v946, 0
  %v1231 = vsel %vm959, %v947, 0
  %v1234 = vsel %vm959, %v948, 0
  %v1237 = vsel %vm959, %v949, 0
  %v1240 = vsel %vm959, %v950, 0
  %v1243 = vsel %vm959, %v951, 0
  %v1246 = vsel %vm959, %v952, 0
  %v1249 = vsel %vm959, %v953, 0
  %v1252 = vsel %vm959, %v954, 0
  %v1255 = vsel %vm959, %v955, 0
  %v1258 = vsel %vm959, %v956, 0
  %v1261 = vsel %vm959, %v957, 0
  %v1264 = vsel %vm959, %v958, 0
  %vm1266 = vcmask 1041408
  %v1268 = vsel %vm1266, %v244, 0
  %1270 = vmatpush.bf16.msra.mxu0 0
  %1271 = vmatpush.bf16.msra.mxu0 0
  %1272 = vmatpush.bf16.msra.mxu0 0
  %1273 = vmatpush.bf16.msra.mxu0 %v1268
  %1274 = vmatpush.bf16.msra.mxu0 %v243
  %1275 = vmatpush.bf16.msra.mxu0 %v242
  %1276 = vmatpush.bf16.msra.mxu0 %v241
  %1277 = vmatpush.bf16.msra.mxu0 %v240
  %1278 = vmatmul.bf16.gmra.mxu0 %v961
  %v1279 = vpop.f32.mrf.mxu0
  %v1280 = vadd.f32 %v245, %v1279
  %v1281 = vpop.f32.mrf.mxu0
  %v1282 = vadd.f32 %v246, %v1281
  %1283 = vmatmul.bf16.gmra.mxu0 %v964
  %v1284 = vpop.f32.mrf.mxu0
  %v1285 = vadd.f32 %v247, %v1284
  %v1286 = vpop.f32.mrf.mxu0
  %v1287 = vadd.f32 %v248, %v1286
  %1288 = vmatmul.bf16.gmra.mxu0 %v967
  %v1289 = vpop.f32.mrf.mxu0
  %v1290 = vadd.f32 %v249, %v1289
  %v1291 = vpop.f32.mrf.mxu0
  %v1292 = vadd.f32 %v250, %v1291
  %1293 = vmatmul.bf16.gmra.mxu0 %v970
  %v1294 = vpop.f32.mrf.mxu0
  %v1295 = vadd.f32 %v251, %v1294
  %v1296 = vpop.f32.mrf.mxu0
  %v1297 = vadd.f32 %v252, %v1296
  %1298 = vmatmul.bf16.gmra.mxu0 %v973
  %v1299 = vpop.f32.mrf.mxu0
  %v1300 = vadd.f32 %v253, %v1299
  %v1301 = vpop.f32.mrf.mxu0
  %v1302 = vadd.f32 %v254, %v1301
  %1303 = vmatmul.bf16.gmra.mxu0 %v976
  %v1304 = vpop.f32.mrf.mxu0
  %v1305 = vadd.f32 %v255, %v1304
  %v1306 = vpop.f32.mrf.mxu0
  %v1307 = vadd.f32 %v256, %v1306
  %1308 = vmatmul.bf16.gmra.mxu0 %v979
  %v1309 = vpop.f32.mrf.mxu0
  %v1310 = vadd.f32 %v257, %v1309
  %v1311 = vpop.f32.mrf.mxu0
  %v1312 = vadd.f32 %v258, %v1311
  %1313 = vmatmul.bf16.gmra.mxu0 %v982
  %v1314 = vpop.f32.mrf.mxu0
  %v1315 = vadd.f32 %v259, %v1314
  %v1316 = vpop.f32.mrf.mxu0
  %v1317 = vadd.f32 %v260, %v1316
  %1318 = vmatmul.bf16.gmra.mxu0 %v985
  %v1319 = vpop.f32.mrf.mxu0
  %v1320 = vadd.f32 %v261, %v1319
  %v1321 = vpop.f32.mrf.mxu0
  %v1322 = vadd.f32 %v262, %v1321
  %1323 = vmatmul.bf16.gmra.mxu0 %v988
  %v1324 = vpop.f32.mrf.mxu0
  %v1325 = vadd.f32 %v263, %v1324
  %v1326 = vpop.f32.mrf.mxu0
  %v1327 = vadd.f32 %v264, %v1326
  %1328 = vmatmul.bf16.gmra.mxu0 %v991
  %v1329 = vpop.f32.mrf.mxu0
  %v1330 = vadd.f32 %v265, %v1329
  %v1331 = vpop.f32.mrf.mxu0
  %v1332 = vadd.f32 %v266, %v1331
  %1333 = vmatmul.bf16.gmra.mxu0 %v994
  %v1334 = vpop.f32.mrf.mxu0
  %v1335 = vadd.f32 %v267, %v1334
  %v1336 = vpop.f32.mrf.mxu0
  %v1337 = vadd.f32 %v268, %v1336
  %1338 = vmatmul.bf16.gmra.mxu0 %v997
  %v1339 = vpop.f32.mrf.mxu0
  %v1340 = vadd.f32 %v269, %v1339
  %v1341 = vpop.f32.mrf.mxu0
  %v1342 = vadd.f32 %v270, %v1341
  %1343 = vmatmul.bf16.gmra.mxu0 %v1000
  %v1344 = vpop.f32.mrf.mxu0
  %v1345 = vadd.f32 %v271, %v1344
  %v1346 = vpop.f32.mrf.mxu0
  %v1347 = vadd.f32 %v272, %v1346
  %1348 = vmatmul.bf16.gmra.mxu0 %v1003
  %v1349 = vpop.f32.mrf.mxu0
  %v1350 = vadd.f32 %v273, %v1349
  %v1351 = vpop.f32.mrf.mxu0
  %v1352 = vadd.f32 %v274, %v1351
  %1353 = vmatmul.bf16.gmra.mxu0 %v1006
  %v1354 = vpop.f32.mrf.mxu0
  %v1355 = vadd.f32 %v275, %v1354
  %v1356 = vpop.f32.mrf.mxu0
  %v1357 = vadd.f32 %v276, %v1356
  %1358 = vmatmul.bf16.gmra.mxu0 %v1009
  %v1359 = vpop.f32.mrf.mxu0
  %v1360 = vadd.f32 %v277, %v1359
  %v1361 = vpop.f32.mrf.mxu0
  %v1362 = vadd.f32 %v278, %v1361
  %1363 = vmatmul.bf16.gmra.mxu0 %v1012
  %v1364 = vpop.f32.mrf.mxu0
  %v1365 = vadd.f32 %v279, %v1364
  %v1366 = vpop.f32.mrf.mxu0
  %v1367 = vadd.f32 %v280, %v1366
  %1368 = vmatmul.bf16.gmra.mxu0 %v1015
  %v1369 = vpop.f32.mrf.mxu0
  %v1370 = vadd.f32 %v281, %v1369
  %v1371 = vpop.f32.mrf.mxu0
  %v1372 = vadd.f32 %v282, %v1371
  %1373 = vmatmul.bf16.gmra.mxu0 %v1018
  %v1374 = vpop.f32.mrf.mxu0
  %v1375 = vadd.f32 %v283, %v1374
  %v1376 = vpop.f32.mrf.mxu0
  %v1377 = vadd.f32 %v284, %v1376
  %1378 = vmatmul.bf16.gmra.mxu0 %v1021
  %v1379 = vpop.f32.mrf.mxu0
  %v1380 = vadd.f32 %v285, %v1379
  %v1381 = vpop.f32.mrf.mxu0
  %v1382 = vadd.f32 %v286, %v1381
  %1383 = vmatmul.bf16.gmra.mxu0 %v1024
  %v1384 = vpop.f32.mrf.mxu0
  %v1385 = vadd.f32 %v287, %v1384
  %v1386 = vpop.f32.mrf.mxu0
  %v1387 = vadd.f32 %v288, %v1386
  %1388 = vmatmul.bf16.gmra.mxu0 %v1027
  %v1389 = vpop.f32.mrf.mxu0
  %v1390 = vadd.f32 %v289, %v1389
  %v1391 = vpop.f32.mrf.mxu0
  %v1392 = vadd.f32 %v290, %v1391
  %1393 = vmatmul.bf16.gmra.mxu0 %v1030
  %v1394 = vpop.f32.mrf.mxu0
  %v1395 = vadd.f32 %v291, %v1394
  %v1396 = vpop.f32.mrf.mxu0
  %v1397 = vadd.f32 %v292, %v1396
  %1398 = vmatmul.bf16.gmra.mxu0 %v1033
  %v1399 = vpop.f32.mrf.mxu0
  %v1400 = vadd.f32 %v293, %v1399
  %v1401 = vpop.f32.mrf.mxu0
  %v1402 = vadd.f32 %v294, %v1401
  %1403 = vmatmul.bf16.gmra.mxu0 %v1036
  %v1404 = vpop.f32.mrf.mxu0
  %v1405 = vadd.f32 %v295, %v1404
  %v1406 = vpop.f32.mrf.mxu0
  %v1407 = vadd.f32 %v296, %v1406
  %1408 = vmatmul.bf16.gmra.mxu0 %v1039
  %v1409 = vpop.f32.mrf.mxu0
  %v1410 = vadd.f32 %v297, %v1409
  %v1411 = vpop.f32.mrf.mxu0
  %v1412 = vadd.f32 %v298, %v1411
  %1413 = vmatmul.bf16.gmra.mxu0 %v1042
  %v1414 = vpop.f32.mrf.mxu0
  %v1415 = vadd.f32 %v299, %v1414
  %v1416 = vpop.f32.mrf.mxu0
  %v1417 = vadd.f32 %v300, %v1416
  %1418 = vmatmul.bf16.gmra.mxu0 %v1045
  %v1419 = vpop.f32.mrf.mxu0
  %v1420 = vadd.f32 %v301, %v1419
  %v1421 = vpop.f32.mrf.mxu0
  %v1422 = vadd.f32 %v302, %v1421
  %1423 = vmatmul.bf16.gmra.mxu0 %v1048
  %v1424 = vpop.f32.mrf.mxu0
  %v1425 = vadd.f32 %v303, %v1424
  %v1426 = vpop.f32.mrf.mxu0
  %v1427 = vadd.f32 %v304, %v1426
  %1428 = vmatmul.bf16.gmra.mxu0 %v1051
  %v1429 = vpop.f32.mrf.mxu0
  %v1430 = vadd.f32 %v305, %v1429
  %v1431 = vpop.f32.mrf.mxu0
  %v1432 = vadd.f32 %v306, %v1431
  %1433 = vmatmul.bf16.gmra.mxu0 %v1054
  %v1434 = vpop.f32.mrf.mxu0
  %v1435 = vadd.f32 %v307, %v1434
  %v1436 = vpop.f32.mrf.mxu0
  %v1437 = vadd.f32 %v308, %v1436
  %1438 = vmatmul.bf16.gmra.mxu0 %v1057
  %v1439 = vpop.f32.mrf.mxu0
  %v1440 = vadd.f32 %v309, %v1439
  %v1441 = vpop.f32.mrf.mxu0
  %v1442 = vadd.f32 %v310, %v1441
  %1443 = vmatmul.bf16.gmra.mxu0 %v1060
  %v1444 = vpop.f32.mrf.mxu0
  %v1445 = vadd.f32 %v311, %v1444
  %v1446 = vpop.f32.mrf.mxu0
  %v1447 = vadd.f32 %v312, %v1446
  %1448 = vmatmul.bf16.gmra.mxu0 %v1063
  %v1449 = vpop.f32.mrf.mxu0
  %v1450 = vadd.f32 %v313, %v1449
  %v1451 = vpop.f32.mrf.mxu0
  %v1452 = vadd.f32 %v314, %v1451
  %1453 = vmatmul.bf16.gmra.mxu0 %v1066
  %v1454 = vpop.f32.mrf.mxu0
  %v1455 = vadd.f32 %v315, %v1454
  %v1456 = vpop.f32.mrf.mxu0
  %v1457 = vadd.f32 %v316, %v1456
  %1458 = vmatmul.bf16.gmra.mxu0 %v1069
  %v1459 = vpop.f32.mrf.mxu0
  %v1460 = vadd.f32 %v317, %v1459
  %v1461 = vpop.f32.mrf.mxu0
  %v1462 = vadd.f32 %v318, %v1461
  %1463 = vmatmul.bf16.gmra.mxu0 %v1072
  %v1464 = vpop.f32.mrf.mxu0
  %v1465 = vadd.f32 %v319, %v1464
  %v1466 = vpop.f32.mrf.mxu0
  %v1467 = vadd.f32 %v320, %v1466
  %1468 = vmatmul.bf16.gmra.mxu0 %v1075
  %v1469 = vpop.f32.mrf.mxu0
  %v1470 = vadd.f32 %v321, %v1469
  %v1471 = vpop.f32.mrf.mxu0
  %v1472 = vadd.f32 %v322, %v1471
  %1473 = vmatmul.bf16.gmra.mxu0 %v1078
  %v1474 = vpop.f32.mrf.mxu0
  %v1475 = vadd.f32 %v323, %v1474
  %v1476 = vpop.f32.mrf.mxu0
  %v1477 = vadd.f32 %v324, %v1476
  %1478 = vmatmul.bf16.gmra.mxu0 %v1081
  %v1479 = vpop.f32.mrf.mxu0
  %v1480 = vadd.f32 %v325, %v1479
  %v1481 = vpop.f32.mrf.mxu0
  %v1482 = vadd.f32 %v326, %v1481
  %1483 = vmatmul.bf16.gmra.mxu0 %v1084
  %v1484 = vpop.f32.mrf.mxu0
  %v1485 = vadd.f32 %v327, %v1484
  %v1486 = vpop.f32.mrf.mxu0
  %v1487 = vadd.f32 %v328, %v1486
  %1488 = vmatmul.bf16.gmra.mxu0 %v1087
  %v1489 = vpop.f32.mrf.mxu0
  %v1490 = vadd.f32 %v329, %v1489
  %v1491 = vpop.f32.mrf.mxu0
  %v1492 = vadd.f32 %v330, %v1491
  %1493 = vmatmul.bf16.gmra.mxu0 %v1090
  %v1494 = vpop.f32.mrf.mxu0
  %v1495 = vadd.f32 %v331, %v1494
  %v1496 = vpop.f32.mrf.mxu0
  %v1497 = vadd.f32 %v332, %v1496
  %1498 = vmatmul.bf16.gmra.mxu0 %v1093
  %v1499 = vpop.f32.mrf.mxu0
  %v1500 = vadd.f32 %v333, %v1499
  %v1501 = vpop.f32.mrf.mxu0
  %v1502 = vadd.f32 %v334, %v1501
  %1503 = vmatmul.bf16.gmra.mxu0 %v1096
  %v1504 = vpop.f32.mrf.mxu0
  %v1505 = vadd.f32 %v335, %v1504
  %v1506 = vpop.f32.mrf.mxu0
  %v1507 = vadd.f32 %v336, %v1506
  %1508 = vmatmul.bf16.gmra.mxu0 %v1099
  %v1509 = vpop.f32.mrf.mxu0
  %v1510 = vadd.f32 %v337, %v1509
  %v1511 = vpop.f32.mrf.mxu0
  %v1512 = vadd.f32 %v338, %v1511
  %1513 = vmatmul.bf16.gmra.mxu0 %v1102
  %v1514 = vpop.f32.mrf.mxu0
  %v1515 = vadd.f32 %v339, %v1514
  %v1516 = vpop.f32.mrf.mxu0
  %v1517 = vadd.f32 %v340, %v1516
  %1518 = vmatmul.bf16.gmra.mxu0 %v1105
  %v1519 = vpop.f32.mrf.mxu0
  %v1520 = vadd.f32 %v341, %v1519
  %v1521 = vpop.f32.mrf.mxu0
  %v1522 = vadd.f32 %v342, %v1521
  %1523 = vmatmul.bf16.gmra.mxu0 %v1108
  %v1524 = vpop.f32.mrf.mxu0
  %v1525 = vadd.f32 %v343, %v1524
  %v1526 = vpop.f32.mrf.mxu0
  %v1527 = vadd.f32 %v344, %v1526
  %1528 = vmatmul.bf16.gmra.mxu0 %v1111
  %v1529 = vpop.f32.mrf.mxu0
  %v1530 = vadd.f32 %v345, %v1529
  %v1531 = vpop.f32.mrf.mxu0
  %v1532 = vadd.f32 %v346, %v1531
  %1533 = vmatmul.bf16.gmra.mxu0 %v1114
  %v1534 = vpop.f32.mrf.mxu0
  %v1535 = vadd.f32 %v347, %v1534
  %v1536 = vpop.f32.mrf.mxu0
  %v1537 = vadd.f32 %v348, %v1536
  %1538 = vmatmul.bf16.gmra.mxu0 %v1117
  %v1539 = vpop.f32.mrf.mxu0
  %v1540 = vadd.f32 %v349, %v1539
  %v1541 = vpop.f32.mrf.mxu0
  %v1542 = vadd.f32 %v350, %v1541
  %1543 = vmatmul.bf16.gmra.mxu0 %v1120
  %v1544 = vpop.f32.mrf.mxu0
  %v1545 = vadd.f32 %v351, %v1544
  %v1546 = vpop.f32.mrf.mxu0
  %v1547 = vadd.f32 %v352, %v1546
  %1548 = vmatmul.bf16.gmra.mxu0 %v1123
  %v1549 = vpop.f32.mrf.mxu0
  %v1550 = vadd.f32 %v353, %v1549
  %v1551 = vpop.f32.mrf.mxu0
  %v1552 = vadd.f32 %v354, %v1551
  %1553 = vmatmul.bf16.gmra.mxu0 %v1126
  %v1554 = vpop.f32.mrf.mxu0
  %v1555 = vadd.f32 %v355, %v1554
  %v1556 = vpop.f32.mrf.mxu0
  %v1557 = vadd.f32 %v356, %v1556
  %1558 = vmatmul.bf16.gmra.mxu0 %v1129
  %v1559 = vpop.f32.mrf.mxu0
  %v1560 = vadd.f32 %v357, %v1559
  %v1561 = vpop.f32.mrf.mxu0
  %v1562 = vadd.f32 %v358, %v1561
  %1563 = vmatmul.bf16.gmra.mxu0 %v1132
  %v1564 = vpop.f32.mrf.mxu0
  %v1565 = vadd.f32 %v359, %v1564
  %v1566 = vpop.f32.mrf.mxu0
  %v1567 = vadd.f32 %v360, %v1566
  %1568 = vmatmul.bf16.gmra.mxu0 %v1135
  %v1569 = vpop.f32.mrf.mxu0
  %v1570 = vadd.f32 %v361, %v1569
  %v1571 = vpop.f32.mrf.mxu0
  %v1572 = vadd.f32 %v362, %v1571
  %1573 = vmatmul.bf16.gmra.mxu0 %v1138
  %v1574 = vpop.f32.mrf.mxu0
  %v1575 = vadd.f32 %v363, %v1574
  %v1576 = vpop.f32.mrf.mxu0
  %v1577 = vadd.f32 %v364, %v1576
  %1578 = vmatmul.bf16.gmra.mxu0 %v1141
  %v1579 = vpop.f32.mrf.mxu0
  %v1580 = vadd.f32 %v365, %v1579
  %v1581 = vpop.f32.mrf.mxu0
  %v1582 = vadd.f32 %v366, %v1581
  %1583 = vmatmul.bf16.gmra.mxu0 %v1144
  %v1584 = vpop.f32.mrf.mxu0
  %v1585 = vadd.f32 %v367, %v1584
  %v1586 = vpop.f32.mrf.mxu0
  %v1587 = vadd.f32 %v368, %v1586
  %1588 = vmatmul.bf16.gmra.mxu0 %v1147
  %v1589 = vpop.f32.mrf.mxu0
  %v1590 = vadd.f32 %v369, %v1589
  %v1591 = vpop.f32.mrf.mxu0
  %v1592 = vadd.f32 %v370, %v1591
  %1593 = vmatmul.bf16.gmra.mxu0 %v1150
  %v1594 = vpop.f32.mrf.mxu0
  %v1595 = vadd.f32 %v371, %v1594
  %v1596 = vpop.f32.mrf.mxu0
  %v1597 = vadd.f32 %v372, %v1596
  %1598 = vmatmul.bf16.gmra.mxu0 %v1153
  %v1599 = vpop.f32.mrf.mxu0
  %v1600 = vadd.f32 %v373, %v1599
  %v1601 = vpop.f32.mrf.mxu0
  %v1602 = vadd.f32 %v374, %v1601
  %1603 = vmatmul.bf16.gmra.mxu0 %v1156
  %v1604 = vpop.f32.mrf.mxu0
  %v1605 = vadd.f32 %v375, %v1604
  %v1606 = vpop.f32.mrf.mxu0
  %v1607 = vadd.f32 %v376, %v1606
  %1608 = vmatmul.bf16.gmra.mxu0 %v1159
  %v1609 = vpop.f32.mrf.mxu0
  %v1610 = vadd.f32 %v377, %v1609
  %v1611 = vpop.f32.mrf.mxu0
  %v1612 = vadd.f32 %v378, %v1611
  %1613 = vmatmul.bf16.gmra.mxu0 %v1162
  %v1614 = vpop.f32.mrf.mxu0
  %v1615 = vadd.f32 %v379, %v1614
  %v1616 = vpop.f32.mrf.mxu0
  %v1617 = vadd.f32 %v380, %v1616
  %1618 = vmatmul.bf16.gmra.mxu0 %v1165
  %v1619 = vpop.f32.mrf.mxu0
  %v1620 = vadd.f32 %v381, %v1619
  %v1621 = vpop.f32.mrf.mxu0
  %v1622 = vadd.f32 %v382, %v1621
  %1623 = vmatmul.bf16.gmra.mxu0 %v1168
  %v1624 = vpop.f32.mrf.mxu0
  %v1625 = vadd.f32 %v383, %v1624
  %v1626 = vpop.f32.mrf.mxu0
  %v1627 = vadd.f32 %v384, %v1626
  %1628 = vmatmul.bf16.gmra.mxu0 %v1171
  %v1629 = vpop.f32.mrf.mxu0
  %v1630 = vadd.f32 %v385, %v1629
  %v1631 = vpop.f32.mrf.mxu0
  %v1632 = vadd.f32 %v386, %v1631
  %1633 = vmatmul.bf16.gmra.mxu0 %v1174
  %v1634 = vpop.f32.mrf.mxu0
  %v1635 = vadd.f32 %v387, %v1634
  %v1636 = vpop.f32.mrf.mxu0
  %v1637 = vadd.f32 %v388, %v1636
  %1638 = vmatmul.bf16.gmra.mxu0 %v1177
  %v1639 = vpop.f32.mrf.mxu0
  %v1640 = vadd.f32 %v389, %v1639
  %v1641 = vpop.f32.mrf.mxu0
  %v1642 = vadd.f32 %v390, %v1641
  %1643 = vmatmul.bf16.gmra.mxu0 %v1180
  %v1644 = vpop.f32.mrf.mxu0
  %v1645 = vadd.f32 %v391, %v1644
  %v1646 = vpop.f32.mrf.mxu0
  %v1647 = vadd.f32 %v392, %v1646
  %1648 = vmatmul.bf16.gmra.mxu0 %v1183
  %v1649 = vpop.f32.mrf.mxu0
  %v1650 = vadd.f32 %v393, %v1649
  %v1651 = vpop.f32.mrf.mxu0
  %v1652 = vadd.f32 %v394, %v1651
  %1653 = vmatmul.bf16.gmra.mxu0 %v1186
  %v1654 = vpop.f32.mrf.mxu0
  %v1655 = vadd.f32 %v395, %v1654
  %v1656 = vpop.f32.mrf.mxu0
  %v1657 = vadd.f32 %v396, %v1656
  %1658 = vmatmul.bf16.gmra.mxu0 %v1189
  %v1659 = vpop.f32.mrf.mxu0
  %v1660 = vadd.f32 %v397, %v1659
  %v1661 = vpop.f32.mrf.mxu0
  %v1662 = vadd.f32 %v398, %v1661
  %1663 = vmatmul.bf16.gmra.mxu0 %v1192
  %v1664 = vpop.f32.mrf.mxu0
  %v1665 = vadd.f32 %v399, %v1664
  %v1666 = vpop.f32.mrf.mxu0
  %v1667 = vadd.f32 %v400, %v1666
  %1668 = vmatmul.bf16.gmra.mxu0 %v1195
  %v1669 = vpop.f32.mrf.mxu0
  %v1670 = vadd.f32 %v401, %v1669
  %v1671 = vpop.f32.mrf.mxu0
  %v1672 = vadd.f32 %v402, %v1671
  %1673 = vmatmul.bf16.gmra.mxu0 %v1198
  %v1674 = vpop.f32.mrf.mxu0
  %v1675 = vadd.f32 %v403, %v1674
  %v1676 = vpop.f32.mrf.mxu0
  %v1677 = vadd.f32 %v404, %v1676
  %1678 = vmatmul.bf16.gmra.mxu0 %v1201
  %v1679 = vpop.f32.mrf.mxu0
  %v1680 = vadd.f32 %v405, %v1679
  %v1681 = vpop.f32.mrf.mxu0
  %v1682 = vadd.f32 %v406, %v1681
  %1683 = vmatmul.bf16.gmra.mxu0 %v1204
  %v1684 = vpop.f32.mrf.mxu0
  %v1685 = vadd.f32 %v407, %v1684
  %v1686 = vpop.f32.mrf.mxu0
  %v1687 = vadd.f32 %v408, %v1686
  %1688 = vmatmul.bf16.gmra.mxu0 %v1207
  %v1689 = vpop.f32.mrf.mxu0
  %v1690 = vadd.f32 %v409, %v1689
  %v1691 = vpop.f32.mrf.mxu0
  %v1692 = vadd.f32 %v410, %v1691
  %1693 = vmatmul.bf16.gmra.mxu0 %v1210
  %v1694 = vpop.f32.mrf.mxu0
  %v1695 = vadd.f32 %v411, %v1694
  %v1696 = vpop.f32.mrf.mxu0
  %v1697 = vadd.f32 %v412, %v1696
  %1698 = vmatmul.bf16.gmra.mxu0 %v1213
  %v1699 = vpop.f32.mrf.mxu0
  %v1700 = vadd.f32 %v413, %v1699
  %v1701 = vpop.f32.mrf.mxu0
  %v1702 = vadd.f32 %v414, %v1701
  %1703 = vmatmul.bf16.gmra.mxu0 %v1216
  %v1704 = vpop.f32.mrf.mxu0
  %v1705 = vadd.f32 %v415, %v1704
  %v1706 = vpop.f32.mrf.mxu0
  %v1707 = vadd.f32 %v416, %v1706
  %1708 = vmatmul.bf16.gmra.mxu0 %v1219
  %v1709 = vpop.f32.mrf.mxu0
  %v1710 = vadd.f32 %v417, %v1709
  %v1711 = vpop.f32.mrf.mxu0
  %v1712 = vadd.f32 %v418, %v1711
  %1713 = vmatmul.bf16.gmra.mxu0 %v1222
  %v1714 = vpop.f32.mrf.mxu0
  %v1715 = vadd.f32 %v419, %v1714
  %v1716 = vpop.f32.mrf.mxu0
  %v1717 = vadd.f32 %v420, %v1716
  %1718 = vmatmul.bf16.gmra.mxu0 %v1225
  %v1719 = vpop.f32.mrf.mxu0
  %v1720 = vadd.f32 %v421, %v1719
  %v1721 = vpop.f32.mrf.mxu0
  %v1722 = vadd.f32 %v422, %v1721
  %1723 = vmatmul.bf16.gmra.mxu0 %v1228
  %v1724 = vpop.f32.mrf.mxu0
  %v1725 = vadd.f32 %v423, %v1724
  %v1726 = vpop.f32.mrf.mxu0
  %v1727 = vadd.f32 %v424, %v1726
  %1728 = vmatmul.bf16.gmra.mxu0 %v1231
  %v1729 = vpop.f32.mrf.mxu0
  %v1730 = vadd.f32 %v425, %v1729
  %v1731 = vpop.f32.mrf.mxu0
  %v1732 = vadd.f32 %v426, %v1731
  %1733 = vmatmul.bf16.gmra.mxu0 %v1234
  %v1734 = vpop.f32.mrf.mxu0
  %v1735 = vadd.f32 %v427, %v1734
  %v1736 = vpop.f32.mrf.mxu0
  %v1737 = vadd.f32 %v428, %v1736
  %1738 = vmatmul.bf16.gmra.mxu0 %v1237
  %v1739 = vpop.f32.mrf.mxu0
  %v1740 = vadd.f32 %v429, %v1739
  %v1741 = vpop.f32.mrf.mxu0
  %v1742 = vadd.f32 %v430, %v1741
  %1743 = vmatmul.bf16.gmra.mxu0 %v1240
  %v1744 = vpop.f32.mrf.mxu0
  %v1745 = vadd.f32 %v431, %v1744
  %v1746 = vpop.f32.mrf.mxu0
  %v1747 = vadd.f32 %v432, %v1746
  %1748 = vmatmul.bf16.gmra.mxu0 %v1243
  %v1749 = vpop.f32.mrf.mxu0
  %v1750 = vadd.f32 %v433, %v1749
  %v1751 = vpop.f32.mrf.mxu0
  %v1752 = vadd.f32 %v434, %v1751
  %1753 = vmatmul.bf16.gmra.mxu0 %v1246
  %v1754 = vpop.f32.mrf.mxu0
  %v1755 = vadd.f32 %v435, %v1754
  %v1756 = vpop.f32.mrf.mxu0
  %v1757 = vadd.f32 %v436, %v1756
  %1758 = vmatmul.bf16.gmra.mxu0 %v1249
  %v1759 = vpop.f32.mrf.mxu0
  %v1760 = vadd.f32 %v437, %v1759
  %v1761 = vpop.f32.mrf.mxu0
  %v1762 = vadd.f32 %v438, %v1761
  %1763 = vmatmul.bf16.gmra.mxu0 %v1252
  %v1764 = vpop.f32.mrf.mxu0
  %v1765 = vadd.f32 %v439, %v1764
  %v1766 = vpop.f32.mrf.mxu0
  %v1767 = vadd.f32 %v440, %v1766
  %1768 = vmatmul.bf16.gmra.mxu0 %v1255
  %v1769 = vpop.f32.mrf.mxu0
  %v1770 = vadd.f32 %v441, %v1769
  %v1771 = vpop.f32.mrf.mxu0
  %v1772 = vadd.f32 %v442, %v1771
  %1773 = vmatmul.bf16.gmra.mxu0 %v1258
  %v1774 = vpop.f32.mrf.mxu0
  %v1775 = vadd.f32 %v443, %v1774
  %v1776 = vpop.f32.mrf.mxu0
  %v1777 = vadd.f32 %v444, %v1776
  %1778 = vmatmul.bf16.gmra.mxu0 %v1261
  %v1779 = vpop.f32.mrf.mxu0
  %v1780 = vadd.f32 %v445, %v1779
  %v1781 = vpop.f32.mrf.mxu0
  %v1782 = vadd.f32 %v446, %v1781
  %1783 = vmatmul.bf16.gmra.mxu0 %v1264
  %v1784 = vpop.f32.mrf.mxu0
  %v1785 = vadd.f32 %v447, %v1784
  %v1786 = vpop.f32.mrf.mxu0
  %v1787 = vadd.f32 %v448, %v1786
  %1788 = vdwg.mxu0
  %v1789 = vxor.u32 %v1280, 2147483648
  %v1790 = vxor.u32 %v1282, 2147483648
  %v1791 = vxor.u32 %v1285, 2147483648
  %v1792 = vxor.u32 %v1287, 2147483648
  %v1793 = vxor.u32 %v1290, 2147483648
  %v1794 = vxor.u32 %v1292, 2147483648
  %v1795 = vxor.u32 %v1295, 2147483648
  %v1796 = vxor.u32 %v1297, 2147483648
  %v1797 = vxor.u32 %v1300, 2147483648
  %v1798 = vxor.u32 %v1302, 2147483648
  %v1799 = vxor.u32 %v1305, 2147483648
  %v1800 = vxor.u32 %v1307, 2147483648
  %v1801 = vxor.u32 %v1310, 2147483648
  %v1802 = vxor.u32 %v1312, 2147483648
  %v1803 = vxor.u32 %v1315, 2147483648
  %v1804 = vxor.u32 %v1317, 2147483648
  %v1805 = vxor.u32 %v1320, 2147483648
  %v1806 = vxor.u32 %v1322, 2147483648
  %v1807 = vxor.u32 %v1325, 2147483648
  %v1808 = vxor.u32 %v1327, 2147483648
  %v1809 = vxor.u32 %v1330, 2147483648
  %v1810 = vxor.u32 %v1332, 2147483648
  %v1811 = vxor.u32 %v1335, 2147483648
  %v1812 = vxor.u32 %v1337, 2147483648
  %v1813 = vxor.u32 %v1340, 2147483648
  %v1814 = vxor.u32 %v1342, 2147483648
  %v1815 = vxor.u32 %v1345, 2147483648
  %v1816 = vxor.u32 %v1347, 2147483648
  %v1817 = vxor.u32 %v1350, 2147483648
  %v1818 = vxor.u32 %v1352, 2147483648
  %v1819 = vxor.u32 %v1355, 2147483648
  %v1820 = vxor.u32 %v1357, 2147483648
  %v1821 = vxor.u32 %v1360, 2147483648
  %v1822 = vxor.u32 %v1362, 2147483648
  %v1823 = vxor.u32 %v1365, 2147483648
  %v1824 = vxor.u32 %v1367, 2147483648
  %v1825 = vxor.u32 %v1370, 2147483648
  %v1826 = vxor.u32 %v1372, 2147483648
  %v1827 = vxor.u32 %v1375, 2147483648
  %v1828 = vxor.u32 %v1377, 2147483648
  %v1829 = vxor.u32 %v1380, 2147483648
  %v1830 = vxor.u32 %v1382, 2147483648
  %v1831 = vxor.u32 %v1385, 2147483648
  %v1832 = vxor.u32 %v1387, 2147483648
  %v1833 = vxor.u32 %v1390, 2147483648
  %v1834 = vxor.u32 %v1392, 2147483648
  %v1835 = vxor.u32 %v1395, 2147483648
  %v1836 = vxor.u32 %v1397, 2147483648
  %v1837 = vxor.u32 %v1400, 2147483648
  %v1838 = vxor.u32 %v1402, 2147483648
  %v1839 = vxor.u32 %v1405, 2147483648
  %v1840 = vxor.u32 %v1407, 2147483648
  %v1841 = vxor.u32 %v1410, 2147483648
  %v1842 = vxor.u32 %v1412, 2147483648
  %v1843 = vxor.u32 %v1415, 2147483648
  %v1844 = vxor.u32 %v1417, 2147483648
  %v1845 = vxor.u32 %v1420, 2147483648
  %v1846 = vxor.u32 %v1422, 2147483648
  %v1847 = vxor.u32 %v1425, 2147483648
  %v1848 = vxor.u32 %v1427, 2147483648
  %v1849 = vxor.u32 %v1430, 2147483648
  %v1850 = vxor.u32 %v1432, 2147483648
  %v1851 = vxor.u32 %v1435, 2147483648
  %v1852 = vxor.u32 %v1437, 2147483648
  %v1853 = vxor.u32 %v1440, 2147483648
  %v1854 = vxor.u32 %v1442, 2147483648
  %v1855 = vxor.u32 %v1445, 2147483648
  %v1856 = vxor.u32 %v1447, 2147483648
  %v1857 = vxor.u32 %v1450, 2147483648
  %v1858 = vxor.u32 %v1452, 2147483648
  %v1859 = vxor.u32 %v1455, 2147483648
  %v1860 = vxor.u32 %v1457, 2147483648
  %v1861 = vxor.u32 %v1460, 2147483648
  %v1862 = vxor.u32 %v1462, 2147483648
  %v1863 = vxor.u32 %v1465, 2147483648
  %v1864 = vxor.u32 %v1467, 2147483648
  %v1865 = vxor.u32 %v1470, 2147483648
  %v1866 = vxor.u32 %v1472, 2147483648
  %v1867 = vxor.u32 %v1475, 2147483648
  %v1868 = vxor.u32 %v1477, 2147483648
  %v1869 = vxor.u32 %v1480, 2147483648
  %v1870 = vxor.u32 %v1482, 2147483648
  %v1871 = vxor.u32 %v1485, 2147483648
  %v1872 = vxor.u32 %v1487, 2147483648
  %v1873 = vxor.u32 %v1490, 2147483648
  %v1874 = vxor.u32 %v1492, 2147483648
  %v1875 = vxor.u32 %v1495, 2147483648
  %v1876 = vxor.u32 %v1497, 2147483648
  %v1877 = vxor.u32 %v1500, 2147483648
  %v1878 = vxor.u32 %v1502, 2147483648
  %v1879 = vxor.u32 %v1505, 2147483648
  %v1880 = vxor.u32 %v1507, 2147483648
  %v1881 = vxor.u32 %v1510, 2147483648
  %v1882 = vxor.u32 %v1512, 2147483648
  %v1883 = vxor.u32 %v1515, 2147483648
  %v1884 = vxor.u32 %v1517, 2147483648
  %v1885 = vxor.u32 %v1520, 2147483648
  %v1886 = vxor.u32 %v1522, 2147483648
  %v1887 = vxor.u32 %v1525, 2147483648
  %v1888 = vxor.u32 %v1527, 2147483648
  %v1889 = vxor.u32 %v1530, 2147483648
  %v1890 = vxor.u32 %v1532, 2147483648
  %v1891 = vxor.u32 %v1535, 2147483648
  %v1892 = vxor.u32 %v1537, 2147483648
  %v1893 = vxor.u32 %v1540, 2147483648
  %v1894 = vxor.u32 %v1542, 2147483648
  %v1895 = vxor.u32 %v1545, 2147483648
  %v1896 = vxor.u32 %v1547, 2147483648
  %v1897 = vxor.u32 %v1550, 2147483648
  %v1898 = vxor.u32 %v1552, 2147483648
  %v1899 = vxor.u32 %v1555, 2147483648
  %v1900 = vxor.u32 %v1557, 2147483648
  %v1901 = vxor.u32 %v1560, 2147483648
  %v1902 = vxor.u32 %v1562, 2147483648
  %v1903 = vxor.u32 %v1565, 2147483648
  %v1904 = vxor.u32 %v1567, 2147483648
  %v1905 = vxor.u32 %v1570, 2147483648
  %v1906 = vxor.u32 %v1572, 2147483648
  %v1907 = vxor.u32 %v1575, 2147483648
  %v1908 = vxor.u32 %v1577, 2147483648
  %v1909 = vxor.u32 %v1580, 2147483648
  %v1910 = vxor.u32 %v1582, 2147483648
  %v1911 = vxor.u32 %v1585, 2147483648
  %v1912 = vxor.u32 %v1587, 2147483648
  %v1913 = vxor.u32 %v1590, 2147483648
  %v1914 = vxor.u32 %v1592, 2147483648
  %v1915 = vxor.u32 %v1595, 2147483648
  %v1916 = vxor.u32 %v1597, 2147483648
  %v1917 = vxor.u32 %v1600, 2147483648
  %v1918 = vxor.u32 %v1602, 2147483648
  %v1919 = vxor.u32 %v1605, 2147483648
  %v1920 = vxor.u32 %v1607, 2147483648
  %v1921 = vxor.u32 %v1610, 2147483648
  %v1922 = vxor.u32 %v1612, 2147483648
  %v1923 = vxor.u32 %v1615, 2147483648
  %v1924 = vxor.u32 %v1617, 2147483648
  %v1925 = vxor.u32 %v1620, 2147483648
  %v1926 = vxor.u32 %v1622, 2147483648
  %v1927 = vxor.u32 %v1625, 2147483648
  %v1928 = vxor.u32 %v1627, 2147483648
  %v1929 = vxor.u32 %v1630, 2147483648
  %v1930 = vxor.u32 %v1632, 2147483648
  %v1931 = vxor.u32 %v1635, 2147483648
  %v1932 = vxor.u32 %v1637, 2147483648
  %v1933 = vxor.u32 %v1640, 2147483648
  %v1934 = vxor.u32 %v1642, 2147483648
  %v1935 = vxor.u32 %v1645, 2147483648
  %v1936 = vxor.u32 %v1647, 2147483648
  %v1937 = vxor.u32 %v1650, 2147483648
  %v1938 = vxor.u32 %v1652, 2147483648
  %v1939 = vxor.u32 %v1655, 2147483648
  %v1940 = vxor.u32 %v1657, 2147483648
  %v1941 = vxor.u32 %v1660, 2147483648
  %v1942 = vxor.u32 %v1662, 2147483648
  %v1943 = vxor.u32 %v1665, 2147483648
  %v1944 = vxor.u32 %v1667, 2147483648
  %v1945 = vxor.u32 %v1670, 2147483648
  %v1946 = vxor.u32 %v1672, 2147483648
  %v1947 = vxor.u32 %v1675, 2147483648
  %v1948 = vxor.u32 %v1677, 2147483648
  %v1949 = vxor.u32 %v1680, 2147483648
  %v1950 = vxor.u32 %v1682, 2147483648
  %v1951 = vxor.u32 %v1685, 2147483648
  %v1952 = vxor.u32 %v1687, 2147483648
  %v1953 = vxor.u32 %v1690, 2147483648
  %v1954 = vxor.u32 %v1692, 2147483648
  %v1955 = vxor.u32 %v1695, 2147483648
  %v1956 = vxor.u32 %v1697, 2147483648
  %v1957 = vxor.u32 %v1700, 2147483648
  %v1958 = vxor.u32 %v1702, 2147483648
  %v1959 = vxor.u32 %v1705, 2147483648
  %v1960 = vxor.u32 %v1707, 2147483648
  %v1961 = vxor.u32 %v1710, 2147483648
  %v1962 = vxor.u32 %v1712, 2147483648
  %v1963 = vxor.u32 %v1715, 2147483648
  %v1964 = vxor.u32 %v1717, 2147483648
  %v1965 = vxor.u32 %v1720, 2147483648
  %v1966 = vxor.u32 %v1722, 2147483648
  %v1967 = vxor.u32 %v1725, 2147483648
  %v1968 = vxor.u32 %v1727, 2147483648
  %v1969 = vxor.u32 %v1730, 2147483648
  %v1970 = vxor.u32 %v1732, 2147483648
  %v1971 = vxor.u32 %v1735, 2147483648
  %v1972 = vxor.u32 %v1737, 2147483648
  %v1973 = vxor.u32 %v1740, 2147483648
  %v1974 = vxor.u32 %v1742, 2147483648
  %v1975 = vxor.u32 %v1745, 2147483648
  %v1976 = vxor.u32 %v1747, 2147483648
  %v1977 = vxor.u32 %v1750, 2147483648
  %v1978 = vxor.u32 %v1752, 2147483648
  %v1979 = vxor.u32 %v1755, 2147483648
  %v1980 = vxor.u32 %v1757, 2147483648
  %v1981 = vxor.u32 %v1760, 2147483648
  %v1982 = vxor.u32 %v1762, 2147483648
  %v1983 = vxor.u32 %v1765, 2147483648
  %v1984 = vxor.u32 %v1767, 2147483648
  %v1985 = vxor.u32 %v1770, 2147483648
  %v1986 = vxor.u32 %v1772, 2147483648
  %v1987 = vxor.u32 %v1775, 2147483648
  %v1988 = vxor.u32 %v1777, 2147483648
  %v1989 = vxor.u32 %v1780, 2147483648
  %v1990 = vxor.u32 %v1782, 2147483648
  %v1991 = vxor.u32 %v1785, 2147483648
  %v1992 = vxor.u32 %v1787, 2147483648
  %v1993 = vmul.f32 %v1789, 1.442695
  %v1994 = vpow.pop %v1993
  %v1995 = vmul.f32 %v1790, 1.442695
  %v1996 = vpow.pop %v1995
  %v1997 = vmul.f32 %v1791, 1.442695
  %v1998 = vpow.pop %v1997
  %v1999 = vmul.f32 %v1792, 1.442695
  %v2000 = vpow.pop %v1999
  %v2001 = vmul.f32 %v1793, 1.442695
  %v2002 = vpow.pop %v2001
  %v2003 = vmul.f32 %v1794, 1.442695
  %v2004 = vpow.pop %v2003
  %v2005 = vmul.f32 %v1795, 1.442695
  %v2006 = vpow.pop %v2005
  %v2007 = vmul.f32 %v1796, 1.442695
  %v2008 = vpow.pop %v2007
  %v2009 = vmul.f32 %v1797, 1.442695
  %v2010 = vpow.pop %v2009
  %v2011 = vmul.f32 %v1798, 1.442695
  %v2012 = vpow.pop %v2011
  %v2013 = vmul.f32 %v1799, 1.442695
  %v2014 = vpow.pop %v2013
  %v2015 = vmul.f32 %v1800, 1.442695
  %v2016 = vpow.pop %v2015
  %v2017 = vmul.f32 %v1801, 1.442695
  %v2018 = vpow.pop %v2017
  %v2019 = vmul.f32 %v1802, 1.442695
  %v2020 = vpow.pop %v2019
  %v2021 = vmul.f32 %v1803, 1.442695
  %v2022 = vpow.pop %v2021
  %v2023 = vmul.f32 %v1804, 1.442695
  %v2024 = vpow.pop %v2023
  %v2025 = vmul.f32 %v1805, 1.442695
  %v2026 = vpow.pop %v2025
  %v2027 = vmul.f32 %v1806, 1.442695
  %v2028 = vpow.pop %v2027
  %v2029 = vmul.f32 %v1807, 1.442695
  %v2030 = vpow.pop %v2029
  %v2031 = vmul.f32 %v1808, 1.442695
  %v2032 = vpow.pop %v2031
  %v2033 = vmul.f32 %v1809, 1.442695
  %v2034 = vpow.pop %v2033
  %v2035 = vmul.f32 %v1810, 1.442695
  %v2036 = vpow.pop %v2035
  %v2037 = vmul.f32 %v1811, 1.442695
  %v2038 = vpow.pop %v2037
  %v2039 = vmul.f32 %v1812, 1.442695
  %v2040 = vpow.pop %v2039
  %v2041 = vmul.f32 %v1813, 1.442695
  %v2042 = vpow.pop %v2041
  %v2043 = vmul.f32 %v1814, 1.442695
  %v2044 = vpow.pop %v2043
  %v2045 = vmul.f32 %v1815, 1.442695
  %v2046 = vpow.pop %v2045
  %v2047 = vmul.f32 %v1816, 1.442695
  %v2048 = vpow.pop %v2047
  %v2049 = vmul.f32 %v1817, 1.442695
  %v2050 = vpow.pop %v2049
  %v2051 = vmul.f32 %v1818, 1.442695
  %v2052 = vpow.pop %v2051
  %v2053 = vmul.f32 %v1819, 1.442695
  %v2054 = vpow.pop %v2053
  %v2055 = vmul.f32 %v1820, 1.442695
  %v2056 = vpow.pop %v2055
  %v2057 = vmul.f32 %v1821, 1.442695
  %v2058 = vpow.pop %v2057
  %v2059 = vmul.f32 %v1822, 1.442695
  %v2060 = vpow.pop %v2059
  %v2061 = vmul.f32 %v1823, 1.442695
  %v2062 = vpow.pop %v2061
  %v2063 = vmul.f32 %v1824, 1.442695
  %v2064 = vpow.pop %v2063
  %v2065 = vmul.f32 %v1825, 1.442695
  %v2066 = vpow.pop %v2065
  %v2067 = vmul.f32 %v1826, 1.442695
  %v2068 = vpow.pop %v2067
  %v2069 = vmul.f32 %v1827, 1.442695
  %v2070 = vpow.pop %v2069
  %v2071 = vmul.f32 %v1828, 1.442695
  %v2072 = vpow.pop %v2071
  %v2073 = vmul.f32 %v1829, 1.442695
  %v2074 = vpow.pop %v2073
  %v2075 = vmul.f32 %v1830, 1.442695
  %v2076 = vpow.pop %v2075
  %v2077 = vmul.f32 %v1831, 1.442695
  %v2078 = vpow.pop %v2077
  %v2079 = vmul.f32 %v1832, 1.442695
  %v2080 = vpow.pop %v2079
  %v2081 = vmul.f32 %v1833, 1.442695
  %v2082 = vpow.pop %v2081
  %v2083 = vmul.f32 %v1834, 1.442695
  %v2084 = vpow.pop %v2083
  %v2085 = vmul.f32 %v1835, 1.442695
  %v2086 = vpow.pop %v2085
  %v2087 = vmul.f32 %v1836, 1.442695
  %v2088 = vpow.pop %v2087
  %v2089 = vmul.f32 %v1837, 1.442695
  %v2090 = vpow.pop %v2089
  %v2091 = vmul.f32 %v1838, 1.442695
  %v2092 = vpow.pop %v2091
  %v2093 = vmul.f32 %v1839, 1.442695
  %v2094 = vpow.pop %v2093
  %v2095 = vmul.f32 %v1840, 1.442695
  %v2096 = vpow.pop %v2095
  %v2097 = vmul.f32 %v1841, 1.442695
  %v2098 = vpow.pop %v2097
  %v2099 = vmul.f32 %v1842, 1.442695
  %v2100 = vpow.pop %v2099
  %v2101 = vmul.f32 %v1843, 1.442695
  %v2102 = vpow.pop %v2101
  %v2103 = vmul.f32 %v1844, 1.442695
  %v2104 = vpow.pop %v2103
  %v2105 = vmul.f32 %v1845, 1.442695
  %v2106 = vpow.pop %v2105
  %v2107 = vmul.f32 %v1846, 1.442695
  %v2108 = vpow.pop %v2107
  %v2109 = vmul.f32 %v1847, 1.442695
  %v2110 = vpow.pop %v2109
  %v2111 = vmul.f32 %v1848, 1.442695
  %v2112 = vpow.pop %v2111
  %v2113 = vmul.f32 %v1849, 1.442695
  %v2114 = vpow.pop %v2113
  %v2115 = vmul.f32 %v1850, 1.442695
  %v2116 = vpow.pop %v2115
  %v2117 = vmul.f32 %v1851, 1.442695
  %v2118 = vpow.pop %v2117
  %v2119 = vmul.f32 %v1852, 1.442695
  %v2120 = vpow.pop %v2119
  %v2121 = vmul.f32 %v1853, 1.442695
  %v2122 = vpow.pop %v2121
  %v2123 = vmul.f32 %v1854, 1.442695
  %v2124 = vpow.pop %v2123
  %v2125 = vmul.f32 %v1855, 1.442695
  %v2126 = vpow.pop %v2125
  %v2127 = vmul.f32 %v1856, 1.442695
  %v2128 = vpow.pop %v2127
  %v2129 = vmul.f32 %v1857, 1.442695
  %v2130 = vpow.pop %v2129
  %v2131 = vmul.f32 %v1858, 1.442695
  %v2132 = vpow.pop %v2131
  %v2133 = vmul.f32 %v1859, 1.442695
  %v2134 = vpow.pop %v2133
  %v2135 = vmul.f32 %v1860, 1.442695
  %v2136 = vpow.pop %v2135
  %v2137 = vmul.f32 %v1861, 1.442695
  %v2138 = vpow.pop %v2137
  %v2139 = vmul.f32 %v1862, 1.442695
  %v2140 = vpow.pop %v2139
  %v2141 = vmul.f32 %v1863, 1.442695
  %v2142 = vpow.pop %v2141
  %v2143 = vmul.f32 %v1864, 1.442695
  %v2144 = vpow.pop %v2143
  %v2145 = vmul.f32 %v1865, 1.442695
  %v2146 = vpow.pop %v2145
  %v2147 = vmul.f32 %v1866, 1.442695
  %v2148 = vpow.pop %v2147
  %v2149 = vmul.f32 %v1867, 1.442695
  %v2150 = vpow.pop %v2149
  %v2151 = vmul.f32 %v1868, 1.442695
  %v2152 = vpow.pop %v2151
  %v2153 = vmul.f32 %v1869, 1.442695
  %v2154 = vpow.pop %v2153
  %v2155 = vmul.f32 %v1870, 1.442695
  %v2156 = vpow.pop %v2155
  %v2157 = vmul.f32 %v1871, 1.442695
  %v2158 = vpow.pop %v2157
  %v2159 = vmul.f32 %v1872, 1.442695
  %v2160 = vpow.pop %v2159
  %v2161 = vmul.f32 %v1873, 1.442695
  %v2162 = vpow.pop %v2161
  %v2163 = vmul.f32 %v1874, 1.442695
  %v2164 = vpow.pop %v2163
  %v2165 = vmul.f32 %v1875, 1.442695
  %v2166 = vpow.pop %v2165
  %v2167 = vmul.f32 %v1876, 1.442695
  %v2168 = vpow.pop %v2167
  %v2169 = vmul.f32 %v1877, 1.442695
  %v2170 = vpow.pop %v2169
  %v2171 = vmul.f32 %v1878, 1.442695
  %v2172 = vpow.pop %v2171
  %v2173 = vmul.f32 %v1879, 1.442695
  %v2174 = vpow.pop %v2173
  %v2175 = vmul.f32 %v1880, 1.442695
  %v2176 = vpow.pop %v2175
  %v2177 = vmul.f32 %v1881, 1.442695
  %v2178 = vpow.pop %v2177
  %v2179 = vmul.f32 %v1882, 1.442695
  %v2180 = vpow.pop %v2179
  %v2181 = vmul.f32 %v1883, 1.442695
  %v2182 = vpow.pop %v2181
  %v2183 = vmul.f32 %v1884, 1.442695
  %v2184 = vpow.pop %v2183
  %v2185 = vmul.f32 %v1885, 1.442695
  %v2186 = vpow.pop %v2185
  %v2187 = vmul.f32 %v1886, 1.442695
  %v2188 = vpow.pop %v2187
  %v2189 = vmul.f32 %v1887, 1.442695
  %v2190 = vpow.pop %v2189
  %v2191 = vmul.f32 %v1888, 1.442695
  %v2192 = vpow.pop %v2191
  %v2193 = vmul.f32 %v1889, 1.442695
  %v2194 = vpow.pop %v2193
  %v2195 = vmul.f32 %v1890, 1.442695
  %v2196 = vpow.pop %v2195
  %v2197 = vmul.f32 %v1891, 1.442695
  %v2198 = vpow.pop %v2197
  %v2199 = vmul.f32 %v1892, 1.442695
  %v2200 = vpow.pop %v2199
  %v2201 = vmul.f32 %v1893, 1.442695
  %v2202 = vpow.pop %v2201
  %v2203 = vmul.f32 %v1894, 1.442695
  %v2204 = vpow.pop %v2203
  %v2205 = vmul.f32 %v1895, 1.442695
  %v2206 = vpow.pop %v2205
  %v2207 = vmul.f32 %v1896, 1.442695
  %v2208 = vpow.pop %v2207
  %v2209 = vmul.f32 %v1897, 1.442695
  %v2210 = vpow.pop %v2209
  %v2211 = vmul.f32 %v1898, 1.442695
  %v2212 = vpow.pop %v2211
  %v2213 = vmul.f32 %v1899, 1.442695
  %v2214 = vpow.pop %v2213
  %v2215 = vmul.f32 %v1900, 1.442695
  %v2216 = vpow.pop %v2215
  %v2217 = vmul.f32 %v1901, 1.442695
  %v2218 = vpow.pop %v2217
  %v2219 = vmul.f32 %v1902, 1.442695
  %v2220 = vpow.pop %v2219
  %v2221 = vmul.f32 %v1903, 1.442695
  %v2222 = vpow.pop %v2221
  %v2223 = vmul.f32 %v1904, 1.442695
  %v2224 = vpow.pop %v2223
  %v2225 = vmul.f32 %v1905, 1.442695
  %v2226 = vpow.pop %v2225
  %v2227 = vmul.f32 %v1906, 1.442695
  %v2228 = vpow.pop %v2227
  %v2229 = vmul.f32 %v1907, 1.442695
  %v2230 = vpow.pop %v2229
  %v2231 = vmul.f32 %v1908, 1.442695
  %v2232 = vpow.pop %v2231
  %v2233 = vmul.f32 %v1909, 1.442695
  %v2234 = vpow.pop %v2233
  %v2235 = vmul.f32 %v1910, 1.442695
  %v2236 = vpow.pop %v2235
  %v2237 = vmul.f32 %v1911, 1.442695
  %v2238 = vpow.pop %v2237
  %v2239 = vmul.f32 %v1912, 1.442695
  %v2240 = vpow.pop %v2239
  %v2241 = vmul.f32 %v1913, 1.442695
  %v2242 = vpow.pop %v2241
  %v2243 = vmul.f32 %v1914, 1.442695
  %v2244 = vpow.pop %v2243
  %v2245 = vmul.f32 %v1915, 1.442695
  %v2246 = vpow.pop %v2245
  %v2247 = vmul.f32 %v1916, 1.442695
  %v2248 = vpow.pop %v2247
  %v2249 = vmul.f32 %v1917, 1.442695
  %v2250 = vpow.pop %v2249
  %v2251 = vmul.f32 %v1918, 1.442695
  %v2252 = vpow.pop %v2251
  %v2253 = vmul.f32 %v1919, 1.442695
  %v2254 = vpow.pop %v2253
  %v2255 = vmul.f32 %v1920, 1.442695
  %v2256 = vpow.pop %v2255
  %v2257 = vmul.f32 %v1921, 1.442695
  %v2258 = vpow.pop %v2257
  %v2259 = vmul.f32 %v1922, 1.442695
  %v2260 = vpow.pop %v2259
  %v2261 = vmul.f32 %v1923, 1.442695
  %v2262 = vpow.pop %v2261
  %v2263 = vmul.f32 %v1924, 1.442695
  %v2264 = vpow.pop %v2263
  %v2265 = vmul.f32 %v1925, 1.442695
  %v2266 = vpow.pop %v2265
  %v2267 = vmul.f32 %v1926, 1.442695
  %v2268 = vpow.pop %v2267
  %v2269 = vmul.f32 %v1927, 1.442695
  %v2270 = vpow.pop %v2269
  %v2271 = vmul.f32 %v1928, 1.442695
  %v2272 = vpow.pop %v2271
  %v2273 = vmul.f32 %v1929, 1.442695
  %v2274 = vpow.pop %v2273
  %v2275 = vmul.f32 %v1930, 1.442695
  %v2276 = vpow.pop %v2275
  %v2277 = vmul.f32 %v1931, 1.442695
  %v2278 = vpow.pop %v2277
  %v2279 = vmul.f32 %v1932, 1.442695
  %v2280 = vpow.pop %v2279
  %v2281 = vmul.f32 %v1933, 1.442695
  %v2282 = vpow.pop %v2281
  %v2283 = vmul.f32 %v1934, 1.442695
  %v2284 = vpow.pop %v2283
  %v2285 = vmul.f32 %v1935, 1.442695
  %v2286 = vpow.pop %v2285
  %v2287 = vmul.f32 %v1936, 1.442695
  %v2288 = vpow.pop %v2287
  %v2289 = vmul.f32 %v1937, 1.442695
  %v2290 = vpow.pop %v2289
  %v2291 = vmul.f32 %v1938, 1.442695
  %v2292 = vpow.pop %v2291
  %v2293 = vmul.f32 %v1939, 1.442695
  %v2294 = vpow.pop %v2293
  %v2295 = vmul.f32 %v1940, 1.442695
  %v2296 = vpow.pop %v2295
  %v2297 = vmul.f32 %v1941, 1.442695
  %v2298 = vpow.pop %v2297
  %v2299 = vmul.f32 %v1942, 1.442695
  %v2300 = vpow.pop %v2299
  %v2301 = vmul.f32 %v1943, 1.442695
  %v2302 = vpow.pop %v2301
  %v2303 = vmul.f32 %v1944, 1.442695
  %v2304 = vpow.pop %v2303
  %v2305 = vmul.f32 %v1945, 1.442695
  %v2306 = vpow.pop %v2305
  %v2307 = vmul.f32 %v1946, 1.442695
  %v2308 = vpow.pop %v2307
  %v2309 = vmul.f32 %v1947, 1.442695
  %v2310 = vpow.pop %v2309
  %v2311 = vmul.f32 %v1948, 1.442695
  %v2312 = vpow.pop %v2311
  %v2313 = vmul.f32 %v1949, 1.442695
  %v2314 = vpow.pop %v2313
  %v2315 = vmul.f32 %v1950, 1.442695
  %v2316 = vpow.pop %v2315
  %v2317 = vmul.f32 %v1951, 1.442695
  %v2318 = vpow.pop %v2317
  %v2319 = vmul.f32 %v1952, 1.442695
  %v2320 = vpow.pop %v2319
  %v2321 = vmul.f32 %v1953, 1.442695
  %v2322 = vpow.pop %v2321
  %v2323 = vmul.f32 %v1954, 1.442695
  %v2324 = vpow.pop %v2323
  %v2325 = vmul.f32 %v1955, 1.442695
  %v2326 = vpow.pop %v2325
  %v2327 = vmul.f32 %v1956, 1.442695
  %v2328 = vpow.pop %v2327
  %v2329 = vmul.f32 %v1957, 1.442695
  %v2330 = vpow.pop %v2329
  %v2331 = vmul.f32 %v1958, 1.442695
  %v2332 = vpow.pop %v2331
  %v2333 = vmul.f32 %v1959, 1.442695
  %v2334 = vpow.pop %v2333
  %v2335 = vmul.f32 %v1960, 1.442695
  %v2336 = vpow.pop %v2335
  %v2337 = vmul.f32 %v1961, 1.442695
  %v2338 = vpow.pop %v2337
  %v2339 = vmul.f32 %v1962, 1.442695
  %v2340 = vpow.pop %v2339
  %v2341 = vmul.f32 %v1963, 1.442695
  %v2342 = vpow.pop %v2341
  %v2343 = vmul.f32 %v1964, 1.442695
  %v2344 = vpow.pop %v2343
  %v2345 = vmul.f32 %v1965, 1.442695
  %v2346 = vpow.pop %v2345
  %v2347 = vmul.f32 %v1966, 1.442695
  %v2348 = vpow.pop %v2347
  %v2349 = vmul.f32 %v1967, 1.442695
  %v2350 = vpow.pop %v2349
  %v2351 = vmul.f32 %v1968, 1.442695
  %v2352 = vpow.pop %v2351
  %v2353 = vmul.f32 %v1969, 1.442695
  %v2354 = vpow.pop %v2353
  %v2355 = vmul.f32 %v1970, 1.442695
  %v2356 = vpow.pop %v2355
  %v2357 = vmul.f32 %v1971, 1.442695
  %v2358 = vpow.pop %v2357
  %v2359 = vmul.f32 %v1972, 1.442695
  %v2360 = vpow.pop %v2359
  %v2361 = vmul.f32 %v1973, 1.442695
  %v2362 = vpow.pop %v2361
  %v2363 = vmul.f32 %v1974, 1.442695
  %v2364 = vpow.pop %v2363
  %v2365 = vmul.f32 %v1975, 1.442695
  %v2366 = vpow.pop %v2365
  %v2367 = vmul.f32 %v1976, 1.442695
  %v2368 = vpow.pop %v2367
  %v2369 = vmul.f32 %v1977, 1.442695
  %v2370 = vpow.pop %v2369
  %v2371 = vmul.f32 %v1978, 1.442695
  %v2372 = vpow.pop %v2371
  %v2373 = vmul.f32 %v1979, 1.442695
  %v2374 = vpow.pop %v2373
  %v2375 = vmul.f32 %v1980, 1.442695
  %v2376 = vpow.pop %v2375
  %v2377 = vmul.f32 %v1981, 1.442695
  %v2378 = vpow.pop %v2377
  %v2379 = vmul.f32 %v1982, 1.442695
  %v2380 = vpow.pop %v2379
  %v2381 = vmul.f32 %v1983, 1.442695
  %v2382 = vpow.pop %v2381
  %v2383 = vmul.f32 %v1984, 1.442695
  %v2384 = vpow.pop %v2383
  %v2385 = vmul.f32 %v1985, 1.442695
  %v2386 = vpow.pop %v2385
  %v2387 = vmul.f32 %v1986, 1.442695
  %v2388 = vpow.pop %v2387
  %v2389 = vmul.f32 %v1987, 1.442695
  %v2390 = vpow.pop %v2389
  %v2391 = vmul.f32 %v1988, 1.442695
  %v2392 = vpow.pop %v2391
  %v2393 = vmul.f32 %v1989, 1.442695
  %v2394 = vpow.pop %v2393
  %v2395 = vmul.f32 %v1990, 1.442695
  %v2396 = vpow.pop %v2395
  %v2397 = vmul.f32 %v1991, 1.442695
  %v2398 = vpow.pop %v2397
  %v2399 = vmul.f32 %v1992, 1.442695
  %v2400 = vpow.pop %v2399
  %v2401 = vadd.f32 %v1994, 1.0
  %v2402 = vadd.f32 %v1996, 1.0
  %v2403 = vadd.f32 %v1998, 1.0
  %v2404 = vadd.f32 %v2000, 1.0
  %v2405 = vadd.f32 %v2002, 1.0
  %v2406 = vadd.f32 %v2004, 1.0
  %v2407 = vadd.f32 %v2006, 1.0
  %v2408 = vadd.f32 %v2008, 1.0
  %v2409 = vadd.f32 %v2010, 1.0
  %v2410 = vadd.f32 %v2012, 1.0
  %v2411 = vadd.f32 %v2014, 1.0
  %v2412 = vadd.f32 %v2016, 1.0
  %v2413 = vadd.f32 %v2018, 1.0
  %v2414 = vadd.f32 %v2020, 1.0
  %v2415 = vadd.f32 %v2022, 1.0
  %v2416 = vadd.f32 %v2024, 1.0
  %v2417 = vadd.f32 %v2026, 1.0
  %v2418 = vadd.f32 %v2028, 1.0
  %v2419 = vadd.f32 %v2030, 1.0
  %v2420 = vadd.f32 %v2032, 1.0
  %v2421 = vadd.f32 %v2034, 1.0
  %v2422 = vadd.f32 %v2036, 1.0
  %v2423 = vadd.f32 %v2038, 1.0
  %v2424 = vadd.f32 %v2040, 1.0
  %v2425 = vadd.f32 %v2042, 1.0
  %v2426 = vadd.f32 %v2044, 1.0
  %v2427 = vadd.f32 %v2046, 1.0
  %v2428 = vadd.f32 %v2048, 1.0
  %v2429 = vadd.f32 %v2050, 1.0
  %v2430 = vadd.f32 %v2052, 1.0
  %v2431 = vadd.f32 %v2054, 1.0
  %v2432 = vadd.f32 %v2056, 1.0
  %v2433 = vadd.f32 %v2058, 1.0
  %v2434 = vadd.f32 %v2060, 1.0
  %v2435 = vadd.f32 %v2062, 1.0
  %v2436 = vadd.f32 %v2064, 1.0
  %v2437 = vadd.f32 %v2066, 1.0
  %v2438 = vadd.f32 %v2068, 1.0
  %v2439 = vadd.f32 %v2070, 1.0
  %v2440 = vadd.f32 %v2072, 1.0
  %v2441 = vadd.f32 %v2074, 1.0
  %v2442 = vadd.f32 %v2076, 1.0
  %v2443 = vadd.f32 %v2078, 1.0
  %v2444 = vadd.f32 %v2080, 1.0
  %v2445 = vadd.f32 %v2082, 1.0
  %v2446 = vadd.f32 %v2084, 1.0
  %v2447 = vadd.f32 %v2086, 1.0
  %v2448 = vadd.f32 %v2088, 1.0
  %v2449 = vadd.f32 %v2090, 1.0
  %v2450 = vadd.f32 %v2092, 1.0
  %v2451 = vadd.f32 %v2094, 1.0
  %v2452 = vadd.f32 %v2096, 1.0
  %v2453 = vadd.f32 %v2098, 1.0
  %v2454 = vadd.f32 %v2100, 1.0
  %v2455 = vadd.f32 %v2102, 1.0
  %v2456 = vadd.f32 %v2104, 1.0
  %v2457 = vadd.f32 %v2106, 1.0
  %v2458 = vadd.f32 %v2108, 1.0
  %v2459 = vadd.f32 %v2110, 1.0
  %v2460 = vadd.f32 %v2112, 1.0
  %v2461 = vadd.f32 %v2114, 1.0
  %v2462 = vadd.f32 %v2116, 1.0
  %v2463 = vadd.f32 %v2118, 1.0
  %v2464 = vadd.f32 %v2120, 1.0
  %v2465 = vadd.f32 %v2122, 1.0
  %v2466 = vadd.f32 %v2124, 1.0
  %v2467 = vadd.f32 %v2126, 1.0
  %v2468 = vadd.f32 %v2128, 1.0
  %v2469 = vadd.f32 %v2130, 1.0
  %v2470 = vadd.f32 %v2132, 1.0
  %v2471 = vadd.f32 %v2134, 1.0
  %v2472 = vadd.f32 %v2136, 1.0
  %v2473 = vadd.f32 %v2138, 1.0
  %v2474 = vadd.f32 %v2140, 1.0
  %v2475 = vadd.f32 %v2142, 1.0
  %v2476 = vadd.f32 %v2144, 1.0
  %v2477 = vadd.f32 %v2146, 1.0
  %v2478 = vadd.f32 %v2148, 1.0
  %v2479 = vadd.f32 %v2150, 1.0
  %v2480 = vadd.f32 %v2152, 1.0
  %v2481 = vadd.f32 %v2154, 1.0
  %v2482 = vadd.f32 %v2156, 1.0
  %v2483 = vadd.f32 %v2158, 1.0
  %v2484 = vadd.f32 %v2160, 1.0
  %v2485 = vadd.f32 %v2162, 1.0
  %v2486 = vadd.f32 %v2164, 1.0
  %v2487 = vadd.f32 %v2166, 1.0
  %v2488 = vadd.f32 %v2168, 1.0
  %v2489 = vadd.f32 %v2170, 1.0
  %v2490 = vadd.f32 %v2172, 1.0
  %v2491 = vadd.f32 %v2174, 1.0
  %v2492 = vadd.f32 %v2176, 1.0
  %v2493 = vadd.f32 %v2178, 1.0
  %v2494 = vadd.f32 %v2180, 1.0
  %v2495 = vadd.f32 %v2182, 1.0
  %v2496 = vadd.f32 %v2184, 1.0
  %v2497 = vadd.f32 %v2186, 1.0
  %v2498 = vadd.f32 %v2188, 1.0
  %v2499 = vadd.f32 %v2190, 1.0
  %v2500 = vadd.f32 %v2192, 1.0
  %v2501 = vadd.f32 %v2194, 1.0
  %v2502 = vadd.f32 %v2196, 1.0
  %v2503 = vadd.f32 %v2198, 1.0
  %v2504 = vadd.f32 %v2200, 1.0
  %v2505 = vadd.f32 %v2202, 1.0
  %v2506 = vadd.f32 %v2204, 1.0
  %v2507 = vadd.f32 %v2206, 1.0
  %v2508 = vadd.f32 %v2208, 1.0
  %v2509 = vadd.f32 %v2210, 1.0
  %v2510 = vadd.f32 %v2212, 1.0
  %v2511 = vadd.f32 %v2214, 1.0
  %v2512 = vadd.f32 %v2216, 1.0
  %v2513 = vadd.f32 %v2218, 1.0
  %v2514 = vadd.f32 %v2220, 1.0
  %v2515 = vadd.f32 %v2222, 1.0
  %v2516 = vadd.f32 %v2224, 1.0
  %v2517 = vadd.f32 %v2226, 1.0
  %v2518 = vadd.f32 %v2228, 1.0
  %v2519 = vadd.f32 %v2230, 1.0
  %v2520 = vadd.f32 %v2232, 1.0
  %v2521 = vadd.f32 %v2234, 1.0
  %v2522 = vadd.f32 %v2236, 1.0
  %v2523 = vadd.f32 %v2238, 1.0
  %v2524 = vadd.f32 %v2240, 1.0
  %v2525 = vadd.f32 %v2242, 1.0
  %v2526 = vadd.f32 %v2244, 1.0
  %v2527 = vadd.f32 %v2246, 1.0
  %v2528 = vadd.f32 %v2248, 1.0
  %v2529 = vadd.f32 %v2250, 1.0
  %v2530 = vadd.f32 %v2252, 1.0
  %v2531 = vadd.f32 %v2254, 1.0
  %v2532 = vadd.f32 %v2256, 1.0
  %v2533 = vadd.f32 %v2258, 1.0
  %v2534 = vadd.f32 %v2260, 1.0
  %v2535 = vadd.f32 %v2262, 1.0
  %v2536 = vadd.f32 %v2264, 1.0
  %v2537 = vadd.f32 %v2266, 1.0
  %v2538 = vadd.f32 %v2268, 1.0
  %v2539 = vadd.f32 %v2270, 1.0
  %v2540 = vadd.f32 %v2272, 1.0
  %v2541 = vadd.f32 %v2274, 1.0
  %v2542 = vadd.f32 %v2276, 1.0
  %v2543 = vadd.f32 %v2278, 1.0
  %v2544 = vadd.f32 %v2280, 1.0
  %v2545 = vadd.f32 %v2282, 1.0
  %v2546 = vadd.f32 %v2284, 1.0
  %v2547 = vadd.f32 %v2286, 1.0
  %v2548 = vadd.f32 %v2288, 1.0
  %v2549 = vadd.f32 %v2290, 1.0
  %v2550 = vadd.f32 %v2292, 1.0
  %v2551 = vadd.f32 %v2294, 1.0
  %v2552 = vadd.f32 %v2296, 1.0
  %v2553 = vadd.f32 %v2298, 1.0
  %v2554 = vadd.f32 %v2300, 1.0
  %v2555 = vadd.f32 %v2302, 1.0
  %v2556 = vadd.f32 %v2304, 1.0
  %v2557 = vadd.f32 %v2306, 1.0
  %v2558 = vadd.f32 %v2308, 1.0
  %v2559 = vadd.f32 %v2310, 1.0
  %v2560 = vadd.f32 %v2312, 1.0
  %v2561 = vadd.f32 %v2314, 1.0
  %v2562 = vadd.f32 %v2316, 1.0
  %v2563 = vadd.f32 %v2318, 1.0
  %v2564 = vadd.f32 %v2320, 1.0
  %v2565 = vadd.f32 %v2322, 1.0
  %v2566 = vadd.f32 %v2324, 1.0
  %v2567 = vadd.f32 %v2326, 1.0
  %v2568 = vadd.f32 %v2328, 1.0
  %v2569 = vadd.f32 %v2330, 1.0
  %v2570 = vadd.f32 %v2332, 1.0
  %v2571 = vadd.f32 %v2334, 1.0
  %v2572 = vadd.f32 %v2336, 1.0
  %v2573 = vadd.f32 %v2338, 1.0
  %v2574 = vadd.f32 %v2340, 1.0
  %v2575 = vadd.f32 %v2342, 1.0
  %v2576 = vadd.f32 %v2344, 1.0
  %v2577 = vadd.f32 %v2346, 1.0
  %v2578 = vadd.f32 %v2348, 1.0
  %v2579 = vadd.f32 %v2350, 1.0
  %v2580 = vadd.f32 %v2352, 1.0
  %v2581 = vadd.f32 %v2354, 1.0
  %v2582 = vadd.f32 %v2356, 1.0
  %v2583 = vadd.f32 %v2358, 1.0
  %v2584 = vadd.f32 %v2360, 1.0
  %v2585 = vadd.f32 %v2362, 1.0
  %v2586 = vadd.f32 %v2364, 1.0
  %v2587 = vadd.f32 %v2366, 1.0
  %v2588 = vadd.f32 %v2368, 1.0
  %v2589 = vadd.f32 %v2370, 1.0
  %v2590 = vadd.f32 %v2372, 1.0
  %v2591 = vadd.f32 %v2374, 1.0
  %v2592 = vadd.f32 %v2376, 1.0
  %v2593 = vadd.f32 %v2378, 1.0
  %v2594 = vadd.f32 %v2380, 1.0
  %v2595 = vadd.f32 %v2382, 1.0
  %v2596 = vadd.f32 %v2384, 1.0
  %v2597 = vadd.f32 %v2386, 1.0
  %v2598 = vadd.f32 %v2388, 1.0
  %v2599 = vadd.f32 %v2390, 1.0
  %v2600 = vadd.f32 %v2392, 1.0
  %v2601 = vadd.f32 %v2394, 1.0
  %v2602 = vadd.f32 %v2396, 1.0
  %v2603 = vadd.f32 %v2398, 1.0
  %v2604 = vadd.f32 %v2400, 1.0
  %v2605 = vrcp.pop %v2401
  %v2606 = vmul.f32 %v2401, %v2605
  %v2607 = vsub.f32 1.0, %v2606
  %v2608 = vmul.f32 %v2605, %v2607
  %v2609 = vadd.f32 %v2605, %v2608
  %vm2610 = vweird.f32 %v2401
  %vm2611 = vweird.f32 %v2605
  %vm2612 = vmor %vm2610, %vm2611
  %v2613 = vsel %vm2612, %v2605, %v2609
  %v2614 = vand.u32 2147483647, %v2401
  %vm2615 = vcmp.eq.f32.partialorder %v2614, 8.507059e+37
  %v2616 = vand.u32 %v2401, 2147483648
  %v2617 = vor.u32 1.1754944e-38, %v2616
  %v2618 = vsel %vm2615, %v2617, %v2613
  %v2619 = vmul.f32 1.0, %v2618
  %v2620 = vrcp.pop %v2402
  %v2621 = vmul.f32 %v2402, %v2620
  %v2622 = vsub.f32 1.0, %v2621
  %v2623 = vmul.f32 %v2620, %v2622
  %v2624 = vadd.f32 %v2620, %v2623
  %vm2625 = vweird.f32 %v2402
  %vm2626 = vweird.f32 %v2620
  %vm2627 = vmor %vm2625, %vm2626
  %v2628 = vsel %vm2627, %v2620, %v2624
  %v2629 = vand.u32 2147483647, %v2402
  %vm2630 = vcmp.eq.f32.partialorder %v2629, 8.507059e+37
  %v2631 = vand.u32 %v2402, 2147483648
  %v2632 = vor.u32 1.1754944e-38, %v2631
  %v2633 = vsel %vm2630, %v2632, %v2628
  %v2634 = vmul.f32 1.0, %v2633
  %v2635 = vrcp.pop %v2403
  %v2636 = vmul.f32 %v2403, %v2635
  %v2637 = vsub.f32 1.0, %v2636
  %v2638 = vmul.f32 %v2635, %v2637
  %v2639 = vadd.f32 %v2635, %v2638
  %vm2640 = vweird.f32 %v2403
  %vm2641 = vweird.f32 %v2635
  %vm2642 = vmor %vm2640, %vm2641
  %v2643 = vsel %vm2642, %v2635, %v2639
  %v2644 = vand.u32 2147483647, %v2403
  %vm2645 = vcmp.eq.f32.partialorder %v2644, 8.507059e+37
  %v2646 = vand.u32 %v2403, 2147483648
  %v2647 = vor.u32 1.1754944e-38, %v2646
  %v2648 = vsel %vm2645, %v2647, %v2643
  %v2649 = vmul.f32 1.0, %v2648
  %v2650 = vrcp.pop %v2404
  %v2651 = vmul.f32 %v2404, %v2650
  %v2652 = vsub.f32 1.0, %v2651
  %v2653 = vmul.f32 %v2650, %v2652
  %v2654 = vadd.f32 %v2650, %v2653
  %vm2655 = vweird.f32 %v2404
  %vm2656 = vweird.f32 %v2650
  %vm2657 = vmor %vm2655, %vm2656
  %v2658 = vsel %vm2657, %v2650, %v2654
  %v2659 = vand.u32 2147483647, %v2404
  %vm2660 = vcmp.eq.f32.partialorder %v2659, 8.507059e+37
  %v2661 = vand.u32 %v2404, 2147483648
  %v2662 = vor.u32 1.1754944e-38, %v2661
  %v2663 = vsel %vm2660, %v2662, %v2658
  %v2664 = vmul.f32 1.0, %v2663
  %v2665 = vrcp.pop %v2405
  %v2666 = vmul.f32 %v2405, %v2665
  %v2667 = vsub.f32 1.0, %v2666
  %v2668 = vmul.f32 %v2665, %v2667
  %v2669 = vadd.f32 %v2665, %v2668
  %vm2670 = vweird.f32 %v2405
  %vm2671 = vweird.f32 %v2665
  %vm2672 = vmor %vm2670, %vm2671
  %v2673 = vsel %vm2672, %v2665, %v2669
  %v2674 = vand.u32 2147483647, %v2405
  %vm2675 = vcmp.eq.f32.partialorder %v2674, 8.507059e+37
  %v2676 = vand.u32 %v2405, 2147483648
  %v2677 = vor.u32 1.1754944e-38, %v2676
  %v2678 = vsel %vm2675, %v2677, %v2673
  %v2679 = vmul.f32 1.0, %v2678
  %v2680 = vrcp.pop %v2406
  %v2681 = vmul.f32 %v2406, %v2680
  %v2682 = vsub.f32 1.0, %v2681
  %v2683 = vmul.f32 %v2680, %v2682
  %v2684 = vadd.f32 %v2680, %v2683
  %vm2685 = vweird.f32 %v2406
  %vm2686 = vweird.f32 %v2680
  %vm2687 = vmor %vm2685, %vm2686
  %v2688 = vsel %vm2687, %v2680, %v2684
  %v2689 = vand.u32 2147483647, %v2406
  %vm2690 = vcmp.eq.f32.partialorder %v2689, 8.507059e+37
  %v2691 = vand.u32 %v2406, 2147483648
  %v2692 = vor.u32 1.1754944e-38, %v2691
  %v2693 = vsel %vm2690, %v2692, %v2688
  %v2694 = vmul.f32 1.0, %v2693
  %v2695 = vrcp.pop %v2407
  %v2696 = vmul.f32 %v2407, %v2695
  %v2697 = vsub.f32 1.0, %v2696
  %v2698 = vmul.f32 %v2695, %v2697
  %v2699 = vadd.f32 %v2695, %v2698
  %vm2700 = vweird.f32 %v2407
  %vm2701 = vweird.f32 %v2695
  %vm2702 = vmor %vm2700, %vm2701
  %v2703 = vsel %vm2702, %v2695, %v2699
  %v2704 = vand.u32 2147483647, %v2407
  %vm2705 = vcmp.eq.f32.partialorder %v2704, 8.507059e+37
  %v2706 = vand.u32 %v2407, 2147483648
  %v2707 = vor.u32 1.1754944e-38, %v2706
  %v2708 = vsel %vm2705, %v2707, %v2703
  %v2709 = vmul.f32 1.0, %v2708
  %v2710 = vrcp.pop %v2408
  %v2711 = vmul.f32 %v2408, %v2710
  %v2712 = vsub.f32 1.0, %v2711
  %v2713 = vmul.f32 %v2710, %v2712
  %v2714 = vadd.f32 %v2710, %v2713
  %vm2715 = vweird.f32 %v2408
  %vm2716 = vweird.f32 %v2710
  %vm2717 = vmor %vm2715, %vm2716
  %v2718 = vsel %vm2717, %v2710, %v2714
  %v2719 = vand.u32 2147483647, %v2408
  %vm2720 = vcmp.eq.f32.partialorder %v2719, 8.507059e+37
  %v2721 = vand.u32 %v2408, 2147483648
  %v2722 = vor.u32 1.1754944e-38, %v2721
  %v2723 = vsel %vm2720, %v2722, %v2718
  %v2724 = vmul.f32 1.0, %v2723
  %v2725 = vrcp.pop %v2409
  %v2726 = vmul.f32 %v2409, %v2725
  %v2727 = vsub.f32 1.0, %v2726
  %v2728 = vmul.f32 %v2725, %v2727
  %v2729 = vadd.f32 %v2725, %v2728
  %vm2730 = vweird.f32 %v2409
  %vm2731 = vweird.f32 %v2725
  %vm2732 = vmor %vm2730, %vm2731
  %v2733 = vsel %vm2732, %v2725, %v2729
  %v2734 = vand.u32 2147483647, %v2409
  %vm2735 = vcmp.eq.f32.partialorder %v2734, 8.507059e+37
  %v2736 = vand.u32 %v2409, 2147483648
  %v2737 = vor.u32 1.1754944e-38, %v2736
  %v2738 = vsel %vm2735, %v2737, %v2733
  %v2739 = vmul.f32 1.0, %v2738
  %v2740 = vrcp.pop %v2410
  %v2741 = vmul.f32 %v2410, %v2740
  %v2742 = vsub.f32 1.0, %v2741
  %v2743 = vmul.f32 %v2740, %v2742
  %v2744 = vadd.f32 %v2740, %v2743
  %vm2745 = vweird.f32 %v2410
  %vm2746 = vweird.f32 %v2740
  %vm2747 = vmor %vm2745, %vm2746
  %v2748 = vsel %vm2747, %v2740, %v2744
  %v2749 = vand.u32 2147483647, %v2410
  %vm2750 = vcmp.eq.f32.partialorder %v2749, 8.507059e+37
  %v2751 = vand.u32 %v2410, 2147483648
  %v2752 = vor.u32 1.1754944e-38, %v2751
  %v2753 = vsel %vm2750, %v2752, %v2748
  %v2754 = vmul.f32 1.0, %v2753
  %v2755 = vrcp.pop %v2411
  %v2756 = vmul.f32 %v2411, %v2755
  %v2757 = vsub.f32 1.0, %v2756
  %v2758 = vmul.f32 %v2755, %v2757
  %v2759 = vadd.f32 %v2755, %v2758
  %vm2760 = vweird.f32 %v2411
  %vm2761 = vweird.f32 %v2755
  %vm2762 = vmor %vm2760, %vm2761
  %v2763 = vsel %vm2762, %v2755, %v2759
  %v2764 = vand.u32 2147483647, %v2411
  %vm2765 = vcmp.eq.f32.partialorder %v2764, 8.507059e+37
  %v2766 = vand.u32 %v2411, 2147483648
  %v2767 = vor.u32 1.1754944e-38, %v2766
  %v2768 = vsel %vm2765, %v2767, %v2763
  %v2769 = vmul.f32 1.0, %v2768
  %v2770 = vrcp.pop %v2412
  %v2771 = vmul.f32 %v2412, %v2770
  %v2772 = vsub.f32 1.0, %v2771
  %v2773 = vmul.f32 %v2770, %v2772
  %v2774 = vadd.f32 %v2770, %v2773
  %vm2775 = vweird.f32 %v2412
  %vm2776 = vweird.f32 %v2770
  %vm2777 = vmor %vm2775, %vm2776
  %v2778 = vsel %vm2777, %v2770, %v2774
  %v2779 = vand.u32 2147483647, %v2412
  %vm2780 = vcmp.eq.f32.partialorder %v2779, 8.507059e+37
  %v2781 = vand.u32 %v2412, 2147483648
  %v2782 = vor.u32 1.1754944e-38, %v2781
  %v2783 = vsel %vm2780, %v2782, %v2778
  %v2784 = vmul.f32 1.0, %v2783
  %v2785 = vrcp.pop %v2413
  %v2786 = vmul.f32 %v2413, %v2785
  %v2787 = vsub.f32 1.0, %v2786
  %v2788 = vmul.f32 %v2785, %v2787
  %v2789 = vadd.f32 %v2785, %v2788
  %vm2790 = vweird.f32 %v2413
  %vm2791 = vweird.f32 %v2785
  %vm2792 = vmor %vm2790, %vm2791
  %v2793 = vsel %vm2792, %v2785, %v2789
  %v2794 = vand.u32 2147483647, %v2413
  %vm2795 = vcmp.eq.f32.partialorder %v2794, 8.507059e+37
  %v2796 = vand.u32 %v2413, 2147483648
  %v2797 = vor.u32 1.1754944e-38, %v2796
  %v2798 = vsel %vm2795, %v2797, %v2793
  %v2799 = vmul.f32 1.0, %v2798
  %v2800 = vrcp.pop %v2414
  %v2801 = vmul.f32 %v2414, %v2800
  %v2802 = vsub.f32 1.0, %v2801
  %v2803 = vmul.f32 %v2800, %v2802
  %v2804 = vadd.f32 %v2800, %v2803
  %vm2805 = vweird.f32 %v2414
  %vm2806 = vweird.f32 %v2800
  %vm2807 = vmor %vm2805, %vm2806
  %v2808 = vsel %vm2807, %v2800, %v2804
  %v2809 = vand.u32 2147483647, %v2414
  %vm2810 = vcmp.eq.f32.partialorder %v2809, 8.507059e+37
  %v2811 = vand.u32 %v2414, 2147483648
  %v2812 = vor.u32 1.1754944e-38, %v2811
  %v2813 = vsel %vm2810, %v2812, %v2808
  %v2814 = vmul.f32 1.0, %v2813
  %v2815 = vrcp.pop %v2415
  %v2816 = vmul.f32 %v2415, %v2815
  %v2817 = vsub.f32 1.0, %v2816
  %v2818 = vmul.f32 %v2815, %v2817
  %v2819 = vadd.f32 %v2815, %v2818
  %vm2820 = vweird.f32 %v2415
  %vm2821 = vweird.f32 %v2815
  %vm2822 = vmor %vm2820, %vm2821
  %v2823 = vsel %vm2822, %v2815, %v2819
  %v2824 = vand.u32 2147483647, %v2415
  %vm2825 = vcmp.eq.f32.partialorder %v2824, 8.507059e+37
  %v2826 = vand.u32 %v2415, 2147483648
  %v2827 = vor.u32 1.1754944e-38, %v2826
  %v2828 = vsel %vm2825, %v2827, %v2823
  %v2829 = vmul.f32 1.0, %v2828
  %v2830 = vrcp.pop %v2416
  %v2831 = vmul.f32 %v2416, %v2830
  %v2832 = vsub.f32 1.0, %v2831
  %v2833 = vmul.f32 %v2830, %v2832
  %v2834 = vadd.f32 %v2830, %v2833
  %vm2835 = vweird.f32 %v2416
  %vm2836 = vweird.f32 %v2830
  %vm2837 = vmor %vm2835, %vm2836
  %v2838 = vsel %vm2837, %v2830, %v2834
  %v2839 = vand.u32 2147483647, %v2416
  %vm2840 = vcmp.eq.f32.partialorder %v2839, 8.507059e+37
  %v2841 = vand.u32 %v2416, 2147483648
  %v2842 = vor.u32 1.1754944e-38, %v2841
  %v2843 = vsel %vm2840, %v2842, %v2838
  %v2844 = vmul.f32 1.0, %v2843
  %v2845 = vrcp.pop %v2417
  %v2846 = vmul.f32 %v2417, %v2845
  %v2847 = vsub.f32 1.0, %v2846
  %v2848 = vmul.f32 %v2845, %v2847
  %v2849 = vadd.f32 %v2845, %v2848
  %vm2850 = vweird.f32 %v2417
  %vm2851 = vweird.f32 %v2845
  %vm2852 = vmor %vm2850, %vm2851
  %v2853 = vsel %vm2852, %v2845, %v2849
  %v2854 = vand.u32 2147483647, %v2417
  %vm2855 = vcmp.eq.f32.partialorder %v2854, 8.507059e+37
  %v2856 = vand.u32 %v2417, 2147483648
  %v2857 = vor.u32 1.1754944e-38, %v2856
  %v2858 = vsel %vm2855, %v2857, %v2853
  %v2859 = vmul.f32 1.0, %v2858
  %v2860 = vrcp.pop %v2418
  %v2861 = vmul.f32 %v2418, %v2860
  %v2862 = vsub.f32 1.0, %v2861
  %v2863 = vmul.f32 %v2860, %v2862
  %v2864 = vadd.f32 %v2860, %v2863
  %vm2865 = vweird.f32 %v2418
  %vm2866 = vweird.f32 %v2860
  %vm2867 = vmor %vm2865, %vm2866
  %v2868 = vsel %vm2867, %v2860, %v2864
  %v2869 = vand.u32 2147483647, %v2418
  %vm2870 = vcmp.eq.f32.partialorder %v2869, 8.507059e+37
  %v2871 = vand.u32 %v2418, 2147483648
  %v2872 = vor.u32 1.1754944e-38, %v2871
  %v2873 = vsel %vm2870, %v2872, %v2868
  %v2874 = vmul.f32 1.0, %v2873
  %v2875 = vrcp.pop %v2419
  %v2876 = vmul.f32 %v2419, %v2875
  %v2877 = vsub.f32 1.0, %v2876
  %v2878 = vmul.f32 %v2875, %v2877
  %v2879 = vadd.f32 %v2875, %v2878
  %vm2880 = vweird.f32 %v2419
  %vm2881 = vweird.f32 %v2875
  %vm2882 = vmor %vm2880, %vm2881
  %v2883 = vsel %vm2882, %v2875, %v2879
  %v2884 = vand.u32 2147483647, %v2419
  %vm2885 = vcmp.eq.f32.partialorder %v2884, 8.507059e+37
  %v2886 = vand.u32 %v2419, 2147483648
  %v2887 = vor.u32 1.1754944e-38, %v2886
  %v2888 = vsel %vm2885, %v2887, %v2883
  %v2889 = vmul.f32 1.0, %v2888
  %v2890 = vrcp.pop %v2420
  %v2891 = vmul.f32 %v2420, %v2890
  %v2892 = vsub.f32 1.0, %v2891
  %v2893 = vmul.f32 %v2890, %v2892
  %v2894 = vadd.f32 %v2890, %v2893
  %vm2895 = vweird.f32 %v2420
  %vm2896 = vweird.f32 %v2890
  %vm2897 = vmor %vm2895, %vm2896
  %v2898 = vsel %vm2897, %v2890, %v2894
  %v2899 = vand.u32 2147483647, %v2420
  %vm2900 = vcmp.eq.f32.partialorder %v2899, 8.507059e+37
  %v2901 = vand.u32 %v2420, 2147483648
  %v2902 = vor.u32 1.1754944e-38, %v2901
  %v2903 = vsel %vm2900, %v2902, %v2898
  %v2904 = vmul.f32 1.0, %v2903
  %v2905 = vrcp.pop %v2421
  %v2906 = vmul.f32 %v2421, %v2905
  %v2907 = vsub.f32 1.0, %v2906
  %v2908 = vmul.f32 %v2905, %v2907
  %v2909 = vadd.f32 %v2905, %v2908
  %vm2910 = vweird.f32 %v2421
  %vm2911 = vweird.f32 %v2905
  %vm2912 = vmor %vm2910, %vm2911
  %v2913 = vsel %vm2912, %v2905, %v2909
  %v2914 = vand.u32 2147483647, %v2421
  %vm2915 = vcmp.eq.f32.partialorder %v2914, 8.507059e+37
  %v2916 = vand.u32 %v2421, 2147483648
  %v2917 = vor.u32 1.1754944e-38, %v2916
  %v2918 = vsel %vm2915, %v2917, %v2913
  %v2919 = vmul.f32 1.0, %v2918
  %v2920 = vrcp.pop %v2422
  %v2921 = vmul.f32 %v2422, %v2920
  %v2922 = vsub.f32 1.0, %v2921
  %v2923 = vmul.f32 %v2920, %v2922
  %v2924 = vadd.f32 %v2920, %v2923
  %vm2925 = vweird.f32 %v2422
  %vm2926 = vweird.f32 %v2920
  %vm2927 = vmor %vm2925, %vm2926
  %v2928 = vsel %vm2927, %v2920, %v2924
  %v2929 = vand.u32 2147483647, %v2422
  %vm2930 = vcmp.eq.f32.partialorder %v2929, 8.507059e+37
  %v2931 = vand.u32 %v2422, 2147483648
  %v2932 = vor.u32 1.1754944e-38, %v2931
  %v2933 = vsel %vm2930, %v2932, %v2928
  %v2934 = vmul.f32 1.0, %v2933
  %v2935 = vrcp.pop %v2423
  %v2936 = vmul.f32 %v2423, %v2935
  %v2937 = vsub.f32 1.0, %v2936
  %v2938 = vmul.f32 %v2935, %v2937
  %v2939 = vadd.f32 %v2935, %v2938
  %vm2940 = vweird.f32 %v2423
  %vm2941 = vweird.f32 %v2935
  %vm2942 = vmor %vm2940, %vm2941
  %v2943 = vsel %vm2942, %v2935, %v2939
  %v2944 = vand.u32 2147483647, %v2423
  %vm2945 = vcmp.eq.f32.partialorder %v2944, 8.507059e+37
  %v2946 = vand.u32 %v2423, 2147483648
  %v2947 = vor.u32 1.1754944e-38, %v2946
  %v2948 = vsel %vm2945, %v2947, %v2943
  %v2949 = vmul.f32 1.0, %v2948
  %v2950 = vrcp.pop %v2424
  %v2951 = vmul.f32 %v2424, %v2950
  %v2952 = vsub.f32 1.0, %v2951
  %v2953 = vmul.f32 %v2950, %v2952
  %v2954 = vadd.f32 %v2950, %v2953
  %vm2955 = vweird.f32 %v2424
  %vm2956 = vweird.f32 %v2950
  %vm2957 = vmor %vm2955, %vm2956
  %v2958 = vsel %vm2957, %v2950, %v2954
  %v2959 = vand.u32 2147483647, %v2424
  %vm2960 = vcmp.eq.f32.partialorder %v2959, 8.507059e+37
  %v2961 = vand.u32 %v2424, 2147483648
  %v2962 = vor.u32 1.1754944e-38, %v2961
  %v2963 = vsel %vm2960, %v2962, %v2958
  %v2964 = vmul.f32 1.0, %v2963
  %v2965 = vrcp.pop %v2425
  %v2966 = vmul.f32 %v2425, %v2965
  %v2967 = vsub.f32 1.0, %v2966
  %v2968 = vmul.f32 %v2965, %v2967
  %v2969 = vadd.f32 %v2965, %v2968
  %vm2970 = vweird.f32 %v2425
  %vm2971 = vweird.f32 %v2965
  %vm2972 = vmor %vm2970, %vm2971
  %v2973 = vsel %vm2972, %v2965, %v2969
  %v2974 = vand.u32 2147483647, %v2425
  %vm2975 = vcmp.eq.f32.partialorder %v2974, 8.507059e+37
  %v2976 = vand.u32 %v2425, 2147483648
  %v2977 = vor.u32 1.1754944e-38, %v2976
  %v2978 = vsel %vm2975, %v2977, %v2973
  %v2979 = vmul.f32 1.0, %v2978
  %v2980 = vrcp.pop %v2426
  %v2981 = vmul.f32 %v2426, %v2980
  %v2982 = vsub.f32 1.0, %v2981
  %v2983 = vmul.f32 %v2980, %v2982
  %v2984 = vadd.f32 %v2980, %v2983
  %vm2985 = vweird.f32 %v2426
  %vm2986 = vweird.f32 %v2980
  %vm2987 = vmor %vm2985, %vm2986
  %v2988 = vsel %vm2987, %v2980, %v2984
  %v2989 = vand.u32 2147483647, %v2426
  %vm2990 = vcmp.eq.f32.partialorder %v2989, 8.507059e+37
  %v2991 = vand.u32 %v2426, 2147483648
  %v2992 = vor.u32 1.1754944e-38, %v2991
  %v2993 = vsel %vm2990, %v2992, %v2988
  %v2994 = vmul.f32 1.0, %v2993
  %v2995 = vrcp.pop %v2427
  %v2996 = vmul.f32 %v2427, %v2995
  %v2997 = vsub.f32 1.0, %v2996
  %v2998 = vmul.f32 %v2995, %v2997
  %v2999 = vadd.f32 %v2995, %v2998
  %vm3000 = vweird.f32 %v2427
  %vm3001 = vweird.f32 %v2995
  %vm3002 = vmor %vm3000, %vm3001
  %v3003 = vsel %vm3002, %v2995, %v2999
  %v3004 = vand.u32 2147483647, %v2427
  %vm3005 = vcmp.eq.f32.partialorder %v3004, 8.507059e+37
  %v3006 = vand.u32 %v2427, 2147483648
  %v3007 = vor.u32 1.1754944e-38, %v3006
  %v3008 = vsel %vm3005, %v3007, %v3003
  %v3009 = vmul.f32 1.0, %v3008
  %v3010 = vrcp.pop %v2428
  %v3011 = vmul.f32 %v2428, %v3010
  %v3012 = vsub.f32 1.0, %v3011
  %v3013 = vmul.f32 %v3010, %v3012
  %v3014 = vadd.f32 %v3010, %v3013
  %vm3015 = vweird.f32 %v2428
  %vm3016 = vweird.f32 %v3010
  %vm3017 = vmor %vm3015, %vm3016
  %v3018 = vsel %vm3017, %v3010, %v3014
  %v3019 = vand.u32 2147483647, %v2428
  %vm3020 = vcmp.eq.f32.partialorder %v3019, 8.507059e+37
  %v3021 = vand.u32 %v2428, 2147483648
  %v3022 = vor.u32 1.1754944e-38, %v3021
  %v3023 = vsel %vm3020, %v3022, %v3018
  %v3024 = vmul.f32 1.0, %v3023
  %v3025 = vrcp.pop %v2429
  %v3026 = vmul.f32 %v2429, %v3025
  %v3027 = vsub.f32 1.0, %v3026
  %v3028 = vmul.f32 %v3025, %v3027
  %v3029 = vadd.f32 %v3025, %v3028
  %vm3030 = vweird.f32 %v2429
  %vm3031 = vweird.f32 %v3025
  %vm3032 = vmor %vm3030, %vm3031
  %v3033 = vsel %vm3032, %v3025, %v3029
  %v3034 = vand.u32 2147483647, %v2429
  %vm3035 = vcmp.eq.f32.partialorder %v3034, 8.507059e+37
  %v3036 = vand.u32 %v2429, 2147483648
  %v3037 = vor.u32 1.1754944e-38, %v3036
  %v3038 = vsel %vm3035, %v3037, %v3033
  %v3039 = vmul.f32 1.0, %v3038
  %v3040 = vrcp.pop %v2430
  %v3041 = vmul.f32 %v2430, %v3040
  %v3042 = vsub.f32 1.0, %v3041
  %v3043 = vmul.f32 %v3040, %v3042
  %v3044 = vadd.f32 %v3040, %v3043
  %vm3045 = vweird.f32 %v2430
  %vm3046 = vweird.f32 %v3040
  %vm3047 = vmor %vm3045, %vm3046
  %v3048 = vsel %vm3047, %v3040, %v3044
  %v3049 = vand.u32 2147483647, %v2430
  %vm3050 = vcmp.eq.f32.partialorder %v3049, 8.507059e+37
  %v3051 = vand.u32 %v2430, 2147483648
  %v3052 = vor.u32 1.1754944e-38, %v3051
  %v3053 = vsel %vm3050, %v3052, %v3048
  %v3054 = vmul.f32 1.0, %v3053
  %v3055 = vrcp.pop %v2431
  %v3056 = vmul.f32 %v2431, %v3055
  %v3057 = vsub.f32 1.0, %v3056
  %v3058 = vmul.f32 %v3055, %v3057
  %v3059 = vadd.f32 %v3055, %v3058
  %vm3060 = vweird.f32 %v2431
  %vm3061 = vweird.f32 %v3055
  %vm3062 = vmor %vm3060, %vm3061
  %v3063 = vsel %vm3062, %v3055, %v3059
  %v3064 = vand.u32 2147483647, %v2431
  %vm3065 = vcmp.eq.f32.partialorder %v3064, 8.507059e+37
  %v3066 = vand.u32 %v2431, 2147483648
  %v3067 = vor.u32 1.1754944e-38, %v3066
  %v3068 = vsel %vm3065, %v3067, %v3063
  %v3069 = vmul.f32 1.0, %v3068
  %v3070 = vrcp.pop %v2432
  %v3071 = vmul.f32 %v2432, %v3070
  %v3072 = vsub.f32 1.0, %v3071
  %v3073 = vmul.f32 %v3070, %v3072
  %v3074 = vadd.f32 %v3070, %v3073
  %vm3075 = vweird.f32 %v2432
  %vm3076 = vweird.f32 %v3070
  %vm3077 = vmor %vm3075, %vm3076
  %v3078 = vsel %vm3077, %v3070, %v3074
  %v3079 = vand.u32 2147483647, %v2432
  %vm3080 = vcmp.eq.f32.partialorder %v3079, 8.507059e+37
  %v3081 = vand.u32 %v2432, 2147483648
  %v3082 = vor.u32 1.1754944e-38, %v3081
  %v3083 = vsel %vm3080, %v3082, %v3078
  %v3084 = vmul.f32 1.0, %v3083
  %v3085 = vrcp.pop %v2433
  %v3086 = vmul.f32 %v2433, %v3085
  %v3087 = vsub.f32 1.0, %v3086
  %v3088 = vmul.f32 %v3085, %v3087
  %v3089 = vadd.f32 %v3085, %v3088
  %vm3090 = vweird.f32 %v2433
  %vm3091 = vweird.f32 %v3085
  %vm3092 = vmor %vm3090, %vm3091
  %v3093 = vsel %vm3092, %v3085, %v3089
  %v3094 = vand.u32 2147483647, %v2433
  %vm3095 = vcmp.eq.f32.partialorder %v3094, 8.507059e+37
  %v3096 = vand.u32 %v2433, 2147483648
  %v3097 = vor.u32 1.1754944e-38, %v3096
  %v3098 = vsel %vm3095, %v3097, %v3093
  %v3099 = vmul.f32 1.0, %v3098
  %v3100 = vrcp.pop %v2434
  %v3101 = vmul.f32 %v2434, %v3100
  %v3102 = vsub.f32 1.0, %v3101
  %v3103 = vmul.f32 %v3100, %v3102
  %v3104 = vadd.f32 %v3100, %v3103
  %vm3105 = vweird.f32 %v2434
  %vm3106 = vweird.f32 %v3100
  %vm3107 = vmor %vm3105, %vm3106
  %v3108 = vsel %vm3107, %v3100, %v3104
  %v3109 = vand.u32 2147483647, %v2434
  %vm3110 = vcmp.eq.f32.partialorder %v3109, 8.507059e+37
  %v3111 = vand.u32 %v2434, 2147483648
  %v3112 = vor.u32 1.1754944e-38, %v3111
  %v3113 = vsel %vm3110, %v3112, %v3108
  %v3114 = vmul.f32 1.0, %v3113
  %v3115 = vrcp.pop %v2435
  %v3116 = vmul.f32 %v2435, %v3115
  %v3117 = vsub.f32 1.0, %v3116
  %v3118 = vmul.f32 %v3115, %v3117
  %v3119 = vadd.f32 %v3115, %v3118
  %vm3120 = vweird.f32 %v2435
  %vm3121 = vweird.f32 %v3115
  %vm3122 = vmor %vm3120, %vm3121
  %v3123 = vsel %vm3122, %v3115, %v3119
  %v3124 = vand.u32 2147483647, %v2435
  %vm3125 = vcmp.eq.f32.partialorder %v3124, 8.507059e+37
  %v3126 = vand.u32 %v2435, 2147483648
  %v3127 = vor.u32 1.1754944e-38, %v3126
  %v3128 = vsel %vm3125, %v3127, %v3123
  %v3129 = vmul.f32 1.0, %v3128
  %v3130 = vrcp.pop %v2436
  %v3131 = vmul.f32 %v2436, %v3130
  %v3132 = vsub.f32 1.0, %v3131
  %v3133 = vmul.f32 %v3130, %v3132
  %v3134 = vadd.f32 %v3130, %v3133
  %vm3135 = vweird.f32 %v2436
  %vm3136 = vweird.f32 %v3130
  %vm3137 = vmor %vm3135, %vm3136
  %v3138 = vsel %vm3137, %v3130, %v3134
  %v3139 = vand.u32 2147483647, %v2436
  %vm3140 = vcmp.eq.f32.partialorder %v3139, 8.507059e+37
  %v3141 = vand.u32 %v2436, 2147483648
  %v3142 = vor.u32 1.1754944e-38, %v3141
  %v3143 = vsel %vm3140, %v3142, %v3138
  %v3144 = vmul.f32 1.0, %v3143
  %v3145 = vrcp.pop %v2437
  %v3146 = vmul.f32 %v2437, %v3145
  %v3147 = vsub.f32 1.0, %v3146
  %v3148 = vmul.f32 %v3145, %v3147
  %v3149 = vadd.f32 %v3145, %v3148
  %vm3150 = vweird.f32 %v2437
  %vm3151 = vweird.f32 %v3145
  %vm3152 = vmor %vm3150, %vm3151
  %v3153 = vsel %vm3152, %v3145, %v3149
  %v3154 = vand.u32 2147483647, %v2437
  %vm3155 = vcmp.eq.f32.partialorder %v3154, 8.507059e+37
  %v3156 = vand.u32 %v2437, 2147483648
  %v3157 = vor.u32 1.1754944e-38, %v3156
  %v3158 = vsel %vm3155, %v3157, %v3153
  %v3159 = vmul.f32 1.0, %v3158
  %v3160 = vrcp.pop %v2438
  %v3161 = vmul.f32 %v2438, %v3160
  %v3162 = vsub.f32 1.0, %v3161
  %v3163 = vmul.f32 %v3160, %v3162
  %v3164 = vadd.f32 %v3160, %v3163
  %vm3165 = vweird.f32 %v2438
  %vm3166 = vweird.f32 %v3160
  %vm3167 = vmor %vm3165, %vm3166
  %v3168 = vsel %vm3167, %v3160, %v3164
  %v3169 = vand.u32 2147483647, %v2438
  %vm3170 = vcmp.eq.f32.partialorder %v3169, 8.507059e+37
  %v3171 = vand.u32 %v2438, 2147483648
  %v3172 = vor.u32 1.1754944e-38, %v3171
  %v3173 = vsel %vm3170, %v3172, %v3168
  %v3174 = vmul.f32 1.0, %v3173
  %v3175 = vrcp.pop %v2439
  %v3176 = vmul.f32 %v2439, %v3175
  %v3177 = vsub.f32 1.0, %v3176
  %v3178 = vmul.f32 %v3175, %v3177
  %v3179 = vadd.f32 %v3175, %v3178
  %vm3180 = vweird.f32 %v2439
  %vm3181 = vweird.f32 %v3175
  %vm3182 = vmor %vm3180, %vm3181
  %v3183 = vsel %vm3182, %v3175, %v3179
  %v3184 = vand.u32 2147483647, %v2439
  %vm3185 = vcmp.eq.f32.partialorder %v3184, 8.507059e+37
  %v3186 = vand.u32 %v2439, 2147483648
  %v3187 = vor.u32 1.1754944e-38, %v3186
  %v3188 = vsel %vm3185, %v3187, %v3183
  %v3189 = vmul.f32 1.0, %v3188
  %v3190 = vrcp.pop %v2440
  %v3191 = vmul.f32 %v2440, %v3190
  %v3192 = vsub.f32 1.0, %v3191
  %v3193 = vmul.f32 %v3190, %v3192
  %v3194 = vadd.f32 %v3190, %v3193
  %vm3195 = vweird.f32 %v2440
  %vm3196 = vweird.f32 %v3190
  %vm3197 = vmor %vm3195, %vm3196
  %v3198 = vsel %vm3197, %v3190, %v3194
  %v3199 = vand.u32 2147483647, %v2440
  %vm3200 = vcmp.eq.f32.partialorder %v3199, 8.507059e+37
  %v3201 = vand.u32 %v2440, 2147483648
  %v3202 = vor.u32 1.1754944e-38, %v3201
  %v3203 = vsel %vm3200, %v3202, %v3198
  %v3204 = vmul.f32 1.0, %v3203
  %v3205 = vrcp.pop %v2441
  %v3206 = vmul.f32 %v2441, %v3205
  %v3207 = vsub.f32 1.0, %v3206
  %v3208 = vmul.f32 %v3205, %v3207
  %v3209 = vadd.f32 %v3205, %v3208
  %vm3210 = vweird.f32 %v2441
  %vm3211 = vweird.f32 %v3205
  %vm3212 = vmor %vm3210, %vm3211
  %v3213 = vsel %vm3212, %v3205, %v3209
  %v3214 = vand.u32 2147483647, %v2441
  %vm3215 = vcmp.eq.f32.partialorder %v3214, 8.507059e+37
  %v3216 = vand.u32 %v2441, 2147483648
  %v3217 = vor.u32 1.1754944e-38, %v3216
  %v3218 = vsel %vm3215, %v3217, %v3213
  %v3219 = vmul.f32 1.0, %v3218
  %v3220 = vrcp.pop %v2442
  %v3221 = vmul.f32 %v2442, %v3220
  %v3222 = vsub.f32 1.0, %v3221
  %v3223 = vmul.f32 %v3220, %v3222
  %v3224 = vadd.f32 %v3220, %v3223
  %vm3225 = vweird.f32 %v2442
  %vm3226 = vweird.f32 %v3220
  %vm3227 = vmor %vm3225, %vm3226
  %v3228 = vsel %vm3227, %v3220, %v3224
  %v3229 = vand.u32 2147483647, %v2442
  %vm3230 = vcmp.eq.f32.partialorder %v3229, 8.507059e+37
  %v3231 = vand.u32 %v2442, 2147483648
  %v3232 = vor.u32 1.1754944e-38, %v3231
  %v3233 = vsel %vm3230, %v3232, %v3228
  %v3234 = vmul.f32 1.0, %v3233
  %v3235 = vrcp.pop %v2443
  %v3236 = vmul.f32 %v2443, %v3235
  %v3237 = vsub.f32 1.0, %v3236
  %v3238 = vmul.f32 %v3235, %v3237
  %v3239 = vadd.f32 %v3235, %v3238
  %vm3240 = vweird.f32 %v2443
  %vm3241 = vweird.f32 %v3235
  %vm3242 = vmor %vm3240, %vm3241
  %v3243 = vsel %vm3242, %v3235, %v3239
  %v3244 = vand.u32 2147483647, %v2443
  %vm3245 = vcmp.eq.f32.partialorder %v3244, 8.507059e+37
  %v3246 = vand.u32 %v2443, 2147483648
  %v3247 = vor.u32 1.1754944e-38, %v3246
  %v3248 = vsel %vm3245, %v3247, %v3243
  %v3249 = vmul.f32 1.0, %v3248
  %v3250 = vrcp.pop %v2444
  %v3251 = vmul.f32 %v2444, %v3250
  %v3252 = vsub.f32 1.0, %v3251
  %v3253 = vmul.f32 %v3250, %v3252
  %v3254 = vadd.f32 %v3250, %v3253
  %vm3255 = vweird.f32 %v2444
  %vm3256 = vweird.f32 %v3250
  %vm3257 = vmor %vm3255, %vm3256
  %v3258 = vsel %vm3257, %v3250, %v3254
  %v3259 = vand.u32 2147483647, %v2444
  %vm3260 = vcmp.eq.f32.partialorder %v3259, 8.507059e+37
  %v3261 = vand.u32 %v2444, 2147483648
  %v3262 = vor.u32 1.1754944e-38, %v3261
  %v3263 = vsel %vm3260, %v3262, %v3258
  %v3264 = vmul.f32 1.0, %v3263
  %v3265 = vrcp.pop %v2445
  %v3266 = vmul.f32 %v2445, %v3265
  %v3267 = vsub.f32 1.0, %v3266
  %v3268 = vmul.f32 %v3265, %v3267
  %v3269 = vadd.f32 %v3265, %v3268
  %vm3270 = vweird.f32 %v2445
  %vm3271 = vweird.f32 %v3265
  %vm3272 = vmor %vm3270, %vm3271
  %v3273 = vsel %vm3272, %v3265, %v3269
  %v3274 = vand.u32 2147483647, %v2445
  %vm3275 = vcmp.eq.f32.partialorder %v3274, 8.507059e+37
  %v3276 = vand.u32 %v2445, 2147483648
  %v3277 = vor.u32 1.1754944e-38, %v3276
  %v3278 = vsel %vm3275, %v3277, %v3273
  %v3279 = vmul.f32 1.0, %v3278
  %v3280 = vrcp.pop %v2446
  %v3281 = vmul.f32 %v2446, %v3280
  %v3282 = vsub.f32 1.0, %v3281
  %v3283 = vmul.f32 %v3280, %v3282
  %v3284 = vadd.f32 %v3280, %v3283
  %vm3285 = vweird.f32 %v2446
  %vm3286 = vweird.f32 %v3280
  %vm3287 = vmor %vm3285, %vm3286
  %v3288 = vsel %vm3287, %v3280, %v3284
  %v3289 = vand.u32 2147483647, %v2446
  %vm3290 = vcmp.eq.f32.partialorder %v3289, 8.507059e+37
  %v3291 = vand.u32 %v2446, 2147483648
  %v3292 = vor.u32 1.1754944e-38, %v3291
  %v3293 = vsel %vm3290, %v3292, %v3288
  %v3294 = vmul.f32 1.0, %v3293
  %v3295 = vrcp.pop %v2447
  %v3296 = vmul.f32 %v2447, %v3295
  %v3297 = vsub.f32 1.0, %v3296
  %v3298 = vmul.f32 %v3295, %v3297
  %v3299 = vadd.f32 %v3295, %v3298
  %vm3300 = vweird.f32 %v2447
  %vm3301 = vweird.f32 %v3295
  %vm3302 = vmor %vm3300, %vm3301
  %v3303 = vsel %vm3302, %v3295, %v3299
  %v3304 = vand.u32 2147483647, %v2447
  %vm3305 = vcmp.eq.f32.partialorder %v3304, 8.507059e+37
  %v3306 = vand.u32 %v2447, 2147483648
  %v3307 = vor.u32 1.1754944e-38, %v3306
  %v3308 = vsel %vm3305, %v3307, %v3303
  %v3309 = vmul.f32 1.0, %v3308
  %v3310 = vrcp.pop %v2448
  %v3311 = vmul.f32 %v2448, %v3310
  %v3312 = vsub.f32 1.0, %v3311
  %v3313 = vmul.f32 %v3310, %v3312
  %v3314 = vadd.f32 %v3310, %v3313
  %vm3315 = vweird.f32 %v2448
  %vm3316 = vweird.f32 %v3310
  %vm3317 = vmor %vm3315, %vm3316
  %v3318 = vsel %vm3317, %v3310, %v3314
  %v3319 = vand.u32 2147483647, %v2448
  %vm3320 = vcmp.eq.f32.partialorder %v3319, 8.507059e+37
  %v3321 = vand.u32 %v2448, 2147483648
  %v3322 = vor.u32 1.1754944e-38, %v3321
  %v3323 = vsel %vm3320, %v3322, %v3318
  %v3324 = vmul.f32 1.0, %v3323
  %v3325 = vrcp.pop %v2449
  %v3326 = vmul.f32 %v2449, %v3325
  %v3327 = vsub.f32 1.0, %v3326
  %v3328 = vmul.f32 %v3325, %v3327
  %v3329 = vadd.f32 %v3325, %v3328
  %vm3330 = vweird.f32 %v2449
  %vm3331 = vweird.f32 %v3325
  %vm3332 = vmor %vm3330, %vm3331
  %v3333 = vsel %vm3332, %v3325, %v3329
  %v3334 = vand.u32 2147483647, %v2449
  %vm3335 = vcmp.eq.f32.partialorder %v3334, 8.507059e+37
  %v3336 = vand.u32 %v2449, 2147483648
  %v3337 = vor.u32 1.1754944e-38, %v3336
  %v3338 = vsel %vm3335, %v3337, %v3333
  %v3339 = vmul.f32 1.0, %v3338
  %v3340 = vrcp.pop %v2450
  %v3341 = vmul.f32 %v2450, %v3340
  %v3342 = vsub.f32 1.0, %v3341
  %v3343 = vmul.f32 %v3340, %v3342
  %v3344 = vadd.f32 %v3340, %v3343
  %vm3345 = vweird.f32 %v2450
  %vm3346 = vweird.f32 %v3340
  %vm3347 = vmor %vm3345, %vm3346
  %v3348 = vsel %vm3347, %v3340, %v3344
  %v3349 = vand.u32 2147483647, %v2450
  %vm3350 = vcmp.eq.f32.partialorder %v3349, 8.507059e+37
  %v3351 = vand.u32 %v2450, 2147483648
  %v3352 = vor.u32 1.1754944e-38, %v3351
  %v3353 = vsel %vm3350, %v3352, %v3348
  %v3354 = vmul.f32 1.0, %v3353
  %v3355 = vrcp.pop %v2451
  %v3356 = vmul.f32 %v2451, %v3355
  %v3357 = vsub.f32 1.0, %v3356
  %v3358 = vmul.f32 %v3355, %v3357
  %v3359 = vadd.f32 %v3355, %v3358
  %vm3360 = vweird.f32 %v2451
  %vm3361 = vweird.f32 %v3355
  %vm3362 = vmor %vm3360, %vm3361
  %v3363 = vsel %vm3362, %v3355, %v3359
  %v3364 = vand.u32 2147483647, %v2451
  %vm3365 = vcmp.eq.f32.partialorder %v3364, 8.507059e+37
  %v3366 = vand.u32 %v2451, 2147483648
  %v3367 = vor.u32 1.1754944e-38, %v3366
  %v3368 = vsel %vm3365, %v3367, %v3363
  %v3369 = vmul.f32 1.0, %v3368
  %v3370 = vrcp.pop %v2452
  %v3371 = vmul.f32 %v2452, %v3370
  %v3372 = vsub.f32 1.0, %v3371
  %v3373 = vmul.f32 %v3370, %v3372
  %v3374 = vadd.f32 %v3370, %v3373
  %vm3375 = vweird.f32 %v2452
  %vm3376 = vweird.f32 %v3370
  %vm3377 = vmor %vm3375, %vm3376
  %v3378 = vsel %vm3377, %v3370, %v3374
  %v3379 = vand.u32 2147483647, %v2452
  %vm3380 = vcmp.eq.f32.partialorder %v3379, 8.507059e+37
  %v3381 = vand.u32 %v2452, 2147483648
  %v3382 = vor.u32 1.1754944e-38, %v3381
  %v3383 = vsel %vm3380, %v3382, %v3378
  %v3384 = vmul.f32 1.0, %v3383
  %v3385 = vrcp.pop %v2453
  %v3386 = vmul.f32 %v2453, %v3385
  %v3387 = vsub.f32 1.0, %v3386
  %v3388 = vmul.f32 %v3385, %v3387
  %v3389 = vadd.f32 %v3385, %v3388
  %vm3390 = vweird.f32 %v2453
  %vm3391 = vweird.f32 %v3385
  %vm3392 = vmor %vm3390, %vm3391
  %v3393 = vsel %vm3392, %v3385, %v3389
  %v3394 = vand.u32 2147483647, %v2453
  %vm3395 = vcmp.eq.f32.partialorder %v3394, 8.507059e+37
  %v3396 = vand.u32 %v2453, 2147483648
  %v3397 = vor.u32 1.1754944e-38, %v3396
  %v3398 = vsel %vm3395, %v3397, %v3393
  %v3399 = vmul.f32 1.0, %v3398
  %v3400 = vrcp.pop %v2454
  %v3401 = vmul.f32 %v2454, %v3400
  %v3402 = vsub.f32 1.0, %v3401
  %v3403 = vmul.f32 %v3400, %v3402
  %v3404 = vadd.f32 %v3400, %v3403
  %vm3405 = vweird.f32 %v2454
  %vm3406 = vweird.f32 %v3400
  %vm3407 = vmor %vm3405, %vm3406
  %v3408 = vsel %vm3407, %v3400, %v3404
  %v3409 = vand.u32 2147483647, %v2454
  %vm3410 = vcmp.eq.f32.partialorder %v3409, 8.507059e+37
  %v3411 = vand.u32 %v2454, 2147483648
  %v3412 = vor.u32 1.1754944e-38, %v3411
  %v3413 = vsel %vm3410, %v3412, %v3408
  %v3414 = vmul.f32 1.0, %v3413
  %v3415 = vrcp.pop %v2455
  %v3416 = vmul.f32 %v2455, %v3415
  %v3417 = vsub.f32 1.0, %v3416
  %v3418 = vmul.f32 %v3415, %v3417
  %v3419 = vadd.f32 %v3415, %v3418
  %vm3420 = vweird.f32 %v2455
  %vm3421 = vweird.f32 %v3415
  %vm3422 = vmor %vm3420, %vm3421
  %v3423 = vsel %vm3422, %v3415, %v3419
  %v3424 = vand.u32 2147483647, %v2455
  %vm3425 = vcmp.eq.f32.partialorder %v3424, 8.507059e+37
  %v3426 = vand.u32 %v2455, 2147483648
  %v3427 = vor.u32 1.1754944e-38, %v3426
  %v3428 = vsel %vm3425, %v3427, %v3423
  %v3429 = vmul.f32 1.0, %v3428
  %v3430 = vrcp.pop %v2456
  %v3431 = vmul.f32 %v2456, %v3430
  %v3432 = vsub.f32 1.0, %v3431
  %v3433 = vmul.f32 %v3430, %v3432
  %v3434 = vadd.f32 %v3430, %v3433
  %vm3435 = vweird.f32 %v2456
  %vm3436 = vweird.f32 %v3430
  %vm3437 = vmor %vm3435, %vm3436
  %v3438 = vsel %vm3437, %v3430, %v3434
  %v3439 = vand.u32 2147483647, %v2456
  %vm3440 = vcmp.eq.f32.partialorder %v3439, 8.507059e+37
  %v3441 = vand.u32 %v2456, 2147483648
  %v3442 = vor.u32 1.1754944e-38, %v3441
  %v3443 = vsel %vm3440, %v3442, %v3438
  %v3444 = vmul.f32 1.0, %v3443
  %v3445 = vrcp.pop %v2457
  %v3446 = vmul.f32 %v2457, %v3445
  %v3447 = vsub.f32 1.0, %v3446
  %v3448 = vmul.f32 %v3445, %v3447
  %v3449 = vadd.f32 %v3445, %v3448
  %vm3450 = vweird.f32 %v2457
  %vm3451 = vweird.f32 %v3445
  %vm3452 = vmor %vm3450, %vm3451
  %v3453 = vsel %vm3452, %v3445, %v3449
  %v3454 = vand.u32 2147483647, %v2457
  %vm3455 = vcmp.eq.f32.partialorder %v3454, 8.507059e+37
  %v3456 = vand.u32 %v2457, 2147483648
  %v3457 = vor.u32 1.1754944e-38, %v3456
  %v3458 = vsel %vm3455, %v3457, %v3453
  %v3459 = vmul.f32 1.0, %v3458
  %v3460 = vrcp.pop %v2458
  %v3461 = vmul.f32 %v2458, %v3460
  %v3462 = vsub.f32 1.0, %v3461
  %v3463 = vmul.f32 %v3460, %v3462
  %v3464 = vadd.f32 %v3460, %v3463
  %vm3465 = vweird.f32 %v2458
  %vm3466 = vweird.f32 %v3460
  %vm3467 = vmor %vm3465, %vm3466
  %v3468 = vsel %vm3467, %v3460, %v3464
  %v3469 = vand.u32 2147483647, %v2458
  %vm3470 = vcmp.eq.f32.partialorder %v3469, 8.507059e+37
  %v3471 = vand.u32 %v2458, 2147483648
  %v3472 = vor.u32 1.1754944e-38, %v3471
  %v3473 = vsel %vm3470, %v3472, %v3468
  %v3474 = vmul.f32 1.0, %v3473
  %v3475 = vrcp.pop %v2459
  %v3476 = vmul.f32 %v2459, %v3475
  %v3477 = vsub.f32 1.0, %v3476
  %v3478 = vmul.f32 %v3475, %v3477
  %v3479 = vadd.f32 %v3475, %v3478
  %vm3480 = vweird.f32 %v2459
  %vm3481 = vweird.f32 %v3475
  %vm3482 = vmor %vm3480, %vm3481
  %v3483 = vsel %vm3482, %v3475, %v3479
  %v3484 = vand.u32 2147483647, %v2459
  %vm3485 = vcmp.eq.f32.partialorder %v3484, 8.507059e+37
  %v3486 = vand.u32 %v2459, 2147483648
  %v3487 = vor.u32 1.1754944e-38, %v3486
  %v3488 = vsel %vm3485, %v3487, %v3483
  %v3489 = vmul.f32 1.0, %v3488
  %v3490 = vrcp.pop %v2460
  %v3491 = vmul.f32 %v2460, %v3490
  %v3492 = vsub.f32 1.0, %v3491
  %v3493 = vmul.f32 %v3490, %v3492
  %v3494 = vadd.f32 %v3490, %v3493
  %vm3495 = vweird.f32 %v2460
  %vm3496 = vweird.f32 %v3490
  %vm3497 = vmor %vm3495, %vm3496
  %v3498 = vsel %vm3497, %v3490, %v3494
  %v3499 = vand.u32 2147483647, %v2460
  %vm3500 = vcmp.eq.f32.partialorder %v3499, 8.507059e+37
  %v3501 = vand.u32 %v2460, 2147483648
  %v3502 = vor.u32 1.1754944e-38, %v3501
  %v3503 = vsel %vm3500, %v3502, %v3498
  %v3504 = vmul.f32 1.0, %v3503
  %v3505 = vrcp.pop %v2461
  %v3506 = vmul.f32 %v2461, %v3505
  %v3507 = vsub.f32 1.0, %v3506
  %v3508 = vmul.f32 %v3505, %v3507
  %v3509 = vadd.f32 %v3505, %v3508
  %vm3510 = vweird.f32 %v2461
  %vm3511 = vweird.f32 %v3505
  %vm3512 = vmor %vm3510, %vm3511
  %v3513 = vsel %vm3512, %v3505, %v3509
  %v3514 = vand.u32 2147483647, %v2461
  %vm3515 = vcmp.eq.f32.partialorder %v3514, 8.507059e+37
  %v3516 = vand.u32 %v2461, 2147483648
  %v3517 = vor.u32 1.1754944e-38, %v3516
  %v3518 = vsel %vm3515, %v3517, %v3513
  %v3519 = vmul.f32 1.0, %v3518
  %v3520 = vrcp.pop %v2462
  %v3521 = vmul.f32 %v2462, %v3520
  %v3522 = vsub.f32 1.0, %v3521
  %v3523 = vmul.f32 %v3520, %v3522
  %v3524 = vadd.f32 %v3520, %v3523
  %vm3525 = vweird.f32 %v2462
  %vm3526 = vweird.f32 %v3520
  %vm3527 = vmor %vm3525, %vm3526
  %v3528 = vsel %vm3527, %v3520, %v3524
  %v3529 = vand.u32 2147483647, %v2462
  %vm3530 = vcmp.eq.f32.partialorder %v3529, 8.507059e+37
  %v3531 = vand.u32 %v2462, 2147483648
  %v3532 = vor.u32 1.1754944e-38, %v3531
  %v3533 = vsel %vm3530, %v3532, %v3528
  %v3534 = vmul.f32 1.0, %v3533
  %v3535 = vrcp.pop %v2463
  %v3536 = vmul.f32 %v2463, %v3535
  %v3537 = vsub.f32 1.0, %v3536
  %v3538 = vmul.f32 %v3535, %v3537
  %v3539 = vadd.f32 %v3535, %v3538
  %vm3540 = vweird.f32 %v2463
  %vm3541 = vweird.f32 %v3535
  %vm3542 = vmor %vm3540, %vm3541
  %v3543 = vsel %vm3542, %v3535, %v3539
  %v3544 = vand.u32 2147483647, %v2463
  %vm3545 = vcmp.eq.f32.partialorder %v3544, 8.507059e+37
  %v3546 = vand.u32 %v2463, 2147483648
  %v3547 = vor.u32 1.1754944e-38, %v3546
  %v3548 = vsel %vm3545, %v3547, %v3543
  %v3549 = vmul.f32 1.0, %v3548
  %v3550 = vrcp.pop %v2464
  %v3551 = vmul.f32 %v2464, %v3550
  %v3552 = vsub.f32 1.0, %v3551
  %v3553 = vmul.f32 %v3550, %v3552
  %v3554 = vadd.f32 %v3550, %v3553
  %vm3555 = vweird.f32 %v2464
  %vm3556 = vweird.f32 %v3550
  %vm3557 = vmor %vm3555, %vm3556
  %v3558 = vsel %vm3557, %v3550, %v3554
  %v3559 = vand.u32 2147483647, %v2464
  %vm3560 = vcmp.eq.f32.partialorder %v3559, 8.507059e+37
  %v3561 = vand.u32 %v2464, 2147483648
  %v3562 = vor.u32 1.1754944e-38, %v3561
  %v3563 = vsel %vm3560, %v3562, %v3558
  %v3564 = vmul.f32 1.0, %v3563
  %v3565 = vrcp.pop %v2465
  %v3566 = vmul.f32 %v2465, %v3565
  %v3567 = vsub.f32 1.0, %v3566
  %v3568 = vmul.f32 %v3565, %v3567
  %v3569 = vadd.f32 %v3565, %v3568
  %vm3570 = vweird.f32 %v2465
  %vm3571 = vweird.f32 %v3565
  %vm3572 = vmor %vm3570, %vm3571
  %v3573 = vsel %vm3572, %v3565, %v3569
  %v3574 = vand.u32 2147483647, %v2465
  %vm3575 = vcmp.eq.f32.partialorder %v3574, 8.507059e+37
  %v3576 = vand.u32 %v2465, 2147483648
  %v3577 = vor.u32 1.1754944e-38, %v3576
  %v3578 = vsel %vm3575, %v3577, %v3573
  %v3579 = vmul.f32 1.0, %v3578
  %v3580 = vrcp.pop %v2466
  %v3581 = vmul.f32 %v2466, %v3580
  %v3582 = vsub.f32 1.0, %v3581
  %v3583 = vmul.f32 %v3580, %v3582
  %v3584 = vadd.f32 %v3580, %v3583
  %vm3585 = vweird.f32 %v2466
  %vm3586 = vweird.f32 %v3580
  %vm3587 = vmor %vm3585, %vm3586
  %v3588 = vsel %vm3587, %v3580, %v3584
  %v3589 = vand.u32 2147483647, %v2466
  %vm3590 = vcmp.eq.f32.partialorder %v3589, 8.507059e+37
  %v3591 = vand.u32 %v2466, 2147483648
  %v3592 = vor.u32 1.1754944e-38, %v3591
  %v3593 = vsel %vm3590, %v3592, %v3588
  %v3594 = vmul.f32 1.0, %v3593
  %v3595 = vrcp.pop %v2467
  %v3596 = vmul.f32 %v2467, %v3595
  %v3597 = vsub.f32 1.0, %v3596
  %v3598 = vmul.f32 %v3595, %v3597
  %v3599 = vadd.f32 %v3595, %v3598
  %vm3600 = vweird.f32 %v2467
  %vm3601 = vweird.f32 %v3595
  %vm3602 = vmor %vm3600, %vm3601
  %v3603 = vsel %vm3602, %v3595, %v3599
  %v3604 = vand.u32 2147483647, %v2467
  %vm3605 = vcmp.eq.f32.partialorder %v3604, 8.507059e+37
  %v3606 = vand.u32 %v2467, 2147483648
  %v3607 = vor.u32 1.1754944e-38, %v3606
  %v3608 = vsel %vm3605, %v3607, %v3603
  %v3609 = vmul.f32 1.0, %v3608
  %v3610 = vrcp.pop %v2468
  %v3611 = vmul.f32 %v2468, %v3610
  %v3612 = vsub.f32 1.0, %v3611
  %v3613 = vmul.f32 %v3610, %v3612
  %v3614 = vadd.f32 %v3610, %v3613
  %vm3615 = vweird.f32 %v2468
  %vm3616 = vweird.f32 %v3610
  %vm3617 = vmor %vm3615, %vm3616
  %v3618 = vsel %vm3617, %v3610, %v3614
  %v3619 = vand.u32 2147483647, %v2468
  %vm3620 = vcmp.eq.f32.partialorder %v3619, 8.507059e+37
  %v3621 = vand.u32 %v2468, 2147483648
  %v3622 = vor.u32 1.1754944e-38, %v3621
  %v3623 = vsel %vm3620, %v3622, %v3618
  %v3624 = vmul.f32 1.0, %v3623
  %v3625 = vrcp.pop %v2469
  %v3626 = vmul.f32 %v2469, %v3625
  %v3627 = vsub.f32 1.0, %v3626
  %v3628 = vmul.f32 %v3625, %v3627
  %v3629 = vadd.f32 %v3625, %v3628
  %vm3630 = vweird.f32 %v2469
  %vm3631 = vweird.f32 %v3625
  %vm3632 = vmor %vm3630, %vm3631
  %v3633 = vsel %vm3632, %v3625, %v3629
  %v3634 = vand.u32 2147483647, %v2469
  %vm3635 = vcmp.eq.f32.partialorder %v3634, 8.507059e+37
  %v3636 = vand.u32 %v2469, 2147483648
  %v3637 = vor.u32 1.1754944e-38, %v3636
  %v3638 = vsel %vm3635, %v3637, %v3633
  %v3639 = vmul.f32 1.0, %v3638
  %v3640 = vrcp.pop %v2470
  %v3641 = vmul.f32 %v2470, %v3640
  %v3642 = vsub.f32 1.0, %v3641
  %v3643 = vmul.f32 %v3640, %v3642
  %v3644 = vadd.f32 %v3640, %v3643
  %vm3645 = vweird.f32 %v2470
  %vm3646 = vweird.f32 %v3640
  %vm3647 = vmor %vm3645, %vm3646
  %v3648 = vsel %vm3647, %v3640, %v3644
  %v3649 = vand.u32 2147483647, %v2470
  %vm3650 = vcmp.eq.f32.partialorder %v3649, 8.507059e+37
  %v3651 = vand.u32 %v2470, 2147483648
  %v3652 = vor.u32 1.1754944e-38, %v3651
  %v3653 = vsel %vm3650, %v3652, %v3648
  %v3654 = vmul.f32 1.0, %v3653
  %v3655 = vrcp.pop %v2471
  %v3656 = vmul.f32 %v2471, %v3655
  %v3657 = vsub.f32 1.0, %v3656
  %v3658 = vmul.f32 %v3655, %v3657
  %v3659 = vadd.f32 %v3655, %v3658
  %vm3660 = vweird.f32 %v2471
  %vm3661 = vweird.f32 %v3655
  %vm3662 = vmor %vm3660, %vm3661
  %v3663 = vsel %vm3662, %v3655, %v3659
  %v3664 = vand.u32 2147483647, %v2471
  %vm3665 = vcmp.eq.f32.partialorder %v3664, 8.507059e+37
  %v3666 = vand.u32 %v2471, 2147483648
  %v3667 = vor.u32 1.1754944e-38, %v3666
  %v3668 = vsel %vm3665, %v3667, %v3663
  %v3669 = vmul.f32 1.0, %v3668
  %v3670 = vrcp.pop %v2472
  %v3671 = vmul.f32 %v2472, %v3670
  %v3672 = vsub.f32 1.0, %v3671
  %v3673 = vmul.f32 %v3670, %v3672
  %v3674 = vadd.f32 %v3670, %v3673
  %vm3675 = vweird.f32 %v2472
  %vm3676 = vweird.f32 %v3670
  %vm3677 = vmor %vm3675, %vm3676
  %v3678 = vsel %vm3677, %v3670, %v3674
  %v3679 = vand.u32 2147483647, %v2472
  %vm3680 = vcmp.eq.f32.partialorder %v3679, 8.507059e+37
  %v3681 = vand.u32 %v2472, 2147483648
  %v3682 = vor.u32 1.1754944e-38, %v3681
  %v3683 = vsel %vm3680, %v3682, %v3678
  %v3684 = vmul.f32 1.0, %v3683
  %v3685 = vrcp.pop %v2473
  %v3686 = vmul.f32 %v2473, %v3685
  %v3687 = vsub.f32 1.0, %v3686
  %v3688 = vmul.f32 %v3685, %v3687
  %v3689 = vadd.f32 %v3685, %v3688
  %vm3690 = vweird.f32 %v2473
  %vm3691 = vweird.f32 %v3685
  %vm3692 = vmor %vm3690, %vm3691
  %v3693 = vsel %vm3692, %v3685, %v3689
  %v3694 = vand.u32 2147483647, %v2473
  %vm3695 = vcmp.eq.f32.partialorder %v3694, 8.507059e+37
  %v3696 = vand.u32 %v2473, 2147483648
  %v3697 = vor.u32 1.1754944e-38, %v3696
  %v3698 = vsel %vm3695, %v3697, %v3693
  %v3699 = vmul.f32 1.0, %v3698
  %v3700 = vrcp.pop %v2474
  %v3701 = vmul.f32 %v2474, %v3700
  %v3702 = vsub.f32 1.0, %v3701
  %v3703 = vmul.f32 %v3700, %v3702
  %v3704 = vadd.f32 %v3700, %v3703
  %vm3705 = vweird.f32 %v2474
  %vm3706 = vweird.f32 %v3700
  %vm3707 = vmor %vm3705, %vm3706
  %v3708 = vsel %vm3707, %v3700, %v3704
  %v3709 = vand.u32 2147483647, %v2474
  %vm3710 = vcmp.eq.f32.partialorder %v3709, 8.507059e+37
  %v3711 = vand.u32 %v2474, 2147483648
  %v3712 = vor.u32 1.1754944e-38, %v3711
  %v3713 = vsel %vm3710, %v3712, %v3708
  %v3714 = vmul.f32 1.0, %v3713
  %v3715 = vrcp.pop %v2475
  %v3716 = vmul.f32 %v2475, %v3715
  %v3717 = vsub.f32 1.0, %v3716
  %v3718 = vmul.f32 %v3715, %v3717
  %v3719 = vadd.f32 %v3715, %v3718
  %vm3720 = vweird.f32 %v2475
  %vm3721 = vweird.f32 %v3715
  %vm3722 = vmor %vm3720, %vm3721
  %v3723 = vsel %vm3722, %v3715, %v3719
  %v3724 = vand.u32 2147483647, %v2475
  %vm3725 = vcmp.eq.f32.partialorder %v3724, 8.507059e+37
  %v3726 = vand.u32 %v2475, 2147483648
  %v3727 = vor.u32 1.1754944e-38, %v3726
  %v3728 = vsel %vm3725, %v3727, %v3723
  %v3729 = vmul.f32 1.0, %v3728
  %v3730 = vrcp.pop %v2476
  %v3731 = vmul.f32 %v2476, %v3730
  %v3732 = vsub.f32 1.0, %v3731
  %v3733 = vmul.f32 %v3730, %v3732
  %v3734 = vadd.f32 %v3730, %v3733
  %vm3735 = vweird.f32 %v2476
  %vm3736 = vweird.f32 %v3730
  %vm3737 = vmor %vm3735, %vm3736
  %v3738 = vsel %vm3737, %v3730, %v3734
  %v3739 = vand.u32 2147483647, %v2476
  %vm3740 = vcmp.eq.f32.partialorder %v3739, 8.507059e+37
  %v3741 = vand.u32 %v2476, 2147483648
  %v3742 = vor.u32 1.1754944e-38, %v3741
  %v3743 = vsel %vm3740, %v3742, %v3738
  %v3744 = vmul.f32 1.0, %v3743
  %v3745 = vrcp.pop %v2477
  %v3746 = vmul.f32 %v2477, %v3745
  %v3747 = vsub.f32 1.0, %v3746
  %v3748 = vmul.f32 %v3745, %v3747
  %v3749 = vadd.f32 %v3745, %v3748
  %vm3750 = vweird.f32 %v2477
  %vm3751 = vweird.f32 %v3745
  %vm3752 = vmor %vm3750, %vm3751
  %v3753 = vsel %vm3752, %v3745, %v3749
  %v3754 = vand.u32 2147483647, %v2477
  %vm3755 = vcmp.eq.f32.partialorder %v3754, 8.507059e+37
  %v3756 = vand.u32 %v2477, 2147483648
  %v3757 = vor.u32 1.1754944e-38, %v3756
  %v3758 = vsel %vm3755, %v3757, %v3753
  %v3759 = vmul.f32 1.0, %v3758
  %v3760 = vrcp.pop %v2478
  %v3761 = vmul.f32 %v2478, %v3760
  %v3762 = vsub.f32 1.0, %v3761
  %v3763 = vmul.f32 %v3760, %v3762
  %v3764 = vadd.f32 %v3760, %v3763
  %vm3765 = vweird.f32 %v2478
  %vm3766 = vweird.f32 %v3760
  %vm3767 = vmor %vm3765, %vm3766
  %v3768 = vsel %vm3767, %v3760, %v3764
  %v3769 = vand.u32 2147483647, %v2478
  %vm3770 = vcmp.eq.f32.partialorder %v3769, 8.507059e+37
  %v3771 = vand.u32 %v2478, 2147483648
  %v3772 = vor.u32 1.1754944e-38, %v3771
  %v3773 = vsel %vm3770, %v3772, %v3768
  %v3774 = vmul.f32 1.0, %v3773
  %v3775 = vrcp.pop %v2479
  %v3776 = vmul.f32 %v2479, %v3775
  %v3777 = vsub.f32 1.0, %v3776
  %v3778 = vmul.f32 %v3775, %v3777
  %v3779 = vadd.f32 %v3775, %v3778
  %vm3780 = vweird.f32 %v2479
  %vm3781 = vweird.f32 %v3775
  %vm3782 = vmor %vm3780, %vm3781
  %v3783 = vsel %vm3782, %v3775, %v3779
  %v3784 = vand.u32 2147483647, %v2479
  %vm3785 = vcmp.eq.f32.partialorder %v3784, 8.507059e+37
  %v3786 = vand.u32 %v2479, 2147483648
  %v3787 = vor.u32 1.1754944e-38, %v3786
  %v3788 = vsel %vm3785, %v3787, %v3783
  %v3789 = vmul.f32 1.0, %v3788
  %v3790 = vrcp.pop %v2480
  %v3791 = vmul.f32 %v2480, %v3790
  %v3792 = vsub.f32 1.0, %v3791
  %v3793 = vmul.f32 %v3790, %v3792
  %v3794 = vadd.f32 %v3790, %v3793
  %vm3795 = vweird.f32 %v2480
  %vm3796 = vweird.f32 %v3790
  %vm3797 = vmor %vm3795, %vm3796
  %v3798 = vsel %vm3797, %v3790, %v3794
  %v3799 = vand.u32 2147483647, %v2480
  %vm3800 = vcmp.eq.f32.partialorder %v3799, 8.507059e+37
  %v3801 = vand.u32 %v2480, 2147483648
  %v3802 = vor.u32 1.1754944e-38, %v3801
  %v3803 = vsel %vm3800, %v3802, %v3798
  %v3804 = vmul.f32 1.0, %v3803
  %v3805 = vrcp.pop %v2481
  %v3806 = vmul.f32 %v2481, %v3805
  %v3807 = vsub.f32 1.0, %v3806
  %v3808 = vmul.f32 %v3805, %v3807
  %v3809 = vadd.f32 %v3805, %v3808
  %vm3810 = vweird.f32 %v2481
  %vm3811 = vweird.f32 %v3805
  %vm3812 = vmor %vm3810, %vm3811
  %v3813 = vsel %vm3812, %v3805, %v3809
  %v3814 = vand.u32 2147483647, %v2481
  %vm3815 = vcmp.eq.f32.partialorder %v3814, 8.507059e+37
  %v3816 = vand.u32 %v2481, 2147483648
  %v3817 = vor.u32 1.1754944e-38, %v3816
  %v3818 = vsel %vm3815, %v3817, %v3813
  %v3819 = vmul.f32 1.0, %v3818
  %v3820 = vrcp.pop %v2482
  %v3821 = vmul.f32 %v2482, %v3820
  %v3822 = vsub.f32 1.0, %v3821
  %v3823 = vmul.f32 %v3820, %v3822
  %v3824 = vadd.f32 %v3820, %v3823
  %vm3825 = vweird.f32 %v2482
  %vm3826 = vweird.f32 %v3820
  %vm3827 = vmor %vm3825, %vm3826
  %v3828 = vsel %vm3827, %v3820, %v3824
  %v3829 = vand.u32 2147483647, %v2482
  %vm3830 = vcmp.eq.f32.partialorder %v3829, 8.507059e+37
  %v3831 = vand.u32 %v2482, 2147483648
  %v3832 = vor.u32 1.1754944e-38, %v3831
  %v3833 = vsel %vm3830, %v3832, %v3828
  %v3834 = vmul.f32 1.0, %v3833
  %v3835 = vrcp.pop %v2483
  %v3836 = vmul.f32 %v2483, %v3835
  %v3837 = vsub.f32 1.0, %v3836
  %v3838 = vmul.f32 %v3835, %v3837
  %v3839 = vadd.f32 %v3835, %v3838
  %vm3840 = vweird.f32 %v2483
  %vm3841 = vweird.f32 %v3835
  %vm3842 = vmor %vm3840, %vm3841
  %v3843 = vsel %vm3842, %v3835, %v3839
  %v3844 = vand.u32 2147483647, %v2483
  %vm3845 = vcmp.eq.f32.partialorder %v3844, 8.507059e+37
  %v3846 = vand.u32 %v2483, 2147483648
  %v3847 = vor.u32 1.1754944e-38, %v3846
  %v3848 = vsel %vm3845, %v3847, %v3843
  %v3849 = vmul.f32 1.0, %v3848
  %v3850 = vrcp.pop %v2484
  %v3851 = vmul.f32 %v2484, %v3850
  %v3852 = vsub.f32 1.0, %v3851
  %v3853 = vmul.f32 %v3850, %v3852
  %v3854 = vadd.f32 %v3850, %v3853
  %vm3855 = vweird.f32 %v2484
  %vm3856 = vweird.f32 %v3850
  %vm3857 = vmor %vm3855, %vm3856
  %v3858 = vsel %vm3857, %v3850, %v3854
  %v3859 = vand.u32 2147483647, %v2484
  %vm3860 = vcmp.eq.f32.partialorder %v3859, 8.507059e+37
  %v3861 = vand.u32 %v2484, 2147483648
  %v3862 = vor.u32 1.1754944e-38, %v3861
  %v3863 = vsel %vm3860, %v3862, %v3858
  %v3864 = vmul.f32 1.0, %v3863
  %v3865 = vrcp.pop %v2485
  %v3866 = vmul.f32 %v2485, %v3865
  %v3867 = vsub.f32 1.0, %v3866
  %v3868 = vmul.f32 %v3865, %v3867
  %v3869 = vadd.f32 %v3865, %v3868
  %vm3870 = vweird.f32 %v2485
  %vm3871 = vweird.f32 %v3865
  %vm3872 = vmor %vm3870, %vm3871
  %v3873 = vsel %vm3872, %v3865, %v3869
  %v3874 = vand.u32 2147483647, %v2485
  %vm3875 = vcmp.eq.f32.partialorder %v3874, 8.507059e+37
  %v3876 = vand.u32 %v2485, 2147483648
  %v3877 = vor.u32 1.1754944e-38, %v3876
  %v3878 = vsel %vm3875, %v3877, %v3873
  %v3879 = vmul.f32 1.0, %v3878
  %v3880 = vrcp.pop %v2486
  %v3881 = vmul.f32 %v2486, %v3880
  %v3882 = vsub.f32 1.0, %v3881
  %v3883 = vmul.f32 %v3880, %v3882
  %v3884 = vadd.f32 %v3880, %v3883
  %vm3885 = vweird.f32 %v2486
  %vm3886 = vweird.f32 %v3880
  %vm3887 = vmor %vm3885, %vm3886
  %v3888 = vsel %vm3887, %v3880, %v3884
  %v3889 = vand.u32 2147483647, %v2486
  %vm3890 = vcmp.eq.f32.partialorder %v3889, 8.507059e+37
  %v3891 = vand.u32 %v2486, 2147483648
  %v3892 = vor.u32 1.1754944e-38, %v3891
  %v3893 = vsel %vm3890, %v3892, %v3888
  %v3894 = vmul.f32 1.0, %v3893
  %v3895 = vrcp.pop %v2487
  %v3896 = vmul.f32 %v2487, %v3895
  %v3897 = vsub.f32 1.0, %v3896
  %v3898 = vmul.f32 %v3895, %v3897
  %v3899 = vadd.f32 %v3895, %v3898
  %vm3900 = vweird.f32 %v2487
  %vm3901 = vweird.f32 %v3895
  %vm3902 = vmor %vm3900, %vm3901
  %v3903 = vsel %vm3902, %v3895, %v3899
  %v3904 = vand.u32 2147483647, %v2487
  %vm3905 = vcmp.eq.f32.partialorder %v3904, 8.507059e+37
  %v3906 = vand.u32 %v2487, 2147483648
  %v3907 = vor.u32 1.1754944e-38, %v3906
  %v3908 = vsel %vm3905, %v3907, %v3903
  %v3909 = vmul.f32 1.0, %v3908
  %v3910 = vrcp.pop %v2488
  %v3911 = vmul.f32 %v2488, %v3910
  %v3912 = vsub.f32 1.0, %v3911
  %v3913 = vmul.f32 %v3910, %v3912
  %v3914 = vadd.f32 %v3910, %v3913
  %vm3915 = vweird.f32 %v2488
  %vm3916 = vweird.f32 %v3910
  %vm3917 = vmor %vm3915, %vm3916
  %v3918 = vsel %vm3917, %v3910, %v3914
  %v3919 = vand.u32 2147483647, %v2488
  %vm3920 = vcmp.eq.f32.partialorder %v3919, 8.507059e+37
  %v3921 = vand.u32 %v2488, 2147483648
  %v3922 = vor.u32 1.1754944e-38, %v3921
  %v3923 = vsel %vm3920, %v3922, %v3918
  %v3924 = vmul.f32 1.0, %v3923
  %v3925 = vrcp.pop %v2489
  %v3926 = vmul.f32 %v2489, %v3925
  %v3927 = vsub.f32 1.0, %v3926
  %v3928 = vmul.f32 %v3925, %v3927
  %v3929 = vadd.f32 %v3925, %v3928
  %vm3930 = vweird.f32 %v2489
  %vm3931 = vweird.f32 %v3925
  %vm3932 = vmor %vm3930, %vm3931
  %v3933 = vsel %vm3932, %v3925, %v3929
  %v3934 = vand.u32 2147483647, %v2489
  %vm3935 = vcmp.eq.f32.partialorder %v3934, 8.507059e+37
  %v3936 = vand.u32 %v2489, 2147483648
  %v3937 = vor.u32 1.1754944e-38, %v3936
  %v3938 = vsel %vm3935, %v3937, %v3933
  %v3939 = vmul.f32 1.0, %v3938
  %v3940 = vrcp.pop %v2490
  %v3941 = vmul.f32 %v2490, %v3940
  %v3942 = vsub.f32 1.0, %v3941
  %v3943 = vmul.f32 %v3940, %v3942
  %v3944 = vadd.f32 %v3940, %v3943
  %vm3945 = vweird.f32 %v2490
  %vm3946 = vweird.f32 %v3940
  %vm3947 = vmor %vm3945, %vm3946
  %v3948 = vsel %vm3947, %v3940, %v3944
  %v3949 = vand.u32 2147483647, %v2490
  %vm3950 = vcmp.eq.f32.partialorder %v3949, 8.507059e+37
  %v3951 = vand.u32 %v2490, 2147483648
  %v3952 = vor.u32 1.1754944e-38, %v3951
  %v3953 = vsel %vm3950, %v3952, %v3948
  %v3954 = vmul.f32 1.0, %v3953
  %v3955 = vrcp.pop %v2491
  %v3956 = vmul.f32 %v2491, %v3955
  %v3957 = vsub.f32 1.0, %v3956
  %v3958 = vmul.f32 %v3955, %v3957
  %v3959 = vadd.f32 %v3955, %v3958
  %vm3960 = vweird.f32 %v2491
  %vm3961 = vweird.f32 %v3955
  %vm3962 = vmor %vm3960, %vm3961
  %v3963 = vsel %vm3962, %v3955, %v3959
  %v3964 = vand.u32 2147483647, %v2491
  %vm3965 = vcmp.eq.f32.partialorder %v3964, 8.507059e+37
  %v3966 = vand.u32 %v2491, 2147483648
  %v3967 = vor.u32 1.1754944e-38, %v3966
  %v3968 = vsel %vm3965, %v3967, %v3963
  %v3969 = vmul.f32 1.0, %v3968
  %v3970 = vrcp.pop %v2492
  %v3971 = vmul.f32 %v2492, %v3970
  %v3972 = vsub.f32 1.0, %v3971
  %v3973 = vmul.f32 %v3970, %v3972
  %v3974 = vadd.f32 %v3970, %v3973
  %vm3975 = vweird.f32 %v2492
  %vm3976 = vweird.f32 %v3970
  %vm3977 = vmor %vm3975, %vm3976
  %v3978 = vsel %vm3977, %v3970, %v3974
  %v3979 = vand.u32 2147483647, %v2492
  %vm3980 = vcmp.eq.f32.partialorder %v3979, 8.507059e+37
  %v3981 = vand.u32 %v2492, 2147483648
  %v3982 = vor.u32 1.1754944e-38, %v3981
  %v3983 = vsel %vm3980, %v3982, %v3978
  %v3984 = vmul.f32 1.0, %v3983
  %v3985 = vrcp.pop %v2493
  %v3986 = vmul.f32 %v2493, %v3985
  %v3987 = vsub.f32 1.0, %v3986
  %v3988 = vmul.f32 %v3985, %v3987
  %v3989 = vadd.f32 %v3985, %v3988
  %vm3990 = vweird.f32 %v2493
  %vm3991 = vweird.f32 %v3985
  %vm3992 = vmor %vm3990, %vm3991
  %v3993 = vsel %vm3992, %v3985, %v3989
  %v3994 = vand.u32 2147483647, %v2493
  %vm3995 = vcmp.eq.f32.partialorder %v3994, 8.507059e+37
  %v3996 = vand.u32 %v2493, 2147483648
  %v3997 = vor.u32 1.1754944e-38, %v3996
  %v3998 = vsel %vm3995, %v3997, %v3993
  %v3999 = vmul.f32 1.0, %v3998
  %v4000 = vrcp.pop %v2494
  %v4001 = vmul.f32 %v2494, %v4000
  %v4002 = vsub.f32 1.0, %v4001
  %v4003 = vmul.f32 %v4000, %v4002
  %v4004 = vadd.f32 %v4000, %v4003
  %vm4005 = vweird.f32 %v2494
  %vm4006 = vweird.f32 %v4000
  %vm4007 = vmor %vm4005, %vm4006
  %v4008 = vsel %vm4007, %v4000, %v4004
  %v4009 = vand.u32 2147483647, %v2494
  %vm4010 = vcmp.eq.f32.partialorder %v4009, 8.507059e+37
  %v4011 = vand.u32 %v2494, 2147483648
  %v4012 = vor.u32 1.1754944e-38, %v4011
  %v4013 = vsel %vm4010, %v4012, %v4008
  %v4014 = vmul.f32 1.0, %v4013
  %v4015 = vrcp.pop %v2495
  %v4016 = vmul.f32 %v2495, %v4015
  %v4017 = vsub.f32 1.0, %v4016
  %v4018 = vmul.f32 %v4015, %v4017
  %v4019 = vadd.f32 %v4015, %v4018
  %vm4020 = vweird.f32 %v2495
  %vm4021 = vweird.f32 %v4015
  %vm4022 = vmor %vm4020, %vm4021
  %v4023 = vsel %vm4022, %v4015, %v4019
  %v4024 = vand.u32 2147483647, %v2495
  %vm4025 = vcmp.eq.f32.partialorder %v4024, 8.507059e+37
  %v4026 = vand.u32 %v2495, 2147483648
  %v4027 = vor.u32 1.1754944e-38, %v4026
  %v4028 = vsel %vm4025, %v4027, %v4023
  %v4029 = vmul.f32 1.0, %v4028
  %v4030 = vrcp.pop %v2496
  %v4031 = vmul.f32 %v2496, %v4030
  %v4032 = vsub.f32 1.0, %v4031
  %v4033 = vmul.f32 %v4030, %v4032
  %v4034 = vadd.f32 %v4030, %v4033
  %vm4035 = vweird.f32 %v2496
  %vm4036 = vweird.f32 %v4030
  %vm4037 = vmor %vm4035, %vm4036
  %v4038 = vsel %vm4037, %v4030, %v4034
  %v4039 = vand.u32 2147483647, %v2496
  %vm4040 = vcmp.eq.f32.partialorder %v4039, 8.507059e+37
  %v4041 = vand.u32 %v2496, 2147483648
  %v4042 = vor.u32 1.1754944e-38, %v4041
  %v4043 = vsel %vm4040, %v4042, %v4038
  %v4044 = vmul.f32 1.0, %v4043
  %v4045 = vrcp.pop %v2497
  %v4046 = vmul.f32 %v2497, %v4045
  %v4047 = vsub.f32 1.0, %v4046
  %v4048 = vmul.f32 %v4045, %v4047
  %v4049 = vadd.f32 %v4045, %v4048
  %vm4050 = vweird.f32 %v2497
  %vm4051 = vweird.f32 %v4045
  %vm4052 = vmor %vm4050, %vm4051
  %v4053 = vsel %vm4052, %v4045, %v4049
  %v4054 = vand.u32 2147483647, %v2497
  %vm4055 = vcmp.eq.f32.partialorder %v4054, 8.507059e+37
  %v4056 = vand.u32 %v2497, 2147483648
  %v4057 = vor.u32 1.1754944e-38, %v4056
  %v4058 = vsel %vm4055, %v4057, %v4053
  %v4059 = vmul.f32 1.0, %v4058
  %v4060 = vrcp.pop %v2498
  %v4061 = vmul.f32 %v2498, %v4060
  %v4062 = vsub.f32 1.0, %v4061
  %v4063 = vmul.f32 %v4060, %v4062
  %v4064 = vadd.f32 %v4060, %v4063
  %vm4065 = vweird.f32 %v2498
  %vm4066 = vweird.f32 %v4060
  %vm4067 = vmor %vm4065, %vm4066
  %v4068 = vsel %vm4067, %v4060, %v4064
  %v4069 = vand.u32 2147483647, %v2498
  %vm4070 = vcmp.eq.f32.partialorder %v4069, 8.507059e+37
  %v4071 = vand.u32 %v2498, 2147483648
  %v4072 = vor.u32 1.1754944e-38, %v4071
  %v4073 = vsel %vm4070, %v4072, %v4068
  %v4074 = vmul.f32 1.0, %v4073
  %v4075 = vrcp.pop %v2499
  %v4076 = vmul.f32 %v2499, %v4075
  %v4077 = vsub.f32 1.0, %v4076
  %v4078 = vmul.f32 %v4075, %v4077
  %v4079 = vadd.f32 %v4075, %v4078
  %vm4080 = vweird.f32 %v2499
  %vm4081 = vweird.f32 %v4075
  %vm4082 = vmor %vm4080, %vm4081
  %v4083 = vsel %vm4082, %v4075, %v4079
  %v4084 = vand.u32 2147483647, %v2499
  %vm4085 = vcmp.eq.f32.partialorder %v4084, 8.507059e+37
  %v4086 = vand.u32 %v2499, 2147483648
  %v4087 = vor.u32 1.1754944e-38, %v4086
  %v4088 = vsel %vm4085, %v4087, %v4083
  %v4089 = vmul.f32 1.0, %v4088
  %v4090 = vrcp.pop %v2500
  %v4091 = vmul.f32 %v2500, %v4090
  %v4092 = vsub.f32 1.0, %v4091
  %v4093 = vmul.f32 %v4090, %v4092
  %v4094 = vadd.f32 %v4090, %v4093
  %vm4095 = vweird.f32 %v2500
  %vm4096 = vweird.f32 %v4090
  %vm4097 = vmor %vm4095, %vm4096
  %v4098 = vsel %vm4097, %v4090, %v4094
  %v4099 = vand.u32 2147483647, %v2500
  %vm4100 = vcmp.eq.f32.partialorder %v4099, 8.507059e+37
  %v4101 = vand.u32 %v2500, 2147483648
  %v4102 = vor.u32 1.1754944e-38, %v4101
  %v4103 = vsel %vm4100, %v4102, %v4098
  %v4104 = vmul.f32 1.0, %v4103
  %v4105 = vrcp.pop %v2501
  %v4106 = vmul.f32 %v2501, %v4105
  %v4107 = vsub.f32 1.0, %v4106
  %v4108 = vmul.f32 %v4105, %v4107
  %v4109 = vadd.f32 %v4105, %v4108
  %vm4110 = vweird.f32 %v2501
  %vm4111 = vweird.f32 %v4105
  %vm4112 = vmor %vm4110, %vm4111
  %v4113 = vsel %vm4112, %v4105, %v4109
  %v4114 = vand.u32 2147483647, %v2501
  %vm4115 = vcmp.eq.f32.partialorder %v4114, 8.507059e+37
  %v4116 = vand.u32 %v2501, 2147483648
  %v4117 = vor.u32 1.1754944e-38, %v4116
  %v4118 = vsel %vm4115, %v4117, %v4113
  %v4119 = vmul.f32 1.0, %v4118
  %v4120 = vrcp.pop %v2502
  %v4121 = vmul.f32 %v2502, %v4120
  %v4122 = vsub.f32 1.0, %v4121
  %v4123 = vmul.f32 %v4120, %v4122
  %v4124 = vadd.f32 %v4120, %v4123
  %vm4125 = vweird.f32 %v2502
  %vm4126 = vweird.f32 %v4120
  %vm4127 = vmor %vm4125, %vm4126
  %v4128 = vsel %vm4127, %v4120, %v4124
  %v4129 = vand.u32 2147483647, %v2502
  %vm4130 = vcmp.eq.f32.partialorder %v4129, 8.507059e+37
  %v4131 = vand.u32 %v2502, 2147483648
  %v4132 = vor.u32 1.1754944e-38, %v4131
  %v4133 = vsel %vm4130, %v4132, %v4128
  %v4134 = vmul.f32 1.0, %v4133
  %v4135 = vrcp.pop %v2503
  %v4136 = vmul.f32 %v2503, %v4135
  %v4137 = vsub.f32 1.0, %v4136
  %v4138 = vmul.f32 %v4135, %v4137
  %v4139 = vadd.f32 %v4135, %v4138
  %vm4140 = vweird.f32 %v2503
  %vm4141 = vweird.f32 %v4135
  %vm4142 = vmor %vm4140, %vm4141
  %v4143 = vsel %vm4142, %v4135, %v4139
  %v4144 = vand.u32 2147483647, %v2503
  %vm4145 = vcmp.eq.f32.partialorder %v4144, 8.507059e+37
  %v4146 = vand.u32 %v2503, 2147483648
  %v4147 = vor.u32 1.1754944e-38, %v4146
  %v4148 = vsel %vm4145, %v4147, %v4143
  %v4149 = vmul.f32 1.0, %v4148
  %v4150 = vrcp.pop %v2504
  %v4151 = vmul.f32 %v2504, %v4150
  %v4152 = vsub.f32 1.0, %v4151
  %v4153 = vmul.f32 %v4150, %v4152
  %v4154 = vadd.f32 %v4150, %v4153
  %vm4155 = vweird.f32 %v2504
  %vm4156 = vweird.f32 %v4150
  %vm4157 = vmor %vm4155, %vm4156
  %v4158 = vsel %vm4157, %v4150, %v4154
  %v4159 = vand.u32 2147483647, %v2504
  %vm4160 = vcmp.eq.f32.partialorder %v4159, 8.507059e+37
  %v4161 = vand.u32 %v2504, 2147483648
  %v4162 = vor.u32 1.1754944e-38, %v4161
  %v4163 = vsel %vm4160, %v4162, %v4158
  %v4164 = vmul.f32 1.0, %v4163
  %v4165 = vrcp.pop %v2505
  %v4166 = vmul.f32 %v2505, %v4165
  %v4167 = vsub.f32 1.0, %v4166
  %v4168 = vmul.f32 %v4165, %v4167
  %v4169 = vadd.f32 %v4165, %v4168
  %vm4170 = vweird.f32 %v2505
  %vm4171 = vweird.f32 %v4165
  %vm4172 = vmor %vm4170, %vm4171
  %v4173 = vsel %vm4172, %v4165, %v4169
  %v4174 = vand.u32 2147483647, %v2505
  %vm4175 = vcmp.eq.f32.partialorder %v4174, 8.507059e+37
  %v4176 = vand.u32 %v2505, 2147483648
  %v4177 = vor.u32 1.1754944e-38, %v4176
  %v4178 = vsel %vm4175, %v4177, %v4173
  %v4179 = vmul.f32 1.0, %v4178
  %v4180 = vrcp.pop %v2506
  %v4181 = vmul.f32 %v2506, %v4180
  %v4182 = vsub.f32 1.0, %v4181
  %v4183 = vmul.f32 %v4180, %v4182
  %v4184 = vadd.f32 %v4180, %v4183
  %vm4185 = vweird.f32 %v2506
  %vm4186 = vweird.f32 %v4180
  %vm4187 = vmor %vm4185, %vm4186
  %v4188 = vsel %vm4187, %v4180, %v4184
  %v4189 = vand.u32 2147483647, %v2506
  %vm4190 = vcmp.eq.f32.partialorder %v4189, 8.507059e+37
  %v4191 = vand.u32 %v2506, 2147483648
  %v4192 = vor.u32 1.1754944e-38, %v4191
  %v4193 = vsel %vm4190, %v4192, %v4188
  %v4194 = vmul.f32 1.0, %v4193
  %v4195 = vrcp.pop %v2507
  %v4196 = vmul.f32 %v2507, %v4195
  %v4197 = vsub.f32 1.0, %v4196
  %v4198 = vmul.f32 %v4195, %v4197
  %v4199 = vadd.f32 %v4195, %v4198
  %vm4200 = vweird.f32 %v2507
  %vm4201 = vweird.f32 %v4195
  %vm4202 = vmor %vm4200, %vm4201
  %v4203 = vsel %vm4202, %v4195, %v4199
  %v4204 = vand.u32 2147483647, %v2507
  %vm4205 = vcmp.eq.f32.partialorder %v4204, 8.507059e+37
  %v4206 = vand.u32 %v2507, 2147483648
  %v4207 = vor.u32 1.1754944e-38, %v4206
  %v4208 = vsel %vm4205, %v4207, %v4203
  %v4209 = vmul.f32 1.0, %v4208
  %v4210 = vrcp.pop %v2508
  %v4211 = vmul.f32 %v2508, %v4210
  %v4212 = vsub.f32 1.0, %v4211
  %v4213 = vmul.f32 %v4210, %v4212
  %v4214 = vadd.f32 %v4210, %v4213
  %vm4215 = vweird.f32 %v2508
  %vm4216 = vweird.f32 %v4210
  %vm4217 = vmor %vm4215, %vm4216
  %v4218 = vsel %vm4217, %v4210, %v4214
  %v4219 = vand.u32 2147483647, %v2508
  %vm4220 = vcmp.eq.f32.partialorder %v4219, 8.507059e+37
  %v4221 = vand.u32 %v2508, 2147483648
  %v4222 = vor.u32 1.1754944e-38, %v4221
  %v4223 = vsel %vm4220, %v4222, %v4218
  %v4224 = vmul.f32 1.0, %v4223
  %v4225 = vrcp.pop %v2509
  %v4226 = vmul.f32 %v2509, %v4225
  %v4227 = vsub.f32 1.0, %v4226
  %v4228 = vmul.f32 %v4225, %v4227
  %v4229 = vadd.f32 %v4225, %v4228
  %vm4230 = vweird.f32 %v2509
  %vm4231 = vweird.f32 %v4225
  %vm4232 = vmor %vm4230, %vm4231
  %v4233 = vsel %vm4232, %v4225, %v4229
  %v4234 = vand.u32 2147483647, %v2509
  %vm4235 = vcmp.eq.f32.partialorder %v4234, 8.507059e+37
  %v4236 = vand.u32 %v2509, 2147483648
  %v4237 = vor.u32 1.1754944e-38, %v4236
  %v4238 = vsel %vm4235, %v4237, %v4233
  %v4239 = vmul.f32 1.0, %v4238
  %v4240 = vrcp.pop %v2510
  %v4241 = vmul.f32 %v2510, %v4240
  %v4242 = vsub.f32 1.0, %v4241
  %v4243 = vmul.f32 %v4240, %v4242
  %v4244 = vadd.f32 %v4240, %v4243
  %vm4245 = vweird.f32 %v2510
  %vm4246 = vweird.f32 %v4240
  %vm4247 = vmor %vm4245, %vm4246
  %v4248 = vsel %vm4247, %v4240, %v4244
  %v4249 = vand.u32 2147483647, %v2510
  %vm4250 = vcmp.eq.f32.partialorder %v4249, 8.507059e+37
  %v4251 = vand.u32 %v2510, 2147483648
  %v4252 = vor.u32 1.1754944e-38, %v4251
  %v4253 = vsel %vm4250, %v4252, %v4248
  %v4254 = vmul.f32 1.0, %v4253
  %v4255 = vrcp.pop %v2511
  %v4256 = vmul.f32 %v2511, %v4255
  %v4257 = vsub.f32 1.0, %v4256
  %v4258 = vmul.f32 %v4255, %v4257
  %v4259 = vadd.f32 %v4255, %v4258
  %vm4260 = vweird.f32 %v2511
  %vm4261 = vweird.f32 %v4255
  %vm4262 = vmor %vm4260, %vm4261
  %v4263 = vsel %vm4262, %v4255, %v4259
  %v4264 = vand.u32 2147483647, %v2511
  %vm4265 = vcmp.eq.f32.partialorder %v4264, 8.507059e+37
  %v4266 = vand.u32 %v2511, 2147483648
  %v4267 = vor.u32 1.1754944e-38, %v4266
  %v4268 = vsel %vm4265, %v4267, %v4263
  %v4269 = vmul.f32 1.0, %v4268
  %v4270 = vrcp.pop %v2512
  %v4271 = vmul.f32 %v2512, %v4270
  %v4272 = vsub.f32 1.0, %v4271
  %v4273 = vmul.f32 %v4270, %v4272
  %v4274 = vadd.f32 %v4270, %v4273
  %vm4275 = vweird.f32 %v2512
  %vm4276 = vweird.f32 %v4270
  %vm4277 = vmor %vm4275, %vm4276
  %v4278 = vsel %vm4277, %v4270, %v4274
  %v4279 = vand.u32 2147483647, %v2512
  %vm4280 = vcmp.eq.f32.partialorder %v4279, 8.507059e+37
  %v4281 = vand.u32 %v2512, 2147483648
  %v4282 = vor.u32 1.1754944e-38, %v4281
  %v4283 = vsel %vm4280, %v4282, %v4278
  %v4284 = vmul.f32 1.0, %v4283
  %v4285 = vrcp.pop %v2513
  %v4286 = vmul.f32 %v2513, %v4285
  %v4287 = vsub.f32 1.0, %v4286
  %v4288 = vmul.f32 %v4285, %v4287
  %v4289 = vadd.f32 %v4285, %v4288
  %vm4290 = vweird.f32 %v2513
  %vm4291 = vweird.f32 %v4285
  %vm4292 = vmor %vm4290, %vm4291
  %v4293 = vsel %vm4292, %v4285, %v4289
  %v4294 = vand.u32 2147483647, %v2513
  %vm4295 = vcmp.eq.f32.partialorder %v4294, 8.507059e+37
  %v4296 = vand.u32 %v2513, 2147483648
  %v4297 = vor.u32 1.1754944e-38, %v4296
  %v4298 = vsel %vm4295, %v4297, %v4293
  %v4299 = vmul.f32 1.0, %v4298
  %v4300 = vrcp.pop %v2514
  %v4301 = vmul.f32 %v2514, %v4300
  %v4302 = vsub.f32 1.0, %v4301
  %v4303 = vmul.f32 %v4300, %v4302
  %v4304 = vadd.f32 %v4300, %v4303
  %vm4305 = vweird.f32 %v2514
  %vm4306 = vweird.f32 %v4300
  %vm4307 = vmor %vm4305, %vm4306
  %v4308 = vsel %vm4307, %v4300, %v4304
  %v4309 = vand.u32 2147483647, %v2514
  %vm4310 = vcmp.eq.f32.partialorder %v4309, 8.507059e+37
  %v4311 = vand.u32 %v2514, 2147483648
  %v4312 = vor.u32 1.1754944e-38, %v4311
  %v4313 = vsel %vm4310, %v4312, %v4308
  %v4314 = vmul.f32 1.0, %v4313
  %v4315 = vrcp.pop %v2515
  %v4316 = vmul.f32 %v2515, %v4315
  %v4317 = vsub.f32 1.0, %v4316
  %v4318 = vmul.f32 %v4315, %v4317
  %v4319 = vadd.f32 %v4315, %v4318
  %vm4320 = vweird.f32 %v2515
  %vm4321 = vweird.f32 %v4315
  %vm4322 = vmor %vm4320, %vm4321
  %v4323 = vsel %vm4322, %v4315, %v4319
  %v4324 = vand.u32 2147483647, %v2515
  %vm4325 = vcmp.eq.f32.partialorder %v4324, 8.507059e+37
  %v4326 = vand.u32 %v2515, 2147483648
  %v4327 = vor.u32 1.1754944e-38, %v4326
  %v4328 = vsel %vm4325, %v4327, %v4323
  %v4329 = vmul.f32 1.0, %v4328
  %v4330 = vrcp.pop %v2516
  %v4331 = vmul.f32 %v2516, %v4330
  %v4332 = vsub.f32 1.0, %v4331
  %v4333 = vmul.f32 %v4330, %v4332
  %v4334 = vadd.f32 %v4330, %v4333
  %vm4335 = vweird.f32 %v2516
  %vm4336 = vweird.f32 %v4330
  %vm4337 = vmor %vm4335, %vm4336
  %v4338 = vsel %vm4337, %v4330, %v4334
  %v4339 = vand.u32 2147483647, %v2516
  %vm4340 = vcmp.eq.f32.partialorder %v4339, 8.507059e+37
  %v4341 = vand.u32 %v2516, 2147483648
  %v4342 = vor.u32 1.1754944e-38, %v4341
  %v4343 = vsel %vm4340, %v4342, %v4338
  %v4344 = vmul.f32 1.0, %v4343
  %v4345 = vrcp.pop %v2517
  %v4346 = vmul.f32 %v2517, %v4345
  %v4347 = vsub.f32 1.0, %v4346
  %v4348 = vmul.f32 %v4345, %v4347
  %v4349 = vadd.f32 %v4345, %v4348
  %vm4350 = vweird.f32 %v2517
  %vm4351 = vweird.f32 %v4345
  %vm4352 = vmor %vm4350, %vm4351
  %v4353 = vsel %vm4352, %v4345, %v4349
  %v4354 = vand.u32 2147483647, %v2517
  %vm4355 = vcmp.eq.f32.partialorder %v4354, 8.507059e+37
  %v4356 = vand.u32 %v2517, 2147483648
  %v4357 = vor.u32 1.1754944e-38, %v4356
  %v4358 = vsel %vm4355, %v4357, %v4353
  %v4359 = vmul.f32 1.0, %v4358
  %v4360 = vrcp.pop %v2518
  %v4361 = vmul.f32 %v2518, %v4360
  %v4362 = vsub.f32 1.0, %v4361
  %v4363 = vmul.f32 %v4360, %v4362
  %v4364 = vadd.f32 %v4360, %v4363
  %vm4365 = vweird.f32 %v2518
  %vm4366 = vweird.f32 %v4360
  %vm4367 = vmor %vm4365, %vm4366
  %v4368 = vsel %vm4367, %v4360, %v4364
  %v4369 = vand.u32 2147483647, %v2518
  %vm4370 = vcmp.eq.f32.partialorder %v4369, 8.507059e+37
  %v4371 = vand.u32 %v2518, 2147483648
  %v4372 = vor.u32 1.1754944e-38, %v4371
  %v4373 = vsel %vm4370, %v4372, %v4368
  %v4374 = vmul.f32 1.0, %v4373
  %v4375 = vrcp.pop %v2519
  %v4376 = vmul.f32 %v2519, %v4375
  %v4377 = vsub.f32 1.0, %v4376
  %v4378 = vmul.f32 %v4375, %v4377
  %v4379 = vadd.f32 %v4375, %v4378
  %vm4380 = vweird.f32 %v2519
  %vm4381 = vweird.f32 %v4375
  %vm4382 = vmor %vm4380, %vm4381
  %v4383 = vsel %vm4382, %v4375, %v4379
  %v4384 = vand.u32 2147483647, %v2519
  %vm4385 = vcmp.eq.f32.partialorder %v4384, 8.507059e+37
  %v4386 = vand.u32 %v2519, 2147483648
  %v4387 = vor.u32 1.1754944e-38, %v4386
  %v4388 = vsel %vm4385, %v4387, %v4383
  %v4389 = vmul.f32 1.0, %v4388
  %v4390 = vrcp.pop %v2520
  %v4391 = vmul.f32 %v2520, %v4390
  %v4392 = vsub.f32 1.0, %v4391
  %v4393 = vmul.f32 %v4390, %v4392
  %v4394 = vadd.f32 %v4390, %v4393
  %vm4395 = vweird.f32 %v2520
  %vm4396 = vweird.f32 %v4390
  %vm4397 = vmor %vm4395, %vm4396
  %v4398 = vsel %vm4397, %v4390, %v4394
  %v4399 = vand.u32 2147483647, %v2520
  %vm4400 = vcmp.eq.f32.partialorder %v4399, 8.507059e+37
  %v4401 = vand.u32 %v2520, 2147483648
  %v4402 = vor.u32 1.1754944e-38, %v4401
  %v4403 = vsel %vm4400, %v4402, %v4398
  %v4404 = vmul.f32 1.0, %v4403
  %v4405 = vrcp.pop %v2521
  %v4406 = vmul.f32 %v2521, %v4405
  %v4407 = vsub.f32 1.0, %v4406
  %v4408 = vmul.f32 %v4405, %v4407
  %v4409 = vadd.f32 %v4405, %v4408
  %vm4410 = vweird.f32 %v2521
  %vm4411 = vweird.f32 %v4405
  %vm4412 = vmor %vm4410, %vm4411
  %v4413 = vsel %vm4412, %v4405, %v4409
  %v4414 = vand.u32 2147483647, %v2521
  %vm4415 = vcmp.eq.f32.partialorder %v4414, 8.507059e+37
  %v4416 = vand.u32 %v2521, 2147483648
  %v4417 = vor.u32 1.1754944e-38, %v4416
  %v4418 = vsel %vm4415, %v4417, %v4413
  %v4419 = vmul.f32 1.0, %v4418
  %v4420 = vrcp.pop %v2522
  %v4421 = vmul.f32 %v2522, %v4420
  %v4422 = vsub.f32 1.0, %v4421
  %v4423 = vmul.f32 %v4420, %v4422
  %v4424 = vadd.f32 %v4420, %v4423
  %vm4425 = vweird.f32 %v2522
  %vm4426 = vweird.f32 %v4420
  %vm4427 = vmor %vm4425, %vm4426
  %v4428 = vsel %vm4427, %v4420, %v4424
  %v4429 = vand.u32 2147483647, %v2522
  %vm4430 = vcmp.eq.f32.partialorder %v4429, 8.507059e+37
  %v4431 = vand.u32 %v2522, 2147483648
  %v4432 = vor.u32 1.1754944e-38, %v4431
  %v4433 = vsel %vm4430, %v4432, %v4428
  %v4434 = vmul.f32 1.0, %v4433
  %v4435 = vrcp.pop %v2523
  %v4436 = vmul.f32 %v2523, %v4435
  %v4437 = vsub.f32 1.0, %v4436
  %v4438 = vmul.f32 %v4435, %v4437
  %v4439 = vadd.f32 %v4435, %v4438
  %vm4440 = vweird.f32 %v2523
  %vm4441 = vweird.f32 %v4435
  %vm4442 = vmor %vm4440, %vm4441
  %v4443 = vsel %vm4442, %v4435, %v4439
  %v4444 = vand.u32 2147483647, %v2523
  %vm4445 = vcmp.eq.f32.partialorder %v4444, 8.507059e+37
  %v4446 = vand.u32 %v2523, 2147483648
  %v4447 = vor.u32 1.1754944e-38, %v4446
  %v4448 = vsel %vm4445, %v4447, %v4443
  %v4449 = vmul.f32 1.0, %v4448
  %v4450 = vrcp.pop %v2524
  %v4451 = vmul.f32 %v2524, %v4450
  %v4452 = vsub.f32 1.0, %v4451
  %v4453 = vmul.f32 %v4450, %v4452
  %v4454 = vadd.f32 %v4450, %v4453
  %vm4455 = vweird.f32 %v2524
  %vm4456 = vweird.f32 %v4450
  %vm4457 = vmor %vm4455, %vm4456
  %v4458 = vsel %vm4457, %v4450, %v4454
  %v4459 = vand.u32 2147483647, %v2524
  %vm4460 = vcmp.eq.f32.partialorder %v4459, 8.507059e+37
  %v4461 = vand.u32 %v2524, 2147483648
  %v4462 = vor.u32 1.1754944e-38, %v4461
  %v4463 = vsel %vm4460, %v4462, %v4458
  %v4464 = vmul.f32 1.0, %v4463
  %v4465 = vrcp.pop %v2525
  %v4466 = vmul.f32 %v2525, %v4465
  %v4467 = vsub.f32 1.0, %v4466
  %v4468 = vmul.f32 %v4465, %v4467
  %v4469 = vadd.f32 %v4465, %v4468
  %vm4470 = vweird.f32 %v2525
  %vm4471 = vweird.f32 %v4465
  %vm4472 = vmor %vm4470, %vm4471
  %v4473 = vsel %vm4472, %v4465, %v4469
  %v4474 = vand.u32 2147483647, %v2525
  %vm4475 = vcmp.eq.f32.partialorder %v4474, 8.507059e+37
  %v4476 = vand.u32 %v2525, 2147483648
  %v4477 = vor.u32 1.1754944e-38, %v4476
  %v4478 = vsel %vm4475, %v4477, %v4473
  %v4479 = vmul.f32 1.0, %v4478
  %v4480 = vrcp.pop %v2526
  %v4481 = vmul.f32 %v2526, %v4480
  %v4482 = vsub.f32 1.0, %v4481
  %v4483 = vmul.f32 %v4480, %v4482
  %v4484 = vadd.f32 %v4480, %v4483
  %vm4485 = vweird.f32 %v2526
  %vm4486 = vweird.f32 %v4480
  %vm4487 = vmor %vm4485, %vm4486
  %v4488 = vsel %vm4487, %v4480, %v4484
  %v4489 = vand.u32 2147483647, %v2526
  %vm4490 = vcmp.eq.f32.partialorder %v4489, 8.507059e+37
  %v4491 = vand.u32 %v2526, 2147483648
  %v4492 = vor.u32 1.1754944e-38, %v4491
  %v4493 = vsel %vm4490, %v4492, %v4488
  %v4494 = vmul.f32 1.0, %v4493
  %v4495 = vrcp.pop %v2527
  %v4496 = vmul.f32 %v2527, %v4495
  %v4497 = vsub.f32 1.0, %v4496
  %v4498 = vmul.f32 %v4495, %v4497
  %v4499 = vadd.f32 %v4495, %v4498
  %vm4500 = vweird.f32 %v2527
  %vm4501 = vweird.f32 %v4495
  %vm4502 = vmor %vm4500, %vm4501
  %v4503 = vsel %vm4502, %v4495, %v4499
  %v4504 = vand.u32 2147483647, %v2527
  %vm4505 = vcmp.eq.f32.partialorder %v4504, 8.507059e+37
  %v4506 = vand.u32 %v2527, 2147483648
  %v4507 = vor.u32 1.1754944e-38, %v4506
  %v4508 = vsel %vm4505, %v4507, %v4503
  %v4509 = vmul.f32 1.0, %v4508
  %v4510 = vrcp.pop %v2528
  %v4511 = vmul.f32 %v2528, %v4510
  %v4512 = vsub.f32 1.0, %v4511
  %v4513 = vmul.f32 %v4510, %v4512
  %v4514 = vadd.f32 %v4510, %v4513
  %vm4515 = vweird.f32 %v2528
  %vm4516 = vweird.f32 %v4510
  %vm4517 = vmor %vm4515, %vm4516
  %v4518 = vsel %vm4517, %v4510, %v4514
  %v4519 = vand.u32 2147483647, %v2528
  %vm4520 = vcmp.eq.f32.partialorder %v4519, 8.507059e+37
  %v4521 = vand.u32 %v2528, 2147483648
  %v4522 = vor.u32 1.1754944e-38, %v4521
  %v4523 = vsel %vm4520, %v4522, %v4518
  %v4524 = vmul.f32 1.0, %v4523
  %v4525 = vrcp.pop %v2529
  %v4526 = vmul.f32 %v2529, %v4525
  %v4527 = vsub.f32 1.0, %v4526
  %v4528 = vmul.f32 %v4525, %v4527
  %v4529 = vadd.f32 %v4525, %v4528
  %vm4530 = vweird.f32 %v2529
  %vm4531 = vweird.f32 %v4525
  %vm4532 = vmor %vm4530, %vm4531
  %v4533 = vsel %vm4532, %v4525, %v4529
  %v4534 = vand.u32 2147483647, %v2529
  %vm4535 = vcmp.eq.f32.partialorder %v4534, 8.507059e+37
  %v4536 = vand.u32 %v2529, 2147483648
  %v4537 = vor.u32 1.1754944e-38, %v4536
  %v4538 = vsel %vm4535, %v4537, %v4533
  %v4539 = vmul.f32 1.0, %v4538
  %v4540 = vrcp.pop %v2530
  %v4541 = vmul.f32 %v2530, %v4540
  %v4542 = vsub.f32 1.0, %v4541
  %v4543 = vmul.f32 %v4540, %v4542
  %v4544 = vadd.f32 %v4540, %v4543
  %vm4545 = vweird.f32 %v2530
  %vm4546 = vweird.f32 %v4540
  %vm4547 = vmor %vm4545, %vm4546
  %v4548 = vsel %vm4547, %v4540, %v4544
  %v4549 = vand.u32 2147483647, %v2530
  %vm4550 = vcmp.eq.f32.partialorder %v4549, 8.507059e+37
  %v4551 = vand.u32 %v2530, 2147483648
  %v4552 = vor.u32 1.1754944e-38, %v4551
  %v4553 = vsel %vm4550, %v4552, %v4548
  %v4554 = vmul.f32 1.0, %v4553
  %v4555 = vrcp.pop %v2531
  %v4556 = vmul.f32 %v2531, %v4555
  %v4557 = vsub.f32 1.0, %v4556
  %v4558 = vmul.f32 %v4555, %v4557
  %v4559 = vadd.f32 %v4555, %v4558
  %vm4560 = vweird.f32 %v2531
  %vm4561 = vweird.f32 %v4555
  %vm4562 = vmor %vm4560, %vm4561
  %v4563 = vsel %vm4562, %v4555, %v4559
  %v4564 = vand.u32 2147483647, %v2531
  %vm4565 = vcmp.eq.f32.partialorder %v4564, 8.507059e+37
  %v4566 = vand.u32 %v2531, 2147483648
  %v4567 = vor.u32 1.1754944e-38, %v4566
  %v4568 = vsel %vm4565, %v4567, %v4563
  %v4569 = vmul.f32 1.0, %v4568
  %v4570 = vrcp.pop %v2532
  %v4571 = vmul.f32 %v2532, %v4570
  %v4572 = vsub.f32 1.0, %v4571
  %v4573 = vmul.f32 %v4570, %v4572
  %v4574 = vadd.f32 %v4570, %v4573
  %vm4575 = vweird.f32 %v2532
  %vm4576 = vweird.f32 %v4570
  %vm4577 = vmor %vm4575, %vm4576
  %v4578 = vsel %vm4577, %v4570, %v4574
  %v4579 = vand.u32 2147483647, %v2532
  %vm4580 = vcmp.eq.f32.partialorder %v4579, 8.507059e+37
  %v4581 = vand.u32 %v2532, 2147483648
  %v4582 = vor.u32 1.1754944e-38, %v4581
  %v4583 = vsel %vm4580, %v4582, %v4578
  %v4584 = vmul.f32 1.0, %v4583
  %v4585 = vrcp.pop %v2533
  %v4586 = vmul.f32 %v2533, %v4585
  %v4587 = vsub.f32 1.0, %v4586
  %v4588 = vmul.f32 %v4585, %v4587
  %v4589 = vadd.f32 %v4585, %v4588
  %vm4590 = vweird.f32 %v2533
  %vm4591 = vweird.f32 %v4585
  %vm4592 = vmor %vm4590, %vm4591
  %v4593 = vsel %vm4592, %v4585, %v4589
  %v4594 = vand.u32 2147483647, %v2533
  %vm4595 = vcmp.eq.f32.partialorder %v4594, 8.507059e+37
  %v4596 = vand.u32 %v2533, 2147483648
  %v4597 = vor.u32 1.1754944e-38, %v4596
  %v4598 = vsel %vm4595, %v4597, %v4593
  %v4599 = vmul.f32 1.0, %v4598
  %v4600 = vrcp.pop %v2534
  %v4601 = vmul.f32 %v2534, %v4600
  %v4602 = vsub.f32 1.0, %v4601
  %v4603 = vmul.f32 %v4600, %v4602
  %v4604 = vadd.f32 %v4600, %v4603
  %vm4605 = vweird.f32 %v2534
  %vm4606 = vweird.f32 %v4600
  %vm4607 = vmor %vm4605, %vm4606
  %v4608 = vsel %vm4607, %v4600, %v4604
  %v4609 = vand.u32 2147483647, %v2534
  %vm4610 = vcmp.eq.f32.partialorder %v4609, 8.507059e+37
  %v4611 = vand.u32 %v2534, 2147483648
  %v4612 = vor.u32 1.1754944e-38, %v4611
  %v4613 = vsel %vm4610, %v4612, %v4608
  %v4614 = vmul.f32 1.0, %v4613
  %v4615 = vrcp.pop %v2535
  %v4616 = vmul.f32 %v2535, %v4615
  %v4617 = vsub.f32 1.0, %v4616
  %v4618 = vmul.f32 %v4615, %v4617
  %v4619 = vadd.f32 %v4615, %v4618
  %vm4620 = vweird.f32 %v2535
  %vm4621 = vweird.f32 %v4615
  %vm4622 = vmor %vm4620, %vm4621
  %v4623 = vsel %vm4622, %v4615, %v4619
  %v4624 = vand.u32 2147483647, %v2535
  %vm4625 = vcmp.eq.f32.partialorder %v4624, 8.507059e+37
  %v4626 = vand.u32 %v2535, 2147483648
  %v4627 = vor.u32 1.1754944e-38, %v4626
  %v4628 = vsel %vm4625, %v4627, %v4623
  %v4629 = vmul.f32 1.0, %v4628
  %v4630 = vrcp.pop %v2536
  %v4631 = vmul.f32 %v2536, %v4630
  %v4632 = vsub.f32 1.0, %v4631
  %v4633 = vmul.f32 %v4630, %v4632
  %v4634 = vadd.f32 %v4630, %v4633
  %vm4635 = vweird.f32 %v2536
  %vm4636 = vweird.f32 %v4630
  %vm4637 = vmor %vm4635, %vm4636
  %v4638 = vsel %vm4637, %v4630, %v4634
  %v4639 = vand.u32 2147483647, %v2536
  %vm4640 = vcmp.eq.f32.partialorder %v4639, 8.507059e+37
  %v4641 = vand.u32 %v2536, 2147483648
  %v4642 = vor.u32 1.1754944e-38, %v4641
  %v4643 = vsel %vm4640, %v4642, %v4638
  %v4644 = vmul.f32 1.0, %v4643
  %v4645 = vrcp.pop %v2537
  %v4646 = vmul.f32 %v2537, %v4645
  %v4647 = vsub.f32 1.0, %v4646
  %v4648 = vmul.f32 %v4645, %v4647
  %v4649 = vadd.f32 %v4645, %v4648
  %vm4650 = vweird.f32 %v2537
  %vm4651 = vweird.f32 %v4645
  %vm4652 = vmor %vm4650, %vm4651
  %v4653 = vsel %vm4652, %v4645, %v4649
  %v4654 = vand.u32 2147483647, %v2537
  %vm4655 = vcmp.eq.f32.partialorder %v4654, 8.507059e+37
  %v4656 = vand.u32 %v2537, 2147483648
  %v4657 = vor.u32 1.1754944e-38, %v4656
  %v4658 = vsel %vm4655, %v4657, %v4653
  %v4659 = vmul.f32 1.0, %v4658
  %v4660 = vrcp.pop %v2538
  %v4661 = vmul.f32 %v2538, %v4660
  %v4662 = vsub.f32 1.0, %v4661
  %v4663 = vmul.f32 %v4660, %v4662
  %v4664 = vadd.f32 %v4660, %v4663
  %vm4665 = vweird.f32 %v2538
  %vm4666 = vweird.f32 %v4660
  %vm4667 = vmor %vm4665, %vm4666
  %v4668 = vsel %vm4667, %v4660, %v4664
  %v4669 = vand.u32 2147483647, %v2538
  %vm4670 = vcmp.eq.f32.partialorder %v4669, 8.507059e+37
  %v4671 = vand.u32 %v2538, 2147483648
  %v4672 = vor.u32 1.1754944e-38, %v4671
  %v4673 = vsel %vm4670, %v4672, %v4668
  %v4674 = vmul.f32 1.0, %v4673
  %v4675 = vrcp.pop %v2539
  %v4676 = vmul.f32 %v2539, %v4675
  %v4677 = vsub.f32 1.0, %v4676
  %v4678 = vmul.f32 %v4675, %v4677
  %v4679 = vadd.f32 %v4675, %v4678
  %vm4680 = vweird.f32 %v2539
  %vm4681 = vweird.f32 %v4675
  %vm4682 = vmor %vm4680, %vm4681
  %v4683 = vsel %vm4682, %v4675, %v4679
  %v4684 = vand.u32 2147483647, %v2539
  %vm4685 = vcmp.eq.f32.partialorder %v4684, 8.507059e+37
  %v4686 = vand.u32 %v2539, 2147483648
  %v4687 = vor.u32 1.1754944e-38, %v4686
  %v4688 = vsel %vm4685, %v4687, %v4683
  %v4689 = vmul.f32 1.0, %v4688
  %v4690 = vrcp.pop %v2540
  %v4691 = vmul.f32 %v2540, %v4690
  %v4692 = vsub.f32 1.0, %v4691
  %v4693 = vmul.f32 %v4690, %v4692
  %v4694 = vadd.f32 %v4690, %v4693
  %vm4695 = vweird.f32 %v2540
  %vm4696 = vweird.f32 %v4690
  %vm4697 = vmor %vm4695, %vm4696
  %v4698 = vsel %vm4697, %v4690, %v4694
  %v4699 = vand.u32 2147483647, %v2540
  %vm4700 = vcmp.eq.f32.partialorder %v4699, 8.507059e+37
  %v4701 = vand.u32 %v2540, 2147483648
  %v4702 = vor.u32 1.1754944e-38, %v4701
  %v4703 = vsel %vm4700, %v4702, %v4698
  %v4704 = vmul.f32 1.0, %v4703
  %v4705 = vrcp.pop %v2541
  %v4706 = vmul.f32 %v2541, %v4705
  %v4707 = vsub.f32 1.0, %v4706
  %v4708 = vmul.f32 %v4705, %v4707
  %v4709 = vadd.f32 %v4705, %v4708
  %vm4710 = vweird.f32 %v2541
  %vm4711 = vweird.f32 %v4705
  %vm4712 = vmor %vm4710, %vm4711
  %v4713 = vsel %vm4712, %v4705, %v4709
  %v4714 = vand.u32 2147483647, %v2541
  %vm4715 = vcmp.eq.f32.partialorder %v4714, 8.507059e+37
  %v4716 = vand.u32 %v2541, 2147483648
  %v4717 = vor.u32 1.1754944e-38, %v4716
  %v4718 = vsel %vm4715, %v4717, %v4713
  %v4719 = vmul.f32 1.0, %v4718
  %v4720 = vrcp.pop %v2542
  %v4721 = vmul.f32 %v2542, %v4720
  %v4722 = vsub.f32 1.0, %v4721
  %v4723 = vmul.f32 %v4720, %v4722
  %v4724 = vadd.f32 %v4720, %v4723
  %vm4725 = vweird.f32 %v2542
  %vm4726 = vweird.f32 %v4720
  %vm4727 = vmor %vm4725, %vm4726
  %v4728 = vsel %vm4727, %v4720, %v4724
  %v4729 = vand.u32 2147483647, %v2542
  %vm4730 = vcmp.eq.f32.partialorder %v4729, 8.507059e+37
  %v4731 = vand.u32 %v2542, 2147483648
  %v4732 = vor.u32 1.1754944e-38, %v4731
  %v4733 = vsel %vm4730, %v4732, %v4728
  %v4734 = vmul.f32 1.0, %v4733
  %v4735 = vrcp.pop %v2543
  %v4736 = vmul.f32 %v2543, %v4735
  %v4737 = vsub.f32 1.0, %v4736
  %v4738 = vmul.f32 %v4735, %v4737
  %v4739 = vadd.f32 %v4735, %v4738
  %vm4740 = vweird.f32 %v2543
  %vm4741 = vweird.f32 %v4735
  %vm4742 = vmor %vm4740, %vm4741
  %v4743 = vsel %vm4742, %v4735, %v4739
  %v4744 = vand.u32 2147483647, %v2543
  %vm4745 = vcmp.eq.f32.partialorder %v4744, 8.507059e+37
  %v4746 = vand.u32 %v2543, 2147483648
  %v4747 = vor.u32 1.1754944e-38, %v4746
  %v4748 = vsel %vm4745, %v4747, %v4743
  %v4749 = vmul.f32 1.0, %v4748
  %v4750 = vrcp.pop %v2544
  %v4751 = vmul.f32 %v2544, %v4750
  %v4752 = vsub.f32 1.0, %v4751
  %v4753 = vmul.f32 %v4750, %v4752
  %v4754 = vadd.f32 %v4750, %v4753
  %vm4755 = vweird.f32 %v2544
  %vm4756 = vweird.f32 %v4750
  %vm4757 = vmor %vm4755, %vm4756
  %v4758 = vsel %vm4757, %v4750, %v4754
  %v4759 = vand.u32 2147483647, %v2544
  %vm4760 = vcmp.eq.f32.partialorder %v4759, 8.507059e+37
  %v4761 = vand.u32 %v2544, 2147483648
  %v4762 = vor.u32 1.1754944e-38, %v4761
  %v4763 = vsel %vm4760, %v4762, %v4758
  %v4764 = vmul.f32 1.0, %v4763
  %v4765 = vrcp.pop %v2545
  %v4766 = vmul.f32 %v2545, %v4765
  %v4767 = vsub.f32 1.0, %v4766
  %v4768 = vmul.f32 %v4765, %v4767
  %v4769 = vadd.f32 %v4765, %v4768
  %vm4770 = vweird.f32 %v2545
  %vm4771 = vweird.f32 %v4765
  %vm4772 = vmor %vm4770, %vm4771
  %v4773 = vsel %vm4772, %v4765, %v4769
  %v4774 = vand.u32 2147483647, %v2545
  %vm4775 = vcmp.eq.f32.partialorder %v4774, 8.507059e+37
  %v4776 = vand.u32 %v2545, 2147483648
  %v4777 = vor.u32 1.1754944e-38, %v4776
  %v4778 = vsel %vm4775, %v4777, %v4773
  %v4779 = vmul.f32 1.0, %v4778
  %v4780 = vrcp.pop %v2546
  %v4781 = vmul.f32 %v2546, %v4780
  %v4782 = vsub.f32 1.0, %v4781
  %v4783 = vmul.f32 %v4780, %v4782
  %v4784 = vadd.f32 %v4780, %v4783
  %vm4785 = vweird.f32 %v2546
  %vm4786 = vweird.f32 %v4780
  %vm4787 = vmor %vm4785, %vm4786
  %v4788 = vsel %vm4787, %v4780, %v4784
  %v4789 = vand.u32 2147483647, %v2546
  %vm4790 = vcmp.eq.f32.partialorder %v4789, 8.507059e+37
  %v4791 = vand.u32 %v2546, 2147483648
  %v4792 = vor.u32 1.1754944e-38, %v4791
  %v4793 = vsel %vm4790, %v4792, %v4788
  %v4794 = vmul.f32 1.0, %v4793
  %v4795 = vrcp.pop %v2547
  %v4796 = vmul.f32 %v2547, %v4795
  %v4797 = vsub.f32 1.0, %v4796
  %v4798 = vmul.f32 %v4795, %v4797
  %v4799 = vadd.f32 %v4795, %v4798
  %vm4800 = vweird.f32 %v2547
  %vm4801 = vweird.f32 %v4795
  %vm4802 = vmor %vm4800, %vm4801
  %v4803 = vsel %vm4802, %v4795, %v4799
  %v4804 = vand.u32 2147483647, %v2547
  %vm4805 = vcmp.eq.f32.partialorder %v4804, 8.507059e+37
  %v4806 = vand.u32 %v2547, 2147483648
  %v4807 = vor.u32 1.1754944e-38, %v4806
  %v4808 = vsel %vm4805, %v4807, %v4803
  %v4809 = vmul.f32 1.0, %v4808
  %v4810 = vrcp.pop %v2548
  %v4811 = vmul.f32 %v2548, %v4810
  %v4812 = vsub.f32 1.0, %v4811
  %v4813 = vmul.f32 %v4810, %v4812
  %v4814 = vadd.f32 %v4810, %v4813
  %vm4815 = vweird.f32 %v2548
  %vm4816 = vweird.f32 %v4810
  %vm4817 = vmor %vm4815, %vm4816
  %v4818 = vsel %vm4817, %v4810, %v4814
  %v4819 = vand.u32 2147483647, %v2548
  %vm4820 = vcmp.eq.f32.partialorder %v4819, 8.507059e+37
  %v4821 = vand.u32 %v2548, 2147483648
  %v4822 = vor.u32 1.1754944e-38, %v4821
  %v4823 = vsel %vm4820, %v4822, %v4818
  %v4824 = vmul.f32 1.0, %v4823
  %v4825 = vrcp.pop %v2549
  %v4826 = vmul.f32 %v2549, %v4825
  %v4827 = vsub.f32 1.0, %v4826
  %v4828 = vmul.f32 %v4825, %v4827
  %v4829 = vadd.f32 %v4825, %v4828
  %vm4830 = vweird.f32 %v2549
  %vm4831 = vweird.f32 %v4825
  %vm4832 = vmor %vm4830, %vm4831
  %v4833 = vsel %vm4832, %v4825, %v4829
  %v4834 = vand.u32 2147483647, %v2549
  %vm4835 = vcmp.eq.f32.partialorder %v4834, 8.507059e+37
  %v4836 = vand.u32 %v2549, 2147483648
  %v4837 = vor.u32 1.1754944e-38, %v4836
  %v4838 = vsel %vm4835, %v4837, %v4833
  %v4839 = vmul.f32 1.0, %v4838
  %v4840 = vrcp.pop %v2550
  %v4841 = vmul.f32 %v2550, %v4840
  %v4842 = vsub.f32 1.0, %v4841
  %v4843 = vmul.f32 %v4840, %v4842
  %v4844 = vadd.f32 %v4840, %v4843
  %vm4845 = vweird.f32 %v2550
  %vm4846 = vweird.f32 %v4840
  %vm4847 = vmor %vm4845, %vm4846
  %v4848 = vsel %vm4847, %v4840, %v4844
  %v4849 = vand.u32 2147483647, %v2550
  %vm4850 = vcmp.eq.f32.partialorder %v4849, 8.507059e+37
  %v4851 = vand.u32 %v2550, 2147483648
  %v4852 = vor.u32 1.1754944e-38, %v4851
  %v4853 = vsel %vm4850, %v4852, %v4848
  %v4854 = vmul.f32 1.0, %v4853
  %v4855 = vrcp.pop %v2551
  %v4856 = vmul.f32 %v2551, %v4855
  %v4857 = vsub.f32 1.0, %v4856
  %v4858 = vmul.f32 %v4855, %v4857
  %v4859 = vadd.f32 %v4855, %v4858
  %vm4860 = vweird.f32 %v2551
  %vm4861 = vweird.f32 %v4855
  %vm4862 = vmor %vm4860, %vm4861
  %v4863 = vsel %vm4862, %v4855, %v4859
  %v4864 = vand.u32 2147483647, %v2551
  %vm4865 = vcmp.eq.f32.partialorder %v4864, 8.507059e+37
  %v4866 = vand.u32 %v2551, 2147483648
  %v4867 = vor.u32 1.1754944e-38, %v4866
  %v4868 = vsel %vm4865, %v4867, %v4863
  %v4869 = vmul.f32 1.0, %v4868
  %v4870 = vrcp.pop %v2552
  %v4871 = vmul.f32 %v2552, %v4870
  %v4872 = vsub.f32 1.0, %v4871
  %v4873 = vmul.f32 %v4870, %v4872
  %v4874 = vadd.f32 %v4870, %v4873
  %vm4875 = vweird.f32 %v2552
  %vm4876 = vweird.f32 %v4870
  %vm4877 = vmor %vm4875, %vm4876
  %v4878 = vsel %vm4877, %v4870, %v4874
  %v4879 = vand.u32 2147483647, %v2552
  %vm4880 = vcmp.eq.f32.partialorder %v4879, 8.507059e+37
  %v4881 = vand.u32 %v2552, 2147483648
  %v4882 = vor.u32 1.1754944e-38, %v4881
  %v4883 = vsel %vm4880, %v4882, %v4878
  %v4884 = vmul.f32 1.0, %v4883
  %v4885 = vrcp.pop %v2553
  %v4886 = vmul.f32 %v2553, %v4885
  %v4887 = vsub.f32 1.0, %v4886
  %v4888 = vmul.f32 %v4885, %v4887
  %v4889 = vadd.f32 %v4885, %v4888
  %vm4890 = vweird.f32 %v2553
  %vm4891 = vweird.f32 %v4885
  %vm4892 = vmor %vm4890, %vm4891
  %v4893 = vsel %vm4892, %v4885, %v4889
  %v4894 = vand.u32 2147483647, %v2553
  %vm4895 = vcmp.eq.f32.partialorder %v4894, 8.507059e+37
  %v4896 = vand.u32 %v2553, 2147483648
  %v4897 = vor.u32 1.1754944e-38, %v4896
  %v4898 = vsel %vm4895, %v4897, %v4893
  %v4899 = vmul.f32 1.0, %v4898
  %v4900 = vrcp.pop %v2554
  %v4901 = vmul.f32 %v2554, %v4900
  %v4902 = vsub.f32 1.0, %v4901
  %v4903 = vmul.f32 %v4900, %v4902
  %v4904 = vadd.f32 %v4900, %v4903
  %vm4905 = vweird.f32 %v2554
  %vm4906 = vweird.f32 %v4900
  %vm4907 = vmor %vm4905, %vm4906
  %v4908 = vsel %vm4907, %v4900, %v4904
  %v4909 = vand.u32 2147483647, %v2554
  %vm4910 = vcmp.eq.f32.partialorder %v4909, 8.507059e+37
  %v4911 = vand.u32 %v2554, 2147483648
  %v4912 = vor.u32 1.1754944e-38, %v4911
  %v4913 = vsel %vm4910, %v4912, %v4908
  %v4914 = vmul.f32 1.0, %v4913
  %v4915 = vrcp.pop %v2555
  %v4916 = vmul.f32 %v2555, %v4915
  %v4917 = vsub.f32 1.0, %v4916
  %v4918 = vmul.f32 %v4915, %v4917
  %v4919 = vadd.f32 %v4915, %v4918
  %vm4920 = vweird.f32 %v2555
  %vm4921 = vweird.f32 %v4915
  %vm4922 = vmor %vm4920, %vm4921
  %v4923 = vsel %vm4922, %v4915, %v4919
  %v4924 = vand.u32 2147483647, %v2555
  %vm4925 = vcmp.eq.f32.partialorder %v4924, 8.507059e+37
  %v4926 = vand.u32 %v2555, 2147483648
  %v4927 = vor.u32 1.1754944e-38, %v4926
  %v4928 = vsel %vm4925, %v4927, %v4923
  %v4929 = vmul.f32 1.0, %v4928
  %v4930 = vrcp.pop %v2556
  %v4931 = vmul.f32 %v2556, %v4930
  %v4932 = vsub.f32 1.0, %v4931
  %v4933 = vmul.f32 %v4930, %v4932
  %v4934 = vadd.f32 %v4930, %v4933
  %vm4935 = vweird.f32 %v2556
  %vm4936 = vweird.f32 %v4930
  %vm4937 = vmor %vm4935, %vm4936
  %v4938 = vsel %vm4937, %v4930, %v4934
  %v4939 = vand.u32 2147483647, %v2556
  %vm4940 = vcmp.eq.f32.partialorder %v4939, 8.507059e+37
  %v4941 = vand.u32 %v2556, 2147483648
  %v4942 = vor.u32 1.1754944e-38, %v4941
  %v4943 = vsel %vm4940, %v4942, %v4938
  %v4944 = vmul.f32 1.0, %v4943
  %v4945 = vrcp.pop %v2557
  %v4946 = vmul.f32 %v2557, %v4945
  %v4947 = vsub.f32 1.0, %v4946
  %v4948 = vmul.f32 %v4945, %v4947
  %v4949 = vadd.f32 %v4945, %v4948
  %vm4950 = vweird.f32 %v2557
  %vm4951 = vweird.f32 %v4945
  %vm4952 = vmor %vm4950, %vm4951
  %v4953 = vsel %vm4952, %v4945, %v4949
  %v4954 = vand.u32 2147483647, %v2557
  %vm4955 = vcmp.eq.f32.partialorder %v4954, 8.507059e+37
  %v4956 = vand.u32 %v2557, 2147483648
  %v4957 = vor.u32 1.1754944e-38, %v4956
  %v4958 = vsel %vm4955, %v4957, %v4953
  %v4959 = vmul.f32 1.0, %v4958
  %v4960 = vrcp.pop %v2558
  %v4961 = vmul.f32 %v2558, %v4960
  %v4962 = vsub.f32 1.0, %v4961
  %v4963 = vmul.f32 %v4960, %v4962
  %v4964 = vadd.f32 %v4960, %v4963
  %vm4965 = vweird.f32 %v2558
  %vm4966 = vweird.f32 %v4960
  %vm4967 = vmor %vm4965, %vm4966
  %v4968 = vsel %vm4967, %v4960, %v4964
  %v4969 = vand.u32 2147483647, %v2558
  %vm4970 = vcmp.eq.f32.partialorder %v4969, 8.507059e+37
  %v4971 = vand.u32 %v2558, 2147483648
  %v4972 = vor.u32 1.1754944e-38, %v4971
  %v4973 = vsel %vm4970, %v4972, %v4968
  %v4974 = vmul.f32 1.0, %v4973
  %v4975 = vrcp.pop %v2559
  %v4976 = vmul.f32 %v2559, %v4975
  %v4977 = vsub.f32 1.0, %v4976
  %v4978 = vmul.f32 %v4975, %v4977
  %v4979 = vadd.f32 %v4975, %v4978
  %vm4980 = vweird.f32 %v2559
  %vm4981 = vweird.f32 %v4975
  %vm4982 = vmor %vm4980, %vm4981
  %v4983 = vsel %vm4982, %v4975, %v4979
  %v4984 = vand.u32 2147483647, %v2559
  %vm4985 = vcmp.eq.f32.partialorder %v4984, 8.507059e+37
  %v4986 = vand.u32 %v2559, 2147483648
  %v4987 = vor.u32 1.1754944e-38, %v4986
  %v4988 = vsel %vm4985, %v4987, %v4983
  %v4989 = vmul.f32 1.0, %v4988
  %v4990 = vrcp.pop %v2560
  %v4991 = vmul.f32 %v2560, %v4990
  %v4992 = vsub.f32 1.0, %v4991
  %v4993 = vmul.f32 %v4990, %v4992
  %v4994 = vadd.f32 %v4990, %v4993
  %vm4995 = vweird.f32 %v2560
  %vm4996 = vweird.f32 %v4990
  %vm4997 = vmor %vm4995, %vm4996
  %v4998 = vsel %vm4997, %v4990, %v4994
  %v4999 = vand.u32 2147483647, %v2560
  %vm5000 = vcmp.eq.f32.partialorder %v4999, 8.507059e+37
  %v5001 = vand.u32 %v2560, 2147483648
  %v5002 = vor.u32 1.1754944e-38, %v5001
  %v5003 = vsel %vm5000, %v5002, %v4998
  %v5004 = vmul.f32 1.0, %v5003
  %v5005 = vrcp.pop %v2561
  %v5006 = vmul.f32 %v2561, %v5005
  %v5007 = vsub.f32 1.0, %v5006
  %v5008 = vmul.f32 %v5005, %v5007
  %v5009 = vadd.f32 %v5005, %v5008
  %vm5010 = vweird.f32 %v2561
  %vm5011 = vweird.f32 %v5005
  %vm5012 = vmor %vm5010, %vm5011
  %v5013 = vsel %vm5012, %v5005, %v5009
  %v5014 = vand.u32 2147483647, %v2561
  %vm5015 = vcmp.eq.f32.partialorder %v5014, 8.507059e+37
  %v5016 = vand.u32 %v2561, 2147483648
  %v5017 = vor.u32 1.1754944e-38, %v5016
  %v5018 = vsel %vm5015, %v5017, %v5013
  %v5019 = vmul.f32 1.0, %v5018
  %v5020 = vrcp.pop %v2562
  %v5021 = vmul.f32 %v2562, %v5020
  %v5022 = vsub.f32 1.0, %v5021
  %v5023 = vmul.f32 %v5020, %v5022
  %v5024 = vadd.f32 %v5020, %v5023
  %vm5025 = vweird.f32 %v2562
  %vm5026 = vweird.f32 %v5020
  %vm5027 = vmor %vm5025, %vm5026
  %v5028 = vsel %vm5027, %v5020, %v5024
  %v5029 = vand.u32 2147483647, %v2562
  %vm5030 = vcmp.eq.f32.partialorder %v5029, 8.507059e+37
  %v5031 = vand.u32 %v2562, 2147483648
  %v5032 = vor.u32 1.1754944e-38, %v5031
  %v5033 = vsel %vm5030, %v5032, %v5028
  %v5034 = vmul.f32 1.0, %v5033
  %v5035 = vrcp.pop %v2563
  %v5036 = vmul.f32 %v2563, %v5035
  %v5037 = vsub.f32 1.0, %v5036
  %v5038 = vmul.f32 %v5035, %v5037
  %v5039 = vadd.f32 %v5035, %v5038
  %vm5040 = vweird.f32 %v2563
  %vm5041 = vweird.f32 %v5035
  %vm5042 = vmor %vm5040, %vm5041
  %v5043 = vsel %vm5042, %v5035, %v5039
  %v5044 = vand.u32 2147483647, %v2563
  %vm5045 = vcmp.eq.f32.partialorder %v5044, 8.507059e+37
  %v5046 = vand.u32 %v2563, 2147483648
  %v5047 = vor.u32 1.1754944e-38, %v5046
  %v5048 = vsel %vm5045, %v5047, %v5043
  %v5049 = vmul.f32 1.0, %v5048
  %v5050 = vrcp.pop %v2564
  %v5051 = vmul.f32 %v2564, %v5050
  %v5052 = vsub.f32 1.0, %v5051
  %v5053 = vmul.f32 %v5050, %v5052
  %v5054 = vadd.f32 %v5050, %v5053
  %vm5055 = vweird.f32 %v2564
  %vm5056 = vweird.f32 %v5050
  %vm5057 = vmor %vm5055, %vm5056
  %v5058 = vsel %vm5057, %v5050, %v5054
  %v5059 = vand.u32 2147483647, %v2564
  %vm5060 = vcmp.eq.f32.partialorder %v5059, 8.507059e+37
  %v5061 = vand.u32 %v2564, 2147483648
  %v5062 = vor.u32 1.1754944e-38, %v5061
  %v5063 = vsel %vm5060, %v5062, %v5058
  %v5064 = vmul.f32 1.0, %v5063
  %v5065 = vrcp.pop %v2565
  %v5066 = vmul.f32 %v2565, %v5065
  %v5067 = vsub.f32 1.0, %v5066
  %v5068 = vmul.f32 %v5065, %v5067
  %v5069 = vadd.f32 %v5065, %v5068
  %vm5070 = vweird.f32 %v2565
  %vm5071 = vweird.f32 %v5065
  %vm5072 = vmor %vm5070, %vm5071
  %v5073 = vsel %vm5072, %v5065, %v5069
  %v5074 = vand.u32 2147483647, %v2565
  %vm5075 = vcmp.eq.f32.partialorder %v5074, 8.507059e+37
  %v5076 = vand.u32 %v2565, 2147483648
  %v5077 = vor.u32 1.1754944e-38, %v5076
  %v5078 = vsel %vm5075, %v5077, %v5073
  %v5079 = vmul.f32 1.0, %v5078
  %v5080 = vrcp.pop %v2566
  %v5081 = vmul.f32 %v2566, %v5080
  %v5082 = vsub.f32 1.0, %v5081
  %v5083 = vmul.f32 %v5080, %v5082
  %v5084 = vadd.f32 %v5080, %v5083
  %vm5085 = vweird.f32 %v2566
  %vm5086 = vweird.f32 %v5080
  %vm5087 = vmor %vm5085, %vm5086
  %v5088 = vsel %vm5087, %v5080, %v5084
  %v5089 = vand.u32 2147483647, %v2566
  %vm5090 = vcmp.eq.f32.partialorder %v5089, 8.507059e+37
  %v5091 = vand.u32 %v2566, 2147483648
  %v5092 = vor.u32 1.1754944e-38, %v5091
  %v5093 = vsel %vm5090, %v5092, %v5088
  %v5094 = vmul.f32 1.0, %v5093
  %v5095 = vrcp.pop %v2567
  %v5096 = vmul.f32 %v2567, %v5095
  %v5097 = vsub.f32 1.0, %v5096
  %v5098 = vmul.f32 %v5095, %v5097
  %v5099 = vadd.f32 %v5095, %v5098
  %vm5100 = vweird.f32 %v2567
  %vm5101 = vweird.f32 %v5095
  %vm5102 = vmor %vm5100, %vm5101
  %v5103 = vsel %vm5102, %v5095, %v5099
  %v5104 = vand.u32 2147483647, %v2567
  %vm5105 = vcmp.eq.f32.partialorder %v5104, 8.507059e+37
  %v5106 = vand.u32 %v2567, 2147483648
  %v5107 = vor.u32 1.1754944e-38, %v5106
  %v5108 = vsel %vm5105, %v5107, %v5103
  %v5109 = vmul.f32 1.0, %v5108
  %v5110 = vrcp.pop %v2568
  %v5111 = vmul.f32 %v2568, %v5110
  %v5112 = vsub.f32 1.0, %v5111
  %v5113 = vmul.f32 %v5110, %v5112
  %v5114 = vadd.f32 %v5110, %v5113
  %vm5115 = vweird.f32 %v2568
  %vm5116 = vweird.f32 %v5110
  %vm5117 = vmor %vm5115, %vm5116
  %v5118 = vsel %vm5117, %v5110, %v5114
  %v5119 = vand.u32 2147483647, %v2568
  %vm5120 = vcmp.eq.f32.partialorder %v5119, 8.507059e+37
  %v5121 = vand.u32 %v2568, 2147483648
  %v5122 = vor.u32 1.1754944e-38, %v5121
  %v5123 = vsel %vm5120, %v5122, %v5118
  %v5124 = vmul.f32 1.0, %v5123
  %v5125 = vrcp.pop %v2569
  %v5126 = vmul.f32 %v2569, %v5125
  %v5127 = vsub.f32 1.0, %v5126
  %v5128 = vmul.f32 %v5125, %v5127
  %v5129 = vadd.f32 %v5125, %v5128
  %vm5130 = vweird.f32 %v2569
  %vm5131 = vweird.f32 %v5125
  %vm5132 = vmor %vm5130, %vm5131
  %v5133 = vsel %vm5132, %v5125, %v5129
  %v5134 = vand.u32 2147483647, %v2569
  %vm5135 = vcmp.eq.f32.partialorder %v5134, 8.507059e+37
  %v5136 = vand.u32 %v2569, 2147483648
  %v5137 = vor.u32 1.1754944e-38, %v5136
  %v5138 = vsel %vm5135, %v5137, %v5133
  %v5139 = vmul.f32 1.0, %v5138
  %v5140 = vrcp.pop %v2570
  %v5141 = vmul.f32 %v2570, %v5140
  %v5142 = vsub.f32 1.0, %v5141
  %v5143 = vmul.f32 %v5140, %v5142
  %v5144 = vadd.f32 %v5140, %v5143
  %vm5145 = vweird.f32 %v2570
  %vm5146 = vweird.f32 %v5140
  %vm5147 = vmor %vm5145, %vm5146
  %v5148 = vsel %vm5147, %v5140, %v5144
  %v5149 = vand.u32 2147483647, %v2570
  %vm5150 = vcmp.eq.f32.partialorder %v5149, 8.507059e+37
  %v5151 = vand.u32 %v2570, 2147483648
  %v5152 = vor.u32 1.1754944e-38, %v5151
  %v5153 = vsel %vm5150, %v5152, %v5148
  %v5154 = vmul.f32 1.0, %v5153
  %v5155 = vrcp.pop %v2571
  %v5156 = vmul.f32 %v2571, %v5155
  %v5157 = vsub.f32 1.0, %v5156
  %v5158 = vmul.f32 %v5155, %v5157
  %v5159 = vadd.f32 %v5155, %v5158
  %vm5160 = vweird.f32 %v2571
  %vm5161 = vweird.f32 %v5155
  %vm5162 = vmor %vm5160, %vm5161
  %v5163 = vsel %vm5162, %v5155, %v5159
  %v5164 = vand.u32 2147483647, %v2571
  %vm5165 = vcmp.eq.f32.partialorder %v5164, 8.507059e+37
  %v5166 = vand.u32 %v2571, 2147483648
  %v5167 = vor.u32 1.1754944e-38, %v5166
  %v5168 = vsel %vm5165, %v5167, %v5163
  %v5169 = vmul.f32 1.0, %v5168
  %v5170 = vrcp.pop %v2572
  %v5171 = vmul.f32 %v2572, %v5170
  %v5172 = vsub.f32 1.0, %v5171
  %v5173 = vmul.f32 %v5170, %v5172
  %v5174 = vadd.f32 %v5170, %v5173
  %vm5175 = vweird.f32 %v2572
  %vm5176 = vweird.f32 %v5170
  %vm5177 = vmor %vm5175, %vm5176
  %v5178 = vsel %vm5177, %v5170, %v5174
  %v5179 = vand.u32 2147483647, %v2572
  %vm5180 = vcmp.eq.f32.partialorder %v5179, 8.507059e+37
  %v5181 = vand.u32 %v2572, 2147483648
  %v5182 = vor.u32 1.1754944e-38, %v5181
  %v5183 = vsel %vm5180, %v5182, %v5178
  %v5184 = vmul.f32 1.0, %v5183
  %v5185 = vrcp.pop %v2573
  %v5186 = vmul.f32 %v2573, %v5185
  %v5187 = vsub.f32 1.0, %v5186
  %v5188 = vmul.f32 %v5185, %v5187
  %v5189 = vadd.f32 %v5185, %v5188
  %vm5190 = vweird.f32 %v2573
  %vm5191 = vweird.f32 %v5185
  %vm5192 = vmor %vm5190, %vm5191
  %v5193 = vsel %vm5192, %v5185, %v5189
  %v5194 = vand.u32 2147483647, %v2573
  %vm5195 = vcmp.eq.f32.partialorder %v5194, 8.507059e+37
  %v5196 = vand.u32 %v2573, 2147483648
  %v5197 = vor.u32 1.1754944e-38, %v5196
  %v5198 = vsel %vm5195, %v5197, %v5193
  %v5199 = vmul.f32 1.0, %v5198
  %v5200 = vrcp.pop %v2574
  %v5201 = vmul.f32 %v2574, %v5200
  %v5202 = vsub.f32 1.0, %v5201
  %v5203 = vmul.f32 %v5200, %v5202
  %v5204 = vadd.f32 %v5200, %v5203
  %vm5205 = vweird.f32 %v2574
  %vm5206 = vweird.f32 %v5200
  %vm5207 = vmor %vm5205, %vm5206
  %v5208 = vsel %vm5207, %v5200, %v5204
  %v5209 = vand.u32 2147483647, %v2574
  %vm5210 = vcmp.eq.f32.partialorder %v5209, 8.507059e+37
  %v5211 = vand.u32 %v2574, 2147483648
  %v5212 = vor.u32 1.1754944e-38, %v5211
  %v5213 = vsel %vm5210, %v5212, %v5208
  %v5214 = vmul.f32 1.0, %v5213
  %v5215 = vrcp.pop %v2575
  %v5216 = vmul.f32 %v2575, %v5215
  %v5217 = vsub.f32 1.0, %v5216
  %v5218 = vmul.f32 %v5215, %v5217
  %v5219 = vadd.f32 %v5215, %v5218
  %vm5220 = vweird.f32 %v2575
  %vm5221 = vweird.f32 %v5215
  %vm5222 = vmor %vm5220, %vm5221
  %v5223 = vsel %vm5222, %v5215, %v5219
  %v5224 = vand.u32 2147483647, %v2575
  %vm5225 = vcmp.eq.f32.partialorder %v5224, 8.507059e+37
  %v5226 = vand.u32 %v2575, 2147483648
  %v5227 = vor.u32 1.1754944e-38, %v5226
  %v5228 = vsel %vm5225, %v5227, %v5223
  %v5229 = vmul.f32 1.0, %v5228
  %v5230 = vrcp.pop %v2576
  %v5231 = vmul.f32 %v2576, %v5230
  %v5232 = vsub.f32 1.0, %v5231
  %v5233 = vmul.f32 %v5230, %v5232
  %v5234 = vadd.f32 %v5230, %v5233
  %vm5235 = vweird.f32 %v2576
  %vm5236 = vweird.f32 %v5230
  %vm5237 = vmor %vm5235, %vm5236
  %v5238 = vsel %vm5237, %v5230, %v5234
  %v5239 = vand.u32 2147483647, %v2576
  %vm5240 = vcmp.eq.f32.partialorder %v5239, 8.507059e+37
  %v5241 = vand.u32 %v2576, 2147483648
  %v5242 = vor.u32 1.1754944e-38, %v5241
  %v5243 = vsel %vm5240, %v5242, %v5238
  %v5244 = vmul.f32 1.0, %v5243
  %v5245 = vrcp.pop %v2577
  %v5246 = vmul.f32 %v2577, %v5245
  %v5247 = vsub.f32 1.0, %v5246
  %v5248 = vmul.f32 %v5245, %v5247
  %v5249 = vadd.f32 %v5245, %v5248
  %vm5250 = vweird.f32 %v2577
  %vm5251 = vweird.f32 %v5245
  %vm5252 = vmor %vm5250, %vm5251
  %v5253 = vsel %vm5252, %v5245, %v5249
  %v5254 = vand.u32 2147483647, %v2577
  %vm5255 = vcmp.eq.f32.partialorder %v5254, 8.507059e+37
  %v5256 = vand.u32 %v2577, 2147483648
  %v5257 = vor.u32 1.1754944e-38, %v5256
  %v5258 = vsel %vm5255, %v5257, %v5253
  %v5259 = vmul.f32 1.0, %v5258
  %v5260 = vrcp.pop %v2578
  %v5261 = vmul.f32 %v2578, %v5260
  %v5262 = vsub.f32 1.0, %v5261
  %v5263 = vmul.f32 %v5260, %v5262
  %v5264 = vadd.f32 %v5260, %v5263
  %vm5265 = vweird.f32 %v2578
  %vm5266 = vweird.f32 %v5260
  %vm5267 = vmor %vm5265, %vm5266
  %v5268 = vsel %vm5267, %v5260, %v5264
  %v5269 = vand.u32 2147483647, %v2578
  %vm5270 = vcmp.eq.f32.partialorder %v5269, 8.507059e+37
  %v5271 = vand.u32 %v2578, 2147483648
  %v5272 = vor.u32 1.1754944e-38, %v5271
  %v5273 = vsel %vm5270, %v5272, %v5268
  %v5274 = vmul.f32 1.0, %v5273
  %v5275 = vrcp.pop %v2579
  %v5276 = vmul.f32 %v2579, %v5275
  %v5277 = vsub.f32 1.0, %v5276
  %v5278 = vmul.f32 %v5275, %v5277
  %v5279 = vadd.f32 %v5275, %v5278
  %vm5280 = vweird.f32 %v2579
  %vm5281 = vweird.f32 %v5275
  %vm5282 = vmor %vm5280, %vm5281
  %v5283 = vsel %vm5282, %v5275, %v5279
  %v5284 = vand.u32 2147483647, %v2579
  %vm5285 = vcmp.eq.f32.partialorder %v5284, 8.507059e+37
  %v5286 = vand.u32 %v2579, 2147483648
  %v5287 = vor.u32 1.1754944e-38, %v5286
  %v5288 = vsel %vm5285, %v5287, %v5283
  %v5289 = vmul.f32 1.0, %v5288
  %v5290 = vrcp.pop %v2580
  %v5291 = vmul.f32 %v2580, %v5290
  %v5292 = vsub.f32 1.0, %v5291
  %v5293 = vmul.f32 %v5290, %v5292
  %v5294 = vadd.f32 %v5290, %v5293
  %vm5295 = vweird.f32 %v2580
  %vm5296 = vweird.f32 %v5290
  %vm5297 = vmor %vm5295, %vm5296
  %v5298 = vsel %vm5297, %v5290, %v5294
  %v5299 = vand.u32 2147483647, %v2580
  %vm5300 = vcmp.eq.f32.partialorder %v5299, 8.507059e+37
  %v5301 = vand.u32 %v2580, 2147483648
  %v5302 = vor.u32 1.1754944e-38, %v5301
  %v5303 = vsel %vm5300, %v5302, %v5298
  %v5304 = vmul.f32 1.0, %v5303
  %v5305 = vrcp.pop %v2581
  %v5306 = vmul.f32 %v2581, %v5305
  %v5307 = vsub.f32 1.0, %v5306
  %v5308 = vmul.f32 %v5305, %v5307
  %v5309 = vadd.f32 %v5305, %v5308
  %vm5310 = vweird.f32 %v2581
  %vm5311 = vweird.f32 %v5305
  %vm5312 = vmor %vm5310, %vm5311
  %v5313 = vsel %vm5312, %v5305, %v5309
  %v5314 = vand.u32 2147483647, %v2581
  %vm5315 = vcmp.eq.f32.partialorder %v5314, 8.507059e+37
  %v5316 = vand.u32 %v2581, 2147483648
  %v5317 = vor.u32 1.1754944e-38, %v5316
  %v5318 = vsel %vm5315, %v5317, %v5313
  %v5319 = vmul.f32 1.0, %v5318
  %v5320 = vrcp.pop %v2582
  %v5321 = vmul.f32 %v2582, %v5320
  %v5322 = vsub.f32 1.0, %v5321
  %v5323 = vmul.f32 %v5320, %v5322
  %v5324 = vadd.f32 %v5320, %v5323
  %vm5325 = vweird.f32 %v2582
  %vm5326 = vweird.f32 %v5320
  %vm5327 = vmor %vm5325, %vm5326
  %v5328 = vsel %vm5327, %v5320, %v5324
  %v5329 = vand.u32 2147483647, %v2582
  %vm5330 = vcmp.eq.f32.partialorder %v5329, 8.507059e+37
  %v5331 = vand.u32 %v2582, 2147483648
  %v5332 = vor.u32 1.1754944e-38, %v5331
  %v5333 = vsel %vm5330, %v5332, %v5328
  %v5334 = vmul.f32 1.0, %v5333
  %v5335 = vrcp.pop %v2583
  %v5336 = vmul.f32 %v2583, %v5335
  %v5337 = vsub.f32 1.0, %v5336
  %v5338 = vmul.f32 %v5335, %v5337
  %v5339 = vadd.f32 %v5335, %v5338
  %vm5340 = vweird.f32 %v2583
  %vm5341 = vweird.f32 %v5335
  %vm5342 = vmor %vm5340, %vm5341
  %v5343 = vsel %vm5342, %v5335, %v5339
  %v5344 = vand.u32 2147483647, %v2583
  %vm5345 = vcmp.eq.f32.partialorder %v5344, 8.507059e+37
  %v5346 = vand.u32 %v2583, 2147483648
  %v5347 = vor.u32 1.1754944e-38, %v5346
  %v5348 = vsel %vm5345, %v5347, %v5343
  %v5349 = vmul.f32 1.0, %v5348
  %v5350 = vrcp.pop %v2584
  %v5351 = vmul.f32 %v2584, %v5350
  %v5352 = vsub.f32 1.0, %v5351
  %v5353 = vmul.f32 %v5350, %v5352
  %v5354 = vadd.f32 %v5350, %v5353
  %vm5355 = vweird.f32 %v2584
  %vm5356 = vweird.f32 %v5350
  %vm5357 = vmor %vm5355, %vm5356
  %v5358 = vsel %vm5357, %v5350, %v5354
  %v5359 = vand.u32 2147483647, %v2584
  %vm5360 = vcmp.eq.f32.partialorder %v5359, 8.507059e+37
  %v5361 = vand.u32 %v2584, 2147483648
  %v5362 = vor.u32 1.1754944e-38, %v5361
  %v5363 = vsel %vm5360, %v5362, %v5358
  %v5364 = vmul.f32 1.0, %v5363
  %v5365 = vrcp.pop %v2585
  %v5366 = vmul.f32 %v2585, %v5365
  %v5367 = vsub.f32 1.0, %v5366
  %v5368 = vmul.f32 %v5365, %v5367
  %v5369 = vadd.f32 %v5365, %v5368
  %vm5370 = vweird.f32 %v2585
  %vm5371 = vweird.f32 %v5365
  %vm5372 = vmor %vm5370, %vm5371
  %v5373 = vsel %vm5372, %v5365, %v5369
  %v5374 = vand.u32 2147483647, %v2585
  %vm5375 = vcmp.eq.f32.partialorder %v5374, 8.507059e+37
  %v5376 = vand.u32 %v2585, 2147483648
  %v5377 = vor.u32 1.1754944e-38, %v5376
  %v5378 = vsel %vm5375, %v5377, %v5373
  %v5379 = vmul.f32 1.0, %v5378
  %v5380 = vrcp.pop %v2586
  %v5381 = vmul.f32 %v2586, %v5380
  %v5382 = vsub.f32 1.0, %v5381
  %v5383 = vmul.f32 %v5380, %v5382
  %v5384 = vadd.f32 %v5380, %v5383
  %vm5385 = vweird.f32 %v2586
  %vm5386 = vweird.f32 %v5380
  %vm5387 = vmor %vm5385, %vm5386
  %v5388 = vsel %vm5387, %v5380, %v5384
  %v5389 = vand.u32 2147483647, %v2586
  %vm5390 = vcmp.eq.f32.partialorder %v5389, 8.507059e+37
  %v5391 = vand.u32 %v2586, 2147483648
  %v5392 = vor.u32 1.1754944e-38, %v5391
  %v5393 = vsel %vm5390, %v5392, %v5388
  %v5394 = vmul.f32 1.0, %v5393
  %v5395 = vrcp.pop %v2587
  %v5396 = vmul.f32 %v2587, %v5395
  %v5397 = vsub.f32 1.0, %v5396
  %v5398 = vmul.f32 %v5395, %v5397
  %v5399 = vadd.f32 %v5395, %v5398
  %vm5400 = vweird.f32 %v2587
  %vm5401 = vweird.f32 %v5395
  %vm5402 = vmor %vm5400, %vm5401
  %v5403 = vsel %vm5402, %v5395, %v5399
  %v5404 = vand.u32 2147483647, %v2587
  %vm5405 = vcmp.eq.f32.partialorder %v5404, 8.507059e+37
  %v5406 = vand.u32 %v2587, 2147483648
  %v5407 = vor.u32 1.1754944e-38, %v5406
  %v5408 = vsel %vm5405, %v5407, %v5403
  %v5409 = vmul.f32 1.0, %v5408
  %v5410 = vrcp.pop %v2588
  %v5411 = vmul.f32 %v2588, %v5410
  %v5412 = vsub.f32 1.0, %v5411
  %v5413 = vmul.f32 %v5410, %v5412
  %v5414 = vadd.f32 %v5410, %v5413
  %vm5415 = vweird.f32 %v2588
  %vm5416 = vweird.f32 %v5410
  %vm5417 = vmor %vm5415, %vm5416
  %v5418 = vsel %vm5417, %v5410, %v5414
  %v5419 = vand.u32 2147483647, %v2588
  %vm5420 = vcmp.eq.f32.partialorder %v5419, 8.507059e+37
  %v5421 = vand.u32 %v2588, 2147483648
  %v5422 = vor.u32 1.1754944e-38, %v5421
  %v5423 = vsel %vm5420, %v5422, %v5418
  %v5424 = vmul.f32 1.0, %v5423
  %v5425 = vrcp.pop %v2589
  %v5426 = vmul.f32 %v2589, %v5425
  %v5427 = vsub.f32 1.0, %v5426
  %v5428 = vmul.f32 %v5425, %v5427
  %v5429 = vadd.f32 %v5425, %v5428
  %vm5430 = vweird.f32 %v2589
  %vm5431 = vweird.f32 %v5425
  %vm5432 = vmor %vm5430, %vm5431
  %v5433 = vsel %vm5432, %v5425, %v5429
  %v5434 = vand.u32 2147483647, %v2589
  %vm5435 = vcmp.eq.f32.partialorder %v5434, 8.507059e+37
  %v5436 = vand.u32 %v2589, 2147483648
  %v5437 = vor.u32 1.1754944e-38, %v5436
  %v5438 = vsel %vm5435, %v5437, %v5433
  %v5439 = vmul.f32 1.0, %v5438
  %v5440 = vrcp.pop %v2590
  %v5441 = vmul.f32 %v2590, %v5440
  %v5442 = vsub.f32 1.0, %v5441
  %v5443 = vmul.f32 %v5440, %v5442
  %v5444 = vadd.f32 %v5440, %v5443
  %vm5445 = vweird.f32 %v2590
  %vm5446 = vweird.f32 %v5440
  %vm5447 = vmor %vm5445, %vm5446
  %v5448 = vsel %vm5447, %v5440, %v5444
  %v5449 = vand.u32 2147483647, %v2590
  %vm5450 = vcmp.eq.f32.partialorder %v5449, 8.507059e+37
  %v5451 = vand.u32 %v2590, 2147483648
  %v5452 = vor.u32 1.1754944e-38, %v5451
  %v5453 = vsel %vm5450, %v5452, %v5448
  %v5454 = vmul.f32 1.0, %v5453
  %v5455 = vrcp.pop %v2591
  %v5456 = vmul.f32 %v2591, %v5455
  %v5457 = vsub.f32 1.0, %v5456
  %v5458 = vmul.f32 %v5455, %v5457
  %v5459 = vadd.f32 %v5455, %v5458
  %vm5460 = vweird.f32 %v2591
  %vm5461 = vweird.f32 %v5455
  %vm5462 = vmor %vm5460, %vm5461
  %v5463 = vsel %vm5462, %v5455, %v5459
  %v5464 = vand.u32 2147483647, %v2591
  %vm5465 = vcmp.eq.f32.partialorder %v5464, 8.507059e+37
  %v5466 = vand.u32 %v2591, 2147483648
  %v5467 = vor.u32 1.1754944e-38, %v5466
  %v5468 = vsel %vm5465, %v5467, %v5463
  %v5469 = vmul.f32 1.0, %v5468
  %v5470 = vrcp.pop %v2592
  %v5471 = vmul.f32 %v2592, %v5470
  %v5472 = vsub.f32 1.0, %v5471
  %v5473 = vmul.f32 %v5470, %v5472
  %v5474 = vadd.f32 %v5470, %v5473
  %vm5475 = vweird.f32 %v2592
  %vm5476 = vweird.f32 %v5470
  %vm5477 = vmor %vm5475, %vm5476
  %v5478 = vsel %vm5477, %v5470, %v5474
  %v5479 = vand.u32 2147483647, %v2592
  %vm5480 = vcmp.eq.f32.partialorder %v5479, 8.507059e+37
  %v5481 = vand.u32 %v2592, 2147483648
  %v5482 = vor.u32 1.1754944e-38, %v5481
  %v5483 = vsel %vm5480, %v5482, %v5478
  %v5484 = vmul.f32 1.0, %v5483
  %v5485 = vrcp.pop %v2593
  %v5486 = vmul.f32 %v2593, %v5485
  %v5487 = vsub.f32 1.0, %v5486
  %v5488 = vmul.f32 %v5485, %v5487
  %v5489 = vadd.f32 %v5485, %v5488
  %vm5490 = vweird.f32 %v2593
  %vm5491 = vweird.f32 %v5485
  %vm5492 = vmor %vm5490, %vm5491
  %v5493 = vsel %vm5492, %v5485, %v5489
  %v5494 = vand.u32 2147483647, %v2593
  %vm5495 = vcmp.eq.f32.partialorder %v5494, 8.507059e+37
  %v5496 = vand.u32 %v2593, 2147483648
  %v5497 = vor.u32 1.1754944e-38, %v5496
  %v5498 = vsel %vm5495, %v5497, %v5493
  %v5499 = vmul.f32 1.0, %v5498
  %v5500 = vrcp.pop %v2594
  %v5501 = vmul.f32 %v2594, %v5500
  %v5502 = vsub.f32 1.0, %v5501
  %v5503 = vmul.f32 %v5500, %v5502
  %v5504 = vadd.f32 %v5500, %v5503
  %vm5505 = vweird.f32 %v2594
  %vm5506 = vweird.f32 %v5500
  %vm5507 = vmor %vm5505, %vm5506
  %v5508 = vsel %vm5507, %v5500, %v5504
  %v5509 = vand.u32 2147483647, %v2594
  %vm5510 = vcmp.eq.f32.partialorder %v5509, 8.507059e+37
  %v5511 = vand.u32 %v2594, 2147483648
  %v5512 = vor.u32 1.1754944e-38, %v5511
  %v5513 = vsel %vm5510, %v5512, %v5508
  %v5514 = vmul.f32 1.0, %v5513
  %v5515 = vrcp.pop %v2595
  %v5516 = vmul.f32 %v2595, %v5515
  %v5517 = vsub.f32 1.0, %v5516
  %v5518 = vmul.f32 %v5515, %v5517
  %v5519 = vadd.f32 %v5515, %v5518
  %vm5520 = vweird.f32 %v2595
  %vm5521 = vweird.f32 %v5515
  %vm5522 = vmor %vm5520, %vm5521
  %v5523 = vsel %vm5522, %v5515, %v5519
  %v5524 = vand.u32 2147483647, %v2595
  %vm5525 = vcmp.eq.f32.partialorder %v5524, 8.507059e+37
  %v5526 = vand.u32 %v2595, 2147483648
  %v5527 = vor.u32 1.1754944e-38, %v5526
  %v5528 = vsel %vm5525, %v5527, %v5523
  %v5529 = vmul.f32 1.0, %v5528
  %v5530 = vrcp.pop %v2596
  %v5531 = vmul.f32 %v2596, %v5530
  %v5532 = vsub.f32 1.0, %v5531
  %v5533 = vmul.f32 %v5530, %v5532
  %v5534 = vadd.f32 %v5530, %v5533
  %vm5535 = vweird.f32 %v2596
  %vm5536 = vweird.f32 %v5530
  %vm5537 = vmor %vm5535, %vm5536
  %v5538 = vsel %vm5537, %v5530, %v5534
  %v5539 = vand.u32 2147483647, %v2596
  %vm5540 = vcmp.eq.f32.partialorder %v5539, 8.507059e+37
  %v5541 = vand.u32 %v2596, 2147483648
  %v5542 = vor.u32 1.1754944e-38, %v5541
  %v5543 = vsel %vm5540, %v5542, %v5538
  %v5544 = vmul.f32 1.0, %v5543
  %v5545 = vrcp.pop %v2597
  %v5546 = vmul.f32 %v2597, %v5545
  %v5547 = vsub.f32 1.0, %v5546
  %v5548 = vmul.f32 %v5545, %v5547
  %v5549 = vadd.f32 %v5545, %v5548
  %vm5550 = vweird.f32 %v2597
  %vm5551 = vweird.f32 %v5545
  %vm5552 = vmor %vm5550, %vm5551
  %v5553 = vsel %vm5552, %v5545, %v5549
  %v5554 = vand.u32 2147483647, %v2597
  %vm5555 = vcmp.eq.f32.partialorder %v5554, 8.507059e+37
  %v5556 = vand.u32 %v2597, 2147483648
  %v5557 = vor.u32 1.1754944e-38, %v5556
  %v5558 = vsel %vm5555, %v5557, %v5553
  %v5559 = vmul.f32 1.0, %v5558
  %v5560 = vrcp.pop %v2598
  %v5561 = vmul.f32 %v2598, %v5560
  %v5562 = vsub.f32 1.0, %v5561
  %v5563 = vmul.f32 %v5560, %v5562
  %v5564 = vadd.f32 %v5560, %v5563
  %vm5565 = vweird.f32 %v2598
  %vm5566 = vweird.f32 %v5560
  %vm5567 = vmor %vm5565, %vm5566
  %v5568 = vsel %vm5567, %v5560, %v5564
  %v5569 = vand.u32 2147483647, %v2598
  %vm5570 = vcmp.eq.f32.partialorder %v5569, 8.507059e+37
  %v5571 = vand.u32 %v2598, 2147483648
  %v5572 = vor.u32 1.1754944e-38, %v5571
  %v5573 = vsel %vm5570, %v5572, %v5568
  %v5574 = vmul.f32 1.0, %v5573
  %v5575 = vrcp.pop %v2599
  %v5576 = vmul.f32 %v2599, %v5575
  %v5577 = vsub.f32 1.0, %v5576
  %v5578 = vmul.f32 %v5575, %v5577
  %v5579 = vadd.f32 %v5575, %v5578
  %vm5580 = vweird.f32 %v2599
  %vm5581 = vweird.f32 %v5575
  %vm5582 = vmor %vm5580, %vm5581
  %v5583 = vsel %vm5582, %v5575, %v5579
  %v5584 = vand.u32 2147483647, %v2599
  %vm5585 = vcmp.eq.f32.partialorder %v5584, 8.507059e+37
  %v5586 = vand.u32 %v2599, 2147483648
  %v5587 = vor.u32 1.1754944e-38, %v5586
  %v5588 = vsel %vm5585, %v5587, %v5583
  %v5589 = vmul.f32 1.0, %v5588
  %v5590 = vrcp.pop %v2600
  %v5591 = vmul.f32 %v2600, %v5590
  %v5592 = vsub.f32 1.0, %v5591
  %v5593 = vmul.f32 %v5590, %v5592
  %v5594 = vadd.f32 %v5590, %v5593
  %vm5595 = vweird.f32 %v2600
  %vm5596 = vweird.f32 %v5590
  %vm5597 = vmor %vm5595, %vm5596
  %v5598 = vsel %vm5597, %v5590, %v5594
  %v5599 = vand.u32 2147483647, %v2600
  %vm5600 = vcmp.eq.f32.partialorder %v5599, 8.507059e+37
  %v5601 = vand.u32 %v2600, 2147483648
  %v5602 = vor.u32 1.1754944e-38, %v5601
  %v5603 = vsel %vm5600, %v5602, %v5598
  %v5604 = vmul.f32 1.0, %v5603
  %v5605 = vrcp.pop %v2601
  %v5606 = vmul.f32 %v2601, %v5605
  %v5607 = vsub.f32 1.0, %v5606
  %v5608 = vmul.f32 %v5605, %v5607
  %v5609 = vadd.f32 %v5605, %v5608
  %vm5610 = vweird.f32 %v2601
  %vm5611 = vweird.f32 %v5605
  %vm5612 = vmor %vm5610, %vm5611
  %v5613 = vsel %vm5612, %v5605, %v5609
  %v5614 = vand.u32 2147483647, %v2601
  %vm5615 = vcmp.eq.f32.partialorder %v5614, 8.507059e+37
  %v5616 = vand.u32 %v2601, 2147483648
  %v5617 = vor.u32 1.1754944e-38, %v5616
  %v5618 = vsel %vm5615, %v5617, %v5613
  %v5619 = vmul.f32 1.0, %v5618
  %v5620 = vrcp.pop %v2602
  %v5621 = vmul.f32 %v2602, %v5620
  %v5622 = vsub.f32 1.0, %v5621
  %v5623 = vmul.f32 %v5620, %v5622
  %v5624 = vadd.f32 %v5620, %v5623
  %vm5625 = vweird.f32 %v2602
  %vm5626 = vweird.f32 %v5620
  %vm5627 = vmor %vm5625, %vm5626
  %v5628 = vsel %vm5627, %v5620, %v5624
  %v5629 = vand.u32 2147483647, %v2602
  %vm5630 = vcmp.eq.f32.partialorder %v5629, 8.507059e+37
  %v5631 = vand.u32 %v2602, 2147483648
  %v5632 = vor.u32 1.1754944e-38, %v5631
  %v5633 = vsel %vm5630, %v5632, %v5628
  %v5634 = vmul.f32 1.0, %v5633
  %v5635 = vrcp.pop %v2603
  %v5636 = vmul.f32 %v2603, %v5635
  %v5637 = vsub.f32 1.0, %v5636
  %v5638 = vmul.f32 %v5635, %v5637
  %v5639 = vadd.f32 %v5635, %v5638
  %vm5640 = vweird.f32 %v2603
  %vm5641 = vweird.f32 %v5635
  %vm5642 = vmor %vm5640, %vm5641
  %v5643 = vsel %vm5642, %v5635, %v5639
  %v5644 = vand.u32 2147483647, %v2603
  %vm5645 = vcmp.eq.f32.partialorder %v5644, 8.507059e+37
  %v5646 = vand.u32 %v2603, 2147483648
  %v5647 = vor.u32 1.1754944e-38, %v5646
  %v5648 = vsel %vm5645, %v5647, %v5643
  %v5649 = vmul.f32 1.0, %v5648
  %v5650 = vrcp.pop %v2604
  %v5651 = vmul.f32 %v2604, %v5650
  %v5652 = vsub.f32 1.0, %v5651
  %v5653 = vmul.f32 %v5650, %v5652
  %v5654 = vadd.f32 %v5650, %v5653
  %vm5655 = vweird.f32 %v2604
  %vm5656 = vweird.f32 %v5650
  %vm5657 = vmor %vm5655, %vm5656
  %v5658 = vsel %vm5657, %v5650, %v5654
  %v5659 = vand.u32 2147483647, %v2604
  %vm5660 = vcmp.eq.f32.partialorder %v5659, 8.507059e+37
  %v5661 = vand.u32 %v2604, 2147483648
  %v5662 = vor.u32 1.1754944e-38, %v5661
  %v5663 = vsel %vm5660, %v5662, %v5658
  %v5664 = vmul.f32 1.0, %v5663
  %v5665 = vld [vmem:[%s3] sm:$0xff]
  %v5666 = vld [vmem:[%s3 + $0x8] sm:$0xff]
  %v5667 = vld [vmem:[%s3 + $0x10] sm:$0xff]
  %v5668 = vld [vmem:[%s3 + $0x18] sm:$0xff]
  %v5669 = vld [vmem:[%s3 + $0x20] sm:$0xff]
  %v5670 = vld [vmem:[%s3 + $0x28] sm:$0xff]
  %v5671 = vld [vmem:[%s3 + $0x30] sm:$0xff]
  %v5672 = vld [vmem:[%s3 + $0x38] sm:$0xff]
  %v5673 = vld [vmem:[%s3 + $0x40] sm:$0xff]
  %v5674 = vld [vmem:[%s3 + $0x48] sm:$0xff]
  %v5675 = vld [vmem:[%s3 + $0x50] sm:$0xff]
  %v5676 = vld [vmem:[%s3 + $0x58] sm:$0xff]
  %v5677 = vld [vmem:[%s3 + $0x60] sm:$0xff]
  %v5678 = vld [vmem:[%s3 + $0x68] sm:$0xff]
  %v5679 = vld [vmem:[%s3 + $0x70] sm:$0xff]
  %v5680 = vld [vmem:[%s3 + $0x78] sm:$0xff]
  %v5681 = vld [vmem:[%s3 + $0x80] sm:$0xff]
  %v5682 = vld [vmem:[%s3 + $0x88] sm:$0xff]
  %v5683 = vld [vmem:[%s3 + $0x90] sm:$0xff]
  %v5684 = vld [vmem:[%s3 + $0x98] sm:$0xff]
  %v5685 = vld [vmem:[%s3 + $0xa0] sm:$0xff]
  %v5686 = vld [vmem:[%s3 + $0xa8] sm:$0xff]
  %v5687 = vld [vmem:[%s3 + $0xb0] sm:$0xff]
  %v5688 = vld [vmem:[%s3 + $0xb8] sm:$0xff]
  %v5689 = vld [vmem:[%s3 + $0xc0] sm:$0xff]
  %v5690 = vld [vmem:[%s3 + $0xc8] sm:$0xff]
  %v5691 = vld [vmem:[%s3 + $0xd0] sm:$0xff]
  %v5692 = vld [vmem:[%s3 + $0xd8] sm:$0xff]
  %v5693 = vld [vmem:[%s3 + $0xe0] sm:$0xff]
  %v5694 = vld [vmem:[%s3 + $0xe8] sm:$0xff]
  %v5695 = vld [vmem:[%s3 + $0xf0] sm:$0xff]
  %v5696 = vld [vmem:[%s3 + $0xf8] sm:$0xff]
  %v5697 = vld [vmem:[%s3 + $0x100] sm:$0xff]
  %v5698 = vld [vmem:[%s3 + $0x108] sm:$0xff]
  %v5699 = vld [vmem:[%s3 + $0x110] sm:$0xff]
  %v5700 = vld [vmem:[%s3 + $0x118] sm:$0xff]
  %v5701 = vld [vmem:[%s3 + $0x120] sm:$0xff]
  %v5702 = vld [vmem:[%s3 + $0x128] sm:$0xff]
  %v5703 = vld [vmem:[%s3 + $0x130] sm:$0xff]
  %v5704 = vld [vmem:[%s3 + $0x138] sm:$0xff]
  %v5705 = vld [vmem:[%s3 + $0x140] sm:$0xff]
  %v5706 = vld [vmem:[%s3 + $0x148] sm:$0xff]
  %v5707 = vld [vmem:[%s3 + $0x150] sm:$0xff]
  %v5708 = vld [vmem:[%s3 + $0x158] sm:$0xff]
  %v5709 = vld [vmem:[%s3 + $0x160] sm:$0xff]
  %v5710 = vld [vmem:[%s3 + $0x168] sm:$0xff]
  %v5711 = vld [vmem:[%s3 + $0x170] sm:$0xff]
  %v5712 = vld [vmem:[%s3 + $0x178] sm:$0xff]
  %v5713 = vld [vmem:[%s3 + $0x180] sm:$0xff]
  %v5714 = vld [vmem:[%s3 + $0x188] sm:$0xff]
  %v5715 = vld [vmem:[%s3 + $0x190] sm:$0xff]
  %v5716 = vld [vmem:[%s3 + $0x198] sm:$0xff]
  %v5717 = vld [vmem:[%s3 + $0x1a0] sm:$0xff]
  %v5718 = vld [vmem:[%s3 + $0x1a8] sm:$0xff]
  %v5719 = vld [vmem:[%s3 + $0x1b0] sm:$0xff]
  %v5720 = vld [vmem:[%s3 + $0x1b8] sm:$0xff]
  %v5721 = vld [vmem:[%s3 + $0x1c0] sm:$0xff]
  %v5722 = vld [vmem:[%s3 + $0x1c8] sm:$0xff]
  %v5723 = vld [vmem:[%s3 + $0x1d0] sm:$0xff]
  %v5724 = vld [vmem:[%s3 + $0x1d8] sm:$0xff]
  %v5725 = vld [vmem:[%s3 + $0x1e0] sm:$0xff]
  %v5726 = vld [vmem:[%s3 + $0x1e8] sm:$0xff]
  %v5727 = vld [vmem:[%s3 + $0x1f0] sm:$0xff]
  %v5728 = vld [vmem:[%s3 + $0x1f8] sm:$0xff]
  %v5729 = vld [vmem:[%s3 + $0x200] sm:$0xff]
  %v5730 = vld [vmem:[%s3 + $0x208] sm:$0xff]
  %v5731 = vld [vmem:[%s3 + $0x210] sm:$0xff]
  %v5732 = vld [vmem:[%s3 + $0x218] sm:$0xff]
  %v5733 = vld [vmem:[%s3 + $0x220] sm:$0xff]
  %v5734 = vld [vmem:[%s3 + $0x228] sm:$0xff]
  %v5735 = vld [vmem:[%s3 + $0x230] sm:$0xff]
  %v5736 = vld [vmem:[%s3 + $0x238] sm:$0xff]
  %v5737 = vld [vmem:[%s3 + $0x240] sm:$0xff]
  %v5738 = vld [vmem:[%s3 + $0x248] sm:$0xff]
  %v5739 = vld [vmem:[%s3 + $0x250] sm:$0xff]
  %v5740 = vld [vmem:[%s3 + $0x258] sm:$0xff]
  %v5741 = vld [vmem:[%s3 + $0x260] sm:$0xff]
  %v5742 = vld [vmem:[%s3 + $0x268] sm:$0xff]
  %v5743 = vld [vmem:[%s3 + $0x270] sm:$0xff]
  %v5744 = vld [vmem:[%s3 + $0x278] sm:$0xff]
  %v5745 = vld [vmem:[%s3 + $0x280] sm:$0xff]
  %v5746 = vld [vmem:[%s3 + $0x288] sm:$0xff]
  %v5747 = vld [vmem:[%s3 + $0x290] sm:$0xff]
  %v5748 = vld [vmem:[%s3 + $0x298] sm:$0xff]
  %v5749 = vld [vmem:[%s3 + $0x2a0] sm:$0xff]
  %v5750 = vld [vmem:[%s3 + $0x2a8] sm:$0xff]
  %v5751 = vld [vmem:[%s3 + $0x2b0] sm:$0xff]
  %v5752 = vld [vmem:[%s3 + $0x2b8] sm:$0xff]
  %v5753 = vld [vmem:[%s3 + $0x2c0] sm:$0xff]
  %v5754 = vld [vmem:[%s3 + $0x2c8] sm:$0xff]
  %v5755 = vld [vmem:[%s3 + $0x2d0] sm:$0xff]
  %v5756 = vld [vmem:[%s3 + $0x2d8] sm:$0xff]
  %v5757 = vld [vmem:[%s3 + $0x2e0] sm:$0xff]
  %v5758 = vld [vmem:[%s3 + $0x2e8] sm:$0xff]
  %v5759 = vld [vmem:[%s3 + $0x2f0] sm:$0xff]
  %v5760 = vld [vmem:[%s3 + $0x2f8] sm:$0xff]
  %v5761 = vld [vmem:[%s3 + $0x300] sm:$0xff]
  %v5762 = vld [vmem:[%s3 + $0x308] sm:$0xff]
  %v5763 = vld [vmem:[%s3 + $0x310] sm:$0xff]
  %v5764 = vld [vmem:[%s3 + $0x318] sm:$0xff]
  %v5765 = vld [vmem:[%s3 + $0x320] sm:$0xff]
  %v5766 = vld [vmem:[%s3 + $0x328] sm:$0xff]
  %v5767 = vld [vmem:[%s3 + $0x330] sm:$0xff]
  %v5768 = vld [vmem:[%s3 + $0x338] sm:$0xff]
  %v5769 = vld [vmem:[%s3 + $0x340] sm:$0xff]
  %v5770 = vld [vmem:[%s3 + $0x348] sm:$0xff]
  %v5771 = vld [vmem:[%s3 + $0x350] sm:$0xff]
  %v5772 = vld [vmem:[%s3 + $0x358] sm:$0xff]
  %v5773 = vld [vmem:[%s3 + $0x360] sm:$0xff]
  %v5774 = vld [vmem:[%s3 + $0x368] sm:$0xff]
  %v5775 = vld [vmem:[%s3 + $0x370] sm:$0xff]
  %v5776 = vld [vmem:[%s3 + $0x378] sm:$0xff]
  %v5777 = vld [vmem:[%s3 + $0x380] sm:$0xff]
  %v5778 = vld [vmem:[%s3 + $0x388] sm:$0xff]
  %v5779 = vld [vmem:[%s3 + $0x390] sm:$0xff]
  %v5780 = vld [vmem:[%s3 + $0x398] sm:$0xff]
  %v5781 = vld [vmem:[%s3 + $0x3a0] sm:$0xff]
  %v5782 = vld [vmem:[%s3 + $0x3a8] sm:$0xff]
  %v5783 = vld [vmem:[%s3 + $0x3b0] sm:$0xff]
  %v5784 = vld [vmem:[%s3 + $0x3b8] sm:$0xff]
  %v5785 = vld [vmem:[%s3 + $0x3c0] sm:$0xff]
  %v5786 = vld [vmem:[%s3 + $0x3c8] sm:$0xff]
  %v5787 = vld [vmem:[%s3 + $0x3d0] sm:$0xff]
  %v5788 = vld [vmem:[%s3 + $0x3d8] sm:$0xff]
  %v5789 = vld [vmem:[%s3 + $0x3e0] sm:$0xff]
  %v5790 = vld [vmem:[%s3 + $0x3e8] sm:$0xff]
  %v5791 = vld [vmem:[%s3 + $0x3f0] sm:$0xff]
  %v5792 = vld [vmem:[%s3 + $0x3f8] sm:$0xff]
  %v5793 = vld [vmem:[%s3 + $0x400] sm:$0xff]
  %v5794 = vld [vmem:[%s3 + $0x408] sm:$0xff]
  %v5795 = vld [vmem:[%s3 + $0x410] sm:$0xff]
  %v5796 = vld [vmem:[%s3 + $0x418] sm:$0xff]
  %v5797 = vld [vmem:[%s3 + $0x420] sm:$0xff]
  %v5798 = vld [vmem:[%s3 + $0x428] sm:$0xff]
  %v5799 = vld [vmem:[%s3 + $0x430] sm:$0xff]
  %v5800 = vld [vmem:[%s3 + $0x438] sm:$0xff]
  %v5801 = vld [vmem:[%s3 + $0x440] sm:$0xff]
  %v5802 = vld [vmem:[%s3 + $0x448] sm:$0xff]
  %v5803 = vld [vmem:[%s3 + $0x450] sm:$0xff]
  %v5804 = vld [vmem:[%s3 + $0x458] sm:$0xff]
  %v5805 = vld [vmem:[%s3 + $0x460] sm:$0xff]
  %v5806 = vld [vmem:[%s3 + $0x468] sm:$0xff]
  %v5807 = vld [vmem:[%s3 + $0x470] sm:$0xff]
  %v5808 = vld [vmem:[%s3 + $0x478] sm:$0xff]
  %v5809 = vld [vmem:[%s3 + $0x480] sm:$0xff]
  %v5810 = vld [vmem:[%s3 + $0x488] sm:$0xff]
  %v5811 = vld [vmem:[%s3 + $0x490] sm:$0xff]
  %v5812 = vld [vmem:[%s3 + $0x498] sm:$0xff]
  %v5813 = vld [vmem:[%s3 + $0x4a0] sm:$0xff]
  %v5814 = vld [vmem:[%s3 + $0x4a8] sm:$0xff]
  %v5815 = vld [vmem:[%s3 + $0x4b0] sm:$0xff]
  %v5816 = vld [vmem:[%s3 + $0x4b8] sm:$0xff]
  %v5817 = vld [vmem:[%s3 + $0x4c0] sm:$0xff]
  %v5818 = vld [vmem:[%s3 + $0x4c8] sm:$0xff]
  %v5819 = vld [vmem:[%s3 + $0x4d0] sm:$0xff]
  %v5820 = vld [vmem:[%s3 + $0x4d8] sm:$0xff]
  %v5821 = vld [vmem:[%s3 + $0x4e0] sm:$0xff]
  %v5822 = vld [vmem:[%s3 + $0x4e8] sm:$0xff]
  %v5823 = vld [vmem:[%s3 + $0x4f0] sm:$0xff]
  %v5824 = vld [vmem:[%s3 + $0x4f8] sm:$0xff]
  %v5825 = vld [vmem:[%s3 + $0x500] sm:$0xff]
  %v5826 = vld [vmem:[%s3 + $0x508] sm:$0xff]
  %v5827 = vld [vmem:[%s3 + $0x510] sm:$0xff]
  %v5828 = vld [vmem:[%s3 + $0x518] sm:$0xff]
  %v5829 = vld [vmem:[%s3 + $0x520] sm:$0xff]
  %v5830 = vld [vmem:[%s3 + $0x528] sm:$0xff]
  %v5831 = vld [vmem:[%s3 + $0x530] sm:$0xff]
  %v5832 = vld [vmem:[%s3 + $0x538] sm:$0xff]
  %v5833 = vld [vmem:[%s3 + $0x540] sm:$0xff]
  %v5834 = vld [vmem:[%s3 + $0x548] sm:$0xff]
  %v5835 = vld [vmem:[%s3 + $0x550] sm:$0xff]
  %v5836 = vld [vmem:[%s3 + $0x558] sm:$0xff]
  %v5837 = vld [vmem:[%s3 + $0x560] sm:$0xff]
  %v5838 = vld [vmem:[%s3 + $0x568] sm:$0xff]
  %v5839 = vld [vmem:[%s3 + $0x570] sm:$0xff]
  %v5840 = vld [vmem:[%s3 + $0x578] sm:$0xff]
  %v5841 = vld [vmem:[%s3 + $0x580] sm:$0xff]
  %v5842 = vld [vmem:[%s3 + $0x588] sm:$0xff]
  %v5843 = vld [vmem:[%s3 + $0x590] sm:$0xff]
  %v5844 = vld [vmem:[%s3 + $0x598] sm:$0xff]
  %v5845 = vld [vmem:[%s3 + $0x5a0] sm:$0xff]
  %v5846 = vld [vmem:[%s3 + $0x5a8] sm:$0xff]
  %v5847 = vld [vmem:[%s3 + $0x5b0] sm:$0xff]
  %v5848 = vld [vmem:[%s3 + $0x5b8] sm:$0xff]
  %v5849 = vld [vmem:[%s3 + $0x5c0] sm:$0xff]
  %v5850 = vld [vmem:[%s3 + $0x5c8] sm:$0xff]
  %v5851 = vld [vmem:[%s3 + $0x5d0] sm:$0xff]
  %v5852 = vld [vmem:[%s3 + $0x5d8] sm:$0xff]
  %v5853 = vld [vmem:[%s3 + $0x5e0] sm:$0xff]
  %v5854 = vld [vmem:[%s3 + $0x5e8] sm:$0xff]
  %v5855 = vld [vmem:[%s3 + $0x5f0] sm:$0xff]
  %v5856 = vld [vmem:[%s3 + $0x5f8] sm:$0xff]
  %v5857 = vld [vmem:[%s3 + $0x600] sm:$0xff]
  %v5858 = vld [vmem:[%s3 + $0x608] sm:$0xff]
  %v5859 = vld [vmem:[%s3 + $0x610] sm:$0xff]
  %v5860 = vld [vmem:[%s3 + $0x618] sm:$0xff]
  %v5861 = vld [vmem:[%s3 + $0x620] sm:$0xff]
  %v5862 = vld [vmem:[%s3 + $0x628] sm:$0xff]
  %v5863 = vld [vmem:[%s3 + $0x630] sm:$0xff]
  %v5864 = vld [vmem:[%s3 + $0x638] sm:$0xff]
  %v5865 = vld [vmem:[%s3 + $0x640] sm:$0xff]
  %v5866 = vld [vmem:[%s3 + $0x648] sm:$0xff]
  %v5867 = vld [vmem:[%s3 + $0x650] sm:$0xff]
  %v5868 = vld [vmem:[%s3 + $0x658] sm:$0xff]
  %5870 = vset.pattern.permute.xlu0 0
  %5871 = vperm.xlu0 %5870, %v2619
  %v5872 = vpop.permute.xlu0 %5871
  %5875 = vset.pattern.permute.xlu0 0
  %5876 = vperm.xlu0 %5875, %v2634
  %v5877 = vpop.permute.xlu0 %5876
  %5880 = vset.pattern.permute.xlu0 0
  %5881 = vperm.xlu0 %5880, %v2649
  %v5882 = vpop.permute.xlu0 %5881
  %5885 = vset.pattern.permute.xlu0 0
  %5886 = vperm.xlu0 %5885, %v2664
  %v5887 = vpop.permute.xlu0 %5886
  %5890 = vset.pattern.permute.xlu0 0
  %5891 = vperm.xlu0 %5890, %v2679
  %v5892 = vpop.permute.xlu0 %5891
  %5895 = vset.pattern.permute.xlu0 0
  %5896 = vperm.xlu0 %5895, %v2694
  %v5897 = vpop.permute.xlu0 %5896
  %5900 = vset.pattern.permute.xlu0 0
  %5901 = vperm.xlu0 %5900, %v2709
  %v5902 = vpop.permute.xlu0 %5901
  %5905 = vset.pattern.permute.xlu0 0
  %5906 = vperm.xlu0 %5905, %v2724
  %v5907 = vpop.permute.xlu0 %5906
  %5910 = vset.pattern.permute.xlu0 0
  %5911 = vperm.xlu0 %5910, %v2739
  %v5912 = vpop.permute.xlu0 %5911
  %5915 = vset.pattern.permute.xlu0 0
  %5916 = vperm.xlu0 %5915, %v2754
  %v5917 = vpop.permute.xlu0 %5916
  %5920 = vset.pattern.permute.xlu0 0
  %5921 = vperm.xlu0 %5920, %v2769
  %v5922 = vpop.permute.xlu0 %5921
  %5925 = vset.pattern.permute.xlu0 0
  %5926 = vperm.xlu0 %5925, %v2784
  %v5927 = vpop.permute.xlu0 %5926
  %5930 = vset.pattern.permute.xlu0 0
  %5931 = vperm.xlu0 %5930, %v2799
  %v5932 = vpop.permute.xlu0 %5931
  %5935 = vset.pattern.permute.xlu0 0
  %5936 = vperm.xlu0 %5935, %v2814
  %v5937 = vpop.permute.xlu0 %5936
  %5940 = vset.pattern.permute.xlu0 0
  %5941 = vperm.xlu0 %5940, %v2829
  %v5942 = vpop.permute.xlu0 %5941
  %5945 = vset.pattern.permute.xlu0 0
  %5946 = vperm.xlu0 %5945, %v2844
  %v5947 = vpop.permute.xlu0 %5946
  %5950 = vset.pattern.permute.xlu0 0
  %5951 = vperm.xlu0 %5950, %v2859
  %v5952 = vpop.permute.xlu0 %5951
  %5955 = vset.pattern.permute.xlu0 0
  %5956 = vperm.xlu0 %5955, %v2874
  %v5957 = vpop.permute.xlu0 %5956
  %5960 = vset.pattern.permute.xlu0 0
  %5961 = vperm.xlu0 %5960, %v2889
  %v5962 = vpop.permute.xlu0 %5961
  %5965 = vset.pattern.permute.xlu0 0
  %5966 = vperm.xlu0 %5965, %v2904
  %v5967 = vpop.permute.xlu0 %5966
  %5970 = vset.pattern.permute.xlu0 0
  %5971 = vperm.xlu0 %5970, %v2919
  %v5972 = vpop.permute.xlu0 %5971
  %5975 = vset.pattern.permute.xlu0 0
  %5976 = vperm.xlu0 %5975, %v2934
  %v5977 = vpop.permute.xlu0 %5976
  %5980 = vset.pattern.permute.xlu0 0
  %5981 = vperm.xlu0 %5980, %v2949
  %v5982 = vpop.permute.xlu0 %5981
  %5985 = vset.pattern.permute.xlu0 0
  %5986 = vperm.xlu0 %5985, %v2964
  %v5987 = vpop.permute.xlu0 %5986
  %5990 = vset.pattern.permute.xlu0 0
  %5991 = vperm.xlu0 %5990, %v2979
  %v5992 = vpop.permute.xlu0 %5991
  %5995 = vset.pattern.permute.xlu0 0
  %5996 = vperm.xlu0 %5995, %v2994
  %v5997 = vpop.permute.xlu0 %5996
  %6000 = vset.pattern.permute.xlu0 0
  %6001 = vperm.xlu0 %6000, %v3009
  %v6002 = vpop.permute.xlu0 %6001
  %6005 = vset.pattern.permute.xlu0 0
  %6006 = vperm.xlu0 %6005, %v3024
  %v6007 = vpop.permute.xlu0 %6006
  %6010 = vset.pattern.permute.xlu0 0
  %6011 = vperm.xlu0 %6010, %v3039
  %v6012 = vpop.permute.xlu0 %6011
  %6015 = vset.pattern.permute.xlu0 0
  %6016 = vperm.xlu0 %6015, %v3054
  %v6017 = vpop.permute.xlu0 %6016
  %6020 = vset.pattern.permute.xlu0 0
  %6021 = vperm.xlu0 %6020, %v3069
  %v6022 = vpop.permute.xlu0 %6021
  %6025 = vset.pattern.permute.xlu0 0
  %6026 = vperm.xlu0 %6025, %v3084
  %v6027 = vpop.permute.xlu0 %6026
  %6030 = vset.pattern.permute.xlu0 0
  %6031 = vperm.xlu0 %6030, %v3099
  %v6032 = vpop.permute.xlu0 %6031
  %6035 = vset.pattern.permute.xlu0 0
  %6036 = vperm.xlu0 %6035, %v3114
  %v6037 = vpop.permute.xlu0 %6036
  %6040 = vset.pattern.permute.xlu0 0
  %6041 = vperm.xlu0 %6040, %v3129
  %v6042 = vpop.permute.xlu0 %6041
  %6045 = vset.pattern.permute.xlu0 0
  %6046 = vperm.xlu0 %6045, %v3144
  %v6047 = vpop.permute.xlu0 %6046
  %6050 = vset.pattern.permute.xlu0 0
  %6051 = vperm.xlu0 %6050, %v3159
  %v6052 = vpop.permute.xlu0 %6051
  %6055 = vset.pattern.permute.xlu0 0
  %6056 = vperm.xlu0 %6055, %v3174
  %v6057 = vpop.permute.xlu0 %6056
  %6060 = vset.pattern.permute.xlu0 0
  %6061 = vperm.xlu0 %6060, %v3189
  %v6062 = vpop.permute.xlu0 %6061
  %6065 = vset.pattern.permute.xlu0 0
  %6066 = vperm.xlu0 %6065, %v3204
  %v6067 = vpop.permute.xlu0 %6066
  %6070 = vset.pattern.permute.xlu0 0
  %6071 = vperm.xlu0 %6070, %v3219
  %v6072 = vpop.permute.xlu0 %6071
  %6075 = vset.pattern.permute.xlu0 0
  %6076 = vperm.xlu0 %6075, %v3234
  %v6077 = vpop.permute.xlu0 %6076
  %6080 = vset.pattern.permute.xlu0 0
  %6081 = vperm.xlu0 %6080, %v3249
  %v6082 = vpop.permute.xlu0 %6081
  %6085 = vset.pattern.permute.xlu0 0
  %6086 = vperm.xlu0 %6085, %v3264
  %v6087 = vpop.permute.xlu0 %6086
  %6090 = vset.pattern.permute.xlu0 0
  %6091 = vperm.xlu0 %6090, %v3279
  %v6092 = vpop.permute.xlu0 %6091
  %6095 = vset.pattern.permute.xlu0 0
  %6096 = vperm.xlu0 %6095, %v3294
  %v6097 = vpop.permute.xlu0 %6096
  %6100 = vset.pattern.permute.xlu0 0
  %6101 = vperm.xlu0 %6100, %v3309
  %v6102 = vpop.permute.xlu0 %6101
  %6105 = vset.pattern.permute.xlu0 0
  %6106 = vperm.xlu0 %6105, %v3324
  %v6107 = vpop.permute.xlu0 %6106
  %6110 = vset.pattern.permute.xlu0 0
  %6111 = vperm.xlu0 %6110, %v3339
  %v6112 = vpop.permute.xlu0 %6111
  %6115 = vset.pattern.permute.xlu0 0
  %6116 = vperm.xlu0 %6115, %v3354
  %v6117 = vpop.permute.xlu0 %6116
  %6120 = vset.pattern.permute.xlu0 0
  %6121 = vperm.xlu0 %6120, %v3369
  %v6122 = vpop.permute.xlu0 %6121
  %6125 = vset.pattern.permute.xlu0 0
  %6126 = vperm.xlu0 %6125, %v3384
  %v6127 = vpop.permute.xlu0 %6126
  %6130 = vset.pattern.permute.xlu0 0
  %6131 = vperm.xlu0 %6130, %v3399
  %v6132 = vpop.permute.xlu0 %6131
  %6135 = vset.pattern.permute.xlu0 0
  %6136 = vperm.xlu0 %6135, %v3414
  %v6137 = vpop.permute.xlu0 %6136
  %6140 = vset.pattern.permute.xlu0 0
  %6141 = vperm.xlu0 %6140, %v3429
  %v6142 = vpop.permute.xlu0 %6141
  %6145 = vset.pattern.permute.xlu0 0
  %6146 = vperm.xlu0 %6145, %v3444
  %v6147 = vpop.permute.xlu0 %6146
  %6150 = vset.pattern.permute.xlu0 0
  %6151 = vperm.xlu0 %6150, %v3459
  %v6152 = vpop.permute.xlu0 %6151
  %6155 = vset.pattern.permute.xlu0 0
  %6156 = vperm.xlu0 %6155, %v3474
  %v6157 = vpop.permute.xlu0 %6156
  %6160 = vset.pattern.permute.xlu0 0
  %6161 = vperm.xlu0 %6160, %v3489
  %v6162 = vpop.permute.xlu0 %6161
  %6165 = vset.pattern.permute.xlu0 0
  %6166 = vperm.xlu0 %6165, %v3504
  %v6167 = vpop.permute.xlu0 %6166
  %6170 = vset.pattern.permute.xlu0 0
  %6171 = vperm.xlu0 %6170, %v3519
  %v6172 = vpop.permute.xlu0 %6171
  %6175 = vset.pattern.permute.xlu0 0
  %6176 = vperm.xlu0 %6175, %v3534
  %v6177 = vpop.permute.xlu0 %6176
  %6180 = vset.pattern.permute.xlu0 0
  %6181 = vperm.xlu0 %6180, %v3549
  %v6182 = vpop.permute.xlu0 %6181
  %6185 = vset.pattern.permute.xlu0 0
  %6186 = vperm.xlu0 %6185, %v3564
  %v6187 = vpop.permute.xlu0 %6186
  %6190 = vset.pattern.permute.xlu0 0
  %6191 = vperm.xlu0 %6190, %v3579
  %v6192 = vpop.permute.xlu0 %6191
  %6195 = vset.pattern.permute.xlu0 0
  %6196 = vperm.xlu0 %6195, %v3594
  %v6197 = vpop.permute.xlu0 %6196
  %6200 = vset.pattern.permute.xlu0 0
  %6201 = vperm.xlu0 %6200, %v3609
  %v6202 = vpop.permute.xlu0 %6201
  %6205 = vset.pattern.permute.xlu0 0
  %6206 = vperm.xlu0 %6205, %v3624
  %v6207 = vpop.permute.xlu0 %6206
  %6210 = vset.pattern.permute.xlu0 0
  %6211 = vperm.xlu0 %6210, %v3639
  %v6212 = vpop.permute.xlu0 %6211
  %6215 = vset.pattern.permute.xlu0 0
  %6216 = vperm.xlu0 %6215, %v3654
  %v6217 = vpop.permute.xlu0 %6216
  %6220 = vset.pattern.permute.xlu0 0
  %6221 = vperm.xlu0 %6220, %v3669
  %v6222 = vpop.permute.xlu0 %6221
  %6225 = vset.pattern.permute.xlu0 0
  %6226 = vperm.xlu0 %6225, %v3684
  %v6227 = vpop.permute.xlu0 %6226
  %6230 = vset.pattern.permute.xlu0 0
  %6231 = vperm.xlu0 %6230, %v3699
  %v6232 = vpop.permute.xlu0 %6231
  %6235 = vset.pattern.permute.xlu0 0
  %6236 = vperm.xlu0 %6235, %v3714
  %v6237 = vpop.permute.xlu0 %6236
  %6240 = vset.pattern.permute.xlu0 0
  %6241 = vperm.xlu0 %6240, %v3729
  %v6242 = vpop.permute.xlu0 %6241
  %6245 = vset.pattern.permute.xlu0 0
  %6246 = vperm.xlu0 %6245, %v3744
  %v6247 = vpop.permute.xlu0 %6246
  %6250 = vset.pattern.permute.xlu0 0
  %6251 = vperm.xlu0 %6250, %v3759
  %v6252 = vpop.permute.xlu0 %6251
  %6255 = vset.pattern.permute.xlu0 0
  %6256 = vperm.xlu0 %6255, %v3774
  %v6257 = vpop.permute.xlu0 %6256
  %6260 = vset.pattern.permute.xlu0 0
  %6261 = vperm.xlu0 %6260, %v3789
  %v6262 = vpop.permute.xlu0 %6261
  %6265 = vset.pattern.permute.xlu0 0
  %6266 = vperm.xlu0 %6265, %v3804
  %v6267 = vpop.permute.xlu0 %6266
  %6270 = vset.pattern.permute.xlu0 0
  %6271 = vperm.xlu0 %6270, %v3819
  %v6272 = vpop.permute.xlu0 %6271
  %6275 = vset.pattern.permute.xlu0 0
  %6276 = vperm.xlu0 %6275, %v3834
  %v6277 = vpop.permute.xlu0 %6276
  %6280 = vset.pattern.permute.xlu0 0
  %6281 = vperm.xlu0 %6280, %v3849
  %v6282 = vpop.permute.xlu0 %6281
  %6285 = vset.pattern.permute.xlu0 0
  %6286 = vperm.xlu0 %6285, %v3864
  %v6287 = vpop.permute.xlu0 %6286
  %6290 = vset.pattern.permute.xlu0 0
  %6291 = vperm.xlu0 %6290, %v3879
  %v6292 = vpop.permute.xlu0 %6291
  %6295 = vset.pattern.permute.xlu0 0
  %6296 = vperm.xlu0 %6295, %v3894
  %v6297 = vpop.permute.xlu0 %6296
  %6300 = vset.pattern.permute.xlu0 0
  %6301 = vperm.xlu0 %6300, %v3909
  %v6302 = vpop.permute.xlu0 %6301
  %6305 = vset.pattern.permute.xlu0 0
  %6306 = vperm.xlu0 %6305, %v3924
  %v6307 = vpop.permute.xlu0 %6306
  %6310 = vset.pattern.permute.xlu0 0
  %6311 = vperm.xlu0 %6310, %v3939
  %v6312 = vpop.permute.xlu0 %6311
  %6315 = vset.pattern.permute.xlu0 0
  %6316 = vperm.xlu0 %6315, %v3954
  %v6317 = vpop.permute.xlu0 %6316
  %6320 = vset.pattern.permute.xlu0 0
  %6321 = vperm.xlu0 %6320, %v3969
  %v6322 = vpop.permute.xlu0 %6321
  %6325 = vset.pattern.permute.xlu0 0
  %6326 = vperm.xlu0 %6325, %v3984
  %v6327 = vpop.permute.xlu0 %6326
  %6330 = vset.pattern.permute.xlu0 0
  %6331 = vperm.xlu0 %6330, %v3999
  %v6332 = vpop.permute.xlu0 %6331
  %6335 = vset.pattern.permute.xlu0 0
  %6336 = vperm.xlu0 %6335, %v4014
  %v6337 = vpop.permute.xlu0 %6336
  %6340 = vset.pattern.permute.xlu0 0
  %6341 = vperm.xlu0 %6340, %v4029
  %v6342 = vpop.permute.xlu0 %6341
  %6345 = vset.pattern.permute.xlu0 0
  %6346 = vperm.xlu0 %6345, %v4044
  %v6347 = vpop.permute.xlu0 %6346
  %6350 = vset.pattern.permute.xlu0 0
  %6351 = vperm.xlu0 %6350, %v4059
  %v6352 = vpop.permute.xlu0 %6351
  %6355 = vset.pattern.permute.xlu0 0
  %6356 = vperm.xlu0 %6355, %v4074
  %v6357 = vpop.permute.xlu0 %6356
  %6360 = vset.pattern.permute.xlu0 0
  %6361 = vperm.xlu0 %6360, %v4089
  %v6362 = vpop.permute.xlu0 %6361
  %6365 = vset.pattern.permute.xlu0 0
  %6366 = vperm.xlu0 %6365, %v4104
  %v6367 = vpop.permute.xlu0 %6366
  %6370 = vset.pattern.permute.xlu0 0
  %6371 = vperm.xlu0 %6370, %v4119
  %v6372 = vpop.permute.xlu0 %6371
  %6375 = vset.pattern.permute.xlu0 0
  %6376 = vperm.xlu0 %6375, %v4134
  %v6377 = vpop.permute.xlu0 %6376
  %6380 = vset.pattern.permute.xlu0 0
  %6381 = vperm.xlu0 %6380, %v4149
  %v6382 = vpop.permute.xlu0 %6381
  %6385 = vset.pattern.permute.xlu0 0
  %6386 = vperm.xlu0 %6385, %v4164
  %v6387 = vpop.permute.xlu0 %6386
  %6390 = vset.pattern.permute.xlu0 0
  %6391 = vperm.xlu0 %6390, %v4179
  %v6392 = vpop.permute.xlu0 %6391
  %6395 = vset.pattern.permute.xlu0 0
  %6396 = vperm.xlu0 %6395, %v4194
  %v6397 = vpop.permute.xlu0 %6396
  %6400 = vset.pattern.permute.xlu0 0
  %6401 = vperm.xlu0 %6400, %v4209
  %v6402 = vpop.permute.xlu0 %6401
  %6405 = vset.pattern.permute.xlu0 0
  %6406 = vperm.xlu0 %6405, %v4224
  %v6407 = vpop.permute.xlu0 %6406
  %6410 = vset.pattern.permute.xlu0 0
  %6411 = vperm.xlu0 %6410, %v4239
  %v6412 = vpop.permute.xlu0 %6411
  %6415 = vset.pattern.permute.xlu0 0
  %6416 = vperm.xlu0 %6415, %v4254
  %v6417 = vpop.permute.xlu0 %6416
  %6420 = vset.pattern.permute.xlu0 0
  %6421 = vperm.xlu0 %6420, %v4269
  %v6422 = vpop.permute.xlu0 %6421
  %6425 = vset.pattern.permute.xlu0 0
  %6426 = vperm.xlu0 %6425, %v4284
  %v6427 = vpop.permute.xlu0 %6426
  %6430 = vset.pattern.permute.xlu0 0
  %6431 = vperm.xlu0 %6430, %v4299
  %v6432 = vpop.permute.xlu0 %6431
  %6435 = vset.pattern.permute.xlu0 0
  %6436 = vperm.xlu0 %6435, %v4314
  %v6437 = vpop.permute.xlu0 %6436
  %6440 = vset.pattern.permute.xlu0 0
  %6441 = vperm.xlu0 %6440, %v4329
  %v6442 = vpop.permute.xlu0 %6441
  %6445 = vset.pattern.permute.xlu0 0
  %6446 = vperm.xlu0 %6445, %v4344
  %v6447 = vpop.permute.xlu0 %6446
  %6450 = vset.pattern.permute.xlu0 0
  %6451 = vperm.xlu0 %6450, %v4359
  %v6452 = vpop.permute.xlu0 %6451
  %6455 = vset.pattern.permute.xlu0 0
  %6456 = vperm.xlu0 %6455, %v4374
  %v6457 = vpop.permute.xlu0 %6456
  %6460 = vset.pattern.permute.xlu0 0
  %6461 = vperm.xlu0 %6460, %v4389
  %v6462 = vpop.permute.xlu0 %6461
  %6465 = vset.pattern.permute.xlu0 0
  %6466 = vperm.xlu0 %6465, %v4404
  %v6467 = vpop.permute.xlu0 %6466
  %6470 = vset.pattern.permute.xlu0 0
  %6471 = vperm.xlu0 %6470, %v4419
  %v6472 = vpop.permute.xlu0 %6471
  %6475 = vset.pattern.permute.xlu0 0
  %6476 = vperm.xlu0 %6475, %v4434
  %v6477 = vpop.permute.xlu0 %6476
  %6480 = vset.pattern.permute.xlu0 0
  %6481 = vperm.xlu0 %6480, %v4449
  %v6482 = vpop.permute.xlu0 %6481
  %6485 = vset.pattern.permute.xlu0 0
  %6486 = vperm.xlu0 %6485, %v4464
  %v6487 = vpop.permute.xlu0 %6486
  %6490 = vset.pattern.permute.xlu0 0
  %6491 = vperm.xlu0 %6490, %v4479
  %v6492 = vpop.permute.xlu0 %6491
  %6495 = vset.pattern.permute.xlu0 0
  %6496 = vperm.xlu0 %6495, %v4494
  %v6497 = vpop.permute.xlu0 %6496
  %6500 = vset.pattern.permute.xlu0 0
  %6501 = vperm.xlu0 %6500, %v4509
  %v6502 = vpop.permute.xlu0 %6501
  %6505 = vset.pattern.permute.xlu0 0
  %6506 = vperm.xlu0 %6505, %v4524
  %v6507 = vpop.permute.xlu0 %6506
  %6510 = vset.pattern.permute.xlu0 0
  %6511 = vperm.xlu0 %6510, %v4539
  %v6512 = vpop.permute.xlu0 %6511
  %6515 = vset.pattern.permute.xlu0 0
  %6516 = vperm.xlu0 %6515, %v4554
  %v6517 = vpop.permute.xlu0 %6516
  %6520 = vset.pattern.permute.xlu0 0
  %6521 = vperm.xlu0 %6520, %v4569
  %v6522 = vpop.permute.xlu0 %6521
  %6525 = vset.pattern.permute.xlu0 0
  %6526 = vperm.xlu0 %6525, %v4584
  %v6527 = vpop.permute.xlu0 %6526
  %6530 = vset.pattern.permute.xlu0 0
  %6531 = vperm.xlu0 %6530, %v4599
  %v6532 = vpop.permute.xlu0 %6531
  %6535 = vset.pattern.permute.xlu0 0
  %6536 = vperm.xlu0 %6535, %v4614
  %v6537 = vpop.permute.xlu0 %6536
  %6540 = vset.pattern.permute.xlu0 0
  %6541 = vperm.xlu0 %6540, %v4629
  %v6542 = vpop.permute.xlu0 %6541
  %6545 = vset.pattern.permute.xlu0 0
  %6546 = vperm.xlu0 %6545, %v4644
  %v6547 = vpop.permute.xlu0 %6546
  %6550 = vset.pattern.permute.xlu0 0
  %6551 = vperm.xlu0 %6550, %v4659
  %v6552 = vpop.permute.xlu0 %6551
  %6555 = vset.pattern.permute.xlu0 0
  %6556 = vperm.xlu0 %6555, %v4674
  %v6557 = vpop.permute.xlu0 %6556
  %6560 = vset.pattern.permute.xlu0 0
  %6561 = vperm.xlu0 %6560, %v4689
  %v6562 = vpop.permute.xlu0 %6561
  %6565 = vset.pattern.permute.xlu0 0
  %6566 = vperm.xlu0 %6565, %v4704
  %v6567 = vpop.permute.xlu0 %6566
  %6570 = vset.pattern.permute.xlu0 0
  %6571 = vperm.xlu0 %6570, %v4719
  %v6572 = vpop.permute.xlu0 %6571
  %6575 = vset.pattern.permute.xlu0 0
  %6576 = vperm.xlu0 %6575, %v4734
  %v6577 = vpop.permute.xlu0 %6576
  %6580 = vset.pattern.permute.xlu0 0
  %6581 = vperm.xlu0 %6580, %v4749
  %v6582 = vpop.permute.xlu0 %6581
  %6585 = vset.pattern.permute.xlu0 0
  %6586 = vperm.xlu0 %6585, %v4764
  %v6587 = vpop.permute.xlu0 %6586
  %6590 = vset.pattern.permute.xlu0 0
  %6591 = vperm.xlu0 %6590, %v4779
  %v6592 = vpop.permute.xlu0 %6591
  %6595 = vset.pattern.permute.xlu0 0
  %6596 = vperm.xlu0 %6595, %v4794
  %v6597 = vpop.permute.xlu0 %6596
  %6600 = vset.pattern.permute.xlu0 0
  %6601 = vperm.xlu0 %6600, %v4809
  %v6602 = vpop.permute.xlu0 %6601
  %6605 = vset.pattern.permute.xlu0 0
  %6606 = vperm.xlu0 %6605, %v4824
  %v6607 = vpop.permute.xlu0 %6606
  %6610 = vset.pattern.permute.xlu0 0
  %6611 = vperm.xlu0 %6610, %v4839
  %v6612 = vpop.permute.xlu0 %6611
  %6615 = vset.pattern.permute.xlu0 0
  %6616 = vperm.xlu0 %6615, %v4854
  %v6617 = vpop.permute.xlu0 %6616
  %6620 = vset.pattern.permute.xlu0 0
  %6621 = vperm.xlu0 %6620, %v4869
  %v6622 = vpop.permute.xlu0 %6621
  %6625 = vset.pattern.permute.xlu0 0
  %6626 = vperm.xlu0 %6625, %v4884
  %v6627 = vpop.permute.xlu0 %6626
  %6630 = vset.pattern.permute.xlu0 0
  %6631 = vperm.xlu0 %6630, %v4899
  %v6632 = vpop.permute.xlu0 %6631
  %6635 = vset.pattern.permute.xlu0 0
  %6636 = vperm.xlu0 %6635, %v4914
  %v6637 = vpop.permute.xlu0 %6636
  %6640 = vset.pattern.permute.xlu0 0
  %6641 = vperm.xlu0 %6640, %v4929
  %v6642 = vpop.permute.xlu0 %6641
  %6645 = vset.pattern.permute.xlu0 0
  %6646 = vperm.xlu0 %6645, %v4944
  %v6647 = vpop.permute.xlu0 %6646
  %6650 = vset.pattern.permute.xlu0 0
  %6651 = vperm.xlu0 %6650, %v4959
  %v6652 = vpop.permute.xlu0 %6651
  %6655 = vset.pattern.permute.xlu0 0
  %6656 = vperm.xlu0 %6655, %v4974
  %v6657 = vpop.permute.xlu0 %6656
  %6660 = vset.pattern.permute.xlu0 0
  %6661 = vperm.xlu0 %6660, %v4989
  %v6662 = vpop.permute.xlu0 %6661
  %6665 = vset.pattern.permute.xlu0 0
  %6666 = vperm.xlu0 %6665, %v5004
  %v6667 = vpop.permute.xlu0 %6666
  %6670 = vset.pattern.permute.xlu0 0
  %6671 = vperm.xlu0 %6670, %v5019
  %v6672 = vpop.permute.xlu0 %6671
  %6675 = vset.pattern.permute.xlu0 0
  %6676 = vperm.xlu0 %6675, %v5034
  %v6677 = vpop.permute.xlu0 %6676
  %6680 = vset.pattern.permute.xlu0 0
  %6681 = vperm.xlu0 %6680, %v5049
  %v6682 = vpop.permute.xlu0 %6681
  %6685 = vset.pattern.permute.xlu0 0
  %6686 = vperm.xlu0 %6685, %v5064
  %v6687 = vpop.permute.xlu0 %6686
  %6690 = vset.pattern.permute.xlu0 0
  %6691 = vperm.xlu0 %6690, %v5079
  %v6692 = vpop.permute.xlu0 %6691
  %6695 = vset.pattern.permute.xlu0 0
  %6696 = vperm.xlu0 %6695, %v5094
  %v6697 = vpop.permute.xlu0 %6696
  %6700 = vset.pattern.permute.xlu0 0
  %6701 = vperm.xlu0 %6700, %v5109
  %v6702 = vpop.permute.xlu0 %6701
  %6705 = vset.pattern.permute.xlu0 0
  %6706 = vperm.xlu0 %6705, %v5124
  %v6707 = vpop.permute.xlu0 %6706
  %6710 = vset.pattern.permute.xlu0 0
  %6711 = vperm.xlu0 %6710, %v5139
  %v6712 = vpop.permute.xlu0 %6711
  %6715 = vset.pattern.permute.xlu0 0
  %6716 = vperm.xlu0 %6715, %v5154
  %v6717 = vpop.permute.xlu0 %6716
  %6720 = vset.pattern.permute.xlu0 0
  %6721 = vperm.xlu0 %6720, %v5169
  %v6722 = vpop.permute.xlu0 %6721
  %6725 = vset.pattern.permute.xlu0 0
  %6726 = vperm.xlu0 %6725, %v5184
  %v6727 = vpop.permute.xlu0 %6726
  %6730 = vset.pattern.permute.xlu0 0
  %6731 = vperm.xlu0 %6730, %v5199
  %v6732 = vpop.permute.xlu0 %6731
  %6735 = vset.pattern.permute.xlu0 0
  %6736 = vperm.xlu0 %6735, %v5214
  %v6737 = vpop.permute.xlu0 %6736
  %6740 = vset.pattern.permute.xlu0 0
  %6741 = vperm.xlu0 %6740, %v5229
  %v6742 = vpop.permute.xlu0 %6741
  %6745 = vset.pattern.permute.xlu0 0
  %6746 = vperm.xlu0 %6745, %v5244
  %v6747 = vpop.permute.xlu0 %6746
  %6750 = vset.pattern.permute.xlu0 0
  %6751 = vperm.xlu0 %6750, %v5259
  %v6752 = vpop.permute.xlu0 %6751
  %6755 = vset.pattern.permute.xlu0 0
  %6756 = vperm.xlu0 %6755, %v5274
  %v6757 = vpop.permute.xlu0 %6756
  %6760 = vset.pattern.permute.xlu0 0
  %6761 = vperm.xlu0 %6760, %v5289
  %v6762 = vpop.permute.xlu0 %6761
  %6765 = vset.pattern.permute.xlu0 0
  %6766 = vperm.xlu0 %6765, %v5304
  %v6767 = vpop.permute.xlu0 %6766
  %6770 = vset.pattern.permute.xlu0 0
  %6771 = vperm.xlu0 %6770, %v5319
  %v6772 = vpop.permute.xlu0 %6771
  %6775 = vset.pattern.permute.xlu0 0
  %6776 = vperm.xlu0 %6775, %v5334
  %v6777 = vpop.permute.xlu0 %6776
  %6780 = vset.pattern.permute.xlu0 0
  %6781 = vperm.xlu0 %6780, %v5349
  %v6782 = vpop.permute.xlu0 %6781
  %6785 = vset.pattern.permute.xlu0 0
  %6786 = vperm.xlu0 %6785, %v5364
  %v6787 = vpop.permute.xlu0 %6786
  %6790 = vset.pattern.permute.xlu0 0
  %6791 = vperm.xlu0 %6790, %v5379
  %v6792 = vpop.permute.xlu0 %6791
  %6795 = vset.pattern.permute.xlu0 0
  %6796 = vperm.xlu0 %6795, %v5394
  %v6797 = vpop.permute.xlu0 %6796
  %6800 = vset.pattern.permute.xlu0 0
  %6801 = vperm.xlu0 %6800, %v5409
  %v6802 = vpop.permute.xlu0 %6801
  %6805 = vset.pattern.permute.xlu0 0
  %6806 = vperm.xlu0 %6805, %v5424
  %v6807 = vpop.permute.xlu0 %6806
  %6810 = vset.pattern.permute.xlu0 0
  %6811 = vperm.xlu0 %6810, %v5439
  %v6812 = vpop.permute.xlu0 %6811
  %6815 = vset.pattern.permute.xlu0 0
  %6816 = vperm.xlu0 %6815, %v5454
  %v6817 = vpop.permute.xlu0 %6816
  %6820 = vset.pattern.permute.xlu0 0
  %6821 = vperm.xlu0 %6820, %v5469
  %v6822 = vpop.permute.xlu0 %6821
  %6825 = vset.pattern.permute.xlu0 0
  %6826 = vperm.xlu0 %6825, %v5484
  %v6827 = vpop.permute.xlu0 %6826
  %6830 = vset.pattern.permute.xlu0 0
  %6831 = vperm.xlu0 %6830, %v5499
  %v6832 = vpop.permute.xlu0 %6831
  %6835 = vset.pattern.permute.xlu0 0
  %6836 = vperm.xlu0 %6835, %v5514
  %v6837 = vpop.permute.xlu0 %6836
  %6840 = vset.pattern.permute.xlu0 0
  %6841 = vperm.xlu0 %6840, %v5529
  %v6842 = vpop.permute.xlu0 %6841
  %6845 = vset.pattern.permute.xlu0 0
  %6846 = vperm.xlu0 %6845, %v5544
  %v6847 = vpop.permute.xlu0 %6846
  %6850 = vset.pattern.permute.xlu0 0
  %6851 = vperm.xlu0 %6850, %v5559
  %v6852 = vpop.permute.xlu0 %6851
  %6855 = vset.pattern.permute.xlu0 0
  %6856 = vperm.xlu0 %6855, %v5574
  %v6857 = vpop.permute.xlu0 %6856
  %6860 = vset.pattern.permute.xlu0 0
  %6861 = vperm.xlu0 %6860, %v5589
  %v6862 = vpop.permute.xlu0 %6861
  %6865 = vset.pattern.permute.xlu0 0
  %6866 = vperm.xlu0 %6865, %v5604
  %v6867 = vpop.permute.xlu0 %6866
  %6870 = vset.pattern.permute.xlu0 0
  %6871 = vperm.xlu0 %6870, %v5619
  %v6872 = vpop.permute.xlu0 %6871
  %6875 = vset.pattern.permute.xlu0 0
  %6876 = vperm.xlu0 %6875, %v5634
  %v6877 = vpop.permute.xlu0 %6876
  %6880 = vset.pattern.permute.xlu0 0
  %6881 = vperm.xlu0 %6880, %v5649
  %v6882 = vpop.permute.xlu0 %6881
  %6885 = vset.pattern.permute.xlu0 0
  %6886 = vperm.xlu0 %6885, %v5664
  %v6887 = vpop.permute.xlu0 %6886
  %v6889 = vmul.f32 %v5872, %v5665
  %v6890 = vmul.f32 %v5877, %v5666
  %v6891 = vmul.f32 %v5882, %v5667
  %v6892 = vmul.f32 %v5887, %v5668
  %v6893 = vmul.f32 %v5892, %v5669
  %v6894 = vmul.f32 %v5897, %v5670
  %v6895 = vmul.f32 %v5902, %v5671
  %v6896 = vmul.f32 %v5907, %v5672
  %v6897 = vmul.f32 %v5912, %v5673
  %v6898 = vmul.f32 %v5917, %v5674
  %v6899 = vmul.f32 %v5922, %v5675
  %v6900 = vmul.f32 %v5927, %v5676
  %v6901 = vmul.f32 %v5932, %v5677
  %v6902 = vmul.f32 %v5937, %v5678
  %v6903 = vmul.f32 %v5942, %v5679
  %v6904 = vmul.f32 %v5947, %v5680
  %v6905 = vmul.f32 %v5952, %v5681
  %v6906 = vmul.f32 %v5957, %v5682
  %v6907 = vmul.f32 %v5962, %v5683
  %v6908 = vmul.f32 %v5967, %v5684
  %v6909 = vmul.f32 %v5972, %v5685
  %v6910 = vmul.f32 %v5977, %v5686
  %v6911 = vmul.f32 %v5982, %v5687
  %v6912 = vmul.f32 %v5987, %v5688
  %v6913 = vmul.f32 %v5992, %v5689
  %v6914 = vmul.f32 %v5997, %v5690
  %v6915 = vmul.f32 %v6002, %v5691
  %v6916 = vmul.f32 %v6007, %v5692
  %v6917 = vmul.f32 %v6012, %v5693
  %v6918 = vmul.f32 %v6017, %v5694
  %v6919 = vmul.f32 %v6022, %v5695
  %v6920 = vmul.f32 %v6027, %v5696
  %v6921 = vmul.f32 %v6032, %v5697
  %v6922 = vmul.f32 %v6037, %v5698
  %v6923 = vmul.f32 %v6042, %v5699
  %v6924 = vmul.f32 %v6047, %v5700
  %v6925 = vmul.f32 %v6052, %v5701
  %v6926 = vmul.f32 %v6057, %v5702
  %v6927 = vmul.f32 %v6062, %v5703
  %v6928 = vmul.f32 %v6067, %v5704
  %v6929 = vmul.f32 %v6072, %v5705
  %v6930 = vmul.f32 %v6077, %v5706
  %v6931 = vmul.f32 %v6082, %v5707
  %v6932 = vmul.f32 %v6087, %v5708
  %v6933 = vmul.f32 %v6092, %v5709
  %v6934 = vmul.f32 %v6097, %v5710
  %v6935 = vmul.f32 %v6102, %v5711
  %v6936 = vmul.f32 %v6107, %v5712
  %v6937 = vmul.f32 %v6112, %v5713
  %v6938 = vmul.f32 %v6117, %v5714
  %v6939 = vmul.f32 %v6122, %v5715
  %v6940 = vmul.f32 %v6127, %v5716
  %v6941 = vmul.f32 %v6132, %v5717
  %v6942 = vmul.f32 %v6137, %v5718
  %v6943 = vmul.f32 %v6142, %v5719
  %v6944 = vmul.f32 %v6147, %v5720
  %v6945 = vmul.f32 %v6152, %v5721
  %v6946 = vmul.f32 %v6157, %v5722
  %v6947 = vmul.f32 %v6162, %v5723
  %v6948 = vmul.f32 %v6167, %v5724
  %v6949 = vmul.f32 %v6172, %v5725
  %v6950 = vmul.f32 %v6177, %v5726
  %v6951 = vmul.f32 %v6182, %v5727
  %v6952 = vmul.f32 %v6187, %v5728
  %v6953 = vmul.f32 %v6192, %v5729
  %v6954 = vmul.f32 %v6197, %v5730
  %v6955 = vmul.f32 %v6202, %v5731
  %v6956 = vmul.f32 %v6207, %v5732
  %v6957 = vmul.f32 %v6212, %v5733
  %v6958 = vmul.f32 %v6217, %v5734
  %v6959 = vmul.f32 %v6222, %v5735
  %v6960 = vmul.f32 %v6227, %v5736
  %v6961 = vmul.f32 %v6232, %v5737
  %v6962 = vmul.f32 %v6237, %v5738
  %v6963 = vmul.f32 %v6242, %v5739
  %v6964 = vmul.f32 %v6247, %v5740
  %v6965 = vmul.f32 %v6252, %v5741
  %v6966 = vmul.f32 %v6257, %v5742
  %v6967 = vmul.f32 %v6262, %v5743
  %v6968 = vmul.f32 %v6267, %v5744
  %v6969 = vmul.f32 %v6272, %v5745
  %v6970 = vmul.f32 %v6277, %v5746
  %v6971 = vmul.f32 %v6282, %v5747
  %v6972 = vmul.f32 %v6287, %v5748
  %v6973 = vmul.f32 %v6292, %v5749
  %v6974 = vmul.f32 %v6297, %v5750
  %v6975 = vmul.f32 %v6302, %v5751
  %v6976 = vmul.f32 %v6307, %v5752
  %v6977 = vmul.f32 %v6312, %v5753
  %v6978 = vmul.f32 %v6317, %v5754
  %v6979 = vmul.f32 %v6322, %v5755
  %v6980 = vmul.f32 %v6327, %v5756
  %v6981 = vmul.f32 %v6332, %v5757
  %v6982 = vmul.f32 %v6337, %v5758
  %v6983 = vmul.f32 %v6342, %v5759
  %v6984 = vmul.f32 %v6347, %v5760
  %v6985 = vmul.f32 %v6352, %v5761
  %v6986 = vmul.f32 %v6357, %v5762
  %v6987 = vmul.f32 %v6362, %v5763
  %v6988 = vmul.f32 %v6367, %v5764
  %v6989 = vmul.f32 %v6372, %v5765
  %v6990 = vmul.f32 %v6377, %v5766
  %v6991 = vmul.f32 %v6382, %v5767
  %v6992 = vmul.f32 %v6387, %v5768
  %v6993 = vmul.f32 %v6392, %v5769
  %v6994 = vmul.f32 %v6397, %v5770
  %v6995 = vmul.f32 %v6402, %v5771
  %v6996 = vmul.f32 %v6407, %v5772
  %v6997 = vmul.f32 %v6412, %v5773
  %v6998 = vmul.f32 %v6417, %v5774
  %v6999 = vmul.f32 %v6422, %v5775
  %v7000 = vmul.f32 %v6427, %v5776
  %v7001 = vmul.f32 %v6432, %v5777
  %v7002 = vmul.f32 %v6437, %v5778
  %v7003 = vmul.f32 %v6442, %v5779
  %v7004 = vmul.f32 %v6447, %v5780
  %v7005 = vmul.f32 %v6452, %v5781
  %v7006 = vmul.f32 %v6457, %v5782
  %v7007 = vmul.f32 %v6462, %v5783
  %v7008 = vmul.f32 %v6467, %v5784
  %v7009 = vmul.f32 %v6472, %v5785
  %v7010 = vmul.f32 %v6477, %v5786
  %v7011 = vmul.f32 %v6482, %v5787
  %v7012 = vmul.f32 %v6487, %v5788
  %v7013 = vmul.f32 %v6492, %v5789
  %v7014 = vmul.f32 %v6497, %v5790
  %v7015 = vmul.f32 %v6502, %v5791
  %v7016 = vmul.f32 %v6507, %v5792
  %v7017 = vmul.f32 %v6512, %v5793
  %v7018 = vmul.f32 %v6517, %v5794
  %v7019 = vmul.f32 %v6522, %v5795
  %v7020 = vmul.f32 %v6527, %v5796
  %v7021 = vmul.f32 %v6532, %v5797
  %v7022 = vmul.f32 %v6537, %v5798
  %v7023 = vmul.f32 %v6542, %v5799
  %v7024 = vmul.f32 %v6547, %v5800
  %v7025 = vmul.f32 %v6552, %v5801
  %v7026 = vmul.f32 %v6557, %v5802
  %v7027 = vmul.f32 %v6562, %v5803
  %v7028 = vmul.f32 %v6567, %v5804
  %v7029 = vmul.f32 %v6572, %v5805
  %v7030 = vmul.f32 %v6577, %v5806
  %v7031 = vmul.f32 %v6582, %v5807
  %v7032 = vmul.f32 %v6587, %v5808
  %v7033 = vmul.f32 %v6592, %v5809
  %v7034 = vmul.f32 %v6597, %v5810
  %v7035 = vmul.f32 %v6602, %v5811
  %v7036 = vmul.f32 %v6607, %v5812
  %v7037 = vmul.f32 %v6612, %v5813
  %v7038 = vmul.f32 %v6617, %v5814
  %v7039 = vmul.f32 %v6622, %v5815
  %v7040 = vmul.f32 %v6627, %v5816
  %v7041 = vmul.f32 %v6632, %v5817
  %v7042 = vmul.f32 %v6637, %v5818
  %v7043 = vmul.f32 %v6642, %v5819
  %v7044 = vmul.f32 %v6647, %v5820
  %v7045 = vmul.f32 %v6652, %v5821
  %v7046 = vmul.f32 %v6657, %v5822
  %v7047 = vmul.f32 %v6662, %v5823
  %v7048 = vmul.f32 %v6667, %v5824
  %v7049 = vmul.f32 %v6672, %v5825
  %v7050 = vmul.f32 %v6677, %v5826
  %v7051 = vmul.f32 %v6682, %v5827
  %v7052 = vmul.f32 %v6687, %v5828
  %v7053 = vmul.f32 %v6692, %v5829
  %v7054 = vmul.f32 %v6697, %v5830
  %v7055 = vmul.f32 %v6702, %v5831
  %v7056 = vmul.f32 %v6707, %v5832
  %v7057 = vmul.f32 %v6712, %v5833
  %v7058 = vmul.f32 %v6717, %v5834
  %v7059 = vmul.f32 %v6722, %v5835
  %v7060 = vmul.f32 %v6727, %v5836
  %v7061 = vmul.f32 %v6732, %v5837
  %v7062 = vmul.f32 %v6737, %v5838
  %v7063 = vmul.f32 %v6742, %v5839
  %v7064 = vmul.f32 %v6747, %v5840
  %v7065 = vmul.f32 %v6752, %v5841
  %v7066 = vmul.f32 %v6757, %v5842
  %v7067 = vmul.f32 %v6762, %v5843
  %v7068 = vmul.f32 %v6767, %v5844
  %v7069 = vmul.f32 %v6772, %v5845
  %v7070 = vmul.f32 %v6777, %v5846
  %v7071 = vmul.f32 %v6782, %v5847
  %v7072 = vmul.f32 %v6787, %v5848
  %v7073 = vmul.f32 %v6792, %v5849
  %v7074 = vmul.f32 %v6797, %v5850
  %v7075 = vmul.f32 %v6802, %v5851
  %v7076 = vmul.f32 %v6807, %v5852
  %v7077 = vmul.f32 %v6812, %v5853
  %v7078 = vmul.f32 %v6817, %v5854
  %v7079 = vmul.f32 %v6822, %v5855
  %v7080 = vmul.f32 %v6827, %v5856
  %v7081 = vmul.f32 %v6832, %v5857
  %v7082 = vmul.f32 %v6837, %v5858
  %v7083 = vmul.f32 %v6842, %v5859
  %v7084 = vmul.f32 %v6847, %v5860
  %v7085 = vmul.f32 %v6852, %v5861
  %v7086 = vmul.f32 %v6857, %v5862
  %v7087 = vmul.f32 %v6862, %v5863
  %v7088 = vmul.f32 %v6867, %v5864
  %v7089 = vmul.f32 %v6872, %v5865
  %v7090 = vmul.f32 %v6877, %v5866
  %v7091 = vmul.f32 %v6882, %v5867
  %v7092 = vmul.f32 %v6887, %v5868
  %v7093 = vpack.c.bf16 %v6890, %v6889
  %v7094 = vpack.c.bf16 %v6892, %v6891
  %v7095 = vpack.c.bf16 %v6894, %v6893
  %v7096 = vpack.c.bf16 %v6896, %v6895
  %v7097 = vpack.c.bf16 %v6898, %v6897
  %v7098 = vpack.c.bf16 %v6900, %v6899
  %v7099 = vpack.c.bf16 %v6902, %v6901
  %v7100 = vpack.c.bf16 %v6904, %v6903
  %v7101 = vpack.c.bf16 %v6906, %v6905
  %v7102 = vpack.c.bf16 %v6908, %v6907
  %v7103 = vpack.c.bf16 %v6910, %v6909
  %v7104 = vpack.c.bf16 %v6912, %v6911
  %v7105 = vpack.c.bf16 %v6914, %v6913
  %v7106 = vpack.c.bf16 %v6916, %v6915
  %v7107 = vpack.c.bf16 %v6918, %v6917
  %v7108 = vpack.c.bf16 %v6920, %v6919
  %v7109 = vpack.c.bf16 %v6922, %v6921
  %v7110 = vpack.c.bf16 %v6924, %v6923
  %v7111 = vpack.c.bf16 %v6926, %v6925
  %v7112 = vpack.c.bf16 %v6928, %v6927
  %v7113 = vpack.c.bf16 %v6930, %v6929
  %v7114 = vpack.c.bf16 %v6932, %v6931
  %v7115 = vpack.c.bf16 %v6934, %v6933
  %v7116 = vpack.c.bf16 %v6936, %v6935
  %v7117 = vpack.c.bf16 %v6938, %v6937
  %v7118 = vpack.c.bf16 %v6940, %v6939
  %v7119 = vpack.c.bf16 %v6942, %v6941
  %v7120 = vpack.c.bf16 %v6944, %v6943
  %v7121 = vpack.c.bf16 %v6946, %v6945
  %v7122 = vpack.c.bf16 %v6948, %v6947
  %v7123 = vpack.c.bf16 %v6950, %v6949
  %v7124 = vpack.c.bf16 %v6952, %v6951
  %v7125 = vpack.c.bf16 %v6954, %v6953
  %v7126 = vpack.c.bf16 %v6956, %v6955
  %v7127 = vpack.c.bf16 %v6958, %v6957
  %v7128 = vpack.c.bf16 %v6960, %v6959
  %v7129 = vpack.c.bf16 %v6962, %v6961
  %v7130 = vpack.c.bf16 %v6964, %v6963
  %v7131 = vpack.c.bf16 %v6966, %v6965
  %v7132 = vpack.c.bf16 %v6968, %v6967
  %v7133 = vpack.c.bf16 %v6970, %v6969
  %v7134 = vpack.c.bf16 %v6972, %v6971
  %v7135 = vpack.c.bf16 %v6974, %v6973
  %v7136 = vpack.c.bf16 %v6976, %v6975
  %v7137 = vpack.c.bf16 %v6978, %v6977
  %v7138 = vpack.c.bf16 %v6980, %v6979
  %v7139 = vpack.c.bf16 %v6982, %v6981
  %v7140 = vpack.c.bf16 %v6984, %v6983
  %v7141 = vpack.c.bf16 %v6986, %v6985
  %v7142 = vpack.c.bf16 %v6988, %v6987
  %v7143 = vpack.c.bf16 %v6990, %v6989
  %v7144 = vpack.c.bf16 %v6992, %v6991
  %v7145 = vpack.c.bf16 %v6994, %v6993
  %v7146 = vpack.c.bf16 %v6996, %v6995
  %v7147 = vpack.c.bf16 %v6998, %v6997
  %v7148 = vpack.c.bf16 %v7000, %v6999
  %v7149 = vpack.c.bf16 %v7002, %v7001
  %v7150 = vpack.c.bf16 %v7004, %v7003
  %v7151 = vpack.c.bf16 %v7006, %v7005
  %v7152 = vpack.c.bf16 %v7008, %v7007
  %v7153 = vpack.c.bf16 %v7010, %v7009
  %v7154 = vpack.c.bf16 %v7012, %v7011
  %v7155 = vpack.c.bf16 %v7014, %v7013
  %v7156 = vpack.c.bf16 %v7016, %v7015
  %v7157 = vpack.c.bf16 %v7018, %v7017
  %v7158 = vpack.c.bf16 %v7020, %v7019
  %v7159 = vpack.c.bf16 %v7022, %v7021
  %v7160 = vpack.c.bf16 %v7024, %v7023
  %v7161 = vpack.c.bf16 %v7026, %v7025
  %v7162 = vpack.c.bf16 %v7028, %v7027
  %v7163 = vpack.c.bf16 %v7030, %v7029
  %v7164 = vpack.c.bf16 %v7032, %v7031
  %v7165 = vpack.c.bf16 %v7034, %v7033
  %v7166 = vpack.c.bf16 %v7036, %v7035
  %v7167 = vpack.c.bf16 %v7038, %v7037
  %v7168 = vpack.c.bf16 %v7040, %v7039
  %v7169 = vpack.c.bf16 %v7042, %v7041
  %v7170 = vpack.c.bf16 %v7044, %v7043
  %v7171 = vpack.c.bf16 %v7046, %v7045
  %v7172 = vpack.c.bf16 %v7048, %v7047
  %v7173 = vpack.c.bf16 %v7050, %v7049
  %v7174 = vpack.c.bf16 %v7052, %v7051
  %v7175 = vpack.c.bf16 %v7054, %v7053
  %v7176 = vpack.c.bf16 %v7056, %v7055
  %v7177 = vpack.c.bf16 %v7058, %v7057
  %v7178 = vpack.c.bf16 %v7060, %v7059
  %v7179 = vpack.c.bf16 %v7062, %v7061
  %v7180 = vpack.c.bf16 %v7064, %v7063
  %v7181 = vpack.c.bf16 %v7066, %v7065
  %v7182 = vpack.c.bf16 %v7068, %v7067
  %v7183 = vpack.c.bf16 %v7070, %v7069
  %v7184 = vpack.c.bf16 %v7072, %v7071
  %v7185 = vpack.c.bf16 %v7074, %v7073
  %v7186 = vpack.c.bf16 %v7076, %v7075
  %v7187 = vpack.c.bf16 %v7078, %v7077
  %v7188 = vpack.c.bf16 %v7080, %v7079
  %v7189 = vpack.c.bf16 %v7082, %v7081
  %v7190 = vpack.c.bf16 %v7084, %v7083
  %v7191 = vpack.c.bf16 %v7086, %v7085
  %v7192 = vpack.c.bf16 %v7088, %v7087
  %v7193 = vpack.c.bf16 %v7090, %v7089
  %v7194 = vpack.c.bf16 %v7092, %v7091
  %v7195 = vld [vmem:[%s4] sm:$0xff]
  %v7196 = vld [vmem:[%s4 + $0x8] sm:$0xff]
  %v7197 = vld [vmem:[%s4 + $0x10] sm:$0xff]
  %v7198 = vld [vmem:[%s4 + $0x18] sm:$0xff]
  %v7199 = vld [vmem:[%s4 + $0x20] sm:$0xff]
  %v7200 = vld [vmem:[%s4 + $0x28] sm:$0xff]
  %v7201 = vld [vmem:[%s4 + $0x30] sm:$0xf]
  %v7202 = vld [vmem:[%s4 + $0x34] sm:$0xff]
  %v7203 = vld [vmem:[%s4 + $0x3c] sm:$0xff]
  %v7204 = vld [vmem:[%s4 + $0x44] sm:$0xff]
  %v7205 = vld [vmem:[%s4 + $0x4c] sm:$0xff]
  %v7206 = vld [vmem:[%s4 + $0x54] sm:$0xff]
  %v7207 = vld [vmem:[%s4 + $0x5c] sm:$0xff]
  %v7208 = vld [vmem:[%s4 + $0x64] sm:$0xf]
  %v7209 = vld [vmem:[%s4 + $0x68] sm:$0xff]
  %v7210 = vld [vmem:[%s4 + $0x70] sm:$0xff]
  %v7211 = vld [vmem:[%s4 + $0x78] sm:$0xff]
  %v7212 = vld [vmem:[%s4 + $0x80] sm:$0xff]
  %v7213 = vld [vmem:[%s4 + $0x88] sm:$0xff]
  %v7214 = vld [vmem:[%s4 + $0x90] sm:$0xff]
  %v7215 = vld [vmem:[%s4 + $0x98] sm:$0xf]
  %v7216 = vld [vmem:[%s4 + $0x9c] sm:$0xff]
  %v7217 = vld [vmem:[%s4 + $0xa4] sm:$0xff]
  %v7218 = vld [vmem:[%s4 + $0xac] sm:$0xff]
  %v7219 = vld [vmem:[%s4 + $0xb4] sm:$0xff]
  %v7220 = vld [vmem:[%s4 + $0xbc] sm:$0xff]
  %v7221 = vld [vmem:[%s4 + $0xc4] sm:$0xff]
  %v7222 = vld [vmem:[%s4 + $0xcc] sm:$0xf]
  %v7223 = vld [vmem:[%s4 + $0xd0] sm:$0xff]
  %v7224 = vld [vmem:[%s4 + $0xd8] sm:$0xff]
  %v7225 = vld [vmem:[%s4 + $0xe0] sm:$0xff]
  %v7226 = vld [vmem:[%s4 + $0xe8] sm:$0xff]
  %v7227 = vld [vmem:[%s4 + $0xf0] sm:$0xff]
  %v7228 = vld [vmem:[%s4 + $0xf8] sm:$0xff]
  %v7229 = vld [vmem:[%s4 + $0x100] sm:$0xf]
  %v7230 = vld [vmem:[%s4 + $0x104] sm:$0xff]
  %v7231 = vld [vmem:[%s4 + $0x10c] sm:$0xff]
  %v7232 = vld [vmem:[%s4 + $0x114] sm:$0xff]
  %v7233 = vld [vmem:[%s4 + $0x11c] sm:$0xff]
  %v7234 = vld [vmem:[%s4 + $0x124] sm:$0xff]
  %v7235 = vld [vmem:[%s4 + $0x12c] sm:$0xff]
  %v7236 = vld [vmem:[%s4 + $0x134] sm:$0xf]
  %v7237 = vld [vmem:[%s4 + $0x138] sm:$0xff]
  %v7238 = vld [vmem:[%s4 + $0x140] sm:$0xff]
  %v7239 = vld [vmem:[%s4 + $0x148] sm:$0xff]
  %v7240 = vld [vmem:[%s4 + $0x150] sm:$0xff]
  %v7241 = vld [vmem:[%s4 + $0x158] sm:$0xff]
  %v7242 = vld [vmem:[%s4 + $0x160] sm:$0xff]
  %v7243 = vld [vmem:[%s4 + $0x168] sm:$0xf]
  %v7244 = vld [vmem:[%s4 + $0x16c] sm:$0xff]
  %v7245 = vld [vmem:[%s4 + $0x174] sm:$0xff]
  %v7246 = vld [vmem:[%s4 + $0x17c] sm:$0xff]
  %v7247 = vld [vmem:[%s4 + $0x184] sm:$0xff]
  %v7248 = vld [vmem:[%s4 + $0x18c] sm:$0xff]
  %v7249 = vld [vmem:[%s4 + $0x194] sm:$0xff]
  %v7250 = vld [vmem:[%s4 + $0x19c] sm:$0xf]
  %v7251 = vld [vmem:[%s4 + $0x1a0] sm:$0xff]
  %v7252 = vld [vmem:[%s4 + $0x1a8] sm:$0xff]
  %v7253 = vld [vmem:[%s4 + $0x1b0] sm:$0xff]
  %v7254 = vld [vmem:[%s4 + $0x1b8] sm:$0xff]
  %v7255 = vld [vmem:[%s4 + $0x1c0] sm:$0xff]
  %v7256 = vld [vmem:[%s4 + $0x1c8] sm:$0xff]
  %v7257 = vld [vmem:[%s4 + $0x1d0] sm:$0xf]
  %v7258 = vld [vmem:[%s4 + $0x1d4] sm:$0xff]
  %v7259 = vld [vmem:[%s4 + $0x1dc] sm:$0xff]
  %v7260 = vld [vmem:[%s4 + $0x1e4] sm:$0xff]
  %v7261 = vld [vmem:[%s4 + $0x1ec] sm:$0xff]
  %v7262 = vld [vmem:[%s4 + $0x1f4] sm:$0xff]
  %v7263 = vld [vmem:[%s4 + $0x1fc] sm:$0xff]
  %v7264 = vld [vmem:[%s4 + $0x204] sm:$0xf]
  %v7265 = vld [vmem:[%s4 + $0x208] sm:$0xff]
  %v7266 = vld [vmem:[%s4 + $0x210] sm:$0xff]
  %v7267 = vld [vmem:[%s4 + $0x218] sm:$0xff]
  %v7268 = vld [vmem:[%s4 + $0x220] sm:$0xff]
  %v7269 = vld [vmem:[%s4 + $0x228] sm:$0xff]
  %v7270 = vld [vmem:[%s4 + $0x230] sm:$0xff]
  %v7271 = vld [vmem:[%s4 + $0x238] sm:$0xf]
  %v7272 = vld [vmem:[%s4 + $0x23c] sm:$0xff]
  %v7273 = vld [vmem:[%s4 + $0x244] sm:$0xff]
  %v7274 = vld [vmem:[%s4 + $0x24c] sm:$0xff]
  %v7275 = vld [vmem:[%s4 + $0x254] sm:$0xff]
  %v7276 = vld [vmem:[%s4 + $0x25c] sm:$0xff]
  %v7277 = vld [vmem:[%s4 + $0x264] sm:$0xff]
  %v7278 = vld [vmem:[%s4 + $0x26c] sm:$0xf]
  %v7279 = vld [vmem:[%s4 + $0x270] sm:$0xff]
  %v7280 = vld [vmem:[%s4 + $0x278] sm:$0xff]
  %v7281 = vld [vmem:[%s4 + $0x280] sm:$0xff]
  %v7282 = vld [vmem:[%s4 + $0x288] sm:$0xff]
  %v7283 = vld [vmem:[%s4 + $0x290] sm:$0xff]
  %v7284 = vld [vmem:[%s4 + $0x298] sm:$0xff]
  %v7285 = vld [vmem:[%s4 + $0x2a0] sm:$0xf]
  %v7286 = vld [vmem:[%s4 + $0x2a4] sm:$0xff]
  %v7287 = vld [vmem:[%s4 + $0x2ac] sm:$0xff]
  %v7288 = vld [vmem:[%s4 + $0x2b4] sm:$0xff]
  %v7289 = vld [vmem:[%s4 + $0x2bc] sm:$0xff]
  %v7290 = vld [vmem:[%s4 + $0x2c4] sm:$0xff]
  %v7291 = vld [vmem:[%s4 + $0x2cc] sm:$0xff]
  %v7292 = vld [vmem:[%s4 + $0x2d4] sm:$0xf]
  %v7293 = vld [vmem:[%s4 + $0x2d8] sm:$0xff]
  %v7294 = vld [vmem:[%s4 + $0x2e0] sm:$0xff]
  %v7295 = vld [vmem:[%s4 + $0x2e8] sm:$0xff]
  %v7296 = vld [vmem:[%s4 + $0x2f0] sm:$0xff]
  %v7297 = vld [vmem:[%s4 + $0x2f8] sm:$0xff]
  %v7298 = vld [vmem:[%s4 + $0x300] sm:$0xff]
  %v7299 = vld [vmem:[%s4 + $0x308] sm:$0xf]
  %v7300 = vld [vmem:[%s4 + $0x30c] sm:$0xff]
  %v7301 = vld [vmem:[%s4 + $0x314] sm:$0xff]
  %v7302 = vld [vmem:[%s4 + $0x31c] sm:$0xff]
  %v7303 = vld [vmem:[%s4 + $0x324] sm:$0xff]
  %v7304 = vld [vmem:[%s4 + $0x32c] sm:$0xff]
  %v7305 = vld [vmem:[%s4 + $0x334] sm:$0xff]
  %v7306 = vld [vmem:[%s4 + $0x33c] sm:$0xf]
  %v7307 = vld [vmem:[%s4 + $0x340] sm:$0xff]
  %v7308 = vld [vmem:[%s4 + $0x348] sm:$0xff]
  %v7309 = vld [vmem:[%s4 + $0x350] sm:$0xff]
  %v7310 = vld [vmem:[%s4 + $0x358] sm:$0xff]
  %v7311 = vld [vmem:[%s4 + $0x360] sm:$0xff]
  %v7312 = vld [vmem:[%s4 + $0x368] sm:$0xff]
  %v7313 = vld [vmem:[%s4 + $0x370] sm:$0xf]
  %v7314 = vld [vmem:[%s4 + $0x374] sm:$0xff]
  %v7315 = vld [vmem:[%s4 + $0x37c] sm:$0xff]
  %v7316 = vld [vmem:[%s4 + $0x384] sm:$0xff]
  %v7317 = vld [vmem:[%s4 + $0x38c] sm:$0xff]
  %v7318 = vld [vmem:[%s4 + $0x394] sm:$0xff]
  %v7319 = vld [vmem:[%s4 + $0x39c] sm:$0xff]
  %v7320 = vld [vmem:[%s4 + $0x3a4] sm:$0xf]
  %v7321 = vld [vmem:[%s4 + $0x3a8] sm:$0xff]
  %v7322 = vld [vmem:[%s4 + $0x3b0] sm:$0xff]
  %v7323 = vld [vmem:[%s4 + $0x3b8] sm:$0xff]
  %v7324 = vld [vmem:[%s4 + $0x3c0] sm:$0xff]
  %v7325 = vld [vmem:[%s4 + $0x3c8] sm:$0xff]
  %v7326 = vld [vmem:[%s4 + $0x3d0] sm:$0xff]
  %v7327 = vld [vmem:[%s4 + $0x3d8] sm:$0xf]
  %v7328 = vld [vmem:[%s4 + $0x3dc] sm:$0xff]
  %v7329 = vld [vmem:[%s4 + $0x3e4] sm:$0xff]
  %v7330 = vld [vmem:[%s4 + $0x3ec] sm:$0xff]
  %v7331 = vld [vmem:[%s4 + $0x3f4] sm:$0xff]
  %v7332 = vld [vmem:[%s4 + $0x3fc] sm:$0xff]
  %v7333 = vld [vmem:[%s4 + $0x404] sm:$0xff]
  %v7334 = vld [vmem:[%s4 + $0x40c] sm:$0xf]
  %v7335 = vld [vmem:[%s4 + $0x410] sm:$0xff]
  %v7336 = vld [vmem:[%s4 + $0x418] sm:$0xff]
  %v7337 = vld [vmem:[%s4 + $0x420] sm:$0xff]
  %v7338 = vld [vmem:[%s4 + $0x428] sm:$0xff]
  %v7339 = vld [vmem:[%s4 + $0x430] sm:$0xff]
  %v7340 = vld [vmem:[%s4 + $0x438] sm:$0xff]
  %v7341 = vld [vmem:[%s4 + $0x440] sm:$0xf]
  %v7342 = vld [vmem:[%s4 + $0x444] sm:$0xff]
  %v7343 = vld [vmem:[%s4 + $0x44c] sm:$0xff]
  %v7344 = vld [vmem:[%s4 + $0x454] sm:$0xff]
  %v7345 = vld [vmem:[%s4 + $0x45c] sm:$0xff]
  %v7346 = vld [vmem:[%s4 + $0x464] sm:$0xff]
  %v7347 = vld [vmem:[%s4 + $0x46c] sm:$0xff]
  %v7348 = vld [vmem:[%s4 + $0x474] sm:$0xf]
  %v7349 = vld [vmem:[%s4 + $0x478] sm:$0xff]
  %v7350 = vld [vmem:[%s4 + $0x480] sm:$0xff]
  %v7351 = vld [vmem:[%s4 + $0x488] sm:$0xff]
  %v7352 = vld [vmem:[%s4 + $0x490] sm:$0xff]
  %v7353 = vld [vmem:[%s4 + $0x498] sm:$0xff]
  %v7354 = vld [vmem:[%s4 + $0x4a0] sm:$0xff]
  %v7355 = vld [vmem:[%s4 + $0x4a8] sm:$0xf]
  %v7356 = vld [vmem:[%s4 + $0x4ac] sm:$0xff]
  %v7357 = vld [vmem:[%s4 + $0x4b4] sm:$0xff]
  %v7358 = vld [vmem:[%s4 + $0x4bc] sm:$0xff]
  %v7359 = vld [vmem:[%s4 + $0x4c4] sm:$0xff]
  %v7360 = vld [vmem:[%s4 + $0x4cc] sm:$0xff]
  %v7361 = vld [vmem:[%s4 + $0x4d4] sm:$0xff]
  %v7362 = vld [vmem:[%s4 + $0x4dc] sm:$0xf]
  %v7363 = vld [vmem:[%s4 + $0x4e0] sm:$0xff]
  %v7364 = vld [vmem:[%s4 + $0x4e8] sm:$0xff]
  %v7365 = vld [vmem:[%s4 + $0x4f0] sm:$0xff]
  %v7366 = vld [vmem:[%s4 + $0x4f8] sm:$0xff]
  %v7367 = vld [vmem:[%s4 + $0x500] sm:$0xff]
  %v7368 = vld [vmem:[%s4 + $0x508] sm:$0xff]
  %v7369 = vld [vmem:[%s4 + $0x510] sm:$0xf]
  %v7370 = vld [vmem:[%s4 + $0x514] sm:$0xff]
  %v7371 = vld [vmem:[%s4 + $0x51c] sm:$0xff]
  %v7372 = vld [vmem:[%s4 + $0x524] sm:$0xff]
  %v7373 = vld [vmem:[%s4 + $0x52c] sm:$0xff]
  %v7374 = vld [vmem:[%s4 + $0x534] sm:$0xff]
  %v7375 = vld [vmem:[%s4 + $0x53c] sm:$0xff]
  %v7376 = vld [vmem:[%s4 + $0x544] sm:$0xf]
  %v7377 = vld [vmem:[%s4 + $0x548] sm:$0xff]
  %v7378 = vld [vmem:[%s4 + $0x550] sm:$0xff]
  %v7379 = vld [vmem:[%s4 + $0x558] sm:$0xff]
  %v7380 = vld [vmem:[%s4 + $0x560] sm:$0xff]
  %v7381 = vld [vmem:[%s4 + $0x568] sm:$0xff]
  %v7382 = vld [vmem:[%s4 + $0x570] sm:$0xff]
  %v7383 = vld [vmem:[%s4 + $0x578] sm:$0xf]
  %v7384 = vld [vmem:[%s4 + $0x57c] sm:$0xff]
  %v7385 = vld [vmem:[%s4 + $0x584] sm:$0xff]
  %v7386 = vld [vmem:[%s4 + $0x58c] sm:$0xff]
  %v7387 = vld [vmem:[%s4 + $0x594] sm:$0xff]
  %v7388 = vld [vmem:[%s4 + $0x59c] sm:$0xff]
  %v7389 = vld [vmem:[%s4 + $0x5a4] sm:$0xff]
  %v7390 = vld [vmem:[%s4 + $0x5ac] sm:$0xf]
  %v7391 = vld [vmem:[%s4 + $0x5b0] sm:$0xff]
  %v7392 = vld [vmem:[%s4 + $0x5b8] sm:$0xff]
  %v7393 = vld [vmem:[%s4 + $0x5c0] sm:$0xff]
  %v7394 = vld [vmem:[%s4 + $0x5c8] sm:$0xff]
  %v7395 = vld [vmem:[%s4 + $0x5d0] sm:$0xff]
  %v7396 = vld [vmem:[%s4 + $0x5d8] sm:$0xff]
  %v7397 = vld [vmem:[%s4 + $0x5e0] sm:$0xf]
  %v7398 = vld [vmem:[%s4 + $0x5e4] sm:$0xff]
  %v7399 = vld [vmem:[%s4 + $0x5ec] sm:$0xff]
  %v7400 = vld [vmem:[%s4 + $0x5f4] sm:$0xff]
  %v7401 = vld [vmem:[%s4 + $0x5fc] sm:$0xff]
  %v7402 = vld [vmem:[%s4 + $0x604] sm:$0xff]
  %v7403 = vld [vmem:[%s4 + $0x60c] sm:$0xff]
  %v7404 = vld [vmem:[%s4 + $0x614] sm:$0xf]
  %v7405 = vld [vmem:[%s4 + $0x618] sm:$0xff]
  %v7406 = vld [vmem:[%s4 + $0x620] sm:$0xff]
  %v7407 = vld [vmem:[%s4 + $0x628] sm:$0xff]
  %v7408 = vld [vmem:[%s4 + $0x630] sm:$0xff]
  %v7409 = vld [vmem:[%s4 + $0x638] sm:$0xff]
  %v7410 = vld [vmem:[%s4 + $0x640] sm:$0xff]
  %v7411 = vld [vmem:[%s4 + $0x648] sm:$0xf]
  %v7412 = vld [vmem:[%s4 + $0x64c] sm:$0xff]
  %v7413 = vld [vmem:[%s4 + $0x654] sm:$0xff]
  %v7414 = vld [vmem:[%s4 + $0x65c] sm:$0xff]
  %v7415 = vld [vmem:[%s4 + $0x664] sm:$0xff]
  %v7416 = vld [vmem:[%s4 + $0x66c] sm:$0xff]
  %v7417 = vld [vmem:[%s4 + $0x674] sm:$0xff]
  %v7418 = vld [vmem:[%s4 + $0x67c] sm:$0xf]
  %v7419 = vld [vmem:[%s4 + $0x680] sm:$0xff]
  %v7420 = vld [vmem:[%s4 + $0x688] sm:$0xff]
  %v7421 = vld [vmem:[%s4 + $0x690] sm:$0xff]
  %v7422 = vld [vmem:[%s4 + $0x698] sm:$0xff]
  %v7423 = vld [vmem:[%s4 + $0x6a0] sm:$0xff]
  %v7424 = vld [vmem:[%s4 + $0x6a8] sm:$0xff]
  %v7425 = vld [vmem:[%s4 + $0x6b0] sm:$0xf]
  %v7426 = vld [vmem:[%s4 + $0x6b4] sm:$0xff]
  %v7427 = vld [vmem:[%s4 + $0x6bc] sm:$0xff]
  %v7428 = vld [vmem:[%s4 + $0x6c4] sm:$0xff]
  %v7429 = vld [vmem:[%s4 + $0x6cc] sm:$0xff]
  %v7430 = vld [vmem:[%s4 + $0x6d4] sm:$0xff]
  %v7431 = vld [vmem:[%s4 + $0x6dc] sm:$0xff]
  %v7432 = vld [vmem:[%s4 + $0x6e4] sm:$0xf]
  %v7671 = vunpack.c.l.b16 %v7195
  %v7672 = vunpack.c.h.b16 %v7195
  %v7673 = vunpack.c.l.b16 %v7196
  %v7674 = vunpack.c.h.b16 %v7196
  %v7675 = vunpack.c.l.b16 %v7197
  %v7676 = vunpack.c.h.b16 %v7197
  %v7677 = vunpack.c.l.b16 %v7198
  %v7678 = vunpack.c.h.b16 %v7198
  %v7679 = vunpack.c.l.b16 %v7199
  %v7680 = vunpack.c.h.b16 %v7199
  %v7681 = vunpack.c.l.b16 %v7200
  %v7682 = vunpack.c.h.b16 %v7200
  %v7683 = vunpack.c.l.b16 %v7201
  %v7684 = vunpack.c.l.b16 %v7202
  %v7685 = vunpack.c.h.b16 %v7202
  %v7686 = vunpack.c.l.b16 %v7203
  %v7687 = vunpack.c.h.b16 %v7203
  %v7688 = vunpack.c.l.b16 %v7204
  %v7689 = vunpack.c.h.b16 %v7204
  %v7690 = vunpack.c.l.b16 %v7205
  %v7691 = vunpack.c.h.b16 %v7205
  %v7692 = vunpack.c.l.b16 %v7206
  %v7693 = vunpack.c.h.b16 %v7206
  %v7694 = vunpack.c.l.b16 %v7207
  %v7695 = vunpack.c.h.b16 %v7207
  %v7696 = vunpack.c.l.b16 %v7208
  %v7697 = vunpack.c.l.b16 %v7209
  %v7698 = vunpack.c.h.b16 %v7209
  %v7699 = vunpack.c.l.b16 %v7210
  %v7700 = vunpack.c.h.b16 %v7210
  %v7701 = vunpack.c.l.b16 %v7211
  %v7702 = vunpack.c.h.b16 %v7211
  %v7703 = vunpack.c.l.b16 %v7212
  %v7704 = vunpack.c.h.b16 %v7212
  %v7705 = vunpack.c.l.b16 %v7213
  %v7706 = vunpack.c.h.b16 %v7213
  %v7707 = vunpack.c.l.b16 %v7214
  %v7708 = vunpack.c.h.b16 %v7214
  %v7709 = vunpack.c.l.b16 %v7215
  %v7710 = vunpack.c.l.b16 %v7216
  %v7711 = vunpack.c.h.b16 %v7216
  %v7712 = vunpack.c.l.b16 %v7217
  %v7713 = vunpack.c.h.b16 %v7217
  %v7714 = vunpack.c.l.b16 %v7218
  %v7715 = vunpack.c.h.b16 %v7218
  %v7716 = vunpack.c.l.b16 %v7219
  %v7717 = vunpack.c.h.b16 %v7219
  %v7718 = vunpack.c.l.b16 %v7220
  %v7719 = vunpack.c.h.b16 %v7220
  %v7720 = vunpack.c.l.b16 %v7221
  %v7721 = vunpack.c.h.b16 %v7221
  %v7722 = vunpack.c.l.b16 %v7222
  %v7723 = vunpack.c.l.b16 %v7223
  %v7724 = vunpack.c.h.b16 %v7223
  %v7725 = vunpack.c.l.b16 %v7224
  %v7726 = vunpack.c.h.b16 %v7224
  %v7727 = vunpack.c.l.b16 %v7225
  %v7728 = vunpack.c.h.b16 %v7225
  %v7729 = vunpack.c.l.b16 %v7226
  %v7730 = vunpack.c.h.b16 %v7226
  %v7731 = vunpack.c.l.b16 %v7227
  %v7732 = vunpack.c.h.b16 %v7227
  %v7733 = vunpack.c.l.b16 %v7228
  %v7734 = vunpack.c.h.b16 %v7228
  %v7735 = vunpack.c.l.b16 %v7229
  %v7736 = vunpack.c.l.b16 %v7230
  %v7737 = vunpack.c.h.b16 %v7230
  %v7738 = vunpack.c.l.b16 %v7231
  %v7739 = vunpack.c.h.b16 %v7231
  %v7740 = vunpack.c.l.b16 %v7232
  %v7741 = vunpack.c.h.b16 %v7232
  %v7742 = vunpack.c.l.b16 %v7233
  %v7743 = vunpack.c.h.b16 %v7233
  %v7744 = vunpack.c.l.b16 %v7234
  %v7745 = vunpack.c.h.b16 %v7234
  %v7746 = vunpack.c.l.b16 %v7235
  %v7747 = vunpack.c.h.b16 %v7235
  %v7748 = vunpack.c.l.b16 %v7236
  %v7749 = vunpack.c.l.b16 %v7237
  %v7750 = vunpack.c.h.b16 %v7237
  %v7751 = vunpack.c.l.b16 %v7238
  %v7752 = vunpack.c.h.b16 %v7238
  %v7753 = vunpack.c.l.b16 %v7239
  %v7754 = vunpack.c.h.b16 %v7239
  %v7755 = vunpack.c.l.b16 %v7240
  %v7756 = vunpack.c.h.b16 %v7240
  %v7757 = vunpack.c.l.b16 %v7241
  %v7758 = vunpack.c.h.b16 %v7241
  %v7759 = vunpack.c.l.b16 %v7242
  %v7760 = vunpack.c.h.b16 %v7242
  %v7761 = vunpack.c.l.b16 %v7243
  %v7762 = vunpack.c.l.b16 %v7244
  %v7763 = vunpack.c.h.b16 %v7244
  %v7764 = vunpack.c.l.b16 %v7245
  %v7765 = vunpack.c.h.b16 %v7245
  %v7766 = vunpack.c.l.b16 %v7246
  %v7767 = vunpack.c.h.b16 %v7246
  %v7768 = vunpack.c.l.b16 %v7247
  %v7769 = vunpack.c.h.b16 %v7247
  %v7770 = vunpack.c.l.b16 %v7248
  %v7771 = vunpack.c.h.b16 %v7248
  %v7772 = vunpack.c.l.b16 %v7249
  %v7773 = vunpack.c.h.b16 %v7249
  %v7774 = vunpack.c.l.b16 %v7250
  %v7775 = vunpack.c.l.b16 %v7251
  %v7776 = vunpack.c.h.b16 %v7251
  %v7777 = vunpack.c.l.b16 %v7252
  %v7778 = vunpack.c.h.b16 %v7252
  %v7779 = vunpack.c.l.b16 %v7253
  %v7780 = vunpack.c.h.b16 %v7253
  %v7781 = vunpack.c.l.b16 %v7254
  %v7782 = vunpack.c.h.b16 %v7254
  %v7783 = vunpack.c.l.b16 %v7255
  %v7784 = vunpack.c.h.b16 %v7255
  %v7785 = vunpack.c.l.b16 %v7256
  %v7786 = vunpack.c.h.b16 %v7256
  %v7787 = vunpack.c.l.b16 %v7257
  %v7788 = vunpack.c.l.b16 %v7258
  %v7789 = vunpack.c.h.b16 %v7258
  %v7790 = vunpack.c.l.b16 %v7259
  %v7791 = vunpack.c.h.b16 %v7259
  %v7792 = vunpack.c.l.b16 %v7260
  %v7793 = vunpack.c.h.b16 %v7260
  %v7794 = vunpack.c.l.b16 %v7261
  %v7795 = vunpack.c.h.b16 %v7261
  %v7796 = vunpack.c.l.b16 %v7262
  %v7797 = vunpack.c.h.b16 %v7262
  %v7798 = vunpack.c.l.b16 %v7263
  %v7799 = vunpack.c.h.b16 %v7263
  %v7800 = vunpack.c.l.b16 %v7264
  %v7801 = vunpack.c.l.b16 %v7265
  %v7802 = vunpack.c.h.b16 %v7265
  %v7803 = vunpack.c.l.b16 %v7266
  %v7804 = vunpack.c.h.b16 %v7266
  %v7805 = vunpack.c.l.b16 %v7267
  %v7806 = vunpack.c.h.b16 %v7267
  %v7807 = vunpack.c.l.b16 %v7268
  %v7808 = vunpack.c.h.b16 %v7268
  %v7809 = vunpack.c.l.b16 %v7269
  %v7810 = vunpack.c.h.b16 %v7269
  %v7811 = vunpack.c.l.b16 %v7270
  %v7812 = vunpack.c.h.b16 %v7270
  %v7813 = vunpack.c.l.b16 %v7271
  %v7814 = vunpack.c.l.b16 %v7272
  %v7815 = vunpack.c.h.b16 %v7272
  %v7816 = vunpack.c.l.b16 %v7273
  %v7817 = vunpack.c.h.b16 %v7273
  %v7818 = vunpack.c.l.b16 %v7274
  %v7819 = vunpack.c.h.b16 %v7274
  %v7820 = vunpack.c.l.b16 %v7275
  %v7821 = vunpack.c.h.b16 %v7275
  %v7822 = vunpack.c.l.b16 %v7276
  %v7823 = vunpack.c.h.b16 %v7276
  %v7824 = vunpack.c.l.b16 %v7277
  %v7825 = vunpack.c.h.b16 %v7277
  %v7826 = vunpack.c.l.b16 %v7278
  %v7827 = vunpack.c.l.b16 %v7279
  %v7828 = vunpack.c.h.b16 %v7279
  %v7829 = vunpack.c.l.b16 %v7280
  %v7830 = vunpack.c.h.b16 %v7280
  %v7831 = vunpack.c.l.b16 %v7281
  %v7832 = vunpack.c.h.b16 %v7281
  %v7833 = vunpack.c.l.b16 %v7282
  %v7834 = vunpack.c.h.b16 %v7282
  %v7835 = vunpack.c.l.b16 %v7283
  %v7836 = vunpack.c.h.b16 %v7283
  %v7837 = vunpack.c.l.b16 %v7284
  %v7838 = vunpack.c.h.b16 %v7284
  %v7839 = vunpack.c.l.b16 %v7285
  %v7840 = vunpack.c.l.b16 %v7286
  %v7841 = vunpack.c.h.b16 %v7286
  %v7842 = vunpack.c.l.b16 %v7287
  %v7843 = vunpack.c.h.b16 %v7287
  %v7844 = vunpack.c.l.b16 %v7288
  %v7845 = vunpack.c.h.b16 %v7288
  %v7846 = vunpack.c.l.b16 %v7289
  %v7847 = vunpack.c.h.b16 %v7289
  %v7848 = vunpack.c.l.b16 %v7290
  %v7849 = vunpack.c.h.b16 %v7290
  %v7850 = vunpack.c.l.b16 %v7291
  %v7851 = vunpack.c.h.b16 %v7291
  %v7852 = vunpack.c.l.b16 %v7292
  %v7853 = vunpack.c.l.b16 %v7293
  %v7854 = vunpack.c.h.b16 %v7293
  %v7855 = vunpack.c.l.b16 %v7294
  %v7856 = vunpack.c.h.b16 %v7294
  %v7857 = vunpack.c.l.b16 %v7295
  %v7858 = vunpack.c.h.b16 %v7295
  %v7859 = vunpack.c.l.b16 %v7296
  %v7860 = vunpack.c.h.b16 %v7296
  %v7861 = vunpack.c.l.b16 %v7297
  %v7862 = vunpack.c.h.b16 %v7297
  %v7863 = vunpack.c.l.b16 %v7298
  %v7864 = vunpack.c.h.b16 %v7298
  %v7865 = vunpack.c.l.b16 %v7299
  %v7866 = vunpack.c.l.b16 %v7300
  %v7867 = vunpack.c.h.b16 %v7300
  %v7868 = vunpack.c.l.b16 %v7301
  %v7869 = vunpack.c.h.b16 %v7301
  %v7870 = vunpack.c.l.b16 %v7302
  %v7871 = vunpack.c.h.b16 %v7302
  %v7872 = vunpack.c.l.b16 %v7303
  %v7873 = vunpack.c.h.b16 %v7303
  %v7874 = vunpack.c.l.b16 %v7304
  %v7875 = vunpack.c.h.b16 %v7304
  %v7876 = vunpack.c.l.b16 %v7305
  %v7877 = vunpack.c.h.b16 %v7305
  %v7878 = vunpack.c.l.b16 %v7306
  %v7879 = vunpack.c.l.b16 %v7307
  %v7880 = vunpack.c.h.b16 %v7307
  %v7881 = vunpack.c.l.b16 %v7308
  %v7882 = vunpack.c.h.b16 %v7308
  %v7883 = vunpack.c.l.b16 %v7309
  %v7884 = vunpack.c.h.b16 %v7309
  %v7885 = vunpack.c.l.b16 %v7310
  %v7886 = vunpack.c.h.b16 %v7310
  %v7887 = vunpack.c.l.b16 %v7311
  %v7888 = vunpack.c.h.b16 %v7311
  %v7889 = vunpack.c.l.b16 %v7312
  %v7890 = vunpack.c.h.b16 %v7312
  %v7891 = vunpack.c.l.b16 %v7313
  %v7892 = vunpack.c.l.b16 %v7314
  %v7893 = vunpack.c.h.b16 %v7314
  %v7894 = vunpack.c.l.b16 %v7315
  %v7895 = vunpack.c.h.b16 %v7315
  %v7896 = vunpack.c.l.b16 %v7316
  %v7897 = vunpack.c.h.b16 %v7316
  %v7898 = vunpack.c.l.b16 %v7317
  %v7899 = vunpack.c.h.b16 %v7317
  %v7900 = vunpack.c.l.b16 %v7318
  %v7901 = vunpack.c.h.b16 %v7318
  %v7902 = vunpack.c.l.b16 %v7319
  %v7903 = vunpack.c.h.b16 %v7319
  %v7904 = vunpack.c.l.b16 %v7320
  %v7905 = vunpack.c.l.b16 %v7321
  %v7906 = vunpack.c.h.b16 %v7321
  %v7907 = vunpack.c.l.b16 %v7322
  %v7908 = vunpack.c.h.b16 %v7322
  %v7909 = vunpack.c.l.b16 %v7323
  %v7910 = vunpack.c.h.b16 %v7323
  %v7911 = vunpack.c.l.b16 %v7324
  %v7912 = vunpack.c.h.b16 %v7324
  %v7913 = vunpack.c.l.b16 %v7325
  %v7914 = vunpack.c.h.b16 %v7325
  %v7915 = vunpack.c.l.b16 %v7326
  %v7916 = vunpack.c.h.b16 %v7326
  %v7917 = vunpack.c.l.b16 %v7327
  %v7918 = vunpack.c.l.b16 %v7328
  %v7919 = vunpack.c.h.b16 %v7328
  %v7920 = vunpack.c.l.b16 %v7329
  %v7921 = vunpack.c.h.b16 %v7329
  %v7922 = vunpack.c.l.b16 %v7330
  %v7923 = vunpack.c.h.b16 %v7330
  %v7924 = vunpack.c.l.b16 %v7331
  %v7925 = vunpack.c.h.b16 %v7331
  %v7926 = vunpack.c.l.b16 %v7332
  %v7927 = vunpack.c.h.b16 %v7332
  %v7928 = vunpack.c.l.b16 %v7333
  %v7929 = vunpack.c.h.b16 %v7333
  %v7930 = vunpack.c.l.b16 %v7334
  %v7931 = vunpack.c.l.b16 %v7335
  %v7932 = vunpack.c.h.b16 %v7335
  %v7933 = vunpack.c.l.b16 %v7336
  %v7934 = vunpack.c.h.b16 %v7336
  %v7935 = vunpack.c.l.b16 %v7337
  %v7936 = vunpack.c.h.b16 %v7337
  %v7937 = vunpack.c.l.b16 %v7338
  %v7938 = vunpack.c.h.b16 %v7338
  %v7939 = vunpack.c.l.b16 %v7339
  %v7940 = vunpack.c.h.b16 %v7339
  %v7941 = vunpack.c.l.b16 %v7340
  %v7942 = vunpack.c.h.b16 %v7340
  %v7943 = vunpack.c.l.b16 %v7341
  %v7944 = vunpack.c.l.b16 %v7342
  %v7945 = vunpack.c.h.b16 %v7342
  %v7946 = vunpack.c.l.b16 %v7343
  %v7947 = vunpack.c.h.b16 %v7343
  %v7948 = vunpack.c.l.b16 %v7344
  %v7949 = vunpack.c.h.b16 %v7344
  %v7950 = vunpack.c.l.b16 %v7345
  %v7951 = vunpack.c.h.b16 %v7345
  %v7952 = vunpack.c.l.b16 %v7346
  %v7953 = vunpack.c.h.b16 %v7346
  %v7954 = vunpack.c.l.b16 %v7347
  %v7955 = vunpack.c.h.b16 %v7347
  %v7956 = vunpack.c.l.b16 %v7348
  %v7957 = vunpack.c.l.b16 %v7349
  %v7958 = vunpack.c.h.b16 %v7349
  %v7959 = vunpack.c.l.b16 %v7350
  %v7960 = vunpack.c.h.b16 %v7350
  %v7961 = vunpack.c.l.b16 %v7351
  %v7962 = vunpack.c.h.b16 %v7351
  %v7963 = vunpack.c.l.b16 %v7352
  %v7964 = vunpack.c.h.b16 %v7352
  %v7965 = vunpack.c.l.b16 %v7353
  %v7966 = vunpack.c.h.b16 %v7353
  %v7967 = vunpack.c.l.b16 %v7354
  %v7968 = vunpack.c.h.b16 %v7354
  %v7969 = vunpack.c.l.b16 %v7355
  %v7970 = vunpack.c.l.b16 %v7356
  %v7971 = vunpack.c.h.b16 %v7356
  %v7972 = vunpack.c.l.b16 %v7357
  %v7973 = vunpack.c.h.b16 %v7357
  %v7974 = vunpack.c.l.b16 %v7358
  %v7975 = vunpack.c.h.b16 %v7358
  %v7976 = vunpack.c.l.b16 %v7359
  %v7977 = vunpack.c.h.b16 %v7359
  %v7978 = vunpack.c.l.b16 %v7360
  %v7979 = vunpack.c.h.b16 %v7360
  %v7980 = vunpack.c.l.b16 %v7361
  %v7981 = vunpack.c.h.b16 %v7361
  %v7982 = vunpack.c.l.b16 %v7362
  %v7983 = vunpack.c.l.b16 %v7363
  %v7984 = vunpack.c.h.b16 %v7363
  %v7985 = vunpack.c.l.b16 %v7364
  %v7986 = vunpack.c.h.b16 %v7364
  %v7987 = vunpack.c.l.b16 %v7365
  %v7988 = vunpack.c.h.b16 %v7365
  %v7989 = vunpack.c.l.b16 %v7366
  %v7990 = vunpack.c.h.b16 %v7366
  %v7991 = vunpack.c.l.b16 %v7367
  %v7992 = vunpack.c.h.b16 %v7367
  %v7993 = vunpack.c.l.b16 %v7368
  %v7994 = vunpack.c.h.b16 %v7368
  %v7995 = vunpack.c.l.b16 %v7369
  %v7996 = vunpack.c.l.b16 %v7370
  %v7997 = vunpack.c.h.b16 %v7370
  %v7998 = vunpack.c.l.b16 %v7371
  %v7999 = vunpack.c.h.b16 %v7371
  %v8000 = vunpack.c.l.b16 %v7372
  %v8001 = vunpack.c.h.b16 %v7372
  %v8002 = vunpack.c.l.b16 %v7373
  %v8003 = vunpack.c.h.b16 %v7373
  %v8004 = vunpack.c.l.b16 %v7374
  %v8005 = vunpack.c.h.b16 %v7374
  %v8006 = vunpack.c.l.b16 %v7375
  %v8007 = vunpack.c.h.b16 %v7375
  %v8008 = vunpack.c.l.b16 %v7376
  %v8009 = vunpack.c.l.b16 %v7377
  %v8010 = vunpack.c.h.b16 %v7377
  %v8011 = vunpack.c.l.b16 %v7378
  %v8012 = vunpack.c.h.b16 %v7378
  %v8013 = vunpack.c.l.b16 %v7379
  %v8014 = vunpack.c.h.b16 %v7379
  %v8015 = vunpack.c.l.b16 %v7380
  %v8016 = vunpack.c.h.b16 %v7380
  %v8017 = vunpack.c.l.b16 %v7381
  %v8018 = vunpack.c.h.b16 %v7381
  %v8019 = vunpack.c.l.b16 %v7382
  %v8020 = vunpack.c.h.b16 %v7382
  %v8021 = vunpack.c.l.b16 %v7383
  %v8022 = vunpack.c.l.b16 %v7384
  %v8023 = vunpack.c.h.b16 %v7384
  %v8024 = vunpack.c.l.b16 %v7385
  %v8025 = vunpack.c.h.b16 %v7385
  %v8026 = vunpack.c.l.b16 %v7386
  %v8027 = vunpack.c.h.b16 %v7386
  %v8028 = vunpack.c.l.b16 %v7387
  %v8029 = vunpack.c.h.b16 %v7387
  %v8030 = vunpack.c.l.b16 %v7388
  %v8031 = vunpack.c.h.b16 %v7388
  %v8032 = vunpack.c.l.b16 %v7389
  %v8033 = vunpack.c.h.b16 %v7389
  %v8034 = vunpack.c.l.b16 %v7390
  %v8035 = vunpack.c.l.b16 %v7391
  %v8036 = vunpack.c.h.b16 %v7391
  %v8037 = vunpack.c.l.b16 %v7392
  %v8038 = vunpack.c.h.b16 %v7392
  %v8039 = vunpack.c.l.b16 %v7393
  %v8040 = vunpack.c.h.b16 %v7393
  %v8041 = vunpack.c.l.b16 %v7394
  %v8042 = vunpack.c.h.b16 %v7394
  %v8043 = vunpack.c.l.b16 %v7395
  %v8044 = vunpack.c.h.b16 %v7395
  %v8045 = vunpack.c.l.b16 %v7396
  %v8046 = vunpack.c.h.b16 %v7396
  %v8047 = vunpack.c.l.b16 %v7397
  %v8048 = vunpack.c.l.b16 %v7398
  %v8049 = vunpack.c.h.b16 %v7398
  %v8050 = vunpack.c.l.b16 %v7399
  %v8051 = vunpack.c.h.b16 %v7399
  %v8052 = vunpack.c.l.b16 %v7400
  %v8053 = vunpack.c.h.b16 %v7400
  %v8054 = vunpack.c.l.b16 %v7401
  %v8055 = vunpack.c.h.b16 %v7401
  %v8056 = vunpack.c.l.b16 %v7402
  %v8057 = vunpack.c.h.b16 %v7402
  %v8058 = vunpack.c.l.b16 %v7403
  %v8059 = vunpack.c.h.b16 %v7403
  %v8060 = vunpack.c.l.b16 %v7404
  %v8061 = vunpack.c.l.b16 %v7405
  %v8062 = vunpack.c.h.b16 %v7405
  %v8063 = vunpack.c.l.b16 %v7406
  %v8064 = vunpack.c.h.b16 %v7406
  %v8065 = vunpack.c.l.b16 %v7407
  %v8066 = vunpack.c.h.b16 %v7407
  %v8067 = vunpack.c.l.b16 %v7408
  %v8068 = vunpack.c.h.b16 %v7408
  %v8069 = vunpack.c.l.b16 %v7409
  %v8070 = vunpack.c.h.b16 %v7409
  %v8071 = vunpack.c.l.b16 %v7410
  %v8072 = vunpack.c.h.b16 %v7410
  %v8073 = vunpack.c.l.b16 %v7411
  %v8074 = vunpack.c.l.b16 %v7412
  %v8075 = vunpack.c.h.b16 %v7412
  %v8076 = vunpack.c.l.b16 %v7413
  %v8077 = vunpack.c.h.b16 %v7413
  %v8078 = vunpack.c.l.b16 %v7414
  %v8079 = vunpack.c.h.b16 %v7414
  %v8080 = vunpack.c.l.b16 %v7415
  %v8081 = vunpack.c.h.b16 %v7415
  %v8082 = vunpack.c.l.b16 %v7416
  %v8083 = vunpack.c.h.b16 %v7416
  %v8084 = vunpack.c.l.b16 %v7417
  %v8085 = vunpack.c.h.b16 %v7417
  %v8086 = vunpack.c.l.b16 %v7418
  %v8087 = vunpack.c.l.b16 %v7419
  %v8088 = vunpack.c.h.b16 %v7419
  %v8089 = vunpack.c.l.b16 %v7420
  %v8090 = vunpack.c.h.b16 %v7420
  %v8091 = vunpack.c.l.b16 %v7421
  %v8092 = vunpack.c.h.b16 %v7421
  %v8093 = vunpack.c.l.b16 %v7422
  %v8094 = vunpack.c.h.b16 %v7422
  %v8095 = vunpack.c.l.b16 %v7423
  %v8096 = vunpack.c.h.b16 %v7423
  %v8097 = vunpack.c.l.b16 %v7424
  %v8098 = vunpack.c.h.b16 %v7424
  %v8099 = vunpack.c.l.b16 %v7425
  %v8100 = vunpack.c.l.b16 %v7426
  %v8101 = vunpack.c.h.b16 %v7426
  %v8102 = vunpack.c.l.b16 %v7427
  %v8103 = vunpack.c.h.b16 %v7427
  %v8104 = vunpack.c.l.b16 %v7428
  %v8105 = vunpack.c.h.b16 %v7428
  %v8106 = vunpack.c.l.b16 %v7429
  %v8107 = vunpack.c.h.b16 %v7429
  %v8108 = vunpack.c.l.b16 %v7430
  %v8109 = vunpack.c.h.b16 %v7430
  %v8110 = vunpack.c.l.b16 %v7431
  %v8111 = vunpack.c.h.b16 %v7431
  %v8112 = vunpack.c.l.b16 %v7432
  %v8113 = vpack.c.b16 %v7684, %v7671
  %v8114 = vpack.c.b16 %v7685, %v7672
  %v8115 = vpack.c.b16 %v7686, %v7673
  %v8116 = vpack.c.b16 %v7687, %v7674
  %v8117 = vpack.c.b16 %v7688, %v7675
  %v8118 = vpack.c.b16 %v7689, %v7676
  %v8119 = vpack.c.b16 %v7690, %v7677
  %v8120 = vpack.c.b16 %v7691, %v7678
  %v8121 = vpack.c.b16 %v7692, %v7679
  %v8122 = vpack.c.b16 %v7693, %v7680
  %v8123 = vpack.c.b16 %v7694, %v7681
  %v8124 = vpack.c.b16 %v7695, %v7682
  %v8125 = vpack.c.b16 %v7696, %v7683
  %v8126 = vpack.c.b16 %v7710, %v7697
  %v8127 = vpack.c.b16 %v7711, %v7698
  %v8128 = vpack.c.b16 %v7712, %v7699
  %v8129 = vpack.c.b16 %v7713, %v7700
  %v8130 = vpack.c.b16 %v7714, %v7701
  %v8131 = vpack.c.b16 %v7715, %v7702
  %v8132 = vpack.c.b16 %v7716, %v7703
  %v8133 = vpack.c.b16 %v7717, %v7704
  %v8134 = vpack.c.b16 %v7718, %v7705
  %v8135 = vpack.c.b16 %v7719, %v7706
  %v8136 = vpack.c.b16 %v7720, %v7707
  %v8137 = vpack.c.b16 %v7721, %v7708
  %v8138 = vpack.c.b16 %v7722, %v7709
  %v8139 = vpack.c.b16 %v7736, %v7723
  %v8140 = vpack.c.b16 %v7737, %v7724
  %v8141 = vpack.c.b16 %v7738, %v7725
  %v8142 = vpack.c.b16 %v7739, %v7726
  %v8143 = vpack.c.b16 %v7740, %v7727
  %v8144 = vpack.c.b16 %v7741, %v7728
  %v8145 = vpack.c.b16 %v7742, %v7729
  %v8146 = vpack.c.b16 %v7743, %v7730
  %v8147 = vpack.c.b16 %v7744, %v7731
  %v8148 = vpack.c.b16 %v7745, %v7732
  %v8149 = vpack.c.b16 %v7746, %v7733
  %v8150 = vpack.c.b16 %v7747, %v7734
  %v8151 = vpack.c.b16 %v7748, %v7735
  %v8152 = vpack.c.b16 %v7762, %v7749
  %v8153 = vpack.c.b16 %v7763, %v7750
  %v8154 = vpack.c.b16 %v7764, %v7751
  %v8155 = vpack.c.b16 %v7765, %v7752
  %v8156 = vpack.c.b16 %v7766, %v7753
  %v8157 = vpack.c.b16 %v7767, %v7754
  %v8158 = vpack.c.b16 %v7768, %v7755
  %v8159 = vpack.c.b16 %v7769, %v7756
  %v8160 = vpack.c.b16 %v7770, %v7757
  %v8161 = vpack.c.b16 %v7771, %v7758
  %v8162 = vpack.c.b16 %v7772, %v7759
  %v8163 = vpack.c.b16 %v7773, %v7760
  %v8164 = vpack.c.b16 %v7774, %v7761
  %v8165 = vpack.c.b16 %v7788, %v7775
  %v8166 = vpack.c.b16 %v7789, %v7776
  %v8167 = vpack.c.b16 %v7790, %v7777
  %v8168 = vpack.c.b16 %v7791, %v7778
  %v8169 = vpack.c.b16 %v7792, %v7779
  %v8170 = vpack.c.b16 %v7793, %v7780
  %v8171 = vpack.c.b16 %v7794, %v7781
  %v8172 = vpack.c.b16 %v7795, %v7782
  %v8173 = vpack.c.b16 %v7796, %v7783
  %v8174 = vpack.c.b16 %v7797, %v7784
  %v8175 = vpack.c.b16 %v7798, %v7785
  %v8176 = vpack.c.b16 %v7799, %v7786
  %v8177 = vpack.c.b16 %v7800, %v7787
  %v8178 = vpack.c.b16 %v7814, %v7801
  %v8179 = vpack.c.b16 %v7815, %v7802
  %v8180 = vpack.c.b16 %v7816, %v7803
  %v8181 = vpack.c.b16 %v7817, %v7804
  %v8182 = vpack.c.b16 %v7818, %v7805
  %v8183 = vpack.c.b16 %v7819, %v7806
  %v8184 = vpack.c.b16 %v7820, %v7807
  %v8185 = vpack.c.b16 %v7821, %v7808
  %v8186 = vpack.c.b16 %v7822, %v7809
  %v8187 = vpack.c.b16 %v7823, %v7810
  %v8188 = vpack.c.b16 %v7824, %v7811
  %v8189 = vpack.c.b16 %v7825, %v7812
  %v8190 = vpack.c.b16 %v7826, %v7813
  %v8191 = vpack.c.b16 %v7840, %v7827
  %v8192 = vpack.c.b16 %v7841, %v7828
  %v8193 = vpack.c.b16 %v7842, %v7829
  %v8194 = vpack.c.b16 %v7843, %v7830
  %v8195 = vpack.c.b16 %v7844, %v7831
  %v8196 = vpack.c.b16 %v7845, %v7832
  %v8197 = vpack.c.b16 %v7846, %v7833
  %v8198 = vpack.c.b16 %v7847, %v7834
  %v8199 = vpack.c.b16 %v7848, %v7835
  %v8200 = vpack.c.b16 %v7849, %v7836
  %v8201 = vpack.c.b16 %v7850, %v7837
  %v8202 = vpack.c.b16 %v7851, %v7838
  %v8203 = vpack.c.b16 %v7852, %v7839
  %v8204 = vpack.c.b16 %v7866, %v7853
  %v8205 = vpack.c.b16 %v7867, %v7854
  %v8206 = vpack.c.b16 %v7868, %v7855
  %v8207 = vpack.c.b16 %v7869, %v7856
  %v8208 = vpack.c.b16 %v7870, %v7857
  %v8209 = vpack.c.b16 %v7871, %v7858
  %v8210 = vpack.c.b16 %v7872, %v7859
  %v8211 = vpack.c.b16 %v7873, %v7860
  %v8212 = vpack.c.b16 %v7874, %v7861
  %v8213 = vpack.c.b16 %v7875, %v7862
  %v8214 = vpack.c.b16 %v7876, %v7863
  %v8215 = vpack.c.b16 %v7877, %v7864
  %v8216 = vpack.c.b16 %v7878, %v7865
  %v8217 = vpack.c.b16 %v7892, %v7879
  %v8218 = vpack.c.b16 %v7893, %v7880
  %v8219 = vpack.c.b16 %v7894, %v7881
  %v8220 = vpack.c.b16 %v7895, %v7882
  %v8221 = vpack.c.b16 %v7896, %v7883
  %v8222 = vpack.c.b16 %v7897, %v7884
  %v8223 = vpack.c.b16 %v7898, %v7885
  %v8224 = vpack.c.b16 %v7899, %v7886
  %v8225 = vpack.c.b16 %v7900, %v7887
  %v8226 = vpack.c.b16 %v7901, %v7888
  %v8227 = vpack.c.b16 %v7902, %v7889
  %v8228 = vpack.c.b16 %v7903, %v7890
  %v8229 = vpack.c.b16 %v7904, %v7891
  %v8230 = vpack.c.b16 %v7918, %v7905
  %v8231 = vpack.c.b16 %v7919, %v7906
  %v8232 = vpack.c.b16 %v7920, %v7907
  %v8233 = vpack.c.b16 %v7921, %v7908
  %v8234 = vpack.c.b16 %v7922, %v7909
  %v8235 = vpack.c.b16 %v7923, %v7910
  %v8236 = vpack.c.b16 %v7924, %v7911
  %v8237 = vpack.c.b16 %v7925, %v7912
  %v8238 = vpack.c.b16 %v7926, %v7913
  %v8239 = vpack.c.b16 %v7927, %v7914
  %v8240 = vpack.c.b16 %v7928, %v7915
  %v8241 = vpack.c.b16 %v7929, %v7916
  %v8242 = vpack.c.b16 %v7930, %v7917
  %v8243 = vpack.c.b16 %v7944, %v7931
  %v8244 = vpack.c.b16 %v7945, %v7932
  %v8245 = vpack.c.b16 %v7946, %v7933
  %v8246 = vpack.c.b16 %v7947, %v7934
  %v8247 = vpack.c.b16 %v7948, %v7935
  %v8248 = vpack.c.b16 %v7949, %v7936
  %v8249 = vpack.c.b16 %v7950, %v7937
  %v8250 = vpack.c.b16 %v7951, %v7938
  %v8251 = vpack.c.b16 %v7952, %v7939
  %v8252 = vpack.c.b16 %v7953, %v7940
  %v8253 = vpack.c.b16 %v7954, %v7941
  %v8254 = vpack.c.b16 %v7955, %v7942
  %v8255 = vpack.c.b16 %v7956, %v7943
  %v8256 = vpack.c.b16 %v7970, %v7957
  %v8257 = vpack.c.b16 %v7971, %v7958
  %v8258 = vpack.c.b16 %v7972, %v7959
  %v8259 = vpack.c.b16 %v7973, %v7960
  %v8260 = vpack.c.b16 %v7974, %v7961
  %v8261 = vpack.c.b16 %v7975, %v7962
  %v8262 = vpack.c.b16 %v7976, %v7963
  %v8263 = vpack.c.b16 %v7977, %v7964
  %v8264 = vpack.c.b16 %v7978, %v7965
  %v8265 = vpack.c.b16 %v7979, %v7966
  %v8266 = vpack.c.b16 %v7980, %v7967
  %v8267 = vpack.c.b16 %v7981, %v7968
  %v8268 = vpack.c.b16 %v7982, %v7969
  %v8269 = vpack.c.b16 %v7996, %v7983
  %v8270 = vpack.c.b16 %v7997, %v7984
  %v8271 = vpack.c.b16 %v7998, %v7985
  %v8272 = vpack.c.b16 %v7999, %v7986
  %v8273 = vpack.c.b16 %v8000, %v7987
  %v8274 = vpack.c.b16 %v8001, %v7988
  %v8275 = vpack.c.b16 %v8002, %v7989
  %v8276 = vpack.c.b16 %v8003, %v7990
  %v8277 = vpack.c.b16 %v8004, %v7991
  %v8278 = vpack.c.b16 %v8005, %v7992
  %v8279 = vpack.c.b16 %v8006, %v7993
  %v8280 = vpack.c.b16 %v8007, %v7994
  %v8281 = vpack.c.b16 %v8008, %v7995
  %v8282 = vpack.c.b16 %v8022, %v8009
  %v8283 = vpack.c.b16 %v8023, %v8010
  %v8284 = vpack.c.b16 %v8024, %v8011
  %v8285 = vpack.c.b16 %v8025, %v8012
  %v8286 = vpack.c.b16 %v8026, %v8013
  %v8287 = vpack.c.b16 %v8027, %v8014
  %v8288 = vpack.c.b16 %v8028, %v8015
  %v8289 = vpack.c.b16 %v8029, %v8016
  %v8290 = vpack.c.b16 %v8030, %v8017
  %v8291 = vpack.c.b16 %v8031, %v8018
  %v8292 = vpack.c.b16 %v8032, %v8019
  %v8293 = vpack.c.b16 %v8033, %v8020
  %v8294 = vpack.c.b16 %v8034, %v8021
  %v8295 = vpack.c.b16 %v8048, %v8035
  %v8296 = vpack.c.b16 %v8049, %v8036
  %v8297 = vpack.c.b16 %v8050, %v8037
  %v8298 = vpack.c.b16 %v8051, %v8038
  %v8299 = vpack.c.b16 %v8052, %v8039
  %v8300 = vpack.c.b16 %v8053, %v8040
  %v8301 = vpack.c.b16 %v8054, %v8041
  %v8302 = vpack.c.b16 %v8055, %v8042
  %v8303 = vpack.c.b16 %v8056, %v8043
  %v8304 = vpack.c.b16 %v8057, %v8044
  %v8305 = vpack.c.b16 %v8058, %v8045
  %v8306 = vpack.c.b16 %v8059, %v8046
  %v8307 = vpack.c.b16 %v8060, %v8047
  %v8308 = vpack.c.b16 %v8074, %v8061
  %v8309 = vpack.c.b16 %v8075, %v8062
  %v8310 = vpack.c.b16 %v8076, %v8063
  %v8311 = vpack.c.b16 %v8077, %v8064
  %v8312 = vpack.c.b16 %v8078, %v8065
  %v8313 = vpack.c.b16 %v8079, %v8066
  %v8314 = vpack.c.b16 %v8080, %v8067
  %v8315 = vpack.c.b16 %v8081, %v8068
  %v8316 = vpack.c.b16 %v8082, %v8069
  %v8317 = vpack.c.b16 %v8083, %v8070
  %v8318 = vpack.c.b16 %v8084, %v8071
  %v8319 = vpack.c.b16 %v8085, %v8072
  %v8320 = vpack.c.b16 %v8086, %v8073
  %v8321 = vpack.c.b16 %v8100, %v8087
  %v8322 = vpack.c.b16 %v8101, %v8088
  %v8323 = vpack.c.b16 %v8102, %v8089
  %v8324 = vpack.c.b16 %v8103, %v8090
  %v8325 = vpack.c.b16 %v8104, %v8091
  %v8326 = vpack.c.b16 %v8105, %v8092
  %v8327 = vpack.c.b16 %v8106, %v8093
  %v8328 = vpack.c.b16 %v8107, %v8094
  %v8329 = vpack.c.b16 %v8108, %v8095
  %v8330 = vpack.c.b16 %v8109, %v8096
  %v8331 = vpack.c.b16 %v8110, %v8097
  %v8332 = vpack.c.b16 %v8111, %v8098
  %v8333 = vpack.c.b16 %v8112, %v8099
  %vm8538 = vcmask 785408
  %v8540 = vsel %vm8538, %v8125, 0
  %v8543 = vsel %vm8538, %v8138, 0
  %v8546 = vsel %vm8538, %v8151, 0
  %v8549 = vsel %vm8538, %v8164, 0
  %v8552 = vsel %vm8538, %v8177, 0
  %v8555 = vsel %vm8538, %v8190, 0
  %v8558 = vsel %vm8538, %v8203, 0
  %v8561 = vsel %vm8538, %v8216, 0
  %v8564 = vsel %vm8538, %v8229, 0
  %v8567 = vsel %vm8538, %v8242, 0
  %v8570 = vsel %vm8538, %v8255, 0
  %v8573 = vsel %vm8538, %v8268, 0
  %v8576 = vsel %vm8538, %v8281, 0
  %v8579 = vsel %vm8538, %v8294, 0
  %v8582 = vsel %vm8538, %v8307, 0
  %v8585 = vsel %vm8538, %v8320, 0
  %v8588 = vsel %vm8538, %v8333, 0
  %8590 = vmatpush.bf16.msra.mxu0 %v7100
  %8591 = vmatpush.bf16.msra.mxu0 %v7099
  %8592 = vmatpush.bf16.msra.mxu0 %v7098
  %8593 = vmatpush.bf16.msra.mxu0 %v7097
  %8594 = vmatpush.bf16.msra.mxu0 %v7096
  %8595 = vmatpush.bf16.msra.mxu0 %v7095
  %8596 = vmatpush.bf16.msra.mxu0 %v7094
  %8597 = vmatpush.bf16.msra.mxu0 %v7093
  %8598 = vmatmul.bf16.gmra.mxu0 %v8113
  %v8599 = vpop.f32.mrf.mxu0
  %v8600 = vadd.f32 0.0, %v8599
  %v8601 = vpop.f32.mrf.mxu0
  %v8602 = vadd.f32 0.0, %v8601
  %8603 = vmatmul.bf16.gmra.mxu0 %v8126
  %v8604 = vpop.f32.mrf.mxu0
  %v8605 = vadd.f32 0.0, %v8604
  %v8606 = vpop.f32.mrf.mxu0
  %v8607 = vadd.f32 0.0, %v8606
  %8608 = vmatmul.bf16.gmra.mxu0 %v8139
  %v8609 = vpop.f32.mrf.mxu0
  %v8610 = vadd.f32 0.0, %v8609
  %v8611 = vpop.f32.mrf.mxu0
  %v8612 = vadd.f32 0.0, %v8611
  %8613 = vmatmul.bf16.gmra.mxu0 %v8152
  %v8614 = vpop.f32.mrf.mxu0
  %v8615 = vadd.f32 0.0, %v8614
  %v8616 = vpop.f32.mrf.mxu0
  %v8617 = vadd.f32 0.0, %v8616
  %8618 = vmatmul.bf16.gmra.mxu0 %v8165
  %v8619 = vpop.f32.mrf.mxu0
  %v8620 = vadd.f32 0.0, %v8619
  %v8621 = vpop.f32.mrf.mxu0
  %v8622 = vadd.f32 0.0, %v8621
  %8623 = vmatmul.bf16.gmra.mxu0 %v8178
  %v8624 = vpop.f32.mrf.mxu0
  %v8625 = vadd.f32 0.0, %v8624
  %v8626 = vpop.f32.mrf.mxu0
  %v8627 = vadd.f32 0.0, %v8626
  %8628 = vmatmul.bf16.gmra.mxu0 %v8191
  %v8629 = vpop.f32.mrf.mxu0
  %v8630 = vadd.f32 0.0, %v8629
  %v8631 = vpop.f32.mrf.mxu0
  %v8632 = vadd.f32 0.0, %v8631
  %8633 = vmatmul.bf16.gmra.mxu0 %v8204
  %v8634 = vpop.f32.mrf.mxu0
  %v8635 = vadd.f32 0.0, %v8634
  %v8636 = vpop.f32.mrf.mxu0
  %v8637 = vadd.f32 0.0, %v8636
  %8638 = vmatmul.bf16.gmra.mxu0 %v8217
  %v8639 = vpop.f32.mrf.mxu0
  %v8640 = vadd.f32 0.0, %v8639
  %v8641 = vpop.f32.mrf.mxu0
  %v8642 = vadd.f32 0.0, %v8641
  %8643 = vmatmul.bf16.gmra.mxu0 %v8230
  %v8644 = vpop.f32.mrf.mxu0
  %v8645 = vadd.f32 0.0, %v8644
  %v8646 = vpop.f32.mrf.mxu0
  %v8647 = vadd.f32 0.0, %v8646
  %8648 = vmatmul.bf16.gmra.mxu0 %v8243
  %v8649 = vpop.f32.mrf.mxu0
  %v8650 = vadd.f32 0.0, %v8649
  %v8651 = vpop.f32.mrf.mxu0
  %v8652 = vadd.f32 0.0, %v8651
  %8653 = vmatmul.bf16.gmra.mxu0 %v8256
  %v8654 = vpop.f32.mrf.mxu0
  %v8655 = vadd.f32 0.0, %v8654
  %v8656 = vpop.f32.mrf.mxu0
  %v8657 = vadd.f32 0.0, %v8656
  %8658 = vmatmul.bf16.gmra.mxu0 %v8269
  %v8659 = vpop.f32.mrf.mxu0
  %v8660 = vadd.f32 0.0, %v8659
  %v8661 = vpop.f32.mrf.mxu0
  %v8662 = vadd.f32 0.0, %v8661
  %8663 = vmatmul.bf16.gmra.mxu0 %v8282
  %v8664 = vpop.f32.mrf.mxu0
  %v8665 = vadd.f32 0.0, %v8664
  %v8666 = vpop.f32.mrf.mxu0
  %v8667 = vadd.f32 0.0, %v8666
  %8668 = vmatmul.bf16.gmra.mxu0 %v8295
  %v8669 = vpop.f32.mrf.mxu0
  %v8670 = vadd.f32 0.0, %v8669
  %v8671 = vpop.f32.mrf.mxu0
  %v8672 = vadd.f32 0.0, %v8671
  %8673 = vmatmul.bf16.gmra.mxu0 %v8308
  %v8674 = vpop.f32.mrf.mxu0
  %v8675 = vadd.f32 0.0, %v8674
  %v8676 = vpop.f32.mrf.mxu0
  %v8677 = vadd.f32 0.0, %v8676
  %8678 = vmatmul.bf16.gmra.mxu0 %v8321
  %v8679 = vpop.f32.mrf.mxu0
  %v8680 = vadd.f32 0.0, %v8679
  %v8681 = vpop.f32.mrf.mxu0
  %v8682 = vadd.f32 0.0, %v8681
  %8683 = vdwg.mxu0
  %8684 = vmatpush.bf16.msra.mxu0 %v7108
  %8685 = vmatpush.bf16.msra.mxu0 %v7107
  %8686 = vmatpush.bf16.msra.mxu0 %v7106
  %8687 = vmatpush.bf16.msra.mxu0 %v7105
  %8688 = vmatpush.bf16.msra.mxu0 %v7104
  %8689 = vmatpush.bf16.msra.mxu0 %v7103
  %8690 = vmatpush.bf16.msra.mxu0 %v7102
  %8691 = vmatpush.bf16.msra.mxu0 %v7101
  %8692 = vmatmul.bf16.gmra.mxu0 %v8114
  %v8693 = vpop.f32.mrf.mxu0
  %v8694 = vadd.f32 %v8600, %v8693
  %v8695 = vpop.f32.mrf.mxu0
  %v8696 = vadd.f32 %v8602, %v8695
  %8697 = vmatmul.bf16.gmra.mxu0 %v8127
  %v8698 = vpop.f32.mrf.mxu0
  %v8699 = vadd.f32 %v8605, %v8698
  %v8700 = vpop.f32.mrf.mxu0
  %v8701 = vadd.f32 %v8607, %v8700
  %8702 = vmatmul.bf16.gmra.mxu0 %v8140
  %v8703 = vpop.f32.mrf.mxu0
  %v8704 = vadd.f32 %v8610, %v8703
  %v8705 = vpop.f32.mrf.mxu0
  %v8706 = vadd.f32 %v8612, %v8705
  %8707 = vmatmul.bf16.gmra.mxu0 %v8153
  %v8708 = vpop.f32.mrf.mxu0
  %v8709 = vadd.f32 %v8615, %v8708
  %v8710 = vpop.f32.mrf.mxu0
  %v8711 = vadd.f32 %v8617, %v8710
  %8712 = vmatmul.bf16.gmra.mxu0 %v8166
  %v8713 = vpop.f32.mrf.mxu0
  %v8714 = vadd.f32 %v8620, %v8713
  %v8715 = vpop.f32.mrf.mxu0
  %v8716 = vadd.f32 %v8622, %v8715
  %8717 = vmatmul.bf16.gmra.mxu0 %v8179
  %v8718 = vpop.f32.mrf.mxu0
  %v8719 = vadd.f32 %v8625, %v8718
  %v8720 = vpop.f32.mrf.mxu0
  %v8721 = vadd.f32 %v8627, %v8720
  %8722 = vmatmul.bf16.gmra.mxu0 %v8192
  %v8723 = vpop.f32.mrf.mxu0
  %v8724 = vadd.f32 %v8630, %v8723
  %v8725 = vpop.f32.mrf.mxu0
  %v8726 = vadd.f32 %v8632, %v8725
  %8727 = vmatmul.bf16.gmra.mxu0 %v8205
  %v8728 = vpop.f32.mrf.mxu0
  %v8729 = vadd.f32 %v8635, %v8728
  %v8730 = vpop.f32.mrf.mxu0
  %v8731 = vadd.f32 %v8637, %v8730
  %8732 = vmatmul.bf16.gmra.mxu0 %v8218
  %v8733 = vpop.f32.mrf.mxu0
  %v8734 = vadd.f32 %v8640, %v8733
  %v8735 = vpop.f32.mrf.mxu0
  %v8736 = vadd.f32 %v8642, %v8735
  %8737 = vmatmul.bf16.gmra.mxu0 %v8231
  %v8738 = vpop.f32.mrf.mxu0
  %v8739 = vadd.f32 %v8645, %v8738
  %v8740 = vpop.f32.mrf.mxu0
  %v8741 = vadd.f32 %v8647, %v8740
  %8742 = vmatmul.bf16.gmra.mxu0 %v8244
  %v8743 = vpop.f32.mrf.mxu0
  %v8744 = vadd.f32 %v8650, %v8743
  %v8745 = vpop.f32.mrf.mxu0
  %v8746 = vadd.f32 %v8652, %v8745
  %8747 = vmatmul.bf16.gmra.mxu0 %v8257
  %v8748 = vpop.f32.mrf.mxu0
  %v8749 = vadd.f32 %v8655, %v8748
  %v8750 = vpop.f32.mrf.mxu0
  %v8751 = vadd.f32 %v8657, %v8750
  %8752 = vmatmul.bf16.gmra.mxu0 %v8270
  %v8753 = vpop.f32.mrf.mxu0
  %v8754 = vadd.f32 %v8660, %v8753
  %v8755 = vpop.f32.mrf.mxu0
  %v8756 = vadd.f32 %v8662, %v8755
  %8757 = vmatmul.bf16.gmra.mxu0 %v8283
  %v8758 = vpop.f32.mrf.mxu0
  %v8759 = vadd.f32 %v8665, %v8758
  %v8760 = vpop.f32.mrf.mxu0
  %v8761 = vadd.f32 %v8667, %v8760
  %8762 = vmatmul.bf16.gmra.mxu0 %v8296
  %v8763 = vpop.f32.mrf.mxu0
  %v8764 = vadd.f32 %v8670, %v8763
  %v8765 = vpop.f32.mrf.mxu0
  %v8766 = vadd.f32 %v8672, %v8765
  %8767 = vmatmul.bf16.gmra.mxu0 %v8309
  %v8768 = vpop.f32.mrf.mxu0
  %v8769 = vadd.f32 %v8675, %v8768
  %v8770 = vpop.f32.mrf.mxu0
  %v8771 = vadd.f32 %v8677, %v8770
  %8772 = vmatmul.bf16.gmra.mxu0 %v8322
  %v8773 = vpop.f32.mrf.mxu0
  %v8774 = vadd.f32 %v8680, %v8773
  %v8775 = vpop.f32.mrf.mxu0
  %v8776 = vadd.f32 %v8682, %v8775
  %8777 = vdwg.mxu0
  %8778 = vmatpush.bf16.msra.mxu0 %v7116
  %8779 = vmatpush.bf16.msra.mxu0 %v7115
  %8780 = vmatpush.bf16.msra.mxu0 %v7114
  %8781 = vmatpush.bf16.msra.mxu0 %v7113
  %8782 = vmatpush.bf16.msra.mxu0 %v7112
  %8783 = vmatpush.bf16.msra.mxu0 %v7111
  %8784 = vmatpush.bf16.msra.mxu0 %v7110
  %8785 = vmatpush.bf16.msra.mxu0 %v7109
  %8786 = vmatmul.bf16.gmra.mxu0 %v8115
  %v8787 = vpop.f32.mrf.mxu0
  %v8788 = vadd.f32 %v8694, %v8787
  %v8789 = vpop.f32.mrf.mxu0
  %v8790 = vadd.f32 %v8696, %v8789
  %8791 = vmatmul.bf16.gmra.mxu0 %v8128
  %v8792 = vpop.f32.mrf.mxu0
  %v8793 = vadd.f32 %v8699, %v8792
  %v8794 = vpop.f32.mrf.mxu0
  %v8795 = vadd.f32 %v8701, %v8794
  %8796 = vmatmul.bf16.gmra.mxu0 %v8141
  %v8797 = vpop.f32.mrf.mxu0
  %v8798 = vadd.f32 %v8704, %v8797
  %v8799 = vpop.f32.mrf.mxu0
  %v8800 = vadd.f32 %v8706, %v8799
  %8801 = vmatmul.bf16.gmra.mxu0 %v8154
  %v8802 = vpop.f32.mrf.mxu0
  %v8803 = vadd.f32 %v8709, %v8802
  %v8804 = vpop.f32.mrf.mxu0
  %v8805 = vadd.f32 %v8711, %v8804
  %8806 = vmatmul.bf16.gmra.mxu0 %v8167
  %v8807 = vpop.f32.mrf.mxu0
  %v8808 = vadd.f32 %v8714, %v8807
  %v8809 = vpop.f32.mrf.mxu0
  %v8810 = vadd.f32 %v8716, %v8809
  %8811 = vmatmul.bf16.gmra.mxu0 %v8180
  %v8812 = vpop.f32.mrf.mxu0
  %v8813 = vadd.f32 %v8719, %v8812
  %v8814 = vpop.f32.mrf.mxu0
  %v8815 = vadd.f32 %v8721, %v8814
  %8816 = vmatmul.bf16.gmra.mxu0 %v8193
  %v8817 = vpop.f32.mrf.mxu0
  %v8818 = vadd.f32 %v8724, %v8817
  %v8819 = vpop.f32.mrf.mxu0
  %v8820 = vadd.f32 %v8726, %v8819
  %8821 = vmatmul.bf16.gmra.mxu0 %v8206
  %v8822 = vpop.f32.mrf.mxu0
  %v8823 = vadd.f32 %v8729, %v8822
  %v8824 = vpop.f32.mrf.mxu0
  %v8825 = vadd.f32 %v8731, %v8824
  %8826 = vmatmul.bf16.gmra.mxu0 %v8219
  %v8827 = vpop.f32.mrf.mxu0
  %v8828 = vadd.f32 %v8734, %v8827
  %v8829 = vpop.f32.mrf.mxu0
  %v8830 = vadd.f32 %v8736, %v8829
  %8831 = vmatmul.bf16.gmra.mxu0 %v8232
  %v8832 = vpop.f32.mrf.mxu0
  %v8833 = vadd.f32 %v8739, %v8832
  %v8834 = vpop.f32.mrf.mxu0
  %v8835 = vadd.f32 %v8741, %v8834
  %8836 = vmatmul.bf16.gmra.mxu0 %v8245
  %v8837 = vpop.f32.mrf.mxu0
  %v8838 = vadd.f32 %v8744, %v8837
  %v8839 = vpop.f32.mrf.mxu0
  %v8840 = vadd.f32 %v8746, %v8839
  %8841 = vmatmul.bf16.gmra.mxu0 %v8258
  %v8842 = vpop.f32.mrf.mxu0
  %v8843 = vadd.f32 %v8749, %v8842
  %v8844 = vpop.f32.mrf.mxu0
  %v8845 = vadd.f32 %v8751, %v8844
  %8846 = vmatmul.bf16.gmra.mxu0 %v8271
  %v8847 = vpop.f32.mrf.mxu0
  %v8848 = vadd.f32 %v8754, %v8847
  %v8849 = vpop.f32.mrf.mxu0
  %v8850 = vadd.f32 %v8756, %v8849
  %8851 = vmatmul.bf16.gmra.mxu0 %v8284
  %v8852 = vpop.f32.mrf.mxu0
  %v8853 = vadd.f32 %v8759, %v8852
  %v8854 = vpop.f32.mrf.mxu0
  %v8855 = vadd.f32 %v8761, %v8854
  %8856 = vmatmul.bf16.gmra.mxu0 %v8297
  %v8857 = vpop.f32.mrf.mxu0
  %v8858 = vadd.f32 %v8764, %v8857
  %v8859 = vpop.f32.mrf.mxu0
  %v8860 = vadd.f32 %v8766, %v8859
  %8861 = vmatmul.bf16.gmra.mxu0 %v8310
  %v8862 = vpop.f32.mrf.mxu0
  %v8863 = vadd.f32 %v8769, %v8862
  %v8864 = vpop.f32.mrf.mxu0
  %v8865 = vadd.f32 %v8771, %v8864
  %8866 = vmatmul.bf16.gmra.mxu0 %v8323
  %v8867 = vpop.f32.mrf.mxu0
  %v8868 = vadd.f32 %v8774, %v8867
  %v8869 = vpop.f32.mrf.mxu0
  %v8870 = vadd.f32 %v8776, %v8869
  %8871 = vdwg.mxu0
  %8872 = vmatpush.bf16.msra.mxu0 %v7124
  %8873 = vmatpush.bf16.msra.mxu0 %v7123
  %8874 = vmatpush.bf16.msra.mxu0 %v7122
  %8875 = vmatpush.bf16.msra.mxu0 %v7121
  %8876 = vmatpush.bf16.msra.mxu0 %v7120
  %8877 = vmatpush.bf16.msra.mxu0 %v7119
  %8878 = vmatpush.bf16.msra.mxu0 %v7118
  %8879 = vmatpush.bf16.msra.mxu0 %v7117
  %8880 = vmatmul.bf16.gmra.mxu0 %v8116
  %v8881 = vpop.f32.mrf.mxu0
  %v8882 = vadd.f32 %v8788, %v8881
  %v8883 = vpop.f32.mrf.mxu0
  %v8884 = vadd.f32 %v8790, %v8883
  %8885 = vmatmul.bf16.gmra.mxu0 %v8129
  %v8886 = vpop.f32.mrf.mxu0
  %v8887 = vadd.f32 %v8793, %v8886
  %v8888 = vpop.f32.mrf.mxu0
  %v8889 = vadd.f32 %v8795, %v8888
  %8890 = vmatmul.bf16.gmra.mxu0 %v8142
  %v8891 = vpop.f32.mrf.mxu0
  %v8892 = vadd.f32 %v8798, %v8891
  %v8893 = vpop.f32.mrf.mxu0
  %v8894 = vadd.f32 %v8800, %v8893
  %8895 = vmatmul.bf16.gmra.mxu0 %v8155
  %v8896 = vpop.f32.mrf.mxu0
  %v8897 = vadd.f32 %v8803, %v8896
  %v8898 = vpop.f32.mrf.mxu0
  %v8899 = vadd.f32 %v8805, %v8898
  %8900 = vmatmul.bf16.gmra.mxu0 %v8168
  %v8901 = vpop.f32.mrf.mxu0
  %v8902 = vadd.f32 %v8808, %v8901
  %v8903 = vpop.f32.mrf.mxu0
  %v8904 = vadd.f32 %v8810, %v8903
  %8905 = vmatmul.bf16.gmra.mxu0 %v8181
  %v8906 = vpop.f32.mrf.mxu0
  %v8907 = vadd.f32 %v8813, %v8906
  %v8908 = vpop.f32.mrf.mxu0
  %v8909 = vadd.f32 %v8815, %v8908
  %8910 = vmatmul.bf16.gmra.mxu0 %v8194
  %v8911 = vpop.f32.mrf.mxu0
  %v8912 = vadd.f32 %v8818, %v8911
  %v8913 = vpop.f32.mrf.mxu0
  %v8914 = vadd.f32 %v8820, %v8913
  %8915 = vmatmul.bf16.gmra.mxu0 %v8207
  %v8916 = vpop.f32.mrf.mxu0
  %v8917 = vadd.f32 %v8823, %v8916
  %v8918 = vpop.f32.mrf.mxu0
  %v8919 = vadd.f32 %v8825, %v8918
  %8920 = vmatmul.bf16.gmra.mxu0 %v8220
  %v8921 = vpop.f32.mrf.mxu0
  %v8922 = vadd.f32 %v8828, %v8921
  %v8923 = vpop.f32.mrf.mxu0
  %v8924 = vadd.f32 %v8830, %v8923
  %8925 = vmatmul.bf16.gmra.mxu0 %v8233
  %v8926 = vpop.f32.mrf.mxu0
  %v8927 = vadd.f32 %v8833, %v8926
  %v8928 = vpop.f32.mrf.mxu0
  %v8929 = vadd.f32 %v8835, %v8928
  %8930 = vmatmul.bf16.gmra.mxu0 %v8246
  %v8931 = vpop.f32.mrf.mxu0
  %v8932 = vadd.f32 %v8838, %v8931
  %v8933 = vpop.f32.mrf.mxu0
  %v8934 = vadd.f32 %v8840, %v8933
  %8935 = vmatmul.bf16.gmra.mxu0 %v8259
  %v8936 = vpop.f32.mrf.mxu0
  %v8937 = vadd.f32 %v8843, %v8936
  %v8938 = vpop.f32.mrf.mxu0
  %v8939 = vadd.f32 %v8845, %v8938
  %8940 = vmatmul.bf16.gmra.mxu0 %v8272
  %v8941 = vpop.f32.mrf.mxu0
  %v8942 = vadd.f32 %v8848, %v8941
  %v8943 = vpop.f32.mrf.mxu0
  %v8944 = vadd.f32 %v8850, %v8943
  %8945 = vmatmul.bf16.gmra.mxu0 %v8285
  %v8946 = vpop.f32.mrf.mxu0
  %v8947 = vadd.f32 %v8853, %v8946
  %v8948 = vpop.f32.mrf.mxu0
  %v8949 = vadd.f32 %v8855, %v8948
  %8950 = vmatmul.bf16.gmra.mxu0 %v8298
  %v8951 = vpop.f32.mrf.mxu0
  %v8952 = vadd.f32 %v8858, %v8951
  %v8953 = vpop.f32.mrf.mxu0
  %v8954 = vadd.f32 %v8860, %v8953
  %8955 = vmatmul.bf16.gmra.mxu0 %v8311
  %v8956 = vpop.f32.mrf.mxu0
  %v8957 = vadd.f32 %v8863, %v8956
  %v8958 = vpop.f32.mrf.mxu0
  %v8959 = vadd.f32 %v8865, %v8958
  %8960 = vmatmul.bf16.gmra.mxu0 %v8324
  %v8961 = vpop.f32.mrf.mxu0
  %v8962 = vadd.f32 %v8868, %v8961
  %v8963 = vpop.f32.mrf.mxu0
  %v8964 = vadd.f32 %v8870, %v8963
  %8965 = vdwg.mxu0
  %8966 = vmatpush.bf16.msra.mxu0 %v7132
  %8967 = vmatpush.bf16.msra.mxu0 %v7131
  %8968 = vmatpush.bf16.msra.mxu0 %v7130
  %8969 = vmatpush.bf16.msra.mxu0 %v7129
  %8970 = vmatpush.bf16.msra.mxu0 %v7128
  %8971 = vmatpush.bf16.msra.mxu0 %v7127
  %8972 = vmatpush.bf16.msra.mxu0 %v7126
  %8973 = vmatpush.bf16.msra.mxu0 %v7125
  %8974 = vmatmul.bf16.gmra.mxu0 %v8117
  %v8975 = vpop.f32.mrf.mxu0
  %v8976 = vadd.f32 %v8882, %v8975
  %v8977 = vpop.f32.mrf.mxu0
  %v8978 = vadd.f32 %v8884, %v8977
  %8979 = vmatmul.bf16.gmra.mxu0 %v8130
  %v8980 = vpop.f32.mrf.mxu0
  %v8981 = vadd.f32 %v8887, %v8980
  %v8982 = vpop.f32.mrf.mxu0
  %v8983 = vadd.f32 %v8889, %v8982
  %8984 = vmatmul.bf16.gmra.mxu0 %v8143
  %v8985 = vpop.f32.mrf.mxu0
  %v8986 = vadd.f32 %v8892, %v8985
  %v8987 = vpop.f32.mrf.mxu0
  %v8988 = vadd.f32 %v8894, %v8987
  %8989 = vmatmul.bf16.gmra.mxu0 %v8156
  %v8990 = vpop.f32.mrf.mxu0
  %v8991 = vadd.f32 %v8897, %v8990
  %v8992 = vpop.f32.mrf.mxu0
  %v8993 = vadd.f32 %v8899, %v8992
  %8994 = vmatmul.bf16.gmra.mxu0 %v8169
  %v8995 = vpop.f32.mrf.mxu0
  %v8996 = vadd.f32 %v8902, %v8995
  %v8997 = vpop.f32.mrf.mxu0
  %v8998 = vadd.f32 %v8904, %v8997
  %8999 = vmatmul.bf16.gmra.mxu0 %v8182
  %v9000 = vpop.f32.mrf.mxu0
  %v9001 = vadd.f32 %v8907, %v9000
  %v9002 = vpop.f32.mrf.mxu0
  %v9003 = vadd.f32 %v8909, %v9002
  %9004 = vmatmul.bf16.gmra.mxu0 %v8195
  %v9005 = vpop.f32.mrf.mxu0
  %v9006 = vadd.f32 %v8912, %v9005
  %v9007 = vpop.f32.mrf.mxu0
  %v9008 = vadd.f32 %v8914, %v9007
  %9009 = vmatmul.bf16.gmra.mxu0 %v8208
  %v9010 = vpop.f32.mrf.mxu0
  %v9011 = vadd.f32 %v8917, %v9010
  %v9012 = vpop.f32.mrf.mxu0
  %v9013 = vadd.f32 %v8919, %v9012
  %9014 = vmatmul.bf16.gmra.mxu0 %v8221
  %v9015 = vpop.f32.mrf.mxu0
  %v9016 = vadd.f32 %v8922, %v9015
  %v9017 = vpop.f32.mrf.mxu0
  %v9018 = vadd.f32 %v8924, %v9017
  %9019 = vmatmul.bf16.gmra.mxu0 %v8234
  %v9020 = vpop.f32.mrf.mxu0
  %v9021 = vadd.f32 %v8927, %v9020
  %v9022 = vpop.f32.mrf.mxu0
  %v9023 = vadd.f32 %v8929, %v9022
  %9024 = vmatmul.bf16.gmra.mxu0 %v8247
  %v9025 = vpop.f32.mrf.mxu0
  %v9026 = vadd.f32 %v8932, %v9025
  %v9027 = vpop.f32.mrf.mxu0
  %v9028 = vadd.f32 %v8934, %v9027
  %9029 = vmatmul.bf16.gmra.mxu0 %v8260
  %v9030 = vpop.f32.mrf.mxu0
  %v9031 = vadd.f32 %v8937, %v9030
  %v9032 = vpop.f32.mrf.mxu0
  %v9033 = vadd.f32 %v8939, %v9032
  %9034 = vmatmul.bf16.gmra.mxu0 %v8273
  %v9035 = vpop.f32.mrf.mxu0
  %v9036 = vadd.f32 %v8942, %v9035
  %v9037 = vpop.f32.mrf.mxu0
  %v9038 = vadd.f32 %v8944, %v9037
  %9039 = vmatmul.bf16.gmra.mxu0 %v8286
  %v9040 = vpop.f32.mrf.mxu0
  %v9041 = vadd.f32 %v8947, %v9040
  %v9042 = vpop.f32.mrf.mxu0
  %v9043 = vadd.f32 %v8949, %v9042
  %9044 = vmatmul.bf16.gmra.mxu0 %v8299
  %v9045 = vpop.f32.mrf.mxu0
  %v9046 = vadd.f32 %v8952, %v9045
  %v9047 = vpop.f32.mrf.mxu0
  %v9048 = vadd.f32 %v8954, %v9047
  %9049 = vmatmul.bf16.gmra.mxu0 %v8312
  %v9050 = vpop.f32.mrf.mxu0
  %v9051 = vadd.f32 %v8957, %v9050
  %v9052 = vpop.f32.mrf.mxu0
  %v9053 = vadd.f32 %v8959, %v9052
  %9054 = vmatmul.bf16.gmra.mxu0 %v8325
  %v9055 = vpop.f32.mrf.mxu0
  %v9056 = vadd.f32 %v8962, %v9055
  %v9057 = vpop.f32.mrf.mxu0
  %v9058 = vadd.f32 %v8964, %v9057
  %9059 = vdwg.mxu0
  %9060 = vmatpush.bf16.msra.mxu0 %v7140
  %9061 = vmatpush.bf16.msra.mxu0 %v7139
  %9062 = vmatpush.bf16.msra.mxu0 %v7138
  %9063 = vmatpush.bf16.msra.mxu0 %v7137
  %9064 = vmatpush.bf16.msra.mxu0 %v7136
  %9065 = vmatpush.bf16.msra.mxu0 %v7135
  %9066 = vmatpush.bf16.msra.mxu0 %v7134
  %9067 = vmatpush.bf16.msra.mxu0 %v7133
  %9068 = vmatmul.bf16.gmra.mxu0 %v8118
  %v9069 = vpop.f32.mrf.mxu0
  %v9070 = vadd.f32 %v8976, %v9069
  %v9071 = vpop.f32.mrf.mxu0
  %v9072 = vadd.f32 %v8978, %v9071
  %9073 = vmatmul.bf16.gmra.mxu0 %v8131
  %v9074 = vpop.f32.mrf.mxu0
  %v9075 = vadd.f32 %v8981, %v9074
  %v9076 = vpop.f32.mrf.mxu0
  %v9077 = vadd.f32 %v8983, %v9076
  %9078 = vmatmul.bf16.gmra.mxu0 %v8144
  %v9079 = vpop.f32.mrf.mxu0
  %v9080 = vadd.f32 %v8986, %v9079
  %v9081 = vpop.f32.mrf.mxu0
  %v9082 = vadd.f32 %v8988, %v9081
  %9083 = vmatmul.bf16.gmra.mxu0 %v8157
  %v9084 = vpop.f32.mrf.mxu0
  %v9085 = vadd.f32 %v8991, %v9084
  %v9086 = vpop.f32.mrf.mxu0
  %v9087 = vadd.f32 %v8993, %v9086
  %9088 = vmatmul.bf16.gmra.mxu0 %v8170
  %v9089 = vpop.f32.mrf.mxu0
  %v9090 = vadd.f32 %v8996, %v9089
  %v9091 = vpop.f32.mrf.mxu0
  %v9092 = vadd.f32 %v8998, %v9091
  %9093 = vmatmul.bf16.gmra.mxu0 %v8183
  %v9094 = vpop.f32.mrf.mxu0
  %v9095 = vadd.f32 %v9001, %v9094
  %v9096 = vpop.f32.mrf.mxu0
  %v9097 = vadd.f32 %v9003, %v9096
  %9098 = vmatmul.bf16.gmra.mxu0 %v8196
  %v9099 = vpop.f32.mrf.mxu0
  %v9100 = vadd.f32 %v9006, %v9099
  %v9101 = vpop.f32.mrf.mxu0
  %v9102 = vadd.f32 %v9008, %v9101
  %9103 = vmatmul.bf16.gmra.mxu0 %v8209
  %v9104 = vpop.f32.mrf.mxu0
  %v9105 = vadd.f32 %v9011, %v9104
  %v9106 = vpop.f32.mrf.mxu0
  %v9107 = vadd.f32 %v9013, %v9106
  %9108 = vmatmul.bf16.gmra.mxu0 %v8222
  %v9109 = vpop.f32.mrf.mxu0
  %v9110 = vadd.f32 %v9016, %v9109
  %v9111 = vpop.f32.mrf.mxu0
  %v9112 = vadd.f32 %v9018, %v9111
  %9113 = vmatmul.bf16.gmra.mxu0 %v8235
  %v9114 = vpop.f32.mrf.mxu0
  %v9115 = vadd.f32 %v9021, %v9114
  %v9116 = vpop.f32.mrf.mxu0
  %v9117 = vadd.f32 %v9023, %v9116
  %9118 = vmatmul.bf16.gmra.mxu0 %v8248
  %v9119 = vpop.f32.mrf.mxu0
  %v9120 = vadd.f32 %v9026, %v9119
  %v9121 = vpop.f32.mrf.mxu0
  %v9122 = vadd.f32 %v9028, %v9121
  %9123 = vmatmul.bf16.gmra.mxu0 %v8261
  %v9124 = vpop.f32.mrf.mxu0
  %v9125 = vadd.f32 %v9031, %v9124
  %v9126 = vpop.f32.mrf.mxu0
  %v9127 = vadd.f32 %v9033, %v9126
  %9128 = vmatmul.bf16.gmra.mxu0 %v8274
  %v9129 = vpop.f32.mrf.mxu0
  %v9130 = vadd.f32 %v9036, %v9129
  %v9131 = vpop.f32.mrf.mxu0
  %v9132 = vadd.f32 %v9038, %v9131
  %9133 = vmatmul.bf16.gmra.mxu0 %v8287
  %v9134 = vpop.f32.mrf.mxu0
  %v9135 = vadd.f32 %v9041, %v9134
  %v9136 = vpop.f32.mrf.mxu0
  %v9137 = vadd.f32 %v9043, %v9136
  %9138 = vmatmul.bf16.gmra.mxu0 %v8300
  %v9139 = vpop.f32.mrf.mxu0
  %v9140 = vadd.f32 %v9046, %v9139
  %v9141 = vpop.f32.mrf.mxu0
  %v9142 = vadd.f32 %v9048, %v9141
  %9143 = vmatmul.bf16.gmra.mxu0 %v8313
  %v9144 = vpop.f32.mrf.mxu0
  %v9145 = vadd.f32 %v9051, %v9144
  %v9146 = vpop.f32.mrf.mxu0
  %v9147 = vadd.f32 %v9053, %v9146
  %9148 = vmatmul.bf16.gmra.mxu0 %v8326
  %v9149 = vpop.f32.mrf.mxu0
  %v9150 = vadd.f32 %v9056, %v9149
  %v9151 = vpop.f32.mrf.mxu0
  %v9152 = vadd.f32 %v9058, %v9151
  %9153 = vdwg.mxu0
  %9154 = vmatpush.bf16.msra.mxu0 %v7148
  %9155 = vmatpush.bf16.msra.mxu0 %v7147
  %9156 = vmatpush.bf16.msra.mxu0 %v7146
  %9157 = vmatpush.bf16.msra.mxu0 %v7145
  %9158 = vmatpush.bf16.msra.mxu0 %v7144
  %9159 = vmatpush.bf16.msra.mxu0 %v7143
  %9160 = vmatpush.bf16.msra.mxu0 %v7142
  %9161 = vmatpush.bf16.msra.mxu0 %v7141
  %9162 = vmatmul.bf16.gmra.mxu0 %v8119
  %v9163 = vpop.f32.mrf.mxu0
  %v9164 = vadd.f32 %v9070, %v9163
  %v9165 = vpop.f32.mrf.mxu0
  %v9166 = vadd.f32 %v9072, %v9165
  %9167 = vmatmul.bf16.gmra.mxu0 %v8132
  %v9168 = vpop.f32.mrf.mxu0
  %v9169 = vadd.f32 %v9075, %v9168
  %v9170 = vpop.f32.mrf.mxu0
  %v9171 = vadd.f32 %v9077, %v9170
  %9172 = vmatmul.bf16.gmra.mxu0 %v8145
  %v9173 = vpop.f32.mrf.mxu0
  %v9174 = vadd.f32 %v9080, %v9173
  %v9175 = vpop.f32.mrf.mxu0
  %v9176 = vadd.f32 %v9082, %v9175
  %9177 = vmatmul.bf16.gmra.mxu0 %v8158
  %v9178 = vpop.f32.mrf.mxu0
  %v9179 = vadd.f32 %v9085, %v9178
  %v9180 = vpop.f32.mrf.mxu0
  %v9181 = vadd.f32 %v9087, %v9180
  %9182 = vmatmul.bf16.gmra.mxu0 %v8171
  %v9183 = vpop.f32.mrf.mxu0
  %v9184 = vadd.f32 %v9090, %v9183
  %v9185 = vpop.f32.mrf.mxu0
  %v9186 = vadd.f32 %v9092, %v9185
  %9187 = vmatmul.bf16.gmra.mxu0 %v8184
  %v9188 = vpop.f32.mrf.mxu0
  %v9189 = vadd.f32 %v9095, %v9188
  %v9190 = vpop.f32.mrf.mxu0
  %v9191 = vadd.f32 %v9097, %v9190
  %9192 = vmatmul.bf16.gmra.mxu0 %v8197
  %v9193 = vpop.f32.mrf.mxu0
  %v9194 = vadd.f32 %v9100, %v9193
  %v9195 = vpop.f32.mrf.mxu0
  %v9196 = vadd.f32 %v9102, %v9195
  %9197 = vmatmul.bf16.gmra.mxu0 %v8210
  %v9198 = vpop.f32.mrf.mxu0
  %v9199 = vadd.f32 %v9105, %v9198
  %v9200 = vpop.f32.mrf.mxu0
  %v9201 = vadd.f32 %v9107, %v9200
  %9202 = vmatmul.bf16.gmra.mxu0 %v8223
  %v9203 = vpop.f32.mrf.mxu0
  %v9204 = vadd.f32 %v9110, %v9203
  %v9205 = vpop.f32.mrf.mxu0
  %v9206 = vadd.f32 %v9112, %v9205
  %9207 = vmatmul.bf16.gmra.mxu0 %v8236
  %v9208 = vpop.f32.mrf.mxu0
  %v9209 = vadd.f32 %v9115, %v9208
  %v9210 = vpop.f32.mrf.mxu0
  %v9211 = vadd.f32 %v9117, %v9210
  %9212 = vmatmul.bf16.gmra.mxu0 %v8249
  %v9213 = vpop.f32.mrf.mxu0
  %v9214 = vadd.f32 %v9120, %v9213
  %v9215 = vpop.f32.mrf.mxu0
  %v9216 = vadd.f32 %v9122, %v9215
  %9217 = vmatmul.bf16.gmra.mxu0 %v8262
  %v9218 = vpop.f32.mrf.mxu0
  %v9219 = vadd.f32 %v9125, %v9218
  %v9220 = vpop.f32.mrf.mxu0
  %v9221 = vadd.f32 %v9127, %v9220
  %9222 = vmatmul.bf16.gmra.mxu0 %v8275
  %v9223 = vpop.f32.mrf.mxu0
  %v9224 = vadd.f32 %v9130, %v9223
  %v9225 = vpop.f32.mrf.mxu0
  %v9226 = vadd.f32 %v9132, %v9225
  %9227 = vmatmul.bf16.gmra.mxu0 %v8288
  %v9228 = vpop.f32.mrf.mxu0
  %v9229 = vadd.f32 %v9135, %v9228
  %v9230 = vpop.f32.mrf.mxu0
  %v9231 = vadd.f32 %v9137, %v9230
  %9232 = vmatmul.bf16.gmra.mxu0 %v8301
  %v9233 = vpop.f32.mrf.mxu0
  %v9234 = vadd.f32 %v9140, %v9233
  %v9235 = vpop.f32.mrf.mxu0
  %v9236 = vadd.f32 %v9142, %v9235
  %9237 = vmatmul.bf16.gmra.mxu0 %v8314
  %v9238 = vpop.f32.mrf.mxu0
  %v9239 = vadd.f32 %v9145, %v9238
  %v9240 = vpop.f32.mrf.mxu0
  %v9241 = vadd.f32 %v9147, %v9240
  %9242 = vmatmul.bf16.gmra.mxu0 %v8327
  %v9243 = vpop.f32.mrf.mxu0
  %v9244 = vadd.f32 %v9150, %v9243
  %v9245 = vpop.f32.mrf.mxu0
  %v9246 = vadd.f32 %v9152, %v9245
  %9247 = vdwg.mxu0
  %9248 = vmatpush.bf16.msra.mxu0 %v7156
  %9249 = vmatpush.bf16.msra.mxu0 %v7155
  %9250 = vmatpush.bf16.msra.mxu0 %v7154
  %9251 = vmatpush.bf16.msra.mxu0 %v7153
  %9252 = vmatpush.bf16.msra.mxu0 %v7152
  %9253 = vmatpush.bf16.msra.mxu0 %v7151
  %9254 = vmatpush.bf16.msra.mxu0 %v7150
  %9255 = vmatpush.bf16.msra.mxu0 %v7149
  %9256 = vmatmul.bf16.gmra.mxu0 %v8120
  %v9257 = vpop.f32.mrf.mxu0
  %v9258 = vadd.f32 %v9164, %v9257
  %v9259 = vpop.f32.mrf.mxu0
  %v9260 = vadd.f32 %v9166, %v9259
  %9261 = vmatmul.bf16.gmra.mxu0 %v8133
  %v9262 = vpop.f32.mrf.mxu0
  %v9263 = vadd.f32 %v9169, %v9262
  %v9264 = vpop.f32.mrf.mxu0
  %v9265 = vadd.f32 %v9171, %v9264
  %9266 = vmatmul.bf16.gmra.mxu0 %v8146
  %v9267 = vpop.f32.mrf.mxu0
  %v9268 = vadd.f32 %v9174, %v9267
  %v9269 = vpop.f32.mrf.mxu0
  %v9270 = vadd.f32 %v9176, %v9269
  %9271 = vmatmul.bf16.gmra.mxu0 %v8159
  %v9272 = vpop.f32.mrf.mxu0
  %v9273 = vadd.f32 %v9179, %v9272
  %v9274 = vpop.f32.mrf.mxu0
  %v9275 = vadd.f32 %v9181, %v9274
  %9276 = vmatmul.bf16.gmra.mxu0 %v8172
  %v9277 = vpop.f32.mrf.mxu0
  %v9278 = vadd.f32 %v9184, %v9277
  %v9279 = vpop.f32.mrf.mxu0
  %v9280 = vadd.f32 %v9186, %v9279
  %9281 = vmatmul.bf16.gmra.mxu0 %v8185
  %v9282 = vpop.f32.mrf.mxu0
  %v9283 = vadd.f32 %v9189, %v9282
  %v9284 = vpop.f32.mrf.mxu0
  %v9285 = vadd.f32 %v9191, %v9284
  %9286 = vmatmul.bf16.gmra.mxu0 %v8198
  %v9287 = vpop.f32.mrf.mxu0
  %v9288 = vadd.f32 %v9194, %v9287
  %v9289 = vpop.f32.mrf.mxu0
  %v9290 = vadd.f32 %v9196, %v9289
  %9291 = vmatmul.bf16.gmra.mxu0 %v8211
  %v9292 = vpop.f32.mrf.mxu0
  %v9293 = vadd.f32 %v9199, %v9292
  %v9294 = vpop.f32.mrf.mxu0
  %v9295 = vadd.f32 %v9201, %v9294
  %9296 = vmatmul.bf16.gmra.mxu0 %v8224
  %v9297 = vpop.f32.mrf.mxu0
  %v9298 = vadd.f32 %v9204, %v9297
  %v9299 = vpop.f32.mrf.mxu0
  %v9300 = vadd.f32 %v9206, %v9299
  %9301 = vmatmul.bf16.gmra.mxu0 %v8237
  %v9302 = vpop.f32.mrf.mxu0
  %v9303 = vadd.f32 %v9209, %v9302
  %v9304 = vpop.f32.mrf.mxu0
  %v9305 = vadd.f32 %v9211, %v9304
  %9306 = vmatmul.bf16.gmra.mxu0 %v8250
  %v9307 = vpop.f32.mrf.mxu0
  %v9308 = vadd.f32 %v9214, %v9307
  %v9309 = vpop.f32.mrf.mxu0
  %v9310 = vadd.f32 %v9216, %v9309
  %9311 = vmatmul.bf16.gmra.mxu0 %v8263
  %v9312 = vpop.f32.mrf.mxu0
  %v9313 = vadd.f32 %v9219, %v9312
  %v9314 = vpop.f32.mrf.mxu0
  %v9315 = vadd.f32 %v9221, %v9314
  %9316 = vmatmul.bf16.gmra.mxu0 %v8276
  %v9317 = vpop.f32.mrf.mxu0
  %v9318 = vadd.f32 %v9224, %v9317
  %v9319 = vpop.f32.mrf.mxu0
  %v9320 = vadd.f32 %v9226, %v9319
  %9321 = vmatmul.bf16.gmra.mxu0 %v8289
  %v9322 = vpop.f32.mrf.mxu0
  %v9323 = vadd.f32 %v9229, %v9322
  %v9324 = vpop.f32.mrf.mxu0
  %v9325 = vadd.f32 %v9231, %v9324
  %9326 = vmatmul.bf16.gmra.mxu0 %v8302
  %v9327 = vpop.f32.mrf.mxu0
  %v9328 = vadd.f32 %v9234, %v9327
  %v9329 = vpop.f32.mrf.mxu0
  %v9330 = vadd.f32 %v9236, %v9329
  %9331 = vmatmul.bf16.gmra.mxu0 %v8315
  %v9332 = vpop.f32.mrf.mxu0
  %v9333 = vadd.f32 %v9239, %v9332
  %v9334 = vpop.f32.mrf.mxu0
  %v9335 = vadd.f32 %v9241, %v9334
  %9336 = vmatmul.bf16.gmra.mxu0 %v8328
  %v9337 = vpop.f32.mrf.mxu0
  %v9338 = vadd.f32 %v9244, %v9337
  %v9339 = vpop.f32.mrf.mxu0
  %v9340 = vadd.f32 %v9246, %v9339
  %9341 = vdwg.mxu0
  %9342 = vmatpush.bf16.msra.mxu0 %v7164
  %9343 = vmatpush.bf16.msra.mxu0 %v7163
  %9344 = vmatpush.bf16.msra.mxu0 %v7162
  %9345 = vmatpush.bf16.msra.mxu0 %v7161
  %9346 = vmatpush.bf16.msra.mxu0 %v7160
  %9347 = vmatpush.bf16.msra.mxu0 %v7159
  %9348 = vmatpush.bf16.msra.mxu0 %v7158
  %9349 = vmatpush.bf16.msra.mxu0 %v7157
  %9350 = vmatmul.bf16.gmra.mxu0 %v8121
  %v9351 = vpop.f32.mrf.mxu0
  %v9352 = vadd.f32 %v9258, %v9351
  %v9353 = vpop.f32.mrf.mxu0
  %v9354 = vadd.f32 %v9260, %v9353
  %9355 = vmatmul.bf16.gmra.mxu0 %v8134
  %v9356 = vpop.f32.mrf.mxu0
  %v9357 = vadd.f32 %v9263, %v9356
  %v9358 = vpop.f32.mrf.mxu0
  %v9359 = vadd.f32 %v9265, %v9358
  %9360 = vmatmul.bf16.gmra.mxu0 %v8147
  %v9361 = vpop.f32.mrf.mxu0
  %v9362 = vadd.f32 %v9268, %v9361
  %v9363 = vpop.f32.mrf.mxu0
  %v9364 = vadd.f32 %v9270, %v9363
  %9365 = vmatmul.bf16.gmra.mxu0 %v8160
  %v9366 = vpop.f32.mrf.mxu0
  %v9367 = vadd.f32 %v9273, %v9366
  %v9368 = vpop.f32.mrf.mxu0
  %v9369 = vadd.f32 %v9275, %v9368
  %9370 = vmatmul.bf16.gmra.mxu0 %v8173
  %v9371 = vpop.f32.mrf.mxu0
  %v9372 = vadd.f32 %v9278, %v9371
  %v9373 = vpop.f32.mrf.mxu0
  %v9374 = vadd.f32 %v9280, %v9373
  %9375 = vmatmul.bf16.gmra.mxu0 %v8186
  %v9376 = vpop.f32.mrf.mxu0
  %v9377 = vadd.f32 %v9283, %v9376
  %v9378 = vpop.f32.mrf.mxu0
  %v9379 = vadd.f32 %v9285, %v9378
  %9380 = vmatmul.bf16.gmra.mxu0 %v8199
  %v9381 = vpop.f32.mrf.mxu0
  %v9382 = vadd.f32 %v9288, %v9381
  %v9383 = vpop.f32.mrf.mxu0
  %v9384 = vadd.f32 %v9290, %v9383
  %9385 = vmatmul.bf16.gmra.mxu0 %v8212
  %v9386 = vpop.f32.mrf.mxu0
  %v9387 = vadd.f32 %v9293, %v9386
  %v9388 = vpop.f32.mrf.mxu0
  %v9389 = vadd.f32 %v9295, %v9388
  %9390 = vmatmul.bf16.gmra.mxu0 %v8225
  %v9391 = vpop.f32.mrf.mxu0
  %v9392 = vadd.f32 %v9298, %v9391
  %v9393 = vpop.f32.mrf.mxu0
  %v9394 = vadd.f32 %v9300, %v9393
  %9395 = vmatmul.bf16.gmra.mxu0 %v8238
  %v9396 = vpop.f32.mrf.mxu0
  %v9397 = vadd.f32 %v9303, %v9396
  %v9398 = vpop.f32.mrf.mxu0
  %v9399 = vadd.f32 %v9305, %v9398
  %9400 = vmatmul.bf16.gmra.mxu0 %v8251
  %v9401 = vpop.f32.mrf.mxu0
  %v9402 = vadd.f32 %v9308, %v9401
  %v9403 = vpop.f32.mrf.mxu0
  %v9404 = vadd.f32 %v9310, %v9403
  %9405 = vmatmul.bf16.gmra.mxu0 %v8264
  %v9406 = vpop.f32.mrf.mxu0
  %v9407 = vadd.f32 %v9313, %v9406
  %v9408 = vpop.f32.mrf.mxu0
  %v9409 = vadd.f32 %v9315, %v9408
  %9410 = vmatmul.bf16.gmra.mxu0 %v8277
  %v9411 = vpop.f32.mrf.mxu0
  %v9412 = vadd.f32 %v9318, %v9411
  %v9413 = vpop.f32.mrf.mxu0
  %v9414 = vadd.f32 %v9320, %v9413
  %9415 = vmatmul.bf16.gmra.mxu0 %v8290
  %v9416 = vpop.f32.mrf.mxu0
  %v9417 = vadd.f32 %v9323, %v9416
  %v9418 = vpop.f32.mrf.mxu0
  %v9419 = vadd.f32 %v9325, %v9418
  %9420 = vmatmul.bf16.gmra.mxu0 %v8303
  %v9421 = vpop.f32.mrf.mxu0
  %v9422 = vadd.f32 %v9328, %v9421
  %v9423 = vpop.f32.mrf.mxu0
  %v9424 = vadd.f32 %v9330, %v9423
  %9425 = vmatmul.bf16.gmra.mxu0 %v8316
  %v9426 = vpop.f32.mrf.mxu0
  %v9427 = vadd.f32 %v9333, %v9426
  %v9428 = vpop.f32.mrf.mxu0
  %v9429 = vadd.f32 %v9335, %v9428
  %9430 = vmatmul.bf16.gmra.mxu0 %v8329
  %v9431 = vpop.f32.mrf.mxu0
  %v9432 = vadd.f32 %v9338, %v9431
  %v9433 = vpop.f32.mrf.mxu0
  %v9434 = vadd.f32 %v9340, %v9433
  %9435 = vdwg.mxu0
  %9436 = vmatpush.bf16.msra.mxu0 %v7172
  %9437 = vmatpush.bf16.msra.mxu0 %v7171
  %9438 = vmatpush.bf16.msra.mxu0 %v7170
  %9439 = vmatpush.bf16.msra.mxu0 %v7169
  %9440 = vmatpush.bf16.msra.mxu0 %v7168
  %9441 = vmatpush.bf16.msra.mxu0 %v7167
  %9442 = vmatpush.bf16.msra.mxu0 %v7166
  %9443 = vmatpush.bf16.msra.mxu0 %v7165
  %9444 = vmatmul.bf16.gmra.mxu0 %v8122
  %v9445 = vpop.f32.mrf.mxu0
  %v9446 = vadd.f32 %v9352, %v9445
  %v9447 = vpop.f32.mrf.mxu0
  %v9448 = vadd.f32 %v9354, %v9447
  %9449 = vmatmul.bf16.gmra.mxu0 %v8135
  %v9450 = vpop.f32.mrf.mxu0
  %v9451 = vadd.f32 %v9357, %v9450
  %v9452 = vpop.f32.mrf.mxu0
  %v9453 = vadd.f32 %v9359, %v9452
  %9454 = vmatmul.bf16.gmra.mxu0 %v8148
  %v9455 = vpop.f32.mrf.mxu0
  %v9456 = vadd.f32 %v9362, %v9455
  %v9457 = vpop.f32.mrf.mxu0
  %v9458 = vadd.f32 %v9364, %v9457
  %9459 = vmatmul.bf16.gmra.mxu0 %v8161
  %v9460 = vpop.f32.mrf.mxu0
  %v9461 = vadd.f32 %v9367, %v9460
  %v9462 = vpop.f32.mrf.mxu0
  %v9463 = vadd.f32 %v9369, %v9462
  %9464 = vmatmul.bf16.gmra.mxu0 %v8174
  %v9465 = vpop.f32.mrf.mxu0
  %v9466 = vadd.f32 %v9372, %v9465
  %v9467 = vpop.f32.mrf.mxu0
  %v9468 = vadd.f32 %v9374, %v9467
  %9469 = vmatmul.bf16.gmra.mxu0 %v8187
  %v9470 = vpop.f32.mrf.mxu0
  %v9471 = vadd.f32 %v9377, %v9470
  %v9472 = vpop.f32.mrf.mxu0
  %v9473 = vadd.f32 %v9379, %v9472
  %9474 = vmatmul.bf16.gmra.mxu0 %v8200
  %v9475 = vpop.f32.mrf.mxu0
  %v9476 = vadd.f32 %v9382, %v9475
  %v9477 = vpop.f32.mrf.mxu0
  %v9478 = vadd.f32 %v9384, %v9477
  %9479 = vmatmul.bf16.gmra.mxu0 %v8213
  %v9480 = vpop.f32.mrf.mxu0
  %v9481 = vadd.f32 %v9387, %v9480
  %v9482 = vpop.f32.mrf.mxu0
  %v9483 = vadd.f32 %v9389, %v9482
  %9484 = vmatmul.bf16.gmra.mxu0 %v8226
  %v9485 = vpop.f32.mrf.mxu0
  %v9486 = vadd.f32 %v9392, %v9485
  %v9487 = vpop.f32.mrf.mxu0
  %v9488 = vadd.f32 %v9394, %v9487
  %9489 = vmatmul.bf16.gmra.mxu0 %v8239
  %v9490 = vpop.f32.mrf.mxu0
  %v9491 = vadd.f32 %v9397, %v9490
  %v9492 = vpop.f32.mrf.mxu0
  %v9493 = vadd.f32 %v9399, %v9492
  %9494 = vmatmul.bf16.gmra.mxu0 %v8252
  %v9495 = vpop.f32.mrf.mxu0
  %v9496 = vadd.f32 %v9402, %v9495
  %v9497 = vpop.f32.mrf.mxu0
  %v9498 = vadd.f32 %v9404, %v9497
  %9499 = vmatmul.bf16.gmra.mxu0 %v8265
  %v9500 = vpop.f32.mrf.mxu0
  %v9501 = vadd.f32 %v9407, %v9500
  %v9502 = vpop.f32.mrf.mxu0
  %v9503 = vadd.f32 %v9409, %v9502
  %9504 = vmatmul.bf16.gmra.mxu0 %v8278
  %v9505 = vpop.f32.mrf.mxu0
  %v9506 = vadd.f32 %v9412, %v9505
  %v9507 = vpop.f32.mrf.mxu0
  %v9508 = vadd.f32 %v9414, %v9507
  %9509 = vmatmul.bf16.gmra.mxu0 %v8291
  %v9510 = vpop.f32.mrf.mxu0
  %v9511 = vadd.f32 %v9417, %v9510
  %v9512 = vpop.f32.mrf.mxu0
  %v9513 = vadd.f32 %v9419, %v9512
  %9514 = vmatmul.bf16.gmra.mxu0 %v8304
  %v9515 = vpop.f32.mrf.mxu0
  %v9516 = vadd.f32 %v9422, %v9515
  %v9517 = vpop.f32.mrf.mxu0
  %v9518 = vadd.f32 %v9424, %v9517
  %9519 = vmatmul.bf16.gmra.mxu0 %v8317
  %v9520 = vpop.f32.mrf.mxu0
  %v9521 = vadd.f32 %v9427, %v9520
  %v9522 = vpop.f32.mrf.mxu0
  %v9523 = vadd.f32 %v9429, %v9522
  %9524 = vmatmul.bf16.gmra.mxu0 %v8330
  %v9525 = vpop.f32.mrf.mxu0
  %v9526 = vadd.f32 %v9432, %v9525
  %v9527 = vpop.f32.mrf.mxu0
  %v9528 = vadd.f32 %v9434, %v9527
  %9529 = vdwg.mxu0
  %9530 = vmatpush.bf16.msra.mxu0 %v7180
  %9531 = vmatpush.bf16.msra.mxu0 %v7179
  %9532 = vmatpush.bf16.msra.mxu0 %v7178
  %9533 = vmatpush.bf16.msra.mxu0 %v7177
  %9534 = vmatpush.bf16.msra.mxu0 %v7176
  %9535 = vmatpush.bf16.msra.mxu0 %v7175
  %9536 = vmatpush.bf16.msra.mxu0 %v7174
  %9537 = vmatpush.bf16.msra.mxu0 %v7173
  %9538 = vmatmul.bf16.gmra.mxu0 %v8123
  %v9539 = vpop.f32.mrf.mxu0
  %v9540 = vadd.f32 %v9446, %v9539
  %v9541 = vpop.f32.mrf.mxu0
  %v9542 = vadd.f32 %v9448, %v9541
  %9543 = vmatmul.bf16.gmra.mxu0 %v8136
  %v9544 = vpop.f32.mrf.mxu0
  %v9545 = vadd.f32 %v9451, %v9544
  %v9546 = vpop.f32.mrf.mxu0
  %v9547 = vadd.f32 %v9453, %v9546
  %9548 = vmatmul.bf16.gmra.mxu0 %v8149
  %v9549 = vpop.f32.mrf.mxu0
  %v9550 = vadd.f32 %v9456, %v9549
  %v9551 = vpop.f32.mrf.mxu0
  %v9552 = vadd.f32 %v9458, %v9551
  %9553 = vmatmul.bf16.gmra.mxu0 %v8162
  %v9554 = vpop.f32.mrf.mxu0
  %v9555 = vadd.f32 %v9461, %v9554
  %v9556 = vpop.f32.mrf.mxu0
  %v9557 = vadd.f32 %v9463, %v9556
  %9558 = vmatmul.bf16.gmra.mxu0 %v8175
  %v9559 = vpop.f32.mrf.mxu0
  %v9560 = vadd.f32 %v9466, %v9559
  %v9561 = vpop.f32.mrf.mxu0
  %v9562 = vadd.f32 %v9468, %v9561
  %9563 = vmatmul.bf16.gmra.mxu0 %v8188
  %v9564 = vpop.f32.mrf.mxu0
  %v9565 = vadd.f32 %v9471, %v9564
  %v9566 = vpop.f32.mrf.mxu0
  %v9567 = vadd.f32 %v9473, %v9566
  %9568 = vmatmul.bf16.gmra.mxu0 %v8201
  %v9569 = vpop.f32.mrf.mxu0
  %v9570 = vadd.f32 %v9476, %v9569
  %v9571 = vpop.f32.mrf.mxu0
  %v9572 = vadd.f32 %v9478, %v9571
  %9573 = vmatmul.bf16.gmra.mxu0 %v8214
  %v9574 = vpop.f32.mrf.mxu0
  %v9575 = vadd.f32 %v9481, %v9574
  %v9576 = vpop.f32.mrf.mxu0
  %v9577 = vadd.f32 %v9483, %v9576
  %9578 = vmatmul.bf16.gmra.mxu0 %v8227
  %v9579 = vpop.f32.mrf.mxu0
  %v9580 = vadd.f32 %v9486, %v9579
  %v9581 = vpop.f32.mrf.mxu0
  %v9582 = vadd.f32 %v9488, %v9581
  %9583 = vmatmul.bf16.gmra.mxu0 %v8240
  %v9584 = vpop.f32.mrf.mxu0
  %v9585 = vadd.f32 %v9491, %v9584
  %v9586 = vpop.f32.mrf.mxu0
  %v9587 = vadd.f32 %v9493, %v9586
  %9588 = vmatmul.bf16.gmra.mxu0 %v8253
  %v9589 = vpop.f32.mrf.mxu0
  %v9590 = vadd.f32 %v9496, %v9589
  %v9591 = vpop.f32.mrf.mxu0
  %v9592 = vadd.f32 %v9498, %v9591
  %9593 = vmatmul.bf16.gmra.mxu0 %v8266
  %v9594 = vpop.f32.mrf.mxu0
  %v9595 = vadd.f32 %v9501, %v9594
  %v9596 = vpop.f32.mrf.mxu0
  %v9597 = vadd.f32 %v9503, %v9596
  %9598 = vmatmul.bf16.gmra.mxu0 %v8279
  %v9599 = vpop.f32.mrf.mxu0
  %v9600 = vadd.f32 %v9506, %v9599
  %v9601 = vpop.f32.mrf.mxu0
  %v9602 = vadd.f32 %v9508, %v9601
  %9603 = vmatmul.bf16.gmra.mxu0 %v8292
  %v9604 = vpop.f32.mrf.mxu0
  %v9605 = vadd.f32 %v9511, %v9604
  %v9606 = vpop.f32.mrf.mxu0
  %v9607 = vadd.f32 %v9513, %v9606
  %9608 = vmatmul.bf16.gmra.mxu0 %v8305
  %v9609 = vpop.f32.mrf.mxu0
  %v9610 = vadd.f32 %v9516, %v9609
  %v9611 = vpop.f32.mrf.mxu0
  %v9612 = vadd.f32 %v9518, %v9611
  %9613 = vmatmul.bf16.gmra.mxu0 %v8318
  %v9614 = vpop.f32.mrf.mxu0
  %v9615 = vadd.f32 %v9521, %v9614
  %v9616 = vpop.f32.mrf.mxu0
  %v9617 = vadd.f32 %v9523, %v9616
  %9618 = vmatmul.bf16.gmra.mxu0 %v8331
  %v9619 = vpop.f32.mrf.mxu0
  %v9620 = vadd.f32 %v9526, %v9619
  %v9621 = vpop.f32.mrf.mxu0
  %v9622 = vadd.f32 %v9528, %v9621
  %9623 = vdwg.mxu0
  %9624 = vmatpush.bf16.msra.mxu0 %v7188
  %9625 = vmatpush.bf16.msra.mxu0 %v7187
  %9626 = vmatpush.bf16.msra.mxu0 %v7186
  %9627 = vmatpush.bf16.msra.mxu0 %v7185
  %9628 = vmatpush.bf16.msra.mxu0 %v7184
  %9629 = vmatpush.bf16.msra.mxu0 %v7183
  %9630 = vmatpush.bf16.msra.mxu0 %v7182
  %9631 = vmatpush.bf16.msra.mxu0 %v7181
  %9632 = vmatmul.bf16.gmra.mxu0 %v8124
  %v9633 = vpop.f32.mrf.mxu0
  %v9634 = vadd.f32 %v9540, %v9633
  %v9635 = vpop.f32.mrf.mxu0
  %v9636 = vadd.f32 %v9542, %v9635
  %9637 = vmatmul.bf16.gmra.mxu0 %v8137
  %v9638 = vpop.f32.mrf.mxu0
  %v9639 = vadd.f32 %v9545, %v9638
  %v9640 = vpop.f32.mrf.mxu0
  %v9641 = vadd.f32 %v9547, %v9640
  %9642 = vmatmul.bf16.gmra.mxu0 %v8150
  %v9643 = vpop.f32.mrf.mxu0
  %v9644 = vadd.f32 %v9550, %v9643
  %v9645 = vpop.f32.mrf.mxu0
  %v9646 = vadd.f32 %v9552, %v9645
  %9647 = vmatmul.bf16.gmra.mxu0 %v8163
  %v9648 = vpop.f32.mrf.mxu0
  %v9649 = vadd.f32 %v9555, %v9648
  %v9650 = vpop.f32.mrf.mxu0
  %v9651 = vadd.f32 %v9557, %v9650
  %9652 = vmatmul.bf16.gmra.mxu0 %v8176
  %v9653 = vpop.f32.mrf.mxu0
  %v9654 = vadd.f32 %v9560, %v9653
  %v9655 = vpop.f32.mrf.mxu0
  %v9656 = vadd.f32 %v9562, %v9655
  %9657 = vmatmul.bf16.gmra.mxu0 %v8189
  %v9658 = vpop.f32.mrf.mxu0
  %v9659 = vadd.f32 %v9565, %v9658
  %v9660 = vpop.f32.mrf.mxu0
  %v9661 = vadd.f32 %v9567, %v9660
  %9662 = vmatmul.bf16.gmra.mxu0 %v8202
  %v9663 = vpop.f32.mrf.mxu0
  %v9664 = vadd.f32 %v9570, %v9663
  %v9665 = vpop.f32.mrf.mxu0
  %v9666 = vadd.f32 %v9572, %v9665
  %9667 = vmatmul.bf16.gmra.mxu0 %v8215
  %v9668 = vpop.f32.mrf.mxu0
  %v9669 = vadd.f32 %v9575, %v9668
  %v9670 = vpop.f32.mrf.mxu0
  %v9671 = vadd.f32 %v9577, %v9670
  %9672 = vmatmul.bf16.gmra.mxu0 %v8228
  %v9673 = vpop.f32.mrf.mxu0
  %v9674 = vadd.f32 %v9580, %v9673
  %v9675 = vpop.f32.mrf.mxu0
  %v9676 = vadd.f32 %v9582, %v9675
  %9677 = vmatmul.bf16.gmra.mxu0 %v8241
  %v9678 = vpop.f32.mrf.mxu0
  %v9679 = vadd.f32 %v9585, %v9678
  %v9680 = vpop.f32.mrf.mxu0
  %v9681 = vadd.f32 %v9587, %v9680
  %9682 = vmatmul.bf16.gmra.mxu0 %v8254
  %v9683 = vpop.f32.mrf.mxu0
  %v9684 = vadd.f32 %v9590, %v9683
  %v9685 = vpop.f32.mrf.mxu0
  %v9686 = vadd.f32 %v9592, %v9685
  %9687 = vmatmul.bf16.gmra.mxu0 %v8267
  %v9688 = vpop.f32.mrf.mxu0
  %v9689 = vadd.f32 %v9595, %v9688
  %v9690 = vpop.f32.mrf.mxu0
  %v9691 = vadd.f32 %v9597, %v9690
  %9692 = vmatmul.bf16.gmra.mxu0 %v8280
  %v9693 = vpop.f32.mrf.mxu0
  %v9694 = vadd.f32 %v9600, %v9693
  %v9695 = vpop.f32.mrf.mxu0
  %v9696 = vadd.f32 %v9602, %v9695
  %9697 = vmatmul.bf16.gmra.mxu0 %v8293
  %v9698 = vpop.f32.mrf.mxu0
  %v9699 = vadd.f32 %v9605, %v9698
  %v9700 = vpop.f32.mrf.mxu0
  %v9701 = vadd.f32 %v9607, %v9700
  %9702 = vmatmul.bf16.gmra.mxu0 %v8306
  %v9703 = vpop.f32.mrf.mxu0
  %v9704 = vadd.f32 %v9610, %v9703
  %v9705 = vpop.f32.mrf.mxu0
  %v9706 = vadd.f32 %v9612, %v9705
  %9707 = vmatmul.bf16.gmra.mxu0 %v8319
  %v9708 = vpop.f32.mrf.mxu0
  %v9709 = vadd.f32 %v9615, %v9708
  %v9710 = vpop.f32.mrf.mxu0
  %v9711 = vadd.f32 %v9617, %v9710
  %9712 = vmatmul.bf16.gmra.mxu0 %v8332
  %v9713 = vpop.f32.mrf.mxu0
  %v9714 = vadd.f32 %v9620, %v9713
  %v9715 = vpop.f32.mrf.mxu0
  %v9716 = vadd.f32 %v9622, %v9715
  %9717 = vdwg.mxu0
  %9718 = vmatpush.bf16.msra.mxu0 0
  %9719 = vmatpush.bf16.msra.mxu0 0
  %9720 = vmatpush.bf16.msra.mxu0 %v7194
  %9721 = vmatpush.bf16.msra.mxu0 %v7193
  %9722 = vmatpush.bf16.msra.mxu0 %v7192
  %9723 = vmatpush.bf16.msra.mxu0 %v7191
  %9724 = vmatpush.bf16.msra.mxu0 %v7190
  %9725 = vmatpush.bf16.msra.mxu0 %v7189
  %9726 = vmatmul.bf16.gmra.mxu0 %v8540
  %v9727 = vpop.f32.mrf.mxu0
  %v9728 = vadd.f32 %v9634, %v9727
  %v9729 = vpop.f32.mrf.mxu0
  %v9730 = vadd.f32 %v9636, %v9729
  %9731 = vmatmul.bf16.gmra.mxu0 %v8543
  %v9732 = vpop.f32.mrf.mxu0
  %v9733 = vadd.f32 %v9639, %v9732
  %v9734 = vpop.f32.mrf.mxu0
  %v9735 = vadd.f32 %v9641, %v9734
  %9736 = vmatmul.bf16.gmra.mxu0 %v8546
  %v9737 = vpop.f32.mrf.mxu0
  %v9738 = vadd.f32 %v9644, %v9737
  %v9739 = vpop.f32.mrf.mxu0
  %v9740 = vadd.f32 %v9646, %v9739
  %9741 = vmatmul.bf16.gmra.mxu0 %v8549
  %v9742 = vpop.f32.mrf.mxu0
  %v9743 = vadd.f32 %v9649, %v9742
  %v9744 = vpop.f32.mrf.mxu0
  %v9745 = vadd.f32 %v9651, %v9744
  %9746 = vmatmul.bf16.gmra.mxu0 %v8552
  %v9747 = vpop.f32.mrf.mxu0
  %v9748 = vadd.f32 %v9654, %v9747
  %v9749 = vpop.f32.mrf.mxu0
  %v9750 = vadd.f32 %v9656, %v9749
  %9751 = vmatmul.bf16.gmra.mxu0 %v8555
  %v9752 = vpop.f32.mrf.mxu0
  %v9753 = vadd.f32 %v9659, %v9752
  %v9754 = vpop.f32.mrf.mxu0
  %v9755 = vadd.f32 %v9661, %v9754
  %9756 = vmatmul.bf16.gmra.mxu0 %v8558
  %v9757 = vpop.f32.mrf.mxu0
  %v9758 = vadd.f32 %v9664, %v9757
  %v9759 = vpop.f32.mrf.mxu0
  %v9760 = vadd.f32 %v9666, %v9759
  %9761 = vmatmul.bf16.gmra.mxu0 %v8561
  %v9762 = vpop.f32.mrf.mxu0
  %v9763 = vadd.f32 %v9669, %v9762
  %v9764 = vpop.f32.mrf.mxu0
  %v9765 = vadd.f32 %v9671, %v9764
  %9766 = vmatmul.bf16.gmra.mxu0 %v8564
  %v9767 = vpop.f32.mrf.mxu0
  %v9768 = vadd.f32 %v9674, %v9767
  %v9769 = vpop.f32.mrf.mxu0
  %v9770 = vadd.f32 %v9676, %v9769
  %9771 = vmatmul.bf16.gmra.mxu0 %v8567
  %v9772 = vpop.f32.mrf.mxu0
  %v9773 = vadd.f32 %v9679, %v9772
  %v9774 = vpop.f32.mrf.mxu0
  %v9775 = vadd.f32 %v9681, %v9774
  %9776 = vmatmul.bf16.gmra.mxu0 %v8570
  %v9777 = vpop.f32.mrf.mxu0
  %v9778 = vadd.f32 %v9684, %v9777
  %v9779 = vpop.f32.mrf.mxu0
  %v9780 = vadd.f32 %v9686, %v9779
  %9781 = vmatmul.bf16.gmra.mxu0 %v8573
  %v9782 = vpop.f32.mrf.mxu0
  %v9783 = vadd.f32 %v9689, %v9782
  %v9784 = vpop.f32.mrf.mxu0
  %v9785 = vadd.f32 %v9691, %v9784
  %9786 = vmatmul.bf16.gmra.mxu0 %v8576
  %v9787 = vpop.f32.mrf.mxu0
  %v9788 = vadd.f32 %v9694, %v9787
  %v9789 = vpop.f32.mrf.mxu0
  %v9790 = vadd.f32 %v9696, %v9789
  %9791 = vmatmul.bf16.gmra.mxu0 %v8579
  %v9792 = vpop.f32.mrf.mxu0
  %v9793 = vadd.f32 %v9699, %v9792
  %v9794 = vpop.f32.mrf.mxu0
  %v9795 = vadd.f32 %v9701, %v9794
  %9796 = vmatmul.bf16.gmra.mxu0 %v8582
  %v9797 = vpop.f32.mrf.mxu0
  %v9798 = vadd.f32 %v9704, %v9797
  %v9799 = vpop.f32.mrf.mxu0
  %v9800 = vadd.f32 %v9706, %v9799
  %9801 = vmatmul.bf16.gmra.mxu0 %v8585
  %v9802 = vpop.f32.mrf.mxu0
  %v9803 = vadd.f32 %v9709, %v9802
  %v9804 = vpop.f32.mrf.mxu0
  %v9805 = vadd.f32 %v9711, %v9804
  %9806 = vmatmul.bf16.gmra.mxu0 %v8588
  %v9807 = vpop.f32.mrf.mxu0
  %v9808 = vadd.f32 %v9714, %v9807
  %v9809 = vpop.f32.mrf.mxu0
  %v9810 = vadd.f32 %v9716, %v9809
  %9811 = vdwg.mxu0
  %vm9812 = vcmask 400384
  %v9813 = vsel %vm9812, %v9728, 0.0
  %9814 = vadd.xlane.f32.xlu0 %v9813
  %v9815 = vpop.xlane.xlu0 %9814
  %v9816 = vsel %vm9812, %v9730, 0.0
  %9817 = vadd.xlane.f32.xlu0 %v9816
  %v9818 = vpop.xlane.xlu0 %9817
  %v9819 = vsel %vm9812, %v9733, 0.0
  %9820 = vadd.xlane.f32.xlu0 %v9819
  %v9821 = vpop.xlane.xlu0 %9820
  %v9822 = vsel %vm9812, %v9735, 0.0
  %9823 = vadd.xlane.f32.xlu0 %v9822
  %v9824 = vpop.xlane.xlu0 %9823
  %v9825 = vsel %vm9812, %v9738, 0.0
  %9826 = vadd.xlane.f32.xlu0 %v9825
  %v9827 = vpop.xlane.xlu0 %9826
  %v9828 = vsel %vm9812, %v9740, 0.0
  %9829 = vadd.xlane.f32.xlu0 %v9828
  %v9830 = vpop.xlane.xlu0 %9829
  %v9831 = vsel %vm9812, %v9743, 0.0
  %9832 = vadd.xlane.f32.xlu0 %v9831
  %v9833 = vpop.xlane.xlu0 %9832
  %v9834 = vsel %vm9812, %v9745, 0.0
  %9835 = vadd.xlane.f32.xlu0 %v9834
  %v9836 = vpop.xlane.xlu0 %9835
  %v9837 = vsel %vm9812, %v9748, 0.0
  %9838 = vadd.xlane.f32.xlu0 %v9837
  %v9839 = vpop.xlane.xlu0 %9838
  %v9840 = vsel %vm9812, %v9750, 0.0
  %9841 = vadd.xlane.f32.xlu0 %v9840
  %v9842 = vpop.xlane.xlu0 %9841
  %v9843 = vsel %vm9812, %v9753, 0.0
  %9844 = vadd.xlane.f32.xlu0 %v9843
  %v9845 = vpop.xlane.xlu0 %9844
  %v9846 = vsel %vm9812, %v9755, 0.0
  %9847 = vadd.xlane.f32.xlu0 %v9846
  %v9848 = vpop.xlane.xlu0 %9847
  %v9849 = vsel %vm9812, %v9758, 0.0
  %9850 = vadd.xlane.f32.xlu0 %v9849
  %v9851 = vpop.xlane.xlu0 %9850
  %v9852 = vsel %vm9812, %v9760, 0.0
  %9853 = vadd.xlane.f32.xlu0 %v9852
  %v9854 = vpop.xlane.xlu0 %9853
  %v9855 = vsel %vm9812, %v9763, 0.0
  %9856 = vadd.xlane.f32.xlu0 %v9855
  %v9857 = vpop.xlane.xlu0 %9856
  %v9858 = vsel %vm9812, %v9765, 0.0
  %9859 = vadd.xlane.f32.xlu0 %v9858
  %v9860 = vpop.xlane.xlu0 %9859
  %v9861 = vsel %vm9812, %v9768, 0.0
  %9862 = vadd.xlane.f32.xlu0 %v9861
  %v9863 = vpop.xlane.xlu0 %9862
  %v9864 = vsel %vm9812, %v9770, 0.0
  %9865 = vadd.xlane.f32.xlu0 %v9864
  %v9866 = vpop.xlane.xlu0 %9865
  %v9867 = vsel %vm9812, %v9773, 0.0
  %9868 = vadd.xlane.f32.xlu0 %v9867
  %v9869 = vpop.xlane.xlu0 %9868
  %v9870 = vsel %vm9812, %v9775, 0.0
  %9871 = vadd.xlane.f32.xlu0 %v9870
  %v9872 = vpop.xlane.xlu0 %9871
  %v9873 = vsel %vm9812, %v9778, 0.0
  %9874 = vadd.xlane.f32.xlu0 %v9873
  %v9875 = vpop.xlane.xlu0 %9874
  %v9876 = vsel %vm9812, %v9780, 0.0
  %9877 = vadd.xlane.f32.xlu0 %v9876
  %v9878 = vpop.xlane.xlu0 %9877
  %v9879 = vsel %vm9812, %v9783, 0.0
  %9880 = vadd.xlane.f32.xlu0 %v9879
  %v9881 = vpop.xlane.xlu0 %9880
  %v9882 = vsel %vm9812, %v9785, 0.0
  %9883 = vadd.xlane.f32.xlu0 %v9882
  %v9884 = vpop.xlane.xlu0 %9883
  %v9885 = vsel %vm9812, %v9788, 0.0
  %9886 = vadd.xlane.f32.xlu0 %v9885
  %v9887 = vpop.xlane.xlu0 %9886
  %v9888 = vsel %vm9812, %v9790, 0.0
  %9889 = vadd.xlane.f32.xlu0 %v9888
  %v9890 = vpop.xlane.xlu0 %9889
  %v9891 = vsel %vm9812, %v9793, 0.0
  %9892 = vadd.xlane.f32.xlu0 %v9891
  %v9893 = vpop.xlane.xlu0 %9892
  %v9894 = vsel %vm9812, %v9795, 0.0
  %9895 = vadd.xlane.f32.xlu0 %v9894
  %v9896 = vpop.xlane.xlu0 %9895
  %v9897 = vsel %vm9812, %v9798, 0.0
  %9898 = vadd.xlane.f32.xlu0 %v9897
  %v9899 = vpop.xlane.xlu0 %9898
  %v9900 = vsel %vm9812, %v9800, 0.0
  %9901 = vadd.xlane.f32.xlu0 %v9900
  %v9902 = vpop.xlane.xlu0 %9901
  %v9903 = vsel %vm9812, %v9803, 0.0
  %9904 = vadd.xlane.f32.xlu0 %v9903
  %v9905 = vpop.xlane.xlu0 %9904
  %v9906 = vsel %vm9812, %v9805, 0.0
  %9907 = vadd.xlane.f32.xlu0 %v9906
  %v9908 = vpop.xlane.xlu0 %9907
  %v9909 = vsel %vm9812, %v9808, 0.0
  %9910 = vadd.xlane.f32.xlu0 %v9909
  %v9911 = vpop.xlane.xlu0 %9910
  %v9912 = vsel %vm9812, %v9810, 0.0
  %9913 = vadd.xlane.f32.xlu0 %v9912
  %v9914 = vpop.xlane.xlu0 %9913
  %v9915 = vmul.f32 %v9815, 0.020408163
  %v9916 = vmul.f32 %v9818, 0.020408163
  %v9917 = vmul.f32 %v9821, 0.020408163
  %v9918 = vmul.f32 %v9824, 0.020408163
  %v9919 = vmul.f32 %v9827, 0.020408163
  %v9920 = vmul.f32 %v9830, 0.020408163
  %v9921 = vmul.f32 %v9833, 0.020408163
  %v9922 = vmul.f32 %v9836, 0.020408163
  %v9923 = vmul.f32 %v9839, 0.020408163
  %v9924 = vmul.f32 %v9842, 0.020408163
  %v9925 = vmul.f32 %v9845, 0.020408163
  %v9926 = vmul.f32 %v9848, 0.020408163
  %v9927 = vmul.f32 %v9851, 0.020408163
  %v9928 = vmul.f32 %v9854, 0.020408163
  %v9929 = vmul.f32 %v9857, 0.020408163
  %v9930 = vmul.f32 %v9860, 0.020408163
  %v9931 = vmul.f32 %v9863, 0.020408163
  %v9932 = vmul.f32 %v9866, 0.020408163
  %v9933 = vmul.f32 %v9869, 0.020408163
  %v9934 = vmul.f32 %v9872, 0.020408163
  %v9935 = vmul.f32 %v9875, 0.020408163
  %v9936 = vmul.f32 %v9878, 0.020408163
  %v9937 = vmul.f32 %v9881, 0.020408163
  %v9938 = vmul.f32 %v9884, 0.020408163
  %v9939 = vmul.f32 %v9887, 0.020408163
  %v9940 = vmul.f32 %v9890, 0.020408163
  %v9941 = vmul.f32 %v9893, 0.020408163
  %v9942 = vmul.f32 %v9896, 0.020408163
  %v9943 = vmul.f32 %v9899, 0.020408163
  %v9944 = vmul.f32 %v9902, 0.020408163
  %v9945 = vmul.f32 %v9905, 0.020408163
  %v9946 = vmul.f32 %v9908, 0.020408163
  %v9947 = vmul.f32 %v9911, 0.020408163
  %v9948 = vmul.f32 %v9914, 0.020408163
  %v9949 = vmul.f32 %v9728, %v9728
  %v9950 = vmul.f32 %v9730, %v9730
  %v9951 = vmul.f32 %v9733, %v9733
  %v9952 = vmul.f32 %v9735, %v9735
  %v9953 = vmul.f32 %v9738, %v9738
  %v9954 = vmul.f32 %v9740, %v9740
  %v9955 = vmul.f32 %v9743, %v9743
  %v9956 = vmul.f32 %v9745, %v9745
  %v9957 = vmul.f32 %v9748, %v9748
  %v9958 = vmul.f32 %v9750, %v9750
  %v9959 = vmul.f32 %v9753, %v9753
  %v9960 = vmul.f32 %v9755, %v9755
  %v9961 = vmul.f32 %v9758, %v9758
  %v9962 = vmul.f32 %v9760, %v9760
  %v9963 = vmul.f32 %v9763, %v9763
  %v9964 = vmul.f32 %v9765, %v9765
  %v9965 = vmul.f32 %v9768, %v9768
  %v9966 = vmul.f32 %v9770, %v9770
  %v9967 = vmul.f32 %v9773, %v9773
  %v9968 = vmul.f32 %v9775, %v9775
  %v9969 = vmul.f32 %v9778, %v9778
  %v9970 = vmul.f32 %v9780, %v9780
  %v9971 = vmul.f32 %v9783, %v9783
  %v9972 = vmul.f32 %v9785, %v9785
  %v9973 = vmul.f32 %v9788, %v9788
  %v9974 = vmul.f32 %v9790, %v9790
  %v9975 = vmul.f32 %v9793, %v9793
  %v9976 = vmul.f32 %v9795, %v9795
  %v9977 = vmul.f32 %v9798, %v9798
  %v9978 = vmul.f32 %v9800, %v9800
  %v9979 = vmul.f32 %v9803, %v9803
  %v9980 = vmul.f32 %v9805, %v9805
  %v9981 = vmul.f32 %v9808, %v9808
  %v9982 = vmul.f32 %v9810, %v9810
  %v9983 = vsel %vm9812, %v9949, 0.0
  %9984 = vadd.xlane.f32.xlu0 %v9983
  %v9985 = vpop.xlane.xlu0 %9984
  %v9986 = vsel %vm9812, %v9950, 0.0
  %9987 = vadd.xlane.f32.xlu0 %v9986
  %v9988 = vpop.xlane.xlu0 %9987
  %v9989 = vsel %vm9812, %v9951, 0.0
  %9990 = vadd.xlane.f32.xlu0 %v9989
  %v9991 = vpop.xlane.xlu0 %9990
  %v9992 = vsel %vm9812, %v9952, 0.0
  %9993 = vadd.xlane.f32.xlu0 %v9992
  %v9994 = vpop.xlane.xlu0 %9993
  %v9995 = vsel %vm9812, %v9953, 0.0
  %9996 = vadd.xlane.f32.xlu0 %v9995
  %v9997 = vpop.xlane.xlu0 %9996
  %v9998 = vsel %vm9812, %v9954, 0.0
  %9999 = vadd.xlane.f32.xlu0 %v9998
  %v10000 = vpop.xlane.xlu0 %9999
  %v10001 = vsel %vm9812, %v9955, 0.0
  %10002 = vadd.xlane.f32.xlu0 %v10001
  %v10003 = vpop.xlane.xlu0 %10002
  %v10004 = vsel %vm9812, %v9956, 0.0
  %10005 = vadd.xlane.f32.xlu0 %v10004
  %v10006 = vpop.xlane.xlu0 %10005
  %v10007 = vsel %vm9812, %v9957, 0.0
  %10008 = vadd.xlane.f32.xlu0 %v10007
  %v10009 = vpop.xlane.xlu0 %10008
  %v10010 = vsel %vm9812, %v9958, 0.0
  %10011 = vadd.xlane.f32.xlu0 %v10010
  %v10012 = vpop.xlane.xlu0 %10011
  %v10013 = vsel %vm9812, %v9959, 0.0
  %10014 = vadd.xlane.f32.xlu0 %v10013
  %v10015 = vpop.xlane.xlu0 %10014
  %v10016 = vsel %vm9812, %v9960, 0.0
  %10017 = vadd.xlane.f32.xlu0 %v10016
  %v10018 = vpop.xlane.xlu0 %10017
  %v10019 = vsel %vm9812, %v9961, 0.0
  %10020 = vadd.xlane.f32.xlu0 %v10019
  %v10021 = vpop.xlane.xlu0 %10020
  %v10022 = vsel %vm9812, %v9962, 0.0
  %10023 = vadd.xlane.f32.xlu0 %v10022
  %v10024 = vpop.xlane.xlu0 %10023
  %v10025 = vsel %vm9812, %v9963, 0.0
  %10026 = vadd.xlane.f32.xlu0 %v10025
  %v10027 = vpop.xlane.xlu0 %10026
  %v10028 = vsel %vm9812, %v9964, 0.0
  %10029 = vadd.xlane.f32.xlu0 %v10028
  %v10030 = vpop.xlane.xlu0 %10029
  %v10031 = vsel %vm9812, %v9965, 0.0
  %10032 = vadd.xlane.f32.xlu0 %v10031
  %v10033 = vpop.xlane.xlu0 %10032
  %v10034 = vsel %vm9812, %v9966, 0.0
  %10035 = vadd.xlane.f32.xlu0 %v10034
  %v10036 = vpop.xlane.xlu0 %10035
  %v10037 = vsel %vm9812, %v9967, 0.0
  %10038 = vadd.xlane.f32.xlu0 %v10037
  %v10039 = vpop.xlane.xlu0 %10038
  %v10040 = vsel %vm9812, %v9968, 0.0
  %10041 = vadd.xlane.f32.xlu0 %v10040
  %v10042 = vpop.xlane.xlu0 %10041
  %v10043 = vsel %vm9812, %v9969, 0.0
  %10044 = vadd.xlane.f32.xlu0 %v10043
  %v10045 = vpop.xlane.xlu0 %10044
  %v10046 = vsel %vm9812, %v9970, 0.0
  %10047 = vadd.xlane.f32.xlu0 %v10046
  %v10048 = vpop.xlane.xlu0 %10047
  %v10049 = vsel %vm9812, %v9971, 0.0
  %10050 = vadd.xlane.f32.xlu0 %v10049
  %v10051 = vpop.xlane.xlu0 %10050
  %v10052 = vsel %vm9812, %v9972, 0.0
  %10053 = vadd.xlane.f32.xlu0 %v10052
  %v10054 = vpop.xlane.xlu0 %10053
  %v10055 = vsel %vm9812, %v9973, 0.0
  %10056 = vadd.xlane.f32.xlu0 %v10055
  %v10057 = vpop.xlane.xlu0 %10056
  %v10058 = vsel %vm9812, %v9974, 0.0
  %10059 = vadd.xlane.f32.xlu0 %v10058
  %v10060 = vpop.xlane.xlu0 %10059
  %v10061 = vsel %vm9812, %v9975, 0.0
  %10062 = vadd.xlane.f32.xlu0 %v10061
  %v10063 = vpop.xlane.xlu0 %10062
  %v10064 = vsel %vm9812, %v9976, 0.0
  %10065 = vadd.xlane.f32.xlu0 %v10064
  %v10066 = vpop.xlane.xlu0 %10065
  %v10067 = vsel %vm9812, %v9977, 0.0
  %10068 = vadd.xlane.f32.xlu0 %v10067
  %v10069 = vpop.xlane.xlu0 %10068
  %v10070 = vsel %vm9812, %v9978, 0.0
  %10071 = vadd.xlane.f32.xlu0 %v10070
  %v10072 = vpop.xlane.xlu0 %10071
  %v10073 = vsel %vm9812, %v9979, 0.0
  %10074 = vadd.xlane.f32.xlu0 %v10073
  %v10075 = vpop.xlane.xlu0 %10074
  %v10076 = vsel %vm9812, %v9980, 0.0
  %10077 = vadd.xlane.f32.xlu0 %v10076
  %v10078 = vpop.xlane.xlu0 %10077
  %v10079 = vsel %vm9812, %v9981, 0.0
  %10080 = vadd.xlane.f32.xlu0 %v10079
  %v10081 = vpop.xlane.xlu0 %10080
  %v10082 = vsel %vm9812, %v9982, 0.0
  %10083 = vadd.xlane.f32.xlu0 %v10082
  %v10084 = vpop.xlane.xlu0 %10083
  %v10085 = vmul.f32 %v9985, 0.020408163
  %v10086 = vmul.f32 %v9988, 0.020408163
  %v10087 = vmul.f32 %v9991, 0.020408163
  %v10088 = vmul.f32 %v9994, 0.020408163
  %v10089 = vmul.f32 %v9997, 0.020408163
  %v10090 = vmul.f32 %v10000, 0.020408163
  %v10091 = vmul.f32 %v10003, 0.020408163
  %v10092 = vmul.f32 %v10006, 0.020408163
  %v10093 = vmul.f32 %v10009, 0.020408163
  %v10094 = vmul.f32 %v10012, 0.020408163
  %v10095 = vmul.f32 %v10015, 0.020408163
  %v10096 = vmul.f32 %v10018, 0.020408163
  %v10097 = vmul.f32 %v10021, 0.020408163
  %v10098 = vmul.f32 %v10024, 0.020408163
  %v10099 = vmul.f32 %v10027, 0.020408163
  %v10100 = vmul.f32 %v10030, 0.020408163
  %v10101 = vmul.f32 %v10033, 0.020408163
  %v10102 = vmul.f32 %v10036, 0.020408163
  %v10103 = vmul.f32 %v10039, 0.020408163
  %v10104 = vmul.f32 %v10042, 0.020408163
  %v10105 = vmul.f32 %v10045, 0.020408163
  %v10106 = vmul.f32 %v10048, 0.020408163
  %v10107 = vmul.f32 %v10051, 0.020408163
  %v10108 = vmul.f32 %v10054, 0.020408163
  %v10109 = vmul.f32 %v10057, 0.020408163
  %v10110 = vmul.f32 %v10060, 0.020408163
  %v10111 = vmul.f32 %v10063, 0.020408163
  %v10112 = vmul.f32 %v10066, 0.020408163
  %v10113 = vmul.f32 %v10069, 0.020408163
  %v10114 = vmul.f32 %v10072, 0.020408163
  %v10115 = vmul.f32 %v10075, 0.020408163
  %v10116 = vmul.f32 %v10078, 0.020408163
  %v10117 = vmul.f32 %v10081, 0.020408163
  %v10118 = vmul.f32 %v10084, 0.020408163
  %v10119 = vmul.f32 %v9915, %v9915
  %v10120 = vmul.f32 %v9916, %v9916
  %v10121 = vmul.f32 %v9917, %v9917
  %v10122 = vmul.f32 %v9918, %v9918
  %v10123 = vmul.f32 %v9919, %v9919
  %v10124 = vmul.f32 %v9920, %v9920
  %v10125 = vmul.f32 %v9921, %v9921
  %v10126 = vmul.f32 %v9922, %v9922
  %v10127 = vmul.f32 %v9923, %v9923
  %v10128 = vmul.f32 %v9924, %v9924
  %v10129 = vmul.f32 %v9925, %v9925
  %v10130 = vmul.f32 %v9926, %v9926
  %v10131 = vmul.f32 %v9927, %v9927
  %v10132 = vmul.f32 %v9928, %v9928
  %v10133 = vmul.f32 %v9929, %v9929
  %v10134 = vmul.f32 %v9930, %v9930
  %v10135 = vmul.f32 %v9931, %v9931
  %v10136 = vmul.f32 %v9932, %v9932
  %v10137 = vmul.f32 %v9933, %v9933
  %v10138 = vmul.f32 %v9934, %v9934
  %v10139 = vmul.f32 %v9935, %v9935
  %v10140 = vmul.f32 %v9936, %v9936
  %v10141 = vmul.f32 %v9937, %v9937
  %v10142 = vmul.f32 %v9938, %v9938
  %v10143 = vmul.f32 %v9939, %v9939
  %v10144 = vmul.f32 %v9940, %v9940
  %v10145 = vmul.f32 %v9941, %v9941
  %v10146 = vmul.f32 %v9942, %v9942
  %v10147 = vmul.f32 %v9943, %v9943
  %v10148 = vmul.f32 %v9944, %v9944
  %v10149 = vmul.f32 %v9945, %v9945
  %v10150 = vmul.f32 %v9946, %v9946
  %v10151 = vmul.f32 %v9947, %v9947
  %v10152 = vmul.f32 %v9948, %v9948
  %v10153 = vsub.f32 %v10085, %v10119
  %v10154 = vsub.f32 %v10086, %v10120
  %v10155 = vsub.f32 %v10087, %v10121
  %v10156 = vsub.f32 %v10088, %v10122
  %v10157 = vsub.f32 %v10089, %v10123
  %v10158 = vsub.f32 %v10090, %v10124
  %v10159 = vsub.f32 %v10091, %v10125
  %v10160 = vsub.f32 %v10092, %v10126
  %v10161 = vsub.f32 %v10093, %v10127
  %v10162 = vsub.f32 %v10094, %v10128
  %v10163 = vsub.f32 %v10095, %v10129
  %v10164 = vsub.f32 %v10096, %v10130
  %v10165 = vsub.f32 %v10097, %v10131
  %v10166 = vsub.f32 %v10098, %v10132
  %v10167 = vsub.f32 %v10099, %v10133
  %v10168 = vsub.f32 %v10100, %v10134
  %v10169 = vsub.f32 %v10101, %v10135
  %v10170 = vsub.f32 %v10102, %v10136
  %v10171 = vsub.f32 %v10103, %v10137
  %v10172 = vsub.f32 %v10104, %v10138
  %v10173 = vsub.f32 %v10105, %v10139
  %v10174 = vsub.f32 %v10106, %v10140
  %v10175 = vsub.f32 %v10107, %v10141
  %v10176 = vsub.f32 %v10108, %v10142
  %v10177 = vsub.f32 %v10109, %v10143
  %v10178 = vsub.f32 %v10110, %v10144
  %v10179 = vsub.f32 %v10111, %v10145
  %v10180 = vsub.f32 %v10112, %v10146
  %v10181 = vsub.f32 %v10113, %v10147
  %v10182 = vsub.f32 %v10114, %v10148
  %v10183 = vsub.f32 %v10115, %v10149
  %v10184 = vsub.f32 %v10116, %v10150
  %v10185 = vsub.f32 %v10117, %v10151
  %v10186 = vsub.f32 %v10118, %v10152
  %v10187 = vmax.f32 %v10153, 0.0
  %v10188 = vmax.f32 %v10154, 0.0
  %v10189 = vmax.f32 %v10155, 0.0
  %v10190 = vmax.f32 %v10156, 0.0
  %v10191 = vmax.f32 %v10157, 0.0
  %v10192 = vmax.f32 %v10158, 0.0
  %v10193 = vmax.f32 %v10159, 0.0
  %v10194 = vmax.f32 %v10160, 0.0
  %v10195 = vmax.f32 %v10161, 0.0
  %v10196 = vmax.f32 %v10162, 0.0
  %v10197 = vmax.f32 %v10163, 0.0
  %v10198 = vmax.f32 %v10164, 0.0
  %v10199 = vmax.f32 %v10165, 0.0
  %v10200 = vmax.f32 %v10166, 0.0
  %v10201 = vmax.f32 %v10167, 0.0
  %v10202 = vmax.f32 %v10168, 0.0
  %v10203 = vmax.f32 %v10169, 0.0
  %v10204 = vmax.f32 %v10170, 0.0
  %v10205 = vmax.f32 %v10171, 0.0
  %v10206 = vmax.f32 %v10172, 0.0
  %v10207 = vmax.f32 %v10173, 0.0
  %v10208 = vmax.f32 %v10174, 0.0
  %v10209 = vmax.f32 %v10175, 0.0
  %v10210 = vmax.f32 %v10176, 0.0
  %v10211 = vmax.f32 %v10177, 0.0
  %v10212 = vmax.f32 %v10178, 0.0
  %v10213 = vmax.f32 %v10179, 0.0
  %v10214 = vmax.f32 %v10180, 0.0
  %v10215 = vmax.f32 %v10181, 0.0
  %v10216 = vmax.f32 %v10182, 0.0
  %v10217 = vmax.f32 %v10183, 0.0
  %v10218 = vmax.f32 %v10184, 0.0
  %v10219 = vmax.f32 %v10185, 0.0
  %v10220 = vmax.f32 %v10186, 0.0
  %v10221 = vld [vmem:[%s5] sm:$0xff]
  %v10222 = vld [vmem:[%s5 + $0x8] sm:$0xff]
  %v10223 = vld [vmem:[%s5 + $0x10] sm:$0xff]
  %v10224 = vld [vmem:[%s5 + $0x18] sm:$0xff]
  %v10225 = vld [vmem:[%s5 + $0x20] sm:$0xff]
  %v10226 = vld [vmem:[%s5 + $0x28] sm:$0xff]
  %v10227 = vld [vmem:[%s5 + $0x30] sm:$0xff]
  %v10228 = vld [vmem:[%s5 + $0x38] sm:$0xff]
  %v10229 = vld [vmem:[%s5 + $0x40] sm:$0xff]
  %v10230 = vld [vmem:[%s5 + $0x48] sm:$0xff]
  %v10231 = vld [vmem:[%s5 + $0x50] sm:$0xff]
  %v10232 = vld [vmem:[%s5 + $0x58] sm:$0xff]
  %v10233 = vld [vmem:[%s5 + $0x60] sm:$0xff]
  %v10234 = vld [vmem:[%s5 + $0x68] sm:$0xff]
  %v10235 = vld [vmem:[%s5 + $0x70] sm:$0xff]
  %v10236 = vld [vmem:[%s5 + $0x78] sm:$0xff]
  %v10237 = vld [vmem:[%s5 + $0x80] sm:$0xff]
  %v10238 = vld [vmem:[%s5 + $0x88] sm:$0xff]
  %v10239 = vld [vmem:[%s5 + $0x90] sm:$0xff]
  %v10240 = vld [vmem:[%s5 + $0x98] sm:$0xff]
  %v10241 = vld [vmem:[%s5 + $0xa0] sm:$0xff]
  %v10242 = vld [vmem:[%s5 + $0xa8] sm:$0xff]
  %v10243 = vld [vmem:[%s5 + $0xb0] sm:$0xff]
  %v10244 = vld [vmem:[%s5 + $0xb8] sm:$0xff]
  %v10245 = vld [vmem:[%s5 + $0xc0] sm:$0xff]
  %v10246 = vld [vmem:[%s5 + $0xc8] sm:$0xff]
  %v10247 = vld [vmem:[%s5 + $0xd0] sm:$0xff]
  %v10248 = vld [vmem:[%s5 + $0xd8] sm:$0xff]
  %v10249 = vld [vmem:[%s5 + $0xe0] sm:$0xff]
  %v10250 = vld [vmem:[%s5 + $0xe8] sm:$0xff]
  %v10251 = vld [vmem:[%s5 + $0xf0] sm:$0xff]
  %v10252 = vld [vmem:[%s5 + $0xf8] sm:$0xff]
  %v10253 = vld [vmem:[%s5 + $0x100] sm:$0xff]
  %v10254 = vld [vmem:[%s5 + $0x108] sm:$0xff]
  %v10255 = vadd.f32 %v10187, 1e-05
  %v10256 = vadd.f32 %v10188, 1e-05
  %v10257 = vadd.f32 %v10189, 1e-05
  %v10258 = vadd.f32 %v10190, 1e-05
  %v10259 = vadd.f32 %v10191, 1e-05
  %v10260 = vadd.f32 %v10192, 1e-05
  %v10261 = vadd.f32 %v10193, 1e-05
  %v10262 = vadd.f32 %v10194, 1e-05
  %v10263 = vadd.f32 %v10195, 1e-05
  %v10264 = vadd.f32 %v10196, 1e-05
  %v10265 = vadd.f32 %v10197, 1e-05
  %v10266 = vadd.f32 %v10198, 1e-05
  %v10267 = vadd.f32 %v10199, 1e-05
  %v10268 = vadd.f32 %v10200, 1e-05
  %v10269 = vadd.f32 %v10201, 1e-05
  %v10270 = vadd.f32 %v10202, 1e-05
  %v10271 = vadd.f32 %v10203, 1e-05
  %v10272 = vadd.f32 %v10204, 1e-05
  %v10273 = vadd.f32 %v10205, 1e-05
  %v10274 = vadd.f32 %v10206, 1e-05
  %v10275 = vadd.f32 %v10207, 1e-05
  %v10276 = vadd.f32 %v10208, 1e-05
  %v10277 = vadd.f32 %v10209, 1e-05
  %v10278 = vadd.f32 %v10210, 1e-05
  %v10279 = vadd.f32 %v10211, 1e-05
  %v10280 = vadd.f32 %v10212, 1e-05
  %v10281 = vadd.f32 %v10213, 1e-05
  %v10282 = vadd.f32 %v10214, 1e-05
  %v10283 = vadd.f32 %v10215, 1e-05
  %v10284 = vadd.f32 %v10216, 1e-05
  %v10285 = vadd.f32 %v10217, 1e-05
  %v10286 = vadd.f32 %v10218, 1e-05
  %v10287 = vadd.f32 %v10219, 1e-05
  %v10288 = vadd.f32 %v10220, 1e-05
  %v10289 = vrsqrt.pop %v10255
  %v10290 = vmul.f32 %v10289, %v10255
  %v10291 = vmul.f32 %v10290, %v10289
  %v10292 = vmul.f32 0.5, %v10291
  %v10293 = vsub.f32 1.5, %v10292
  %v10294 = vmul.f32 %v10289, %v10293
  %vm10295 = vweird.f32 %v10255
  %vm10296 = vweird.f32 %v10289
  %vm10297 = vmor %vm10295, %vm10296
  %v10298 = vsel %vm10297, %v10289, %v10294
  %v10299 = vrsqrt.pop %v10256
  %v10300 = vmul.f32 %v10299, %v10256
  %v10301 = vmul.f32 %v10300, %v10299
  %v10302 = vmul.f32 0.5, %v10301
  %v10303 = vsub.f32 1.5, %v10302
  %v10304 = vmul.f32 %v10299, %v10303
  %vm10305 = vweird.f32 %v10256
  %vm10306 = vweird.f32 %v10299
  %vm10307 = vmor %vm10305, %vm10306
  %v10308 = vsel %vm10307, %v10299, %v10304
  %v10309 = vrsqrt.pop %v10257
  %v10310 = vmul.f32 %v10309, %v10257
  %v10311 = vmul.f32 %v10310, %v10309
  %v10312 = vmul.f32 0.5, %v10311
  %v10313 = vsub.f32 1.5, %v10312
  %v10314 = vmul.f32 %v10309, %v10313
  %vm10315 = vweird.f32 %v10257
  %vm10316 = vweird.f32 %v10309
  %vm10317 = vmor %vm10315, %vm10316
  %v10318 = vsel %vm10317, %v10309, %v10314
  %v10319 = vrsqrt.pop %v10258
  %v10320 = vmul.f32 %v10319, %v10258
  %v10321 = vmul.f32 %v10320, %v10319
  %v10322 = vmul.f32 0.5, %v10321
  %v10323 = vsub.f32 1.5, %v10322
  %v10324 = vmul.f32 %v10319, %v10323
  %vm10325 = vweird.f32 %v10258
  %vm10326 = vweird.f32 %v10319
  %vm10327 = vmor %vm10325, %vm10326
  %v10328 = vsel %vm10327, %v10319, %v10324
  %v10329 = vrsqrt.pop %v10259
  %v10330 = vmul.f32 %v10329, %v10259
  %v10331 = vmul.f32 %v10330, %v10329
  %v10332 = vmul.f32 0.5, %v10331
  %v10333 = vsub.f32 1.5, %v10332
  %v10334 = vmul.f32 %v10329, %v10333
  %vm10335 = vweird.f32 %v10259
  %vm10336 = vweird.f32 %v10329
  %vm10337 = vmor %vm10335, %vm10336
  %v10338 = vsel %vm10337, %v10329, %v10334
  %v10339 = vrsqrt.pop %v10260
  %v10340 = vmul.f32 %v10339, %v10260
  %v10341 = vmul.f32 %v10340, %v10339
  %v10342 = vmul.f32 0.5, %v10341
  %v10343 = vsub.f32 1.5, %v10342
  %v10344 = vmul.f32 %v10339, %v10343
  %vm10345 = vweird.f32 %v10260
  %vm10346 = vweird.f32 %v10339
  %vm10347 = vmor %vm10345, %vm10346
  %v10348 = vsel %vm10347, %v10339, %v10344
  %v10349 = vrsqrt.pop %v10261
  %v10350 = vmul.f32 %v10349, %v10261
  %v10351 = vmul.f32 %v10350, %v10349
  %v10352 = vmul.f32 0.5, %v10351
  %v10353 = vsub.f32 1.5, %v10352
  %v10354 = vmul.f32 %v10349, %v10353
  %vm10355 = vweird.f32 %v10261
  %vm10356 = vweird.f32 %v10349
  %vm10357 = vmor %vm10355, %vm10356
  %v10358 = vsel %vm10357, %v10349, %v10354
  %v10359 = vrsqrt.pop %v10262
  %v10360 = vmul.f32 %v10359, %v10262
  %v10361 = vmul.f32 %v10360, %v10359
  %v10362 = vmul.f32 0.5, %v10361
  %v10363 = vsub.f32 1.5, %v10362
  %v10364 = vmul.f32 %v10359, %v10363
  %vm10365 = vweird.f32 %v10262
  %vm10366 = vweird.f32 %v10359
  %vm10367 = vmor %vm10365, %vm10366
  %v10368 = vsel %vm10367, %v10359, %v10364
  %v10369 = vrsqrt.pop %v10263
  %v10370 = vmul.f32 %v10369, %v10263
  %v10371 = vmul.f32 %v10370, %v10369
  %v10372 = vmul.f32 0.5, %v10371
  %v10373 = vsub.f32 1.5, %v10372
  %v10374 = vmul.f32 %v10369, %v10373
  %vm10375 = vweird.f32 %v10263
  %vm10376 = vweird.f32 %v10369
  %vm10377 = vmor %vm10375, %vm10376
  %v10378 = vsel %vm10377, %v10369, %v10374
  %v10379 = vrsqrt.pop %v10264
  %v10380 = vmul.f32 %v10379, %v10264
  %v10381 = vmul.f32 %v10380, %v10379
  %v10382 = vmul.f32 0.5, %v10381
  %v10383 = vsub.f32 1.5, %v10382
  %v10384 = vmul.f32 %v10379, %v10383
  %vm10385 = vweird.f32 %v10264
  %vm10386 = vweird.f32 %v10379
  %vm10387 = vmor %vm10385, %vm10386
  %v10388 = vsel %vm10387, %v10379, %v10384
  %v10389 = vrsqrt.pop %v10265
  %v10390 = vmul.f32 %v10389, %v10265
  %v10391 = vmul.f32 %v10390, %v10389
  %v10392 = vmul.f32 0.5, %v10391
  %v10393 = vsub.f32 1.5, %v10392
  %v10394 = vmul.f32 %v10389, %v10393
  %vm10395 = vweird.f32 %v10265
  %vm10396 = vweird.f32 %v10389
  %vm10397 = vmor %vm10395, %vm10396
  %v10398 = vsel %vm10397, %v10389, %v10394
  %v10399 = vrsqrt.pop %v10266
  %v10400 = vmul.f32 %v10399, %v10266
  %v10401 = vmul.f32 %v10400, %v10399
  %v10402 = vmul.f32 0.5, %v10401
  %v10403 = vsub.f32 1.5, %v10402
  %v10404 = vmul.f32 %v10399, %v10403
  %vm10405 = vweird.f32 %v10266
  %vm10406 = vweird.f32 %v10399
  %vm10407 = vmor %vm10405, %vm10406
  %v10408 = vsel %vm10407, %v10399, %v10404
  %v10409 = vrsqrt.pop %v10267
  %v10410 = vmul.f32 %v10409, %v10267
  %v10411 = vmul.f32 %v10410, %v10409
  %v10412 = vmul.f32 0.5, %v10411
  %v10413 = vsub.f32 1.5, %v10412
  %v10414 = vmul.f32 %v10409, %v10413
  %vm10415 = vweird.f32 %v10267
  %vm10416 = vweird.f32 %v10409
  %vm10417 = vmor %vm10415, %vm10416
  %v10418 = vsel %vm10417, %v10409, %v10414
  %v10419 = vrsqrt.pop %v10268
  %v10420 = vmul.f32 %v10419, %v10268
  %v10421 = vmul.f32 %v10420, %v10419
  %v10422 = vmul.f32 0.5, %v10421
  %v10423 = vsub.f32 1.5, %v10422
  %v10424 = vmul.f32 %v10419, %v10423
  %vm10425 = vweird.f32 %v10268
  %vm10426 = vweird.f32 %v10419
  %vm10427 = vmor %vm10425, %vm10426
  %v10428 = vsel %vm10427, %v10419, %v10424
  %v10429 = vrsqrt.pop %v10269
  %v10430 = vmul.f32 %v10429, %v10269
  %v10431 = vmul.f32 %v10430, %v10429
  %v10432 = vmul.f32 0.5, %v10431
  %v10433 = vsub.f32 1.5, %v10432
  %v10434 = vmul.f32 %v10429, %v10433
  %vm10435 = vweird.f32 %v10269
  %vm10436 = vweird.f32 %v10429
  %vm10437 = vmor %vm10435, %vm10436
  %v10438 = vsel %vm10437, %v10429, %v10434
  %v10439 = vrsqrt.pop %v10270
  %v10440 = vmul.f32 %v10439, %v10270
  %v10441 = vmul.f32 %v10440, %v10439
  %v10442 = vmul.f32 0.5, %v10441
  %v10443 = vsub.f32 1.5, %v10442
  %v10444 = vmul.f32 %v10439, %v10443
  %vm10445 = vweird.f32 %v10270
  %vm10446 = vweird.f32 %v10439
  %vm10447 = vmor %vm10445, %vm10446
  %v10448 = vsel %vm10447, %v10439, %v10444
  %v10449 = vrsqrt.pop %v10271
  %v10450 = vmul.f32 %v10449, %v10271
  %v10451 = vmul.f32 %v10450, %v10449
  %v10452 = vmul.f32 0.5, %v10451
  %v10453 = vsub.f32 1.5, %v10452
  %v10454 = vmul.f32 %v10449, %v10453
  %vm10455 = vweird.f32 %v10271
  %vm10456 = vweird.f32 %v10449
  %vm10457 = vmor %vm10455, %vm10456
  %v10458 = vsel %vm10457, %v10449, %v10454
  %v10459 = vrsqrt.pop %v10272
  %v10460 = vmul.f32 %v10459, %v10272
  %v10461 = vmul.f32 %v10460, %v10459
  %v10462 = vmul.f32 0.5, %v10461
  %v10463 = vsub.f32 1.5, %v10462
  %v10464 = vmul.f32 %v10459, %v10463
  %vm10465 = vweird.f32 %v10272
  %vm10466 = vweird.f32 %v10459
  %vm10467 = vmor %vm10465, %vm10466
  %v10468 = vsel %vm10467, %v10459, %v10464
  %v10469 = vrsqrt.pop %v10273
  %v10470 = vmul.f32 %v10469, %v10273
  %v10471 = vmul.f32 %v10470, %v10469
  %v10472 = vmul.f32 0.5, %v10471
  %v10473 = vsub.f32 1.5, %v10472
  %v10474 = vmul.f32 %v10469, %v10473
  %vm10475 = vweird.f32 %v10273
  %vm10476 = vweird.f32 %v10469
  %vm10477 = vmor %vm10475, %vm10476
  %v10478 = vsel %vm10477, %v10469, %v10474
  %v10479 = vrsqrt.pop %v10274
  %v10480 = vmul.f32 %v10479, %v10274
  %v10481 = vmul.f32 %v10480, %v10479
  %v10482 = vmul.f32 0.5, %v10481
  %v10483 = vsub.f32 1.5, %v10482
  %v10484 = vmul.f32 %v10479, %v10483
  %vm10485 = vweird.f32 %v10274
  %vm10486 = vweird.f32 %v10479
  %vm10487 = vmor %vm10485, %vm10486
  %v10488 = vsel %vm10487, %v10479, %v10484
  %v10489 = vrsqrt.pop %v10275
  %v10490 = vmul.f32 %v10489, %v10275
  %v10491 = vmul.f32 %v10490, %v10489
  %v10492 = vmul.f32 0.5, %v10491
  %v10493 = vsub.f32 1.5, %v10492
  %v10494 = vmul.f32 %v10489, %v10493
  %vm10495 = vweird.f32 %v10275
  %vm10496 = vweird.f32 %v10489
  %vm10497 = vmor %vm10495, %vm10496
  %v10498 = vsel %vm10497, %v10489, %v10494
  %v10499 = vrsqrt.pop %v10276
  %v10500 = vmul.f32 %v10499, %v10276
  %v10501 = vmul.f32 %v10500, %v10499
  %v10502 = vmul.f32 0.5, %v10501
  %v10503 = vsub.f32 1.5, %v10502
  %v10504 = vmul.f32 %v10499, %v10503
  %vm10505 = vweird.f32 %v10276
  %vm10506 = vweird.f32 %v10499
  %vm10507 = vmor %vm10505, %vm10506
  %v10508 = vsel %vm10507, %v10499, %v10504
  %v10509 = vrsqrt.pop %v10277
  %v10510 = vmul.f32 %v10509, %v10277
  %v10511 = vmul.f32 %v10510, %v10509
  %v10512 = vmul.f32 0.5, %v10511
  %v10513 = vsub.f32 1.5, %v10512
  %v10514 = vmul.f32 %v10509, %v10513
  %vm10515 = vweird.f32 %v10277
  %vm10516 = vweird.f32 %v10509
  %vm10517 = vmor %vm10515, %vm10516
  %v10518 = vsel %vm10517, %v10509, %v10514
  %v10519 = vrsqrt.pop %v10278
  %v10520 = vmul.f32 %v10519, %v10278
  %v10521 = vmul.f32 %v10520, %v10519
  %v10522 = vmul.f32 0.5, %v10521
  %v10523 = vsub.f32 1.5, %v10522
  %v10524 = vmul.f32 %v10519, %v10523
  %vm10525 = vweird.f32 %v10278
  %vm10526 = vweird.f32 %v10519
  %vm10527 = vmor %vm10525, %vm10526
  %v10528 = vsel %vm10527, %v10519, %v10524
  %v10529 = vrsqrt.pop %v10279
  %v10530 = vmul.f32 %v10529, %v10279
  %v10531 = vmul.f32 %v10530, %v10529
  %v10532 = vmul.f32 0.5, %v10531
  %v10533 = vsub.f32 1.5, %v10532
  %v10534 = vmul.f32 %v10529, %v10533
  %vm10535 = vweird.f32 %v10279
  %vm10536 = vweird.f32 %v10529
  %vm10537 = vmor %vm10535, %vm10536
  %v10538 = vsel %vm10537, %v10529, %v10534
  %v10539 = vrsqrt.pop %v10280
  %v10540 = vmul.f32 %v10539, %v10280
  %v10541 = vmul.f32 %v10540, %v10539
  %v10542 = vmul.f32 0.5, %v10541
  %v10543 = vsub.f32 1.5, %v10542
  %v10544 = vmul.f32 %v10539, %v10543
  %vm10545 = vweird.f32 %v10280
  %vm10546 = vweird.f32 %v10539
  %vm10547 = vmor %vm10545, %vm10546
  %v10548 = vsel %vm10547, %v10539, %v10544
  %v10549 = vrsqrt.pop %v10281
  %v10550 = vmul.f32 %v10549, %v10281
  %v10551 = vmul.f32 %v10550, %v10549
  %v10552 = vmul.f32 0.5, %v10551
  %v10553 = vsub.f32 1.5, %v10552
  %v10554 = vmul.f32 %v10549, %v10553
  %vm10555 = vweird.f32 %v10281
  %vm10556 = vweird.f32 %v10549
  %vm10557 = vmor %vm10555, %vm10556
  %v10558 = vsel %vm10557, %v10549, %v10554
  %v10559 = vrsqrt.pop %v10282
  %v10560 = vmul.f32 %v10559, %v10282
  %v10561 = vmul.f32 %v10560, %v10559
  %v10562 = vmul.f32 0.5, %v10561
  %v10563 = vsub.f32 1.5, %v10562
  %v10564 = vmul.f32 %v10559, %v10563
  %vm10565 = vweird.f32 %v10282
  %vm10566 = vweird.f32 %v10559
  %vm10567 = vmor %vm10565, %vm10566
  %v10568 = vsel %vm10567, %v10559, %v10564
  %v10569 = vrsqrt.pop %v10283
  %v10570 = vmul.f32 %v10569, %v10283
  %v10571 = vmul.f32 %v10570, %v10569
  %v10572 = vmul.f32 0.5, %v10571
  %v10573 = vsub.f32 1.5, %v10572
  %v10574 = vmul.f32 %v10569, %v10573
  %vm10575 = vweird.f32 %v10283
  %vm10576 = vweird.f32 %v10569
  %vm10577 = vmor %vm10575, %vm10576
  %v10578 = vsel %vm10577, %v10569, %v10574
  %v10579 = vrsqrt.pop %v10284
  %v10580 = vmul.f32 %v10579, %v10284
  %v10581 = vmul.f32 %v10580, %v10579
  %v10582 = vmul.f32 0.5, %v10581
  %v10583 = vsub.f32 1.5, %v10582
  %v10584 = vmul.f32 %v10579, %v10583
  %vm10585 = vweird.f32 %v10284
  %vm10586 = vweird.f32 %v10579
  %vm10587 = vmor %vm10585, %vm10586
  %v10588 = vsel %vm10587, %v10579, %v10584
  %v10589 = vrsqrt.pop %v10285
  %v10590 = vmul.f32 %v10589, %v10285
  %v10591 = vmul.f32 %v10590, %v10589
  %v10592 = vmul.f32 0.5, %v10591
  %v10593 = vsub.f32 1.5, %v10592
  %v10594 = vmul.f32 %v10589, %v10593
  %vm10595 = vweird.f32 %v10285
  %vm10596 = vweird.f32 %v10589
  %vm10597 = vmor %vm10595, %vm10596
  %v10598 = vsel %vm10597, %v10589, %v10594
  %v10599 = vrsqrt.pop %v10286
  %v10600 = vmul.f32 %v10599, %v10286
  %v10601 = vmul.f32 %v10600, %v10599
  %v10602 = vmul.f32 0.5, %v10601
  %v10603 = vsub.f32 1.5, %v10602
  %v10604 = vmul.f32 %v10599, %v10603
  %vm10605 = vweird.f32 %v10286
  %vm10606 = vweird.f32 %v10599
  %vm10607 = vmor %vm10605, %vm10606
  %v10608 = vsel %vm10607, %v10599, %v10604
  %v10609 = vrsqrt.pop %v10287
  %v10610 = vmul.f32 %v10609, %v10287
  %v10611 = vmul.f32 %v10610, %v10609
  %v10612 = vmul.f32 0.5, %v10611
  %v10613 = vsub.f32 1.5, %v10612
  %v10614 = vmul.f32 %v10609, %v10613
  %vm10615 = vweird.f32 %v10287
  %vm10616 = vweird.f32 %v10609
  %vm10617 = vmor %vm10615, %vm10616
  %v10618 = vsel %vm10617, %v10609, %v10614
  %v10619 = vrsqrt.pop %v10288
  %v10620 = vmul.f32 %v10619, %v10288
  %v10621 = vmul.f32 %v10620, %v10619
  %v10622 = vmul.f32 0.5, %v10621
  %v10623 = vsub.f32 1.5, %v10622
  %v10624 = vmul.f32 %v10619, %v10623
  %vm10625 = vweird.f32 %v10288
  %vm10626 = vweird.f32 %v10619
  %vm10627 = vmor %vm10625, %vm10626
  %v10628 = vsel %vm10627, %v10619, %v10624
  %v10629 = vmul.f32 %v10221, %v10298
  %v10630 = vmul.f32 %v10222, %v10308
  %v10631 = vmul.f32 %v10223, %v10318
  %v10632 = vmul.f32 %v10224, %v10328
  %v10633 = vmul.f32 %v10225, %v10338
  %v10634 = vmul.f32 %v10226, %v10348
  %v10635 = vmul.f32 %v10227, %v10358
  %v10636 = vmul.f32 %v10228, %v10368
  %v10637 = vmul.f32 %v10229, %v10378
  %v10638 = vmul.f32 %v10230, %v10388
  %v10639 = vmul.f32 %v10231, %v10398
  %v10640 = vmul.f32 %v10232, %v10408
  %v10641 = vmul.f32 %v10233, %v10418
  %v10642 = vmul.f32 %v10234, %v10428
  %v10643 = vmul.f32 %v10235, %v10438
  %v10644 = vmul.f32 %v10236, %v10448
  %v10645 = vmul.f32 %v10237, %v10458
  %v10646 = vmul.f32 %v10238, %v10468
  %v10647 = vmul.f32 %v10239, %v10478
  %v10648 = vmul.f32 %v10240, %v10488
  %v10649 = vmul.f32 %v10241, %v10498
  %v10650 = vmul.f32 %v10242, %v10508
  %v10651 = vmul.f32 %v10243, %v10518
  %v10652 = vmul.f32 %v10244, %v10528
  %v10653 = vmul.f32 %v10245, %v10538
  %v10654 = vmul.f32 %v10246, %v10548
  %v10655 = vmul.f32 %v10247, %v10558
  %v10656 = vmul.f32 %v10248, %v10568
  %v10657 = vmul.f32 %v10249, %v10578
  %v10658 = vmul.f32 %v10250, %v10588
  %v10659 = vmul.f32 %v10251, %v10598
  %v10660 = vmul.f32 %v10252, %v10608
  %v10661 = vmul.f32 %v10253, %v10618
  %v10662 = vmul.f32 %v10254, %v10628
  %v10663 = vld [vmem:[%s6] sm:$0xff]
  %v10664 = vld [vmem:[%s6 + $0x8] sm:$0xff]
  %v10665 = vld [vmem:[%s6 + $0x10] sm:$0xff]
  %v10666 = vld [vmem:[%s6 + $0x18] sm:$0xff]
  %v10667 = vld [vmem:[%s6 + $0x20] sm:$0xff]
  %v10668 = vld [vmem:[%s6 + $0x28] sm:$0xff]
  %v10669 = vld [vmem:[%s6 + $0x30] sm:$0xff]
  %v10670 = vld [vmem:[%s6 + $0x38] sm:$0xff]
  %v10671 = vld [vmem:[%s6 + $0x40] sm:$0xff]
  %v10672 = vld [vmem:[%s6 + $0x48] sm:$0xff]
  %v10673 = vld [vmem:[%s6 + $0x50] sm:$0xff]
  %v10674 = vld [vmem:[%s6 + $0x58] sm:$0xff]
  %v10675 = vld [vmem:[%s6 + $0x60] sm:$0xff]
  %v10676 = vld [vmem:[%s6 + $0x68] sm:$0xff]
  %v10677 = vld [vmem:[%s6 + $0x70] sm:$0xff]
  %v10678 = vld [vmem:[%s6 + $0x78] sm:$0xff]
  %v10679 = vld [vmem:[%s6 + $0x80] sm:$0xff]
  %v10680 = vld [vmem:[%s6 + $0x88] sm:$0xff]
  %v10681 = vld [vmem:[%s6 + $0x90] sm:$0xff]
  %v10682 = vld [vmem:[%s6 + $0x98] sm:$0xff]
  %v10683 = vld [vmem:[%s6 + $0xa0] sm:$0xff]
  %v10684 = vld [vmem:[%s6 + $0xa8] sm:$0xff]
  %v10685 = vld [vmem:[%s6 + $0xb0] sm:$0xff]
  %v10686 = vld [vmem:[%s6 + $0xb8] sm:$0xff]
  %v10687 = vld [vmem:[%s6 + $0xc0] sm:$0xff]
  %v10688 = vld [vmem:[%s6 + $0xc8] sm:$0xff]
  %v10689 = vld [vmem:[%s6 + $0xd0] sm:$0xff]
  %v10690 = vld [vmem:[%s6 + $0xd8] sm:$0xff]
  %v10691 = vld [vmem:[%s6 + $0xe0] sm:$0xff]
  %v10692 = vld [vmem:[%s6 + $0xe8] sm:$0xff]
  %v10693 = vld [vmem:[%s6 + $0xf0] sm:$0xff]
  %v10694 = vld [vmem:[%s6 + $0xf8] sm:$0xff]
  %v10695 = vld [vmem:[%s6 + $0x100] sm:$0xff]
  %v10696 = vld [vmem:[%s6 + $0x108] sm:$0xff]
  %v10697 = vmul.f32 %v9915, %v10629
  %v10698 = vmul.f32 %v9916, %v10630
  %v10699 = vmul.f32 %v9917, %v10631
  %v10700 = vmul.f32 %v9918, %v10632
  %v10701 = vmul.f32 %v9919, %v10633
  %v10702 = vmul.f32 %v9920, %v10634
  %v10703 = vmul.f32 %v9921, %v10635
  %v10704 = vmul.f32 %v9922, %v10636
  %v10705 = vmul.f32 %v9923, %v10637
  %v10706 = vmul.f32 %v9924, %v10638
  %v10707 = vmul.f32 %v9925, %v10639
  %v10708 = vmul.f32 %v9926, %v10640
  %v10709 = vmul.f32 %v9927, %v10641
  %v10710 = vmul.f32 %v9928, %v10642
  %v10711 = vmul.f32 %v9929, %v10643
  %v10712 = vmul.f32 %v9930, %v10644
  %v10713 = vmul.f32 %v9931, %v10645
  %v10714 = vmul.f32 %v9932, %v10646
  %v10715 = vmul.f32 %v9933, %v10647
  %v10716 = vmul.f32 %v9934, %v10648
  %v10717 = vmul.f32 %v9935, %v10649
  %v10718 = vmul.f32 %v9936, %v10650
  %v10719 = vmul.f32 %v9937, %v10651
  %v10720 = vmul.f32 %v9938, %v10652
  %v10721 = vmul.f32 %v9939, %v10653
  %v10722 = vmul.f32 %v9940, %v10654
  %v10723 = vmul.f32 %v9941, %v10655
  %v10724 = vmul.f32 %v9942, %v10656
  %v10725 = vmul.f32 %v9943, %v10657
  %v10726 = vmul.f32 %v9944, %v10658
  %v10727 = vmul.f32 %v9945, %v10659
  %v10728 = vmul.f32 %v9946, %v10660
  %v10729 = vmul.f32 %v9947, %v10661
  %v10730 = vmul.f32 %v9948, %v10662
  %v10731 = vsub.f32 %v10663, %v10697
  %v10732 = vsub.f32 %v10664, %v10698
  %v10733 = vsub.f32 %v10665, %v10699
  %v10734 = vsub.f32 %v10666, %v10700
  %v10735 = vsub.f32 %v10667, %v10701
  %v10736 = vsub.f32 %v10668, %v10702
  %v10737 = vsub.f32 %v10669, %v10703
  %v10738 = vsub.f32 %v10670, %v10704
  %v10739 = vsub.f32 %v10671, %v10705
  %v10740 = vsub.f32 %v10672, %v10706
  %v10741 = vsub.f32 %v10673, %v10707
  %v10742 = vsub.f32 %v10674, %v10708
  %v10743 = vsub.f32 %v10675, %v10709
  %v10744 = vsub.f32 %v10676, %v10710
  %v10745 = vsub.f32 %v10677, %v10711
  %v10746 = vsub.f32 %v10678, %v10712
  %v10747 = vsub.f32 %v10679, %v10713
  %v10748 = vsub.f32 %v10680, %v10714
  %v10749 = vsub.f32 %v10681, %v10715
  %v10750 = vsub.f32 %v10682, %v10716
  %v10751 = vsub.f32 %v10683, %v10717
  %v10752 = vsub.f32 %v10684, %v10718
  %v10753 = vsub.f32 %v10685, %v10719
  %v10754 = vsub.f32 %v10686, %v10720
  %v10755 = vsub.f32 %v10687, %v10721
  %v10756 = vsub.f32 %v10688, %v10722
  %v10757 = vsub.f32 %v10689, %v10723
  %v10758 = vsub.f32 %v10690, %v10724
  %v10759 = vsub.f32 %v10691, %v10725
  %v10760 = vsub.f32 %v10692, %v10726
  %v10761 = vsub.f32 %v10693, %v10727
  %v10762 = vsub.f32 %v10694, %v10728
  %v10763 = vsub.f32 %v10695, %v10729
  %v10764 = vsub.f32 %v10696, %v10730
  %10766 = vset.pattern.permute.xlu0 0
  %10767 = vperm.xlu0 %10766, %v10629
  %v10768 = vpop.permute.xlu0 %10767
  %10771 = vset.pattern.permute.xlu0 0
  %10772 = vperm.xlu0 %10771, %v10630
  %v10773 = vpop.permute.xlu0 %10772
  %10776 = vset.pattern.permute.xlu0 0
  %10777 = vperm.xlu0 %10776, %v10631
  %v10778 = vpop.permute.xlu0 %10777
  %10781 = vset.pattern.permute.xlu0 0
  %10782 = vperm.xlu0 %10781, %v10632
  %v10783 = vpop.permute.xlu0 %10782
  %10786 = vset.pattern.permute.xlu0 0
  %10787 = vperm.xlu0 %10786, %v10633
  %v10788 = vpop.permute.xlu0 %10787
  %10791 = vset.pattern.permute.xlu0 0
  %10792 = vperm.xlu0 %10791, %v10634
  %v10793 = vpop.permute.xlu0 %10792
  %10796 = vset.pattern.permute.xlu0 0
  %10797 = vperm.xlu0 %10796, %v10635
  %v10798 = vpop.permute.xlu0 %10797
  %10801 = vset.pattern.permute.xlu0 0
  %10802 = vperm.xlu0 %10801, %v10636
  %v10803 = vpop.permute.xlu0 %10802
  %10806 = vset.pattern.permute.xlu0 0
  %10807 = vperm.xlu0 %10806, %v10637
  %v10808 = vpop.permute.xlu0 %10807
  %10811 = vset.pattern.permute.xlu0 0
  %10812 = vperm.xlu0 %10811, %v10638
  %v10813 = vpop.permute.xlu0 %10812
  %10816 = vset.pattern.permute.xlu0 0
  %10817 = vperm.xlu0 %10816, %v10639
  %v10818 = vpop.permute.xlu0 %10817
  %10821 = vset.pattern.permute.xlu0 0
  %10822 = vperm.xlu0 %10821, %v10640
  %v10823 = vpop.permute.xlu0 %10822
  %10826 = vset.pattern.permute.xlu0 0
  %10827 = vperm.xlu0 %10826, %v10641
  %v10828 = vpop.permute.xlu0 %10827
  %10831 = vset.pattern.permute.xlu0 0
  %10832 = vperm.xlu0 %10831, %v10642
  %v10833 = vpop.permute.xlu0 %10832
  %10836 = vset.pattern.permute.xlu0 0
  %10837 = vperm.xlu0 %10836, %v10643
  %v10838 = vpop.permute.xlu0 %10837
  %10841 = vset.pattern.permute.xlu0 0
  %10842 = vperm.xlu0 %10841, %v10644
  %v10843 = vpop.permute.xlu0 %10842
  %10846 = vset.pattern.permute.xlu0 0
  %10847 = vperm.xlu0 %10846, %v10645
  %v10848 = vpop.permute.xlu0 %10847
  %10851 = vset.pattern.permute.xlu0 0
  %10852 = vperm.xlu0 %10851, %v10646
  %v10853 = vpop.permute.xlu0 %10852
  %10856 = vset.pattern.permute.xlu0 0
  %10857 = vperm.xlu0 %10856, %v10647
  %v10858 = vpop.permute.xlu0 %10857
  %10861 = vset.pattern.permute.xlu0 0
  %10862 = vperm.xlu0 %10861, %v10648
  %v10863 = vpop.permute.xlu0 %10862
  %10866 = vset.pattern.permute.xlu0 0
  %10867 = vperm.xlu0 %10866, %v10649
  %v10868 = vpop.permute.xlu0 %10867
  %10871 = vset.pattern.permute.xlu0 0
  %10872 = vperm.xlu0 %10871, %v10650
  %v10873 = vpop.permute.xlu0 %10872
  %10876 = vset.pattern.permute.xlu0 0
  %10877 = vperm.xlu0 %10876, %v10651
  %v10878 = vpop.permute.xlu0 %10877
  %10881 = vset.pattern.permute.xlu0 0
  %10882 = vperm.xlu0 %10881, %v10652
  %v10883 = vpop.permute.xlu0 %10882
  %10886 = vset.pattern.permute.xlu0 0
  %10887 = vperm.xlu0 %10886, %v10653
  %v10888 = vpop.permute.xlu0 %10887
  %10891 = vset.pattern.permute.xlu0 0
  %10892 = vperm.xlu0 %10891, %v10654
  %v10893 = vpop.permute.xlu0 %10892
  %10896 = vset.pattern.permute.xlu0 0
  %10897 = vperm.xlu0 %10896, %v10655
  %v10898 = vpop.permute.xlu0 %10897
  %10901 = vset.pattern.permute.xlu0 0
  %10902 = vperm.xlu0 %10901, %v10656
  %v10903 = vpop.permute.xlu0 %10902
  %10906 = vset.pattern.permute.xlu0 0
  %10907 = vperm.xlu0 %10906, %v10657
  %v10908 = vpop.permute.xlu0 %10907
  %10911 = vset.pattern.permute.xlu0 0
  %10912 = vperm.xlu0 %10911, %v10658
  %v10913 = vpop.permute.xlu0 %10912
  %10916 = vset.pattern.permute.xlu0 0
  %10917 = vperm.xlu0 %10916, %v10659
  %v10918 = vpop.permute.xlu0 %10917
  %10921 = vset.pattern.permute.xlu0 0
  %10922 = vperm.xlu0 %10921, %v10660
  %v10923 = vpop.permute.xlu0 %10922
  %10926 = vset.pattern.permute.xlu0 0
  %10927 = vperm.xlu0 %10926, %v10661
  %v10928 = vpop.permute.xlu0 %10927
  %10931 = vset.pattern.permute.xlu0 0
  %10932 = vperm.xlu0 %10931, %v10662
  %v10933 = vpop.permute.xlu0 %10932
  %v10935 = vmul.f32 %v9728, %v10768
  %v10936 = vmul.f32 %v9730, %v10773
  %v10937 = vmul.f32 %v9733, %v10778
  %v10938 = vmul.f32 %v9735, %v10783
  %v10939 = vmul.f32 %v9738, %v10788
  %v10940 = vmul.f32 %v9740, %v10793
  %v10941 = vmul.f32 %v9743, %v10798
  %v10942 = vmul.f32 %v9745, %v10803
  %v10943 = vmul.f32 %v9748, %v10808
  %v10944 = vmul.f32 %v9750, %v10813
  %v10945 = vmul.f32 %v9753, %v10818
  %v10946 = vmul.f32 %v9755, %v10823
  %v10947 = vmul.f32 %v9758, %v10828
  %v10948 = vmul.f32 %v9760, %v10833
  %v10949 = vmul.f32 %v9763, %v10838
  %v10950 = vmul.f32 %v9765, %v10843
  %v10951 = vmul.f32 %v9768, %v10848
  %v10952 = vmul.f32 %v9770, %v10853
  %v10953 = vmul.f32 %v9773, %v10858
  %v10954 = vmul.f32 %v9775, %v10863
  %v10955 = vmul.f32 %v9778, %v10868
  %v10956 = vmul.f32 %v9780, %v10873
  %v10957 = vmul.f32 %v9783, %v10878
  %v10958 = vmul.f32 %v9785, %v10883
  %v10959 = vmul.f32 %v9788, %v10888
  %v10960 = vmul.f32 %v9790, %v10893
  %v10961 = vmul.f32 %v9793, %v10898
  %v10962 = vmul.f32 %v9795, %v10903
  %v10963 = vmul.f32 %v9798, %v10908
  %v10964 = vmul.f32 %v9800, %v10913
  %v10965 = vmul.f32 %v9803, %v10918
  %v10966 = vmul.f32 %v9805, %v10923
  %v10967 = vmul.f32 %v9808, %v10928
  %v10968 = vmul.f32 %v9810, %v10933
  %10970 = vset.pattern.permute.xlu0 0
  %10971 = vperm.xlu0 %10970, %v10731
  %v10972 = vpop.permute.xlu0 %10971
  %10975 = vset.pattern.permute.xlu0 0
  %10976 = vperm.xlu0 %10975, %v10732
  %v10977 = vpop.permute.xlu0 %10976
  %10980 = vset.pattern.permute.xlu0 0
  %10981 = vperm.xlu0 %10980, %v10733
  %v10982 = vpop.permute.xlu0 %10981
  %10985 = vset.pattern.permute.xlu0 0
  %10986 = vperm.xlu0 %10985, %v10734
  %v10987 = vpop.permute.xlu0 %10986
  %10990 = vset.pattern.permute.xlu0 0
  %10991 = vperm.xlu0 %10990, %v10735
  %v10992 = vpop.permute.xlu0 %10991
  %10995 = vset.pattern.permute.xlu0 0
  %10996 = vperm.xlu0 %10995, %v10736
  %v10997 = vpop.permute.xlu0 %10996
  %11000 = vset.pattern.permute.xlu0 0
  %11001 = vperm.xlu0 %11000, %v10737
  %v11002 = vpop.permute.xlu0 %11001
  %11005 = vset.pattern.permute.xlu0 0
  %11006 = vperm.xlu0 %11005, %v10738
  %v11007 = vpop.permute.xlu0 %11006
  %11010 = vset.pattern.permute.xlu0 0
  %11011 = vperm.xlu0 %11010, %v10739
  %v11012 = vpop.permute.xlu0 %11011
  %11015 = vset.pattern.permute.xlu0 0
  %11016 = vperm.xlu0 %11015, %v10740
  %v11017 = vpop.permute.xlu0 %11016
  %11020 = vset.pattern.permute.xlu0 0
  %11021 = vperm.xlu0 %11020, %v10741
  %v11022 = vpop.permute.xlu0 %11021
  %11025 = vset.pattern.permute.xlu0 0
  %11026 = vperm.xlu0 %11025, %v10742
  %v11027 = vpop.permute.xlu0 %11026
  %11030 = vset.pattern.permute.xlu0 0
  %11031 = vperm.xlu0 %11030, %v10743
  %v11032 = vpop.permute.xlu0 %11031
  %11035 = vset.pattern.permute.xlu0 0
  %11036 = vperm.xlu0 %11035, %v10744
  %v11037 = vpop.permute.xlu0 %11036
  %11040 = vset.pattern.permute.xlu0 0
  %11041 = vperm.xlu0 %11040, %v10745
  %v11042 = vpop.permute.xlu0 %11041
  %11045 = vset.pattern.permute.xlu0 0
  %11046 = vperm.xlu0 %11045, %v10746
  %v11047 = vpop.permute.xlu0 %11046
  %11050 = vset.pattern.permute.xlu0 0
  %11051 = vperm.xlu0 %11050, %v10747
  %v11052 = vpop.permute.xlu0 %11051
  %11055 = vset.pattern.permute.xlu0 0
  %11056 = vperm.xlu0 %11055, %v10748
  %v11057 = vpop.permute.xlu0 %11056
  %11060 = vset.pattern.permute.xlu0 0
  %11061 = vperm.xlu0 %11060, %v10749
  %v11062 = vpop.permute.xlu0 %11061
  %11065 = vset.pattern.permute.xlu0 0
  %11066 = vperm.xlu0 %11065, %v10750
  %v11067 = vpop.permute.xlu0 %11066
  %11070 = vset.pattern.permute.xlu0 0
  %11071 = vperm.xlu0 %11070, %v10751
  %v11072 = vpop.permute.xlu0 %11071
  %11075 = vset.pattern.permute.xlu0 0
  %11076 = vperm.xlu0 %11075, %v10752
  %v11077 = vpop.permute.xlu0 %11076
  %11080 = vset.pattern.permute.xlu0 0
  %11081 = vperm.xlu0 %11080, %v10753
  %v11082 = vpop.permute.xlu0 %11081
  %11085 = vset.pattern.permute.xlu0 0
  %11086 = vperm.xlu0 %11085, %v10754
  %v11087 = vpop.permute.xlu0 %11086
  %11090 = vset.pattern.permute.xlu0 0
  %11091 = vperm.xlu0 %11090, %v10755
  %v11092 = vpop.permute.xlu0 %11091
  %11095 = vset.pattern.permute.xlu0 0
  %11096 = vperm.xlu0 %11095, %v10756
  %v11097 = vpop.permute.xlu0 %11096
  %11100 = vset.pattern.permute.xlu0 0
  %11101 = vperm.xlu0 %11100, %v10757
  %v11102 = vpop.permute.xlu0 %11101
  %11105 = vset.pattern.permute.xlu0 0
  %11106 = vperm.xlu0 %11105, %v10758
  %v11107 = vpop.permute.xlu0 %11106
  %11110 = vset.pattern.permute.xlu0 0
  %11111 = vperm.xlu0 %11110, %v10759
  %v11112 = vpop.permute.xlu0 %11111
  %11115 = vset.pattern.permute.xlu0 0
  %11116 = vperm.xlu0 %11115, %v10760
  %v11117 = vpop.permute.xlu0 %11116
  %11120 = vset.pattern.permute.xlu0 0
  %11121 = vperm.xlu0 %11120, %v10761
  %v11122 = vpop.permute.xlu0 %11121
  %11125 = vset.pattern.permute.xlu0 0
  %11126 = vperm.xlu0 %11125, %v10762
  %v11127 = vpop.permute.xlu0 %11126
  %11130 = vset.pattern.permute.xlu0 0
  %11131 = vperm.xlu0 %11130, %v10763
  %v11132 = vpop.permute.xlu0 %11131
  %11135 = vset.pattern.permute.xlu0 0
  %11136 = vperm.xlu0 %11135, %v10764
  %v11137 = vpop.permute.xlu0 %11136
  %v11139 = vadd.f32 %v10935, %v10972
  %v11140 = vadd.f32 %v10936, %v10977
  %v11141 = vadd.f32 %v10937, %v10982
  %v11142 = vadd.f32 %v10938, %v10987
  %v11143 = vadd.f32 %v10939, %v10992
  %v11144 = vadd.f32 %v10940, %v10997
  %v11145 = vadd.f32 %v10941, %v11002
  %v11146 = vadd.f32 %v10942, %v11007
  %v11147 = vadd.f32 %v10943, %v11012
  %v11148 = vadd.f32 %v10944, %v11017
  %v11149 = vadd.f32 %v10945, %v11022
  %v11150 = vadd.f32 %v10946, %v11027
  %v11151 = vadd.f32 %v10947, %v11032
  %v11152 = vadd.f32 %v10948, %v11037
  %v11153 = vadd.f32 %v10949, %v11042
  %v11154 = vadd.f32 %v10950, %v11047
  %v11155 = vadd.f32 %v10951, %v11052
  %v11156 = vadd.f32 %v10952, %v11057
  %v11157 = vadd.f32 %v10953, %v11062
  %v11158 = vadd.f32 %v10954, %v11067
  %v11159 = vadd.f32 %v10955, %v11072
  %v11160 = vadd.f32 %v10956, %v11077
  %v11161 = vadd.f32 %v10957, %v11082
  %v11162 = vadd.f32 %v10958, %v11087
  %v11163 = vadd.f32 %v10959, %v11092
  %v11164 = vadd.f32 %v10960, %v11097
  %v11165 = vadd.f32 %v10961, %v11102
  %v11166 = vadd.f32 %v10962, %v11107
  %v11167 = vadd.f32 %v10963, %v11112
  %v11168 = vadd.f32 %v10964, %v11117
  %v11169 = vadd.f32 %v10965, %v11122
  %v11170 = vadd.f32 %v10966, %v11127
  %v11171 = vadd.f32 %v10967, %v11132
  %v11172 = vadd.f32 %v10968, %v11137
  %11173 = vst.msk [vmem:[%s7] sm:$0xff] %vm9812, %v11139
  %11174 = vst.msk [vmem:[%s7 + $0x8] sm:$0xff] %vm9812, %v11140
  %11175 = vst.msk [vmem:[%s7 + $0x10] sm:$0xff] %vm9812, %v11141
  %11176 = vst.msk [vmem:[%s7 + $0x18] sm:$0xff] %vm9812, %v11142
  %11177 = vst.msk [vmem:[%s7 + $0x20] sm:$0xff] %vm9812, %v11143
  %11178 = vst.msk [vmem:[%s7 + $0x28] sm:$0xff] %vm9812, %v11144
  %11179 = vst.msk [vmem:[%s7 + $0x30] sm:$0xff] %vm9812, %v11145
  %11180 = vst.msk [vmem:[%s7 + $0x38] sm:$0xff] %vm9812, %v11146
  %11181 = vst.msk [vmem:[%s7 + $0x40] sm:$0xff] %vm9812, %v11147
  %11182 = vst.msk [vmem:[%s7 + $0x48] sm:$0xff] %vm9812, %v11148
  %11183 = vst.msk [vmem:[%s7 + $0x50] sm:$0xff] %vm9812, %v11149
  %11184 = vst.msk [vmem:[%s7 + $0x58] sm:$0xff] %vm9812, %v11150
  %11185 = vst.msk [vmem:[%s7 + $0x60] sm:$0xff] %vm9812, %v11151
  %11186 = vst.msk [vmem:[%s7 + $0x68] sm:$0xff] %vm9812, %v11152
  %11187 = vst.msk [vmem:[%s7 + $0x70] sm:$0xff] %vm9812, %v11153
  %11188 = vst.msk [vmem:[%s7 + $0x78] sm:$0xff] %vm9812, %v11154
  %11189 = vst.msk [vmem:[%s7 + $0x80] sm:$0xff] %vm9812, %v11155
  %11190 = vst.msk [vmem:[%s7 + $0x88] sm:$0xff] %vm9812, %v11156
  %11191 = vst.msk [vmem:[%s7 + $0x90] sm:$0xff] %vm9812, %v11157
  %11192 = vst.msk [vmem:[%s7 + $0x98] sm:$0xff] %vm9812, %v11158
  %11193 = vst.msk [vmem:[%s7 + $0xa0] sm:$0xff] %vm9812, %v11159
  %11194 = vst.msk [vmem:[%s7 + $0xa8] sm:$0xff] %vm9812, %v11160
  %11195 = vst.msk [vmem:[%s7 + $0xb0] sm:$0xff] %vm9812, %v11161
  %11196 = vst.msk [vmem:[%s7 + $0xb8] sm:$0xff] %vm9812, %v11162
  %11197 = vst.msk [vmem:[%s7 + $0xc0] sm:$0xff] %vm9812, %v11163
  %11198 = vst.msk [vmem:[%s7 + $0xc8] sm:$0xff] %vm9812, %v11164
  %11199 = vst.msk [vmem:[%s7 + $0xd0] sm:$0xff] %vm9812, %v11165
  %11200 = vst.msk [vmem:[%s7 + $0xd8] sm:$0xff] %vm9812, %v11166
  %11201 = vst.msk [vmem:[%s7 + $0xe0] sm:$0xff] %vm9812, %v11167
  %11202 = vst.msk [vmem:[%s7 + $0xe8] sm:$0xff] %vm9812, %v11168
  %11203 = vst.msk [vmem:[%s7 + $0xf0] sm:$0xff] %vm9812, %v11169
  %11204 = vst.msk [vmem:[%s7 + $0xf8] sm:$0xff] %vm9812, %v11170
  %11205 = vst.msk [vmem:[%s7 + $0x100] sm:$0xff] %vm9812, %v11171
  %11206 = vst.msk [vmem:[%s7 + $0x108] sm:$0xff] %vm9812, %v11172
  // Predicated region
  $region30: #{model_forward.1} parent=0 // pred_check
    _
  $region31: #{model_forward.1} parent=0 // pred_check_branch
    %11208 = sbr.rel (0) target = $region33
  $region32: #{model_forward.1} parent=0 // pred_region
    _
  $region33: #{model_forward.1} parent=0 // pred_fallthru
    _
  // Predicated region
  $region34: #{model_forward.1} parent=0 // pred_check
    _
  $region35: #{model_forward.1} parent=0 // pred_check_branch
    %11210 = sbr.rel (0) target = $region37
  $region36: #{model_forward.1} parent=0 // pred_region
    _
  $region37: #{model_forward.1} parent=0 // pred_fallthru
    _

</llo_original>
